<compile_context>
chip_gen: v5e
topology: v5e:2x2
jax: 0.10.0
libtpu: 0.0.40
codegen_flags: <defaults>
</compile_context>

<pallas_src>
import functools

import jax
import jax.numpy as jnp
from jax.experimental import pallas as pl
from jax.experimental.pallas import tpu as pltpu


_VMEM_BUDGET = 40 * 1024 * 1024   # target working set (safe for v7x's 64 MiB VMEM)
_VMEM_LIMIT = 48 * 1024 * 1024    # scoped-VMEM cap handed to Mosaic


def _round_up(x, m):
    return ((x + m - 1) // m) * m


def _lane(n):   # lane (last-dim) footprint of a VMEM-resident block
    return _round_up(max(int(n), 1), 128)


def _sub(n):    # sublane footprint (bf16 packs 16 rows per tile)
    return _round_up(max(int(n), 1), 16)


# --------------------------------------------------------------------------
# Kernel 1a: direct conv (stride 1, k > 1) + per-block BatchNorm partials
# --------------------------------------------------------------------------
def _direct_conv_kernel(x_ref, halo_ref, w_ref, m_ref, y_ref, stats_ref,
                        slab_ref, acc_ref, *, offsets, tm):
    """One M-block of the convolution computed straight from the flattened
    padded input: each conv tap is a statically-offset row window of the
    contiguous [block ; halo] slab (one MXU matmul per tap, f32 accumulation).
    The mask zeroes raster rows that are not real output pixels before the
    BatchNorm partial (sum, sum-of-squares) rows are emitted."""
    slab_ref[0:tm, :] = x_ref[...]
    slab_ref[tm:, :] = halo_ref[...]
    for t, off in enumerate(offsets):
        d = jnp.dot(slab_ref[off:off + tm, :], w_ref[t],
                    preferred_element_type=jnp.float32)
        if t == 0:
            acc_ref[...] = d
        else:
            acc_ref[...] += d
    acc = acc_ref[...] * m_ref[...]
    y_ref[...] = acc.astype(y_ref.dtype)
    stats_ref[0, 0:1, :] = jnp.sum(acc, axis=0, keepdims=True)
    stats_ref[0, 1:2, :] = jnp.sum(acc * acc, axis=0, keepdims=True)


# --------------------------------------------------------------------------
# Kernel 1b: fallback tiled-K matmul (1x1 convs, strided convs) + BN partials
# --------------------------------------------------------------------------
def _matmul_stats_kernel(p_ref, w_ref, y_ref, stats_ref, acc_ref):
    k = pl.program_id(1)
    nk = pl.num_programs(1)

    @pl.when(k == 0)
    def _():
        acc_ref[...] = jnp.zeros_like(acc_ref)

    acc_ref[...] += jnp.dot(p_ref[...], w_ref[...],
                            preferred_element_type=jnp.float32)

    @pl.when(k == nk - 1)
    def _():
        acc = acc_ref[...]
        y_ref[...] = acc.astype(y_ref.dtype)
        stats_ref[0, 0:1, :] = jnp.sum(acc, axis=0, keepdims=True)
        stats_ref[0, 1:2, :] = jnp.sum(acc * acc, axis=0, keepdims=True)


# --------------------------------------------------------------------------
# Kernel 2: folded BatchNorm affine + LeakyReLU (memory bound)
# --------------------------------------------------------------------------
def _bn_act_kernel(y_ref, scale_ref, shift_ref, o_ref, *, neg_slope):
    z = y_ref[...].astype(jnp.float32) * scale_ref[...] + shift_ref[...]
    o_ref[...] = jnp.where(z > 0, z, neg_slope * z).astype(o_ref.dtype)


def _apply_bn_act(y2d, scale, shift, *, tm_rows, neg_slope, out_dtype):
    mpad, c2p = y2d.shape
    return pl.pallas_call(
        functools.partial(_bn_act_kernel, neg_slope=neg_slope),
        out_shape=jax.ShapeDtypeStruct((mpad, c2p), out_dtype),
        grid_spec=pltpu.PrefetchScalarGridSpec(
            num_scalar_prefetch=0,
            grid=(mpad // tm_rows,),
            in_specs=[
                pl.BlockSpec((tm_rows, c2p), lambda i: (i, 0)),
                pl.BlockSpec((1, c2p), lambda i: (0, 0)),
                pl.BlockSpec((1, c2p), lambda i: (0, 0)),
            ],
            out_specs=pl.BlockSpec((tm_rows, c2p), lambda i: (i, 0)),
        ),
        compiler_params=pltpu.CompilerParams(
            dimension_semantics=("parallel",),
            vmem_limit_bytes=_VMEM_LIMIT),
    )(y2d, scale, shift)


# --------------------------------------------------------------------------
# Tile planning
# --------------------------------------------------------------------------
def _direct_vmem_bytes(tm, hs, c1, c2_blk, taps):
    in_row = _lane(c1) * 2                          # bf16 bytes per input row
    out_lanes = _lane(c2_blk)
    return (2 * _sub(tm) * in_row                   # x block (double-buffered)
            + 2 * _sub(hs) * in_row                 # halo block
            + 2 * taps * _sub(c1) * out_lanes * 2   # resident weights
            + 2 * _sub(tm) * out_lanes * 2          # bf16 y block
            + _sub(tm + hs) * in_row                # slab scratch
            + _sub(tm) * out_lanes * 4              # f32 accumulator
            + _sub(tm) * out_lanes * 4              # dot temporary headroom
            + 2 * _sub(tm) * _lane(1) * 4)          # mask block


def _plan_direct(c2p, taps, needed, c1):
    """Pick (tm, halo, n_c2_blocks) for the direct path, or None to fall back."""
    hs = max(8, int(pl.next_power_of_2(int(needed))))
    max_nj = c2p // 128
    nj = 1
    while nj <= max_nj:
        if max_nj % nj == 0:
            c2_blk = c2p // nj
            for tm in (2048, 1024, 512):
                if tm >= hs and _direct_vmem_bytes(tm, hs, c1, c2_blk,
                                                   taps) <= _VMEM_BUDGET:
                    return tm, hs, nj
        nj *= 2
    return None


# --------------------------------------------------------------------------
# Public wrapper: conv (no bias) -> BatchNorm (batch stats) -> LeakyReLU
# --------------------------------------------------------------------------
def conv_forward(x_nchw, weight, gamma, beta, *, stride=1, padding=None,
                 neg_slope=0.01, eps=1e-5, out_dtype=jnp.bfloat16):
    """Pallas implementation of Conv.forward (conv -> BN(train) -> LeakyReLU)."""
    c2, c1, kh, kw = weight.shape
    if padding is None:                                   # auto_pad
        padding = kh // 2
    B, C1, H, W = x_nchw.shape
    assert C1 == c1
    Ho = (H + 2 * padding - kh) // stride + 1
    Wo = (W + 2 * padding - kw) // stride + 1
    M = B * Ho * Wo                                       # true output-pixel count
    c2p = _round_up(c2, 128)                              # lane-dense channels

    # NCHW -> NHWC, bf16 operands for the MXU.
    x = jnp.transpose(x_nchw, (0, 2, 3, 1)).astype(jnp.bfloat16)

    Hp, Wp = H + 2 * padding, W + 2 * padding
    plan = None
    if stride == 1 and (kh > 1 or kw > 1):
        needed = (kh - 1) * Wp + (kw - 1)                 # max tap row-offset
        plan = _plan_direct(c2p, kh * kw, needed, C1)

    if plan is not None:
        # ---------------- direct path: no im2col ----------------
        tm, hs, nj = plan
        Mflat = B * Hp * Wp
        tm = max(hs, min(tm, _round_up(Mflat, hs)))       # keep hs | tm
        ng = pl.cdiv(Mflat, tm)
        Mpad = ng * tm
        c2_blk = c2p // nj

        if padding:
            x = jnp.pad(x, ((0, 0), (padding, padding),
                            (padding, padding), (0, 0)))
        x_flat = x.reshape(Mflat, C1)
        x_flat = jnp.pad(x_flat, ((0, Mpad + hs - Mflat), (0, 0)))

        # 0/1 mask of raster rows that are real output pixels.
        valid = ((jnp.arange(Hp)[:, None] < Ho) &
                 (jnp.arange(Wp)[None, :] < Wo))
        mask = jnp.broadcast_to(valid[None], (B, Hp, Wp)).reshape(Mflat, 1)
        mask = jnp.pad(mask.astype(jnp.float32), ((0, Mpad - Mflat), (0, 0)))

        # weight (c2, c1, kh, kw) -> (kh*kw, c1, c2p), bf16.
        w3 = jnp.transpose(weight, (2, 3, 1, 0)).reshape(kh * kw, C1, c2)
        w3 = jnp.pad(w3, ((0, 0), (0, 0), (0, c2p - c2))).astype(jnp.bfloat16)

        offsets = tuple(ih * Wp + iw for ih in range(kh) for iw in range(kw))
        kernel = functools.partial(_direct_conv_kernel, offsets=offsets, tm=tm)

        y, stats = pl.pallas_call(
            kernel,
            out_shape=(
                jax.ShapeDtypeStruct((Mpad, c2p), jnp.bfloat16),
                jax.ShapeDtypeStruct((ng, 2, c2p), jnp.float32),
            ),
            grid_spec=pltpu.PrefetchScalarGridSpec(
                num_scalar_prefetch=0,
                grid=(nj, ng),
                in_specs=[
                    pl.BlockSpec((tm, C1), lambda j, i: (i, 0)),
                    pl.BlockSpec((hs, C1),
                                 lambda j, i: ((i + 1) * (tm // hs), 0)),
                    pl.BlockSpec((kh * kw, C1, c2_blk), lambda j, i: (0, 0, j)),
                    pl.BlockSpec((tm, 1), lambda j, i: (i, 0)),
                ],
                out_specs=[
                    pl.BlockSpec((tm, c2_blk), lambda j, i: (i, j)),
                    pl.BlockSpec((1, 2, c2_blk), lambda j, i: (i, 0, j)),
                ],
                scratch_shapes=[
                    pltpu.VMEM((tm + hs, C1), jnp.bfloat16),
                    pltpu.VMEM((tm, c2_blk), jnp.float32),
                ],
            ),
            compiler_params=pltpu.CompilerParams(
                dimension_semantics=("arbitrary", "parallel"),
                vmem_limit_bytes=_VMEM_LIMIT),
            cost_estimate=pl.CostEstimate(
                flops=2 * Mpad * kh * kw * C1 * c2p,
                transcendentals=0,
                bytes_accessed=(nj * (Mpad + ng * hs) * C1 * 2
                                + nj * kh * kw * C1 * c2p * 2
                                + Mpad * c2p * 2 + ng * 2 * c2p * 4)),
        )(x_flat, x_flat, w3, mask)
    else:
        # ---------- fallback: (strided) im2col + tiled-K matmul ----------
        K = kh * kw * C1
        xp = jnp.pad(x, ((0, 0), (padding, padding),
                         (padding, padding), (0, 0))) if padding else x
        if kh == 1 and kw == 1:
            # 1x1 conv: no im2col, just a (strided) reshape.
            patches = xp[:, ::stride, ::stride, :].reshape(M, K)
        else:
            slabs = []
            for ih in range(kh):
                for iw in range(kw):
                    slabs.append(xp[:, ih:ih + Ho * stride:stride,
                                    iw:iw + Wo * stride:stride, :])
            patches = jnp.concatenate(slabs, axis=-1).reshape(M, K)

        w_mat = (jnp.transpose(weight, (2, 3, 1, 0)).reshape(K, c2)
                 .astype(jnp.bfloat16))

        tm = min(1024, _round_up(M, 256))
        resident = (2 * _sub(K) * _lane(c2p) * 2        # W, double-buffered
                    + 2 * _sub(tm) * _lane(K) * 2       # patches block
                    + 2 * _sub(tm) * _lane(c2p) * 2     # y block
                    + 2 * _sub(tm) * _lane(c2p) * 4)    # accumulator + temp
        if resident <= _VMEM_BUDGET:
            kb, Kpad = K, K              # weights stay VMEM-resident (nk = 1)
        else:
            kb, Kpad = 1024, _round_up(K, 1024)
        Mpad = _round_up(M, tm)
        if Mpad != M or Kpad != K:
            patches = jnp.pad(patches, ((0, Mpad - M), (0, Kpad - K)))
        if Kpad != K or c2p != c2:
            w_mat = jnp.pad(w_mat, ((0, Kpad - K), (0, c2p - c2)))
        nm, nk = Mpad // tm, Kpad // kb

        y, stats = pl.pallas_call(
            _matmul_stats_kernel,
            out_shape=(
                jax.ShapeDtypeStruct((Mpad, c2p), jnp.bfloat16),
                jax.ShapeDtypeStruct((nm, 2, c2p), jnp.float32),
            ),
            grid_spec=pltpu.PrefetchScalarGridSpec(
                num_scalar_prefetch=0,
                grid=(nm, nk),
                in_specs=[
                    pl.BlockSpec((tm, kb), lambda i, k: (i, k)),
                    pl.BlockSpec((kb, c2p), lambda i, k: (k, 0)),
                ],
                out_specs=[
                    pl.BlockSpec((tm, c2p), lambda i, k: (i, 0)),
                    pl.BlockSpec((1, 2, c2p), lambda i, k: (i, 0, 0)),
                ],
                scratch_shapes=[pltpu.VMEM((tm, c2p), jnp.float32)],
            ),
            compiler_params=pltpu.CompilerParams(
                dimension_semantics=("parallel", "arbitrary"),
                vmem_limit_bytes=_VMEM_LIMIT),
            cost_estimate=pl.CostEstimate(
                flops=2 * Mpad * Kpad * c2p,
                transcendentals=0,
                bytes_accessed=(Mpad * Kpad * 2 + Kpad * c2p * 2
                                + Mpad * c2p * 2 + nm * 2 * c2p * 4)),
        )(patches, w_mat)

    # ---- fold BN (training mode: batch mean, biased variance) ----
    sums = jnp.sum(stats, axis=0)                         # (2, c2p)
    mean = sums[0] / M
    var = jnp.maximum(sums[1] / M - mean * mean, 0.0)     # guard cancellation
    inv = jax.lax.rsqrt(var + eps)
    gamma_p = jnp.pad(gamma.astype(jnp.float32), (0, c2p - c2))
    beta_p = jnp.pad(beta.astype(jnp.float32), (0, c2p - c2))
    scale = (gamma_p * inv)[None, :]                      # (1, c2p)
    shift = (beta_p - mean * gamma_p * inv)[None, :]      # (1, c2p)

    # ---- kernel 2: BN affine + LeakyReLU, bf16 output (memory bound) ----
    out2d = _apply_bn_act(y, scale, shift, tm_rows=tm,
                          neg_slope=neg_slope, out_dtype=out_dtype)

    if plan is not None:
        out = out2d[:Mflat].reshape(B, Hp, Wp, c2p)[:, :Ho, :Wo, :c2]
    else:
        out = out2d[:M, :c2].reshape(B, Ho, Wo, c2)
    # TODO(synk): keep NHWC end-to-end to drop this relayout when possible.
    return jnp.transpose(out, (0, 3, 1, 2))               # back to NCHW


def _reference(x, weight, gamma, beta, stride, padding, neg_slope=0.01, eps=1e-5):
    y = jax.lax.conv_general_dilated(
        x, weight, window_strides=(stride, stride),
        padding=[(padding, padding), (padding, padding)],
        dimension_numbers=("NCHW", "OIHW", "NCHW"))
    mean = jnp.mean(y, axis=(0, 2, 3), keepdims=True)
    var = jnp.mean((y - mean) ** 2, axis=(0, 2, 3), keepdims=True)
    z = (y - mean) * jax.lax.rsqrt(var + eps)
    z = z * gamma[None, :, None, None] + beta[None, :, None, None]
    return jnp.where(z > 0, z, neg_slope * z)


if __name__ == "__main__":
    key = jax.random.PRNGKey(0)
    kx, kw_, kg, kb_ = jax.random.split(key, 4)

    B, C1, H, W, C2 = 2, 4, 16, 16, 8
    x = jax.random.normal(kx, (B, C1, H, W), jnp.float32)
    gamma = 1.0 + 0.1 * jax.random.normal(kg, (C2,), jnp.float32)
    beta = 0.1 * jax.random.normal(kb_, (C2,), jnp.float32)

    # (k, s): 3x3/s1 -> direct (no-im2col) path, 1x1 -> pointwise matmul path,
    #         3x3/s2 -> strided im2col fallback path.
    for ksz, stride in ((3, 1), (1, 1), (3, 2)):
        pad = ksz // 2                                    # auto_pad
        weight = 0.1 * jax.random.normal(kw_, (C2, C1, ksz, ksz), jnp.float32)
        out = conv_forward(x, weight, gamma, beta, stride=stride, padding=pad)
        out = jax.block_until_ready(out)
        ref = _reference(x, weight, gamma, beta, stride, pad)
        Ho = (H + 2 * pad - ksz) // stride + 1
        Wo = (W + 2 * pad - ksz) // stride + 1
        assert out.shape == (B, C2, Ho, Wo), (out.shape, ksz, stride)
        # bf16 MXU operands / bf16 output -> looser tolerance than pure f32
        assert jnp.allclose(out.astype(jnp.float32), ref,
                            rtol=2e-2, atol=2e-2), (ksz, stride)

    print("KERNEL_OK")
</pallas_src>

<mosaic_0001>
module attributes {stable_mosaic.version = 11 : i64} {
  func.func @_direct_conv_kernel(%arg0: i32, %arg1: i32, %arg2: memref<704x4xbf16, #tpu.memory_space<vmem>>, %arg3: memref<64x4xbf16, #tpu.memory_space<vmem>>, %arg4: memref<9x4x128xbf16, #tpu.memory_space<vmem>>, %arg5: memref<704x1xf32, #tpu.memory_space<vmem>>, %arg6: memref<704x128xbf16, #tpu.memory_space<vmem>>, %arg7: memref<1x2x128xf32, #tpu.memory_space<vmem>>, %arg8: memref<768x4xbf16, #tpu.memory_space<vmem>>, %arg9: memref<704x128xf32, #tpu.memory_space<vmem>>) attributes {dimension_semantics = [#tpu.dimension_semantics<arbitrary>, #tpu.dimension_semantics<parallel>], iteration_bounds = array<i64: 1, 1>, scalar_prefetch = 0 : i64, scratch_operands = 2 : i64, tpu.core_type = #tpu.core_type<tc>, window_params = [{transform_indices = @transform_0, window_bounds = array<i64: 704, 4>}, {transform_indices = @transform_1, window_bounds = array<i64: 64, 4>}, {transform_indices = @transform_2, window_bounds = array<i64: 9, 4, 128>}, {transform_indices = @transform_3, window_bounds = array<i64: 704, 1>}, {transform_indices = @transform_4, window_bounds = array<i64: 704, 128>}, {transform_indices = @transform_5, window_bounds = array<i64: 1, 2, 128>}]} {
    %c0 = arith.constant 0 : index
    %c0_0 = arith.constant 0 : index
    %0 = vector.load %arg2[%c0, %c0_0] : memref<704x4xbf16, #tpu.memory_space<vmem>>, vector<704x4xbf16>
    %c0_1 = arith.constant 0 : index
    %c0_2 = arith.constant 0 : index
    %1 = vector.load %arg8[%c0_1, %c0_2] : memref<768x4xbf16, #tpu.memory_space<vmem>>, vector<704x4xbf16>
    tpu.vector_store %arg8[%c0_1, %c0_2], %0 {strides = array<i32>} : memref<768x4xbf16, #tpu.memory_space<vmem>>, vector<704x4xbf16>,
    %c0_3 = arith.constant 0 : index
    %c0_4 = arith.constant 0 : index
    %2 = vector.load %arg3[%c0_3, %c0_4] : memref<64x4xbf16, #tpu.memory_space<vmem>>, vector<64x4xbf16>
    %c704 = arith.constant 704 : index
    %c0_5 = arith.constant 0 : index
    %3 = vector.load %arg8[%c704, %c0_5] : memref<768x4xbf16, #tpu.memory_space<vmem>>, vector<64x4xbf16>
    tpu.vector_store %arg8[%c704, %c0_5], %2 {strides = array<i32>} : memref<768x4xbf16, #tpu.memory_space<vmem>>, vector<64x4xbf16>,
    %c0_6 = arith.constant 0 : index
    %c0_7 = arith.constant 0 : index
    %4 = vector.load %arg8[%c0_6, %c0_7] : memref<768x4xbf16, #tpu.memory_space<vmem>>, vector<704x4xbf16>
    %c0_8 = arith.constant 0 : index
    %c0_9 = arith.constant 0 : index
    %c0_10 = arith.constant 0 : index
    %5 = vector.load %arg4[%c0_8, %c0_9, %c0_10] : memref<9x4x128xbf16, #tpu.memory_space<vmem>>, vector<1x4x128xbf16>
    %6 = vector.shape_cast %5 : vector<1x4x128xbf16> to vector<4x128xbf16>
    %cst = arith.constant dense<0.000000e+00> : vector<704x128xf32>
    %7 = tpu.matmul %4, %6, %cst {dimension_numbers = #tpu.dot_dimension_numbers<[1], [0], [0], [1], [0, 0, 1, 1], [], []>} : vector<704x4xbf16>, vector<4x128xbf16>, vector<704x128xf32> -> vector<704x128xf32>
    %c0_11 = arith.constant 0 : index
    %c0_12 = arith.constant 0 : index
    %8 = vector.load %arg9[%c0_11, %c0_12] : memref<704x128xf32, #tpu.memory_space<vmem>>, vector<704x128xf32>
    tpu.vector_store %arg9[%c0_11, %c0_12], %7 {strides = array<i32>} : memref<704x128xf32, #tpu.memory_space<vmem>>, vector<704x128xf32>,
    %c1 = arith.constant 1 : index
    %c0_13 = arith.constant 0 : index
    %9 = vector.load %arg8[%c1, %c0_13] : memref<768x4xbf16, #tpu.memory_space<vmem>>, vector<704x4xbf16>
    %c1_14 = arith.constant 1 : index
    %c0_15 = arith.constant 0 : index
    %c0_16 = arith.constant 0 : index
    %10 = vector.load %arg4[%c1_14, %c0_15, %c0_16] : memref<9x4x128xbf16, #tpu.memory_space<vmem>>, vector<1x4x128xbf16>
    %11 = vector.shape_cast %10 : vector<1x4x128xbf16> to vector<4x128xbf16>
    %cst_17 = arith.constant dense<0.000000e+00> : vector<704x128xf32>
    %12 = tpu.matmul %9, %11, %cst_17 {dimension_numbers = #tpu.dot_dimension_numbers<[1], [0], [0], [1], [0, 0, 1, 1], [], []>} : vector<704x4xbf16>, vector<4x128xbf16>, vector<704x128xf32> -> vector<704x128xf32>
    %c0_18 = arith.constant 0 : index
    %c0_19 = arith.constant 0 : index
    %13 = vector.load %arg9[%c0_18, %c0_19] : memref<704x128xf32, #tpu.memory_space<vmem>>, vector<704x128xf32>
    %14 = arith.addf %13, %12 : vector<704x128xf32>
    %c0_20 = arith.constant 0 : index
    %c0_21 = arith.constant 0 : index
    %15 = vector.load %arg9[%c0_20, %c0_21] : memref<704x128xf32, #tpu.memory_space<vmem>>, vector<704x128xf32>
    tpu.vector_store %arg9[%c0_20, %c0_21], %14 {strides = array<i32>} : memref<704x128xf32, #tpu.memory_space<vmem>>, vector<704x128xf32>,
    %c2 = arith.constant 2 : index
    %c0_22 = arith.constant 0 : index
    %16 = vector.load %arg8[%c2, %c0_22] : memref<768x4xbf16, #tpu.memory_space<vmem>>, vector<704x4xbf16>
    %c2_23 = arith.constant 2 : index
    %c0_24 = arith.constant 0 : index
    %c0_25 = arith.constant 0 : index
    %17 = vector.load %arg4[%c2_23, %c0_24, %c0_25] : memref<9x4x128xbf16, #tpu.memory_space<vmem>>, vector<1x4x128xbf16>
    %18 = vector.shape_cast %17 : vector<1x4x128xbf16> to vector<4x128xbf16>
    %cst_26 = arith.constant dense<0.000000e+00> : vector<704x128xf32>
    %19 = tpu.matmul %16, %18, %cst_26 {dimension_numbers = #tpu.dot_dimension_numbers<[1], [0], [0], [1], [0, 0, 1, 1], [], []>} : vector<704x4xbf16>, vector<4x128xbf16>, vector<704x128xf32> -> vector<704x128xf32>
    %c0_27 = arith.constant 0 : index
    %c0_28 = arith.constant 0 : index
    %20 = vector.load %arg9[%c0_27, %c0_28] : memref<704x128xf32, #tpu.memory_space<vmem>>, vector<704x128xf32>
    %21 = arith.addf %20, %19 : vector<704x128xf32>
    %c0_29 = arith.constant 0 : index
    %c0_30 = arith.constant 0 : index
    %22 = vector.load %arg9[%c0_29, %c0_30] : memref<704x128xf32, #tpu.memory_space<vmem>>, vector<704x128xf32>
    tpu.vector_store %arg9[%c0_29, %c0_30], %21 {strides = array<i32>} : memref<704x128xf32, #tpu.memory_space<vmem>>, vector<704x128xf32>,
    %c18 = arith.constant 18 : index
    %c0_31 = arith.constant 0 : index
    %23 = vector.load %arg8[%c18, %c0_31] : memref<768x4xbf16, #tpu.memory_space<vmem>>, vector<704x4xbf16>
    %c3 = arith.constant 3 : index
    %c0_32 = arith.constant 0 : index
    %c0_33 = arith.constant 0 : index
    %24 = vector.load %arg4[%c3, %c0_32, %c0_33] : memref<9x4x128xbf16, #tpu.memory_space<vmem>>, vector<1x4x128xbf16>
    %25 = vector.shape_cast %24 : vector<1x4x128xbf16> to vector<4x128xbf16>
    %cst_34 = arith.constant dense<0.000000e+00> : vector<704x128xf32>
    %26 = tpu.matmul %23, %25, %cst_34 {dimension_numbers = #tpu.dot_dimension_numbers<[1], [0], [0], [1], [0, 0, 1, 1], [], []>} : vector<704x4xbf16>, vector<4x128xbf16>, vector<704x128xf32> -> vector<704x128xf32>
    %c0_35 = arith.constant 0 : index
    %c0_36 = arith.constant 0 : index
    %27 = vector.load %arg9[%c0_35, %c0_36] : memref<704x128xf32, #tpu.memory_space<vmem>>, vector<704x128xf32>
    %28 = arith.addf %27, %26 : vector<704x128xf32>
    %c0_37 = arith.constant 0 : index
    %c0_38 = arith.constant 0 : index
    %29 = vector.load %arg9[%c0_37, %c0_38] : memref<704x128xf32, #tpu.memory_space<vmem>>, vector<704x128xf32>
    tpu.vector_store %arg9[%c0_37, %c0_38], %28 {strides = array<i32>} : memref<704x128xf32, #tpu.memory_space<vmem>>, vector<704x128xf32>,
    %c19 = arith.constant 19 : index
    %c0_39 = arith.constant 0 : index
    %30 = vector.load %arg8[%c19, %c0_39] : memref<768x4xbf16, #tpu.memory_space<vmem>>, vector<704x4xbf16>
    %c4 = arith.constant 4 : index
    %c0_40 = arith.constant 0 : index
    %c0_41 = arith.constant 0 : index
    %31 = vector.load %arg4[%c4, %c0_40, %c0_41] : memref<9x4x128xbf16, #tpu.memory_space<vmem>>, vector<1x4x128xbf16>
    %32 = vector.shape_cast %31 : vector<1x4x128xbf16> to vector<4x128xbf16>
    %cst_42 = arith.constant dense<0.000000e+00> : vector<704x128xf32>
    %33 = tpu.matmul %30, %32, %cst_42 {dimension_numbers = #tpu.dot_dimension_numbers<[1], [0], [0], [1], [0, 0, 1, 1], [], []>} : vector<704x4xbf16>, vector<4x128xbf16>, vector<704x128xf32> -> vector<704x128xf32>
    %c0_43 = arith.constant 0 : index
    %c0_44 = arith.constant 0 : index
    %34 = vector.load %arg9[%c0_43, %c0_44] : memref<704x128xf32, #tpu.memory_space<vmem>>, vector<704x128xf32>
    %35 = arith.addf %34, %33 : vector<704x128xf32>
    %c0_45 = arith.constant 0 : index
    %c0_46 = arith.constant 0 : index
    %36 = vector.load %arg9[%c0_45, %c0_46] : memref<704x128xf32, #tpu.memory_space<vmem>>, vector<704x128xf32>
    tpu.vector_store %arg9[%c0_45, %c0_46], %35 {strides = array<i32>} : memref<704x128xf32, #tpu.memory_space<vmem>>, vector<704x128xf32>,
    %c20 = arith.constant 20 : index
    %c0_47 = arith.constant 0 : index
    %37 = vector.load %arg8[%c20, %c0_47] : memref<768x4xbf16, #tpu.memory_space<vmem>>, vector<704x4xbf16>
    %c5 = arith.constant 5 : index
    %c0_48 = arith.constant 0 : index
    %c0_49 = arith.constant 0 : index
    %38 = vector.load %arg4[%c5, %c0_48, %c0_49] : memref<9x4x128xbf16, #tpu.memory_space<vmem>>, vector<1x4x128xbf16>
    %39 = vector.shape_cast %38 : vector<1x4x128xbf16> to vector<4x128xbf16>
    %cst_50 = arith.constant dense<0.000000e+00> : vector<704x128xf32>
    %40 = tpu.matmul %37, %39, %cst_50 {dimension_numbers = #tpu.dot_dimension_numbers<[1], [0], [0], [1], [0, 0, 1, 1], [], []>} : vector<704x4xbf16>, vector<4x128xbf16>, vector<704x128xf32> -> vector<704x128xf32>
    %c0_51 = arith.constant 0 : index
    %c0_52 = arith.constant 0 : index
    %41 = vector.load %arg9[%c0_51, %c0_52] : memref<704x128xf32, #tpu.memory_space<vmem>>, vector<704x128xf32>
    %42 = arith.addf %41, %40 : vector<704x128xf32>
    %c0_53 = arith.constant 0 : index
    %c0_54 = arith.constant 0 : index
    %43 = vector.load %arg9[%c0_53, %c0_54] : memref<704x128xf32, #tpu.memory_space<vmem>>, vector<704x128xf32>
    tpu.vector_store %arg9[%c0_53, %c0_54], %42 {strides = array<i32>} : memref<704x128xf32, #tpu.memory_space<vmem>>, vector<704x128xf32>,
    %c36 = arith.constant 36 : index
    %c0_55 = arith.constant 0 : index
    %44 = vector.load %arg8[%c36, %c0_55] : memref<768x4xbf16, #tpu.memory_space<vmem>>, vector<704x4xbf16>
    %c6 = arith.constant 6 : index
    %c0_56 = arith.constant 0 : index
    %c0_57 = arith.constant 0 : index
    %45 = vector.load %arg4[%c6, %c0_56, %c0_57] : memref<9x4x128xbf16, #tpu.memory_space<vmem>>, vector<1x4x128xbf16>
    %46 = vector.shape_cast %45 : vector<1x4x128xbf16> to vector<4x128xbf16>
    %cst_58 = arith.constant dense<0.000000e+00> : vector<704x128xf32>
    %47 = tpu.matmul %44, %46, %cst_58 {dimension_numbers = #tpu.dot_dimension_numbers<[1], [0], [0], [1], [0, 0, 1, 1], [], []>} : vector<704x4xbf16>, vector<4x128xbf16>, vector<704x128xf32> -> vector<704x128xf32>
    %c0_59 = arith.constant 0 : index
    %c0_60 = arith.constant 0 : index
    %48 = vector.load %arg9[%c0_59, %c0_60] : memref<704x128xf32, #tpu.memory_space<vmem>>, vector<704x128xf32>
    %49 = arith.addf %48, %47 : vector<704x128xf32>
    %c0_61 = arith.constant 0 : index
    %c0_62 = arith.constant 0 : index
    %50 = vector.load %arg9[%c0_61, %c0_62] : memref<704x128xf32, #tpu.memory_space<vmem>>, vector<704x128xf32>
    tpu.vector_store %arg9[%c0_61, %c0_62], %49 {strides = array<i32>} : memref<704x128xf32, #tpu.memory_space<vmem>>, vector<704x128xf32>,
    %c37 = arith.constant 37 : index
    %c0_63 = arith.constant 0 : index
    %51 = vector.load %arg8[%c37, %c0_63] : memref<768x4xbf16, #tpu.memory_space<vmem>>, vector<704x4xbf16>
    %c7 = arith.constant 7 : index
    %c0_64 = arith.constant 0 : index
    %c0_65 = arith.constant 0 : index
    %52 = vector.load %arg4[%c7, %c0_64, %c0_65] : memref<9x4x128xbf16, #tpu.memory_space<vmem>>, vector<1x4x128xbf16>
    %53 = vector.shape_cast %52 : vector<1x4x128xbf16> to vector<4x128xbf16>
    %cst_66 = arith.constant dense<0.000000e+00> : vector<704x128xf32>
    %54 = tpu.matmul %51, %53, %cst_66 {dimension_numbers = #tpu.dot_dimension_numbers<[1], [0], [0], [1], [0, 0, 1, 1], [], []>} : vector<704x4xbf16>, vector<4x128xbf16>, vector<704x128xf32> -> vector<704x128xf32>
    %c0_67 = arith.constant 0 : index
    %c0_68 = arith.constant 0 : index
    %55 = vector.load %arg9[%c0_67, %c0_68] : memref<704x128xf32, #tpu.memory_space<vmem>>, vector<704x128xf32>
    %56 = arith.addf %55, %54 : vector<704x128xf32>
    %c0_69 = arith.constant 0 : index
    %c0_70 = arith.constant 0 : index
    %57 = vector.load %arg9[%c0_69, %c0_70] : memref<704x128xf32, #tpu.memory_space<vmem>>, vector<704x128xf32>
    tpu.vector_store %arg9[%c0_69, %c0_70], %56 {strides = array<i32>} : memref<704x128xf32, #tpu.memory_space<vmem>>, vector<704x128xf32>,
    %c38 = arith.constant 38 : index
    %c0_71 = arith.constant 0 : index
    %58 = vector.load %arg8[%c38, %c0_71] : memref<768x4xbf16, #tpu.memory_space<vmem>>, vector<704x4xbf16>
    %c8 = arith.constant 8 : index
    %c0_72 = arith.constant 0 : index
    %c0_73 = arith.constant 0 : index
    %59 = vector.load %arg4[%c8, %c0_72, %c0_73] : memref<9x4x128xbf16, #tpu.memory_space<vmem>>, vector<1x4x128xbf16>
    %60 = vector.shape_cast %59 : vector<1x4x128xbf16> to vector<4x128xbf16>
    %cst_74 = arith.constant dense<0.000000e+00> : vector<704x128xf32>
    %61 = tpu.matmul %58, %60, %cst_74 {dimension_numbers = #tpu.dot_dimension_numbers<[1], [0], [0], [1], [0, 0, 1, 1], [], []>} : vector<704x4xbf16>, vector<4x128xbf16>, vector<704x128xf32> -> vector<704x128xf32>
    %c0_75 = arith.constant 0 : index
    %c0_76 = arith.constant 0 : index
    %62 = vector.load %arg9[%c0_75, %c0_76] : memref<704x128xf32, #tpu.memory_space<vmem>>, vector<704x128xf32>
    %63 = arith.addf %62, %61 : vector<704x128xf32>
    %c0_77 = arith.constant 0 : index
    %c0_78 = arith.constant 0 : index
    %64 = vector.load %arg9[%c0_77, %c0_78] : memref<704x128xf32, #tpu.memory_space<vmem>>, vector<704x128xf32>
    tpu.vector_store %arg9[%c0_77, %c0_78], %63 {strides = array<i32>} : memref<704x128xf32, #tpu.memory_space<vmem>>, vector<704x128xf32>,
    %c0_79 = arith.constant 0 : index
    %c0_80 = arith.constant 0 : index
    %65 = vector.load %arg9[%c0_79, %c0_80] : memref<704x128xf32, #tpu.memory_space<vmem>>, vector<704x128xf32>
    %c0_81 = arith.constant 0 : index
    %c0_82 = arith.constant 0 : index
    %66 = vector.load %arg5[%c0_81, %c0_82] : memref<704x1xf32, #tpu.memory_space<vmem>>, vector<704x1xf32>
    %67 = vector.broadcast %66 : vector<704x1xf32> to vector<704x128xf32>
    %68 = arith.mulf %65, %67 : vector<704x128xf32>
    %69 = arith.truncf %68 : vector<704x128xf32> to vector<704x128xbf16>
    %c0_83 = arith.constant 0 : index
    %c0_84 = arith.constant 0 : index
    %70 = vector.load %arg6[%c0_83, %c0_84] : memref<704x128xbf16, #tpu.memory_space<vmem>>, vector<704x128xbf16>
    tpu.vector_store %arg6[%c0_83, %c0_84], %69 {strides = array<i32>} : memref<704x128xbf16, #tpu.memory_space<vmem>>, vector<704x128xbf16>,
    %cst_85 = arith.constant dense<0.000000e+00> : vector<128xf32>
    %71 = vector.multi_reduction <add>, %68, %cst_85 [0] : vector<704x128xf32> to vector<128xf32>
    %72 = vector.shape_cast %71 : vector<128xf32> to vector<1x128xf32>
    %c0_86 = arith.constant 0 : index
    %c0_87 = arith.constant 0 : index
    %c0_88 = arith.constant 0 : index
    %73 = vector.load %arg7[%c0_86, %c0_87, %c0_88] : memref<1x2x128xf32, #tpu.memory_space<vmem>>, vector<1x1x128xf32>
    %74 = vector.shape_cast %73 : vector<1x1x128xf32> to vector<1x128xf32>
    %75 = vector.shape_cast %72 : vector<1x128xf32> to vector<1x1x128xf32>
    tpu.vector_store %arg7[%c0_86, %c0_87, %c0_88], %75 {strides = array<i32>} : memref<1x2x128xf32, #tpu.memory_space<vmem>>, vector<1x1x128xf32>,
    %76 = arith.mulf %68, %68 : vector<704x128xf32>
    %cst_89 = arith.constant dense<0.000000e+00> : vector<128xf32>
    %77 = vector.multi_reduction <add>, %76, %cst_89 [0] : vector<704x128xf32> to vector<128xf32>
    %78 = vector.shape_cast %77 : vector<128xf32> to vector<1x128xf32>
    %c0_90 = arith.constant 0 : index
    %c1_91 = arith.constant 1 : index
    %c0_92 = arith.constant 0 : index
    %79 = vector.load %arg7[%c0_90, %c1_91, %c0_92] : memref<1x2x128xf32, #tpu.memory_space<vmem>>, vector<1x1x128xf32>
    %80 = vector.shape_cast %79 : vector<1x1x128xf32> to vector<1x128xf32>
    %81 = vector.shape_cast %78 : vector<1x128xf32> to vector<1x1x128xf32>
    tpu.vector_store %arg7[%c0_90, %c1_91, %c0_92], %81 {strides = array<i32>} : memref<1x2x128xf32, #tpu.memory_space<vmem>>, vector<1x1x128xf32>,
    return
  }
  func.func @transform_0(%arg0: i32, %arg1: i32) -> (i32, i32) {
    %c0_i32 = arith.constant 0 : i32
    %c0_i32_0 = arith.constant 0 : i32
    return %arg1, %c0_i32 : i32, i32
  }
  func.func @transform_1(%arg0: i32, %arg1: i32) -> (i32, i32) {
    %c1_i32 = arith.constant 1 : i32
    %0 = arith.addi %arg1, %c1_i32 : i32
    %c11_i32 = arith.constant 11 : i32
    %1 = arith.muli %0, %c11_i32 : i32
    %c0_i32 = arith.constant 0 : i32
    %c0_i32_0 = arith.constant 0 : i32
    return %1, %c0_i32 : i32, i32
  }
  func.func @transform_2(%arg0: i32, %arg1: i32) -> (i32, i32, i32) {
    %c0_i32 = arith.constant 0 : i32
    %c0_i32_0 = arith.constant 0 : i32
    %c0_i32_1 = arith.constant 0 : i32
    return %c0_i32, %c0_i32_0, %arg0 : i32, i32, i32
  }
  func.func @transform_3(%arg0: i32, %arg1: i32) -> (i32, i32) {
    %c0_i32 = arith.constant 0 : i32
    %c0_i32_0 = arith.constant 0 : i32
    return %arg1, %c0_i32 : i32, i32
  }
  func.func @transform_4(%arg0: i32, %arg1: i32) -> (i32, i32) {
    %c0_i32 = arith.constant 0 : i32
    return %arg1, %arg0 : i32, i32
  }
  func.func @transform_5(%arg0: i32, %arg1: i32) -> (i32, i32, i32) {
    %c0_i32 = arith.constant 0 : i32
    %c0_i32_0 = arith.constant 0 : i32
    return %arg1, %c0_i32, %arg0 : i32, i32, i32
  }
}

</mosaic_0001>

<llo_original>
// kernel: tpu_custom_call.1
$region0: #{tpu_custom_call.1}
  #allocation0 [shape = 'u32[]', space=smem, size = 0x4, offset = 0x4, fixed_abs, tag = 'smem constant byte address 0x4 - core index']
  #allocation1 [shape = 'u32[72,128]{1,0:T(1,128)}', space=vmem, size = 0x9000, scoped, tag = 'internal scratch']
  #allocation2 [shape = 'bf16[768,4]{1,0:T(8,128)(2,1)}', space=vmem, size = 0x30000, scoped, tag = 'scratch operand']
  #allocation3 [shape = 'f32[704,128]{1,0:T(8,128)}', space=vmem, size = 0x58000, scoped, tag = 'scratch operand']
  %s0 = inlined_call_operand.vmem [shape: bf16[768,4], index: 0, kind: input, shape index: {}]
  %s1 = inlined_call_operand.vmem [shape: bf16[768,4], index: 1, kind: input, shape index: {}]
  %s2 = inlined_call_operand.vmem [shape: bf16[9,4,128], index: 2, kind: input, shape index: {}]
  %s3 = inlined_call_operand.vmem [shape: f32[704,1], index: 3, kind: input, shape index: {}]
  %s4 = inlined_call_operand.hbm [shape: bf16[704,128], index: 4, kind: output, shape index: {0}]
  %s5 = inlined_call_operand.hbm [shape: f32[1,2,128], index: 5, kind: output, shape index: {1}]
  %6 = xla_tuple %s4, %s5
  %s7 = sld [smem:[#allocation0]]
  $region34: #{tpu_custom_call.1} parent=0
    _
  %s9 = ssub.s32 1, %s7
  %s10 = scalar_select 0, %s9, %s7
  $region1: #{tpu_custom_call.1} parent=0
    #allocation4 [shape = 'u8[180224]{0}', space=vmem, size = 0x2c000, scoped, tag = 'output window, operand 0, single buffered']
    #allocation5 [shape = 's32[1]{0}', space=sflag, size = 0x4, scoped, tag = 'scoped memory for tpu_custom_call.1']
    #allocation6 [shape = 'u8[1024]{0}', space=vmem, size = 0x400, scoped, tag = 'output window, operand 1, single buffered']
    #allocation7 [shape = 's32[1]{0}', space=sflag, size = 0x4, scoped, tag = 'scoped memory for tpu_custom_call.1']
    %11 = vsyncpa [#allocation5], 0
    %12 = vsyncpa [#allocation7], 0
    // Predicated region
    $region2: #{tpu_custom_call.1} parent=1 // pred_check
      _
    $region3: #{tpu_custom_call.1} parent=1 // pred_check_branch
      %14 = sbr.rel (0) target = $region5
    $region4: #{tpu_custom_call.1} parent=1 // pred_region
      _
    $region5: #{tpu_custom_call.1} parent=1 // pred_fallthru
      _
    // Predicated region
    $region6: #{tpu_custom_call.1} parent=1 // pred_check
      _
    $region7: #{tpu_custom_call.1} parent=1 // pred_check_branch
      %16 = sbr.rel (0) target = $region9
    $region8: #{tpu_custom_call.1} parent=1 // pred_region
      %s17 = sadd.s32 0, 1
      %s18 = smul.u32 %s17, 11
      %s19 = smul.u32 8, %s18
      %p20 = scmp.lt.s32.totalorder %s19, 95
      %s21 = scalar_select %p20, %s19, 95
      %s22 = smul.addr %s21, 4
      %s23 = scalar_lea.vmem %s1, %s22
      %s24 = sadd.s32 0, 1
      %s25 = smul.u32 %s24, 11
      %s26 = smul.u32 8, %s25
    $region9: #{tpu_custom_call.1} parent=1 // pred_fallthru
      _
    // Predicated region
    $region10: #{tpu_custom_call.1} parent=1 // pred_check
      _
    $region11: #{tpu_custom_call.1} parent=1 // pred_check_branch
      %28 = sbr.rel (0) target = $region13
    $region12: #{tpu_custom_call.1} parent=1 // pred_region
      _
    $region13: #{tpu_custom_call.1} parent=1 // pred_fallthru
      _
    // Predicated region
    $region14: #{tpu_custom_call.1} parent=1 // pred_check
      _
    $region15: #{tpu_custom_call.1} parent=1 // pred_check_branch
      %30 = sbr.rel (0) target = $region17
    $region16: #{tpu_custom_call.1} parent=1 // pred_region
      _
    $region17: #{tpu_custom_call.1} parent=1 // pred_fallthru
      _
    %s31 = sadd.s32 0, 1
    %s32 = smul.u32 %s31, 11
    %s33 = smul.u32 8, %s32
    %p34 = scmp.lt.s32.totalorder %s33, 95
    %s35 = scalar_select %p34, %s33, 95
    %s36 = smul.addr %s35, 4
    %s37 = scalar_lea.vmem %s1, %s36
    %s38 = sadd.s32 0, 1
    %s39 = smul.u32 %s38, 11
    %s40 = smul.u32 8, %s39
    %p41 = scmp.lt.s32.totalorder %s40, 95
    %s42 = scalar_select %p41, %s40, 95
    %s43 = smul.addr %s42, 4
    %s44 = scalar_lea.vmem %s1, %s43
    %s45 = sadd.s32 0, 1
    %s46 = smul.u32 %s45, 11
    %s47 = smul.u32 8, %s46
    %v49 = vld [vmem:[%s0] sm:$0xf]
    %v50 = vld [vmem:[%s0 + $0x4] sm:$0xf]
    %v51 = vld [vmem:[%s0 + $0x8] sm:$0xf]
    %v52 = vld [vmem:[%s0 + $0xc] sm:$0xf]
    %v53 = vld [vmem:[%s0 + $0x10] sm:$0xf]
    %v54 = vld [vmem:[%s0 + $0x14] sm:$0xf]
    %v55 = vld [vmem:[%s0 + $0x18] sm:$0xf]
    %v56 = vld [vmem:[%s0 + $0x1c] sm:$0xf]
    %v57 = vld [vmem:[%s0 + $0x20] sm:$0xf]
    %v58 = vld [vmem:[%s0 + $0x24] sm:$0xf]
    %v59 = vld [vmem:[%s0 + $0x28] sm:$0xf]
    %v60 = vld [vmem:[%s0 + $0x2c] sm:$0xf]
    %v61 = vld [vmem:[%s0 + $0x30] sm:$0xf]
    %v62 = vld [vmem:[%s0 + $0x34] sm:$0xf]
    %v63 = vld [vmem:[%s0 + $0x38] sm:$0xf]
    %v64 = vld [vmem:[%s0 + $0x3c] sm:$0xf]
    %v65 = vld [vmem:[%s0 + $0x40] sm:$0xf]
    %v66 = vld [vmem:[%s0 + $0x44] sm:$0xf]
    %v67 = vld [vmem:[%s0 + $0x48] sm:$0xf]
    %v68 = vld [vmem:[%s0 + $0x4c] sm:$0xf]
    %v69 = vld [vmem:[%s0 + $0x50] sm:$0xf]
    %v70 = vld [vmem:[%s0 + $0x54] sm:$0xf]
    %v71 = vld [vmem:[%s0 + $0x58] sm:$0xf]
    %v72 = vld [vmem:[%s0 + $0x5c] sm:$0xf]
    %v73 = vld [vmem:[%s0 + $0x60] sm:$0xf]
    %v74 = vld [vmem:[%s0 + $0x64] sm:$0xf]
    %v75 = vld [vmem:[%s0 + $0x68] sm:$0xf]
    %v76 = vld [vmem:[%s0 + $0x6c] sm:$0xf]
    %v77 = vld [vmem:[%s0 + $0x70] sm:$0xf]
    %v78 = vld [vmem:[%s0 + $0x74] sm:$0xf]
    %v79 = vld [vmem:[%s0 + $0x78] sm:$0xf]
    %v80 = vld [vmem:[%s0 + $0x7c] sm:$0xf]
    %v81 = vld [vmem:[%s0 + $0x80] sm:$0xf]
    %v82 = vld [vmem:[%s0 + $0x84] sm:$0xf]
    %v83 = vld [vmem:[%s0 + $0x88] sm:$0xf]
    %v84 = vld [vmem:[%s0 + $0x8c] sm:$0xf]
    %v85 = vld [vmem:[%s0 + $0x90] sm:$0xf]
    %v86 = vld [vmem:[%s0 + $0x94] sm:$0xf]
    %v87 = vld [vmem:[%s0 + $0x98] sm:$0xf]
    %v88 = vld [vmem:[%s0 + $0x9c] sm:$0xf]
    %v89 = vld [vmem:[%s0 + $0xa0] sm:$0xf]
    %v90 = vld [vmem:[%s0 + $0xa4] sm:$0xf]
    %v91 = vld [vmem:[%s0 + $0xa8] sm:$0xf]
    %v92 = vld [vmem:[%s0 + $0xac] sm:$0xf]
    %v93 = vld [vmem:[%s0 + $0xb0] sm:$0xf]
    %v94 = vld [vmem:[%s0 + $0xb4] sm:$0xf]
    %v95 = vld [vmem:[%s0 + $0xb8] sm:$0xf]
    %v96 = vld [vmem:[%s0 + $0xbc] sm:$0xf]
    %v97 = vld [vmem:[%s0 + $0xc0] sm:$0xf]
    %v98 = vld [vmem:[%s0 + $0xc4] sm:$0xf]
    %v99 = vld [vmem:[%s0 + $0xc8] sm:$0xf]
    %v100 = vld [vmem:[%s0 + $0xcc] sm:$0xf]
    %v101 = vld [vmem:[%s0 + $0xd0] sm:$0xf]
    %v102 = vld [vmem:[%s0 + $0xd4] sm:$0xf]
    %v103 = vld [vmem:[%s0 + $0xd8] sm:$0xf]
    %v104 = vld [vmem:[%s0 + $0xdc] sm:$0xf]
    %v105 = vld [vmem:[%s0 + $0xe0] sm:$0xf]
    %v106 = vld [vmem:[%s0 + $0xe4] sm:$0xf]
    %v107 = vld [vmem:[%s0 + $0xe8] sm:$0xf]
    %v108 = vld [vmem:[%s0 + $0xec] sm:$0xf]
    %v109 = vld [vmem:[%s0 + $0xf0] sm:$0xf]
    %v110 = vld [vmem:[%s0 + $0xf4] sm:$0xf]
    %v111 = vld [vmem:[%s0 + $0xf8] sm:$0xf]
    %v112 = vld [vmem:[%s0 + $0xfc] sm:$0xf]
    %v113 = vld [vmem:[%s0 + $0x100] sm:$0xf]
    %v114 = vld [vmem:[%s0 + $0x104] sm:$0xf]
    %v115 = vld [vmem:[%s0 + $0x108] sm:$0xf]
    %v116 = vld [vmem:[%s0 + $0x10c] sm:$0xf]
    %v117 = vld [vmem:[%s0 + $0x110] sm:$0xf]
    %v118 = vld [vmem:[%s0 + $0x114] sm:$0xf]
    %v119 = vld [vmem:[%s0 + $0x118] sm:$0xf]
    %v120 = vld [vmem:[%s0 + $0x11c] sm:$0xf]
    %v121 = vld [vmem:[%s0 + $0x120] sm:$0xf]
    %v122 = vld [vmem:[%s0 + $0x124] sm:$0xf]
    %v123 = vld [vmem:[%s0 + $0x128] sm:$0xf]
    %v124 = vld [vmem:[%s0 + $0x12c] sm:$0xf]
    %v125 = vld [vmem:[%s0 + $0x130] sm:$0xf]
    %v126 = vld [vmem:[%s0 + $0x134] sm:$0xf]
    %v127 = vld [vmem:[%s0 + $0x138] sm:$0xf]
    %v128 = vld [vmem:[%s0 + $0x13c] sm:$0xf]
    %v129 = vld [vmem:[%s0 + $0x140] sm:$0xf]
    %v130 = vld [vmem:[%s0 + $0x144] sm:$0xf]
    %v131 = vld [vmem:[%s0 + $0x148] sm:$0xf]
    %v132 = vld [vmem:[%s0 + $0x14c] sm:$0xf]
    %v133 = vld [vmem:[%s0 + $0x150] sm:$0xf]
    %v134 = vld [vmem:[%s0 + $0x154] sm:$0xf]
    %v135 = vld [vmem:[%s0 + $0x158] sm:$0xf]
    %v136 = vld [vmem:[%s0 + $0x15c] sm:$0xf]
    %vm137 = vcmask 27648
    %138 = vst.msk [vmem:[#allocation2] sm:$0xf] %vm137, %v49
    %139 = vst.msk [vmem:[#allocation2 + $0x4] sm:$0xf] %vm137, %v50
    %140 = vst.msk [vmem:[#allocation2 + $0x8] sm:$0xf] %vm137, %v51
    %141 = vst.msk [vmem:[#allocation2 + $0xc] sm:$0xf] %vm137, %v52
    %142 = vst.msk [vmem:[#allocation2 + $0x10] sm:$0xf] %vm137, %v53
    %143 = vst.msk [vmem:[#allocation2 + $0x14] sm:$0xf] %vm137, %v54
    %144 = vst.msk [vmem:[#allocation2 + $0x18] sm:$0xf] %vm137, %v55
    %145 = vst.msk [vmem:[#allocation2 + $0x1c] sm:$0xf] %vm137, %v56
    %146 = vst.msk [vmem:[#allocation2 + $0x20] sm:$0xf] %vm137, %v57
    %147 = vst.msk [vmem:[#allocation2 + $0x24] sm:$0xf] %vm137, %v58
    %148 = vst.msk [vmem:[#allocation2 + $0x28] sm:$0xf] %vm137, %v59
    %149 = vst.msk [vmem:[#allocation2 + $0x2c] sm:$0xf] %vm137, %v60
    %150 = vst.msk [vmem:[#allocation2 + $0x30] sm:$0xf] %vm137, %v61
    %151 = vst.msk [vmem:[#allocation2 + $0x34] sm:$0xf] %vm137, %v62
    %152 = vst.msk [vmem:[#allocation2 + $0x38] sm:$0xf] %vm137, %v63
    %153 = vst.msk [vmem:[#allocation2 + $0x3c] sm:$0xf] %vm137, %v64
    %154 = vst.msk [vmem:[#allocation2 + $0x40] sm:$0xf] %vm137, %v65
    %155 = vst.msk [vmem:[#allocation2 + $0x44] sm:$0xf] %vm137, %v66
    %156 = vst.msk [vmem:[#allocation2 + $0x48] sm:$0xf] %vm137, %v67
    %157 = vst.msk [vmem:[#allocation2 + $0x4c] sm:$0xf] %vm137, %v68
    %158 = vst.msk [vmem:[#allocation2 + $0x50] sm:$0xf] %vm137, %v69
    %159 = vst.msk [vmem:[#allocation2 + $0x54] sm:$0xf] %vm137, %v70
    %160 = vst.msk [vmem:[#allocation2 + $0x58] sm:$0xf] %vm137, %v71
    %161 = vst.msk [vmem:[#allocation2 + $0x5c] sm:$0xf] %vm137, %v72
    %162 = vst.msk [vmem:[#allocation2 + $0x60] sm:$0xf] %vm137, %v73
    %163 = vst.msk [vmem:[#allocation2 + $0x64] sm:$0xf] %vm137, %v74
    %164 = vst.msk [vmem:[#allocation2 + $0x68] sm:$0xf] %vm137, %v75
    %165 = vst.msk [vmem:[#allocation2 + $0x6c] sm:$0xf] %vm137, %v76
    %166 = vst.msk [vmem:[#allocation2 + $0x70] sm:$0xf] %vm137, %v77
    %167 = vst.msk [vmem:[#allocation2 + $0x74] sm:$0xf] %vm137, %v78
    %168 = vst.msk [vmem:[#allocation2 + $0x78] sm:$0xf] %vm137, %v79
    %169 = vst.msk [vmem:[#allocation2 + $0x7c] sm:$0xf] %vm137, %v80
    %170 = vst.msk [vmem:[#allocation2 + $0x80] sm:$0xf] %vm137, %v81
    %171 = vst.msk [vmem:[#allocation2 + $0x84] sm:$0xf] %vm137, %v82
    %172 = vst.msk [vmem:[#allocation2 + $0x88] sm:$0xf] %vm137, %v83
    %173 = vst.msk [vmem:[#allocation2 + $0x8c] sm:$0xf] %vm137, %v84
    %174 = vst.msk [vmem:[#allocation2 + $0x90] sm:$0xf] %vm137, %v85
    %175 = vst.msk [vmem:[#allocation2 + $0x94] sm:$0xf] %vm137, %v86
    %176 = vst.msk [vmem:[#allocation2 + $0x98] sm:$0xf] %vm137, %v87
    %177 = vst.msk [vmem:[#allocation2 + $0x9c] sm:$0xf] %vm137, %v88
    %178 = vst.msk [vmem:[#allocation2 + $0xa0] sm:$0xf] %vm137, %v89
    %179 = vst.msk [vmem:[#allocation2 + $0xa4] sm:$0xf] %vm137, %v90
    %180 = vst.msk [vmem:[#allocation2 + $0xa8] sm:$0xf] %vm137, %v91
    %181 = vst.msk [vmem:[#allocation2 + $0xac] sm:$0xf] %vm137, %v92
    %182 = vst.msk [vmem:[#allocation2 + $0xb0] sm:$0xf] %vm137, %v93
    %183 = vst.msk [vmem:[#allocation2 + $0xb4] sm:$0xf] %vm137, %v94
    %184 = vst.msk [vmem:[#allocation2 + $0xb8] sm:$0xf] %vm137, %v95
    %185 = vst.msk [vmem:[#allocation2 + $0xbc] sm:$0xf] %vm137, %v96
    %186 = vst.msk [vmem:[#allocation2 + $0xc0] sm:$0xf] %vm137, %v97
    %187 = vst.msk [vmem:[#allocation2 + $0xc4] sm:$0xf] %vm137, %v98
    %188 = vst.msk [vmem:[#allocation2 + $0xc8] sm:$0xf] %vm137, %v99
    %189 = vst.msk [vmem:[#allocation2 + $0xcc] sm:$0xf] %vm137, %v100
    %190 = vst.msk [vmem:[#allocation2 + $0xd0] sm:$0xf] %vm137, %v101
    %191 = vst.msk [vmem:[#allocation2 + $0xd4] sm:$0xf] %vm137, %v102
    %192 = vst.msk [vmem:[#allocation2 + $0xd8] sm:$0xf] %vm137, %v103
    %193 = vst.msk [vmem:[#allocation2 + $0xdc] sm:$0xf] %vm137, %v104
    %194 = vst.msk [vmem:[#allocation2 + $0xe0] sm:$0xf] %vm137, %v105
    %195 = vst.msk [vmem:[#allocation2 + $0xe4] sm:$0xf] %vm137, %v106
    %196 = vst.msk [vmem:[#allocation2 + $0xe8] sm:$0xf] %vm137, %v107
    %197 = vst.msk [vmem:[#allocation2 + $0xec] sm:$0xf] %vm137, %v108
    %198 = vst.msk [vmem:[#allocation2 + $0xf0] sm:$0xf] %vm137, %v109
    %199 = vst.msk [vmem:[#allocation2 + $0xf4] sm:$0xf] %vm137, %v110
    %200 = vst.msk [vmem:[#allocation2 + $0xf8] sm:$0xf] %vm137, %v111
    %201 = vst.msk [vmem:[#allocation2 + $0xfc] sm:$0xf] %vm137, %v112
    %202 = vst.msk [vmem:[#allocation2 + $0x100] sm:$0xf] %vm137, %v113
    %203 = vst.msk [vmem:[#allocation2 + $0x104] sm:$0xf] %vm137, %v114
    %204 = vst.msk [vmem:[#allocation2 + $0x108] sm:$0xf] %vm137, %v115
    %205 = vst.msk [vmem:[#allocation2 + $0x10c] sm:$0xf] %vm137, %v116
    %206 = vst.msk [vmem:[#allocation2 + $0x110] sm:$0xf] %vm137, %v117
    %207 = vst.msk [vmem:[#allocation2 + $0x114] sm:$0xf] %vm137, %v118
    %208 = vst.msk [vmem:[#allocation2 + $0x118] sm:$0xf] %vm137, %v119
    %209 = vst.msk [vmem:[#allocation2 + $0x11c] sm:$0xf] %vm137, %v120
    %210 = vst.msk [vmem:[#allocation2 + $0x120] sm:$0xf] %vm137, %v121
    %211 = vst.msk [vmem:[#allocation2 + $0x124] sm:$0xf] %vm137, %v122
    %212 = vst.msk [vmem:[#allocation2 + $0x128] sm:$0xf] %vm137, %v123
    %213 = vst.msk [vmem:[#allocation2 + $0x12c] sm:$0xf] %vm137, %v124
    %214 = vst.msk [vmem:[#allocation2 + $0x130] sm:$0xf] %vm137, %v125
    %215 = vst.msk [vmem:[#allocation2 + $0x134] sm:$0xf] %vm137, %v126
    %216 = vst.msk [vmem:[#allocation2 + $0x138] sm:$0xf] %vm137, %v127
    %217 = vst.msk [vmem:[#allocation2 + $0x13c] sm:$0xf] %vm137, %v128
    %218 = vst.msk [vmem:[#allocation2 + $0x140] sm:$0xf] %vm137, %v129
    %219 = vst.msk [vmem:[#allocation2 + $0x144] sm:$0xf] %vm137, %v130
    %220 = vst.msk [vmem:[#allocation2 + $0x148] sm:$0xf] %vm137, %v131
    %221 = vst.msk [vmem:[#allocation2 + $0x14c] sm:$0xf] %vm137, %v132
    %222 = vst.msk [vmem:[#allocation2 + $0x150] sm:$0xf] %vm137, %v133
    %223 = vst.msk [vmem:[#allocation2 + $0x154] sm:$0xf] %vm137, %v134
    %224 = vst.msk [vmem:[#allocation2 + $0x158] sm:$0xf] %vm137, %v135
    %225 = vst.msk [vmem:[#allocation2 + $0x15c] sm:$0xf] %vm137, %v136
    %v226 = vld [vmem:[%s44] sm:$0xf]
    %v227 = vld [vmem:[%s44 + $0x4] sm:$0xf]
    %v228 = vld [vmem:[%s44 + $0x8] sm:$0xf]
    %v229 = vld [vmem:[%s44 + $0xc] sm:$0xf]
    %v230 = vld [vmem:[%s44 + $0x10] sm:$0xf]
    %v231 = vld [vmem:[%s44 + $0x14] sm:$0xf]
    %v232 = vld [vmem:[%s44 + $0x18] sm:$0xf]
    %v233 = vld [vmem:[%s44 + $0x1c] sm:$0xf]
    %234 = vst.msk [vmem:[#allocation2 + $0x160] sm:$0xf] %vm137, %v226
    %235 = vst.msk [vmem:[#allocation2 + $0x164] sm:$0xf] %vm137, %v227
    %236 = vst.msk [vmem:[#allocation2 + $0x168] sm:$0xf] %vm137, %v228
    %237 = vst.msk [vmem:[#allocation2 + $0x16c] sm:$0xf] %vm137, %v229
    %238 = vst.msk [vmem:[#allocation2 + $0x170] sm:$0xf] %vm137, %v230
    %239 = vst.msk [vmem:[#allocation2 + $0x174] sm:$0xf] %vm137, %v231
    %240 = vst.msk [vmem:[#allocation2 + $0x178] sm:$0xf] %vm137, %v232
    %241 = vst.msk [vmem:[#allocation2 + $0x17c] sm:$0xf] %vm137, %v233
    %v242 = vld [vmem:[#allocation2] sm:$0xf]
    %v243 = vld [vmem:[#allocation2 + $0x4] sm:$0xf]
    %v244 = vld [vmem:[#allocation2 + $0x8] sm:$0xf]
    %v245 = vld [vmem:[#allocation2 + $0xc] sm:$0xf]
    %v246 = vld [vmem:[#allocation2 + $0x10] sm:$0xf]
    %v247 = vld [vmem:[#allocation2 + $0x14] sm:$0xf]
    %v248 = vld [vmem:[#allocation2 + $0x18] sm:$0xf]
    %v249 = vld [vmem:[#allocation2 + $0x1c] sm:$0xf]
    %v250 = vld [vmem:[#allocation2 + $0x20] sm:$0xf]
    %v251 = vld [vmem:[#allocation2 + $0x24] sm:$0xf]
    %v252 = vld [vmem:[#allocation2 + $0x28] sm:$0xf]
    %v253 = vld [vmem:[#allocation2 + $0x2c] sm:$0xf]
    %v254 = vld [vmem:[#allocation2 + $0x30] sm:$0xf]
    %v255 = vld [vmem:[#allocation2 + $0x34] sm:$0xf]
    %v256 = vld [vmem:[#allocation2 + $0x38] sm:$0xf]
    %v257 = vld [vmem:[#allocation2 + $0x3c] sm:$0xf]
    %v258 = vld [vmem:[#allocation2 + $0x40] sm:$0xf]
    %v259 = vld [vmem:[#allocation2 + $0x44] sm:$0xf]
    %v260 = vld [vmem:[#allocation2 + $0x48] sm:$0xf]
    %v261 = vld [vmem:[#allocation2 + $0x4c] sm:$0xf]
    %v262 = vld [vmem:[#allocation2 + $0x50] sm:$0xf]
    %v263 = vld [vmem:[#allocation2 + $0x54] sm:$0xf]
    %v264 = vld [vmem:[#allocation2 + $0x58] sm:$0xf]
    %v265 = vld [vmem:[#allocation2 + $0x5c] sm:$0xf]
    %v266 = vld [vmem:[#allocation2 + $0x60] sm:$0xf]
    %v267 = vld [vmem:[#allocation2 + $0x64] sm:$0xf]
    %v268 = vld [vmem:[#allocation2 + $0x68] sm:$0xf]
    %v269 = vld [vmem:[#allocation2 + $0x6c] sm:$0xf]
    %v270 = vld [vmem:[#allocation2 + $0x70] sm:$0xf]
    %v271 = vld [vmem:[#allocation2 + $0x74] sm:$0xf]
    %v272 = vld [vmem:[#allocation2 + $0x78] sm:$0xf]
    %v273 = vld [vmem:[#allocation2 + $0x7c] sm:$0xf]
    %v274 = vld [vmem:[#allocation2 + $0x80] sm:$0xf]
    %v275 = vld [vmem:[#allocation2 + $0x84] sm:$0xf]
    %v276 = vld [vmem:[#allocation2 + $0x88] sm:$0xf]
    %v277 = vld [vmem:[#allocation2 + $0x8c] sm:$0xf]
    %v278 = vld [vmem:[#allocation2 + $0x90] sm:$0xf]
    %v279 = vld [vmem:[#allocation2 + $0x94] sm:$0xf]
    %v280 = vld [vmem:[#allocation2 + $0x98] sm:$0xf]
    %v281 = vld [vmem:[#allocation2 + $0x9c] sm:$0xf]
    %v282 = vld [vmem:[#allocation2 + $0xa0] sm:$0xf]
    %v283 = vld [vmem:[#allocation2 + $0xa4] sm:$0xf]
    %v284 = vld [vmem:[#allocation2 + $0xa8] sm:$0xf]
    %v285 = vld [vmem:[#allocation2 + $0xac] sm:$0xf]
    %v286 = vld [vmem:[#allocation2 + $0xb0] sm:$0xf]
    %v287 = vld [vmem:[#allocation2 + $0xb4] sm:$0xf]
    %v288 = vld [vmem:[#allocation2 + $0xb8] sm:$0xf]
    %v289 = vld [vmem:[#allocation2 + $0xbc] sm:$0xf]
    %v290 = vld [vmem:[#allocation2 + $0xc0] sm:$0xf]
    %v291 = vld [vmem:[#allocation2 + $0xc4] sm:$0xf]
    %v292 = vld [vmem:[#allocation2 + $0xc8] sm:$0xf]
    %v293 = vld [vmem:[#allocation2 + $0xcc] sm:$0xf]
    %v294 = vld [vmem:[#allocation2 + $0xd0] sm:$0xf]
    %v295 = vld [vmem:[#allocation2 + $0xd4] sm:$0xf]
    %v296 = vld [vmem:[#allocation2 + $0xd8] sm:$0xf]
    %v297 = vld [vmem:[#allocation2 + $0xdc] sm:$0xf]
    %v298 = vld [vmem:[#allocation2 + $0xe0] sm:$0xf]
    %v299 = vld [vmem:[#allocation2 + $0xe4] sm:$0xf]
    %v300 = vld [vmem:[#allocation2 + $0xe8] sm:$0xf]
    %v301 = vld [vmem:[#allocation2 + $0xec] sm:$0xf]
    %v302 = vld [vmem:[#allocation2 + $0xf0] sm:$0xf]
    %v303 = vld [vmem:[#allocation2 + $0xf4] sm:$0xf]
    %v304 = vld [vmem:[#allocation2 + $0xf8] sm:$0xf]
    %v305 = vld [vmem:[#allocation2 + $0xfc] sm:$0xf]
    %v306 = vld [vmem:[#allocation2 + $0x100] sm:$0xf]
    %v307 = vld [vmem:[#allocation2 + $0x104] sm:$0xf]
    %v308 = vld [vmem:[#allocation2 + $0x108] sm:$0xf]
    %v309 = vld [vmem:[#allocation2 + $0x10c] sm:$0xf]
    %v310 = vld [vmem:[#allocation2 + $0x110] sm:$0xf]
    %v311 = vld [vmem:[#allocation2 + $0x114] sm:$0xf]
    %v312 = vld [vmem:[#allocation2 + $0x118] sm:$0xf]
    %v313 = vld [vmem:[#allocation2 + $0x11c] sm:$0xf]
    %v314 = vld [vmem:[#allocation2 + $0x120] sm:$0xf]
    %v315 = vld [vmem:[#allocation2 + $0x124] sm:$0xf]
    %v316 = vld [vmem:[#allocation2 + $0x128] sm:$0xf]
    %v317 = vld [vmem:[#allocation2 + $0x12c] sm:$0xf]
    %v318 = vld [vmem:[#allocation2 + $0x130] sm:$0xf]
    %v319 = vld [vmem:[#allocation2 + $0x134] sm:$0xf]
    %v320 = vld [vmem:[#allocation2 + $0x138] sm:$0xf]
    %v321 = vld [vmem:[#allocation2 + $0x13c] sm:$0xf]
    %v322 = vld [vmem:[#allocation2 + $0x140] sm:$0xf]
    %v323 = vld [vmem:[#allocation2 + $0x144] sm:$0xf]
    %v324 = vld [vmem:[#allocation2 + $0x148] sm:$0xf]
    %v325 = vld [vmem:[#allocation2 + $0x14c] sm:$0xf]
    %v326 = vld [vmem:[#allocation2 + $0x150] sm:$0xf]
    %v327 = vld [vmem:[#allocation2 + $0x154] sm:$0xf]
    %v328 = vld [vmem:[#allocation2 + $0x158] sm:$0xf]
    %v329 = vld [vmem:[#allocation2 + $0x15c] sm:$0xf]
    %v330 = vld [vmem:[%s2] sm:$0x3]
    %v419 = vunpack.c.l.b16 %v242
    %v420 = vunpack.c.l.b16 %v243
    %v421 = vunpack.c.l.b16 %v244
    %v422 = vunpack.c.l.b16 %v245
    %v423 = vunpack.c.l.b16 %v246
    %v424 = vunpack.c.l.b16 %v247
    %v425 = vunpack.c.l.b16 %v248
    %v426 = vunpack.c.l.b16 %v249
    %v427 = vunpack.c.l.b16 %v250
    %v428 = vunpack.c.l.b16 %v251
    %v429 = vunpack.c.l.b16 %v252
    %v430 = vunpack.c.l.b16 %v253
    %v431 = vunpack.c.l.b16 %v254
    %v432 = vunpack.c.l.b16 %v255
    %v433 = vunpack.c.l.b16 %v256
    %v434 = vunpack.c.l.b16 %v257
    %v435 = vunpack.c.l.b16 %v258
    %v436 = vunpack.c.l.b16 %v259
    %v437 = vunpack.c.l.b16 %v260
    %v438 = vunpack.c.l.b16 %v261
    %v439 = vunpack.c.l.b16 %v262
    %v440 = vunpack.c.l.b16 %v263
    %v441 = vunpack.c.l.b16 %v264
    %v442 = vunpack.c.l.b16 %v265
    %v443 = vunpack.c.l.b16 %v266
    %v444 = vunpack.c.l.b16 %v267
    %v445 = vunpack.c.l.b16 %v268
    %v446 = vunpack.c.l.b16 %v269
    %v447 = vunpack.c.l.b16 %v270
    %v448 = vunpack.c.l.b16 %v271
    %v449 = vunpack.c.l.b16 %v272
    %v450 = vunpack.c.l.b16 %v273
    %v451 = vunpack.c.l.b16 %v274
    %v452 = vunpack.c.l.b16 %v275
    %v453 = vunpack.c.l.b16 %v276
    %v454 = vunpack.c.l.b16 %v277
    %v455 = vunpack.c.l.b16 %v278
    %v456 = vunpack.c.l.b16 %v279
    %v457 = vunpack.c.l.b16 %v280
    %v458 = vunpack.c.l.b16 %v281
    %v459 = vunpack.c.l.b16 %v282
    %v460 = vunpack.c.l.b16 %v283
    %v461 = vunpack.c.l.b16 %v284
    %v462 = vunpack.c.l.b16 %v285
    %v463 = vunpack.c.l.b16 %v286
    %v464 = vunpack.c.l.b16 %v287
    %v465 = vunpack.c.l.b16 %v288
    %v466 = vunpack.c.l.b16 %v289
    %v467 = vunpack.c.l.b16 %v290
    %v468 = vunpack.c.l.b16 %v291
    %v469 = vunpack.c.l.b16 %v292
    %v470 = vunpack.c.l.b16 %v293
    %v471 = vunpack.c.l.b16 %v294
    %v472 = vunpack.c.l.b16 %v295
    %v473 = vunpack.c.l.b16 %v296
    %v474 = vunpack.c.l.b16 %v297
    %v475 = vunpack.c.l.b16 %v298
    %v476 = vunpack.c.l.b16 %v299
    %v477 = vunpack.c.l.b16 %v300
    %v478 = vunpack.c.l.b16 %v301
    %v479 = vunpack.c.l.b16 %v302
    %v480 = vunpack.c.l.b16 %v303
    %v481 = vunpack.c.l.b16 %v304
    %v482 = vunpack.c.l.b16 %v305
    %v483 = vunpack.c.l.b16 %v306
    %v484 = vunpack.c.l.b16 %v307
    %v485 = vunpack.c.l.b16 %v308
    %v486 = vunpack.c.l.b16 %v309
    %v487 = vunpack.c.l.b16 %v310
    %v488 = vunpack.c.l.b16 %v311
    %v489 = vunpack.c.l.b16 %v312
    %v490 = vunpack.c.l.b16 %v313
    %v491 = vunpack.c.l.b16 %v314
    %v492 = vunpack.c.l.b16 %v315
    %v493 = vunpack.c.l.b16 %v316
    %v494 = vunpack.c.l.b16 %v317
    %v495 = vunpack.c.l.b16 %v318
    %v496 = vunpack.c.l.b16 %v319
    %v497 = vunpack.c.l.b16 %v320
    %v498 = vunpack.c.l.b16 %v321
    %v499 = vunpack.c.l.b16 %v322
    %v500 = vunpack.c.l.b16 %v323
    %v501 = vunpack.c.l.b16 %v324
    %v502 = vunpack.c.l.b16 %v325
    %v503 = vunpack.c.l.b16 %v326
    %v504 = vunpack.c.l.b16 %v327
    %v505 = vunpack.c.l.b16 %v328
    %v506 = vunpack.c.l.b16 %v329
    %v507 = vpack.c.b16 %v420, %v419
    %v508 = vpack.c.b16 %v422, %v421
    %v509 = vpack.c.b16 %v424, %v423
    %v510 = vpack.c.b16 %v426, %v425
    %v511 = vpack.c.b16 %v428, %v427
    %v512 = vpack.c.b16 %v430, %v429
    %v513 = vpack.c.b16 %v432, %v431
    %v514 = vpack.c.b16 %v434, %v433
    %v515 = vpack.c.b16 %v436, %v435
    %v516 = vpack.c.b16 %v438, %v437
    %v517 = vpack.c.b16 %v440, %v439
    %v518 = vpack.c.b16 %v442, %v441
    %v519 = vpack.c.b16 %v444, %v443
    %v520 = vpack.c.b16 %v446, %v445
    %v521 = vpack.c.b16 %v448, %v447
    %v522 = vpack.c.b16 %v450, %v449
    %v523 = vpack.c.b16 %v452, %v451
    %v524 = vpack.c.b16 %v454, %v453
    %v525 = vpack.c.b16 %v456, %v455
    %v526 = vpack.c.b16 %v458, %v457
    %v527 = vpack.c.b16 %v460, %v459
    %v528 = vpack.c.b16 %v462, %v461
    %v529 = vpack.c.b16 %v464, %v463
    %v530 = vpack.c.b16 %v466, %v465
    %v531 = vpack.c.b16 %v468, %v467
    %v532 = vpack.c.b16 %v470, %v469
    %v533 = vpack.c.b16 %v472, %v471
    %v534 = vpack.c.b16 %v474, %v473
    %v535 = vpack.c.b16 %v476, %v475
    %v536 = vpack.c.b16 %v478, %v477
    %v537 = vpack.c.b16 %v480, %v479
    %v538 = vpack.c.b16 %v482, %v481
    %v539 = vpack.c.b16 %v484, %v483
    %v540 = vpack.c.b16 %v486, %v485
    %v541 = vpack.c.b16 %v488, %v487
    %v542 = vpack.c.b16 %v490, %v489
    %v543 = vpack.c.b16 %v492, %v491
    %v544 = vpack.c.b16 %v494, %v493
    %v545 = vpack.c.b16 %v496, %v495
    %v546 = vpack.c.b16 %v498, %v497
    %v547 = vpack.c.b16 %v500, %v499
    %v548 = vpack.c.b16 %v502, %v501
    %v549 = vpack.c.b16 %v504, %v503
    %v550 = vpack.c.b16 %v506, %v505
    %vm551 = vcmask 31744
    %v553 = vsel %vm551, %v507, 0
    %v556 = vsel %vm551, %v508, 0
    %v559 = vsel %vm551, %v509, 0
    %v562 = vsel %vm551, %v510, 0
    %v565 = vsel %vm551, %v511, 0
    %v568 = vsel %vm551, %v512, 0
    %v571 = vsel %vm551, %v513, 0
    %v574 = vsel %vm551, %v514, 0
    %v577 = vsel %vm551, %v515, 0
    %v580 = vsel %vm551, %v516, 0
    %v583 = vsel %vm551, %v517, 0
    %v586 = vsel %vm551, %v518, 0
    %v589 = vsel %vm551, %v519, 0
    %v592 = vsel %vm551, %v520, 0
    %v595 = vsel %vm551, %v521, 0
    %v598 = vsel %vm551, %v522, 0
    %v601 = vsel %vm551, %v523, 0
    %v604 = vsel %vm551, %v524, 0
    %v607 = vsel %vm551, %v525, 0
    %v610 = vsel %vm551, %v526, 0
    %v613 = vsel %vm551, %v527, 0
    %v616 = vsel %vm551, %v528, 0
    %v619 = vsel %vm551, %v529, 0
    %v622 = vsel %vm551, %v530, 0
    %v625 = vsel %vm551, %v531, 0
    %v628 = vsel %vm551, %v532, 0
    %v631 = vsel %vm551, %v533, 0
    %v634 = vsel %vm551, %v534, 0
    %v637 = vsel %vm551, %v535, 0
    %v640 = vsel %vm551, %v536, 0
    %v643 = vsel %vm551, %v537, 0
    %v646 = vsel %vm551, %v538, 0
    %v649 = vsel %vm551, %v539, 0
    %v652 = vsel %vm551, %v540, 0
    %v655 = vsel %vm551, %v541, 0
    %v658 = vsel %vm551, %v542, 0
    %v661 = vsel %vm551, %v543, 0
    %v664 = vsel %vm551, %v544, 0
    %v667 = vsel %vm551, %v545, 0
    %v670 = vsel %vm551, %v546, 0
    %v673 = vsel %vm551, %v547, 0
    %v676 = vsel %vm551, %v548, 0
    %v679 = vsel %vm551, %v549, 0
    %v682 = vsel %vm551, %v550, 0
    %vm684 = vcmask 1041408
    %v686 = vsel %vm684, %v330, 0
    %688 = vmatpush.bf16.msra.mxu0 0
    %689 = vmatpush.bf16.msra.mxu0 0
    %690 = vmatpush.bf16.msra.mxu0 0
    %691 = vmatpush.bf16.msra.mxu0 0
    %692 = vmatpush.bf16.msra.mxu0 0
    %693 = vmatpush.bf16.msra.mxu0 0
    %694 = vmatpush.bf16.msra.mxu0 0
    %695 = vmatpush.bf16.msra.mxu0 %v686
    %696 = vmatmul.bf16.gmra.mxu0 %v553
    %v697 = vpop.f32.mrf.mxu0
    %v698 = vadd.f32 0.0, %v697
    %v699 = vpop.f32.mrf.mxu0
    %v700 = vadd.f32 0.0, %v699
    %701 = vmatmul.bf16.gmra.mxu0 %v556
    %v702 = vpop.f32.mrf.mxu0
    %v703 = vadd.f32 0.0, %v702
    %v704 = vpop.f32.mrf.mxu0
    %v705 = vadd.f32 0.0, %v704
    %706 = vmatmul.bf16.gmra.mxu0 %v559
    %v707 = vpop.f32.mrf.mxu0
    %v708 = vadd.f32 0.0, %v707
    %v709 = vpop.f32.mrf.mxu0
    %v710 = vadd.f32 0.0, %v709
    %711 = vmatmul.bf16.gmra.mxu0 %v562
    %v712 = vpop.f32.mrf.mxu0
    %v713 = vadd.f32 0.0, %v712
    %v714 = vpop.f32.mrf.mxu0
    %v715 = vadd.f32 0.0, %v714
    %716 = vmatmul.bf16.gmra.mxu0 %v565
    %v717 = vpop.f32.mrf.mxu0
    %v718 = vadd.f32 0.0, %v717
    %v719 = vpop.f32.mrf.mxu0
    %v720 = vadd.f32 0.0, %v719
    %721 = vmatmul.bf16.gmra.mxu0 %v568
    %v722 = vpop.f32.mrf.mxu0
    %v723 = vadd.f32 0.0, %v722
    %v724 = vpop.f32.mrf.mxu0
    %v725 = vadd.f32 0.0, %v724
    %726 = vmatmul.bf16.gmra.mxu0 %v571
    %v727 = vpop.f32.mrf.mxu0
    %v728 = vadd.f32 0.0, %v727
    %v729 = vpop.f32.mrf.mxu0
    %v730 = vadd.f32 0.0, %v729
    %731 = vmatmul.bf16.gmra.mxu0 %v574
    %v732 = vpop.f32.mrf.mxu0
    %v733 = vadd.f32 0.0, %v732
    %v734 = vpop.f32.mrf.mxu0
    %v735 = vadd.f32 0.0, %v734
    %736 = vmatmul.bf16.gmra.mxu0 %v577
    %v737 = vpop.f32.mrf.mxu0
    %v738 = vadd.f32 0.0, %v737
    %v739 = vpop.f32.mrf.mxu0
    %v740 = vadd.f32 0.0, %v739
    %741 = vmatmul.bf16.gmra.mxu0 %v580
    %v742 = vpop.f32.mrf.mxu0
    %v743 = vadd.f32 0.0, %v742
    %v744 = vpop.f32.mrf.mxu0
    %v745 = vadd.f32 0.0, %v744
    %746 = vmatmul.bf16.gmra.mxu0 %v583
    %v747 = vpop.f32.mrf.mxu0
    %v748 = vadd.f32 0.0, %v747
    %v749 = vpop.f32.mrf.mxu0
    %v750 = vadd.f32 0.0, %v749
    %751 = vmatmul.bf16.gmra.mxu0 %v586
    %v752 = vpop.f32.mrf.mxu0
    %v753 = vadd.f32 0.0, %v752
    %v754 = vpop.f32.mrf.mxu0
    %v755 = vadd.f32 0.0, %v754
    %756 = vmatmul.bf16.gmra.mxu0 %v589
    %v757 = vpop.f32.mrf.mxu0
    %v758 = vadd.f32 0.0, %v757
    %v759 = vpop.f32.mrf.mxu0
    %v760 = vadd.f32 0.0, %v759
    %761 = vmatmul.bf16.gmra.mxu0 %v592
    %v762 = vpop.f32.mrf.mxu0
    %v763 = vadd.f32 0.0, %v762
    %v764 = vpop.f32.mrf.mxu0
    %v765 = vadd.f32 0.0, %v764
    %766 = vmatmul.bf16.gmra.mxu0 %v595
    %v767 = vpop.f32.mrf.mxu0
    %v768 = vadd.f32 0.0, %v767
    %v769 = vpop.f32.mrf.mxu0
    %v770 = vadd.f32 0.0, %v769
    %771 = vmatmul.bf16.gmra.mxu0 %v598
    %v772 = vpop.f32.mrf.mxu0
    %v773 = vadd.f32 0.0, %v772
    %v774 = vpop.f32.mrf.mxu0
    %v775 = vadd.f32 0.0, %v774
    %776 = vmatmul.bf16.gmra.mxu0 %v601
    %v777 = vpop.f32.mrf.mxu0
    %v778 = vadd.f32 0.0, %v777
    %v779 = vpop.f32.mrf.mxu0
    %v780 = vadd.f32 0.0, %v779
    %781 = vmatmul.bf16.gmra.mxu0 %v604
    %v782 = vpop.f32.mrf.mxu0
    %v783 = vadd.f32 0.0, %v782
    %v784 = vpop.f32.mrf.mxu0
    %v785 = vadd.f32 0.0, %v784
    %786 = vmatmul.bf16.gmra.mxu0 %v607
    %v787 = vpop.f32.mrf.mxu0
    %v788 = vadd.f32 0.0, %v787
    %v789 = vpop.f32.mrf.mxu0
    %v790 = vadd.f32 0.0, %v789
    %791 = vmatmul.bf16.gmra.mxu0 %v610
    %v792 = vpop.f32.mrf.mxu0
    %v793 = vadd.f32 0.0, %v792
    %v794 = vpop.f32.mrf.mxu0
    %v795 = vadd.f32 0.0, %v794
    %796 = vmatmul.bf16.gmra.mxu0 %v613
    %v797 = vpop.f32.mrf.mxu0
    %v798 = vadd.f32 0.0, %v797
    %v799 = vpop.f32.mrf.mxu0
    %v800 = vadd.f32 0.0, %v799
    %801 = vmatmul.bf16.gmra.mxu0 %v616
    %v802 = vpop.f32.mrf.mxu0
    %v803 = vadd.f32 0.0, %v802
    %v804 = vpop.f32.mrf.mxu0
    %v805 = vadd.f32 0.0, %v804
    %806 = vmatmul.bf16.gmra.mxu0 %v619
    %v807 = vpop.f32.mrf.mxu0
    %v808 = vadd.f32 0.0, %v807
    %v809 = vpop.f32.mrf.mxu0
    %v810 = vadd.f32 0.0, %v809
    %811 = vmatmul.bf16.gmra.mxu0 %v622
    %v812 = vpop.f32.mrf.mxu0
    %v813 = vadd.f32 0.0, %v812
    %v814 = vpop.f32.mrf.mxu0
    %v815 = vadd.f32 0.0, %v814
    %816 = vmatmul.bf16.gmra.mxu0 %v625
    %v817 = vpop.f32.mrf.mxu0
    %v818 = vadd.f32 0.0, %v817
    %v819 = vpop.f32.mrf.mxu0
    %v820 = vadd.f32 0.0, %v819
    %821 = vmatmul.bf16.gmra.mxu0 %v628
    %v822 = vpop.f32.mrf.mxu0
    %v823 = vadd.f32 0.0, %v822
    %v824 = vpop.f32.mrf.mxu0
    %v825 = vadd.f32 0.0, %v824
    %826 = vmatmul.bf16.gmra.mxu0 %v631
    %v827 = vpop.f32.mrf.mxu0
    %v828 = vadd.f32 0.0, %v827
    %v829 = vpop.f32.mrf.mxu0
    %v830 = vadd.f32 0.0, %v829
    %831 = vmatmul.bf16.gmra.mxu0 %v634
    %v832 = vpop.f32.mrf.mxu0
    %v833 = vadd.f32 0.0, %v832
    %v834 = vpop.f32.mrf.mxu0
    %v835 = vadd.f32 0.0, %v834
    %836 = vmatmul.bf16.gmra.mxu0 %v637
    %v837 = vpop.f32.mrf.mxu0
    %v838 = vadd.f32 0.0, %v837
    %v839 = vpop.f32.mrf.mxu0
    %v840 = vadd.f32 0.0, %v839
    %841 = vmatmul.bf16.gmra.mxu0 %v640
    %v842 = vpop.f32.mrf.mxu0
    %v843 = vadd.f32 0.0, %v842
    %v844 = vpop.f32.mrf.mxu0
    %v845 = vadd.f32 0.0, %v844
    %846 = vmatmul.bf16.gmra.mxu0 %v643
    %v847 = vpop.f32.mrf.mxu0
    %v848 = vadd.f32 0.0, %v847
    %v849 = vpop.f32.mrf.mxu0
    %v850 = vadd.f32 0.0, %v849
    %851 = vmatmul.bf16.gmra.mxu0 %v646
    %v852 = vpop.f32.mrf.mxu0
    %v853 = vadd.f32 0.0, %v852
    %v854 = vpop.f32.mrf.mxu0
    %v855 = vadd.f32 0.0, %v854
    %856 = vmatmul.bf16.gmra.mxu0 %v649
    %v857 = vpop.f32.mrf.mxu0
    %v858 = vadd.f32 0.0, %v857
    %v859 = vpop.f32.mrf.mxu0
    %v860 = vadd.f32 0.0, %v859
    %861 = vmatmul.bf16.gmra.mxu0 %v652
    %v862 = vpop.f32.mrf.mxu0
    %v863 = vadd.f32 0.0, %v862
    %v864 = vpop.f32.mrf.mxu0
    %v865 = vadd.f32 0.0, %v864
    %866 = vmatmul.bf16.gmra.mxu0 %v655
    %v867 = vpop.f32.mrf.mxu0
    %v868 = vadd.f32 0.0, %v867
    %v869 = vpop.f32.mrf.mxu0
    %v870 = vadd.f32 0.0, %v869
    %871 = vmatmul.bf16.gmra.mxu0 %v658
    %v872 = vpop.f32.mrf.mxu0
    %v873 = vadd.f32 0.0, %v872
    %v874 = vpop.f32.mrf.mxu0
    %v875 = vadd.f32 0.0, %v874
    %876 = vmatmul.bf16.gmra.mxu0 %v661
    %v877 = vpop.f32.mrf.mxu0
    %v878 = vadd.f32 0.0, %v877
    %v879 = vpop.f32.mrf.mxu0
    %v880 = vadd.f32 0.0, %v879
    %881 = vmatmul.bf16.gmra.mxu0 %v664
    %v882 = vpop.f32.mrf.mxu0
    %v883 = vadd.f32 0.0, %v882
    %v884 = vpop.f32.mrf.mxu0
    %v885 = vadd.f32 0.0, %v884
    %886 = vmatmul.bf16.gmra.mxu0 %v667
    %v887 = vpop.f32.mrf.mxu0
    %v888 = vadd.f32 0.0, %v887
    %v889 = vpop.f32.mrf.mxu0
    %v890 = vadd.f32 0.0, %v889
    %891 = vmatmul.bf16.gmra.mxu0 %v670
    %v892 = vpop.f32.mrf.mxu0
    %v893 = vadd.f32 0.0, %v892
    %v894 = vpop.f32.mrf.mxu0
    %v895 = vadd.f32 0.0, %v894
    %896 = vmatmul.bf16.gmra.mxu0 %v673
    %v897 = vpop.f32.mrf.mxu0
    %v898 = vadd.f32 0.0, %v897
    %v899 = vpop.f32.mrf.mxu0
    %v900 = vadd.f32 0.0, %v899
    %901 = vmatmul.bf16.gmra.mxu0 %v676
    %v902 = vpop.f32.mrf.mxu0
    %v903 = vadd.f32 0.0, %v902
    %v904 = vpop.f32.mrf.mxu0
    %v905 = vadd.f32 0.0, %v904
    %906 = vmatmul.bf16.gmra.mxu0 %v679
    %v907 = vpop.f32.mrf.mxu0
    %v908 = vadd.f32 0.0, %v907
    %v909 = vpop.f32.mrf.mxu0
    %v910 = vadd.f32 0.0, %v909
    %911 = vmatmul.bf16.gmra.mxu0 %v682
    %v912 = vpop.f32.mrf.mxu0
    %v913 = vadd.f32 0.0, %v912
    %v914 = vpop.f32.mrf.mxu0
    %v915 = vadd.f32 0.0, %v914
    %916 = vdwg.mxu0
    %917 = vst [vmem:[#allocation3] sm:$0xff] %v698
    %918 = vst [vmem:[#allocation3 + $0x8] sm:$0xff] %v700
    %919 = vst [vmem:[#allocation3 + $0x10] sm:$0xff] %v703
    %920 = vst [vmem:[#allocation3 + $0x18] sm:$0xff] %v705
    %921 = vst [vmem:[#allocation3 + $0x20] sm:$0xff] %v708
    %922 = vst [vmem:[#allocation3 + $0x28] sm:$0xff] %v710
    %923 = vst [vmem:[#allocation3 + $0x30] sm:$0xff] %v713
    %924 = vst [vmem:[#allocation3 + $0x38] sm:$0xff] %v715
    %925 = vst [vmem:[#allocation3 + $0x40] sm:$0xff] %v718
    %926 = vst [vmem:[#allocation3 + $0x48] sm:$0xff] %v720
    %927 = vst [vmem:[#allocation3 + $0x50] sm:$0xff] %v723
    %928 = vst [vmem:[#allocation3 + $0x58] sm:$0xff] %v725
    %929 = vst [vmem:[#allocation3 + $0x60] sm:$0xff] %v728
    %930 = vst [vmem:[#allocation3 + $0x68] sm:$0xff] %v730
    %931 = vst [vmem:[#allocation3 + $0x70] sm:$0xff] %v733
    %932 = vst [vmem:[#allocation3 + $0x78] sm:$0xff] %v735
    %933 = vst [vmem:[#allocation3 + $0x80] sm:$0xff] %v738
    %934 = vst [vmem:[#allocation3 + $0x88] sm:$0xff] %v740
    %935 = vst [vmem:[#allocation3 + $0x90] sm:$0xff] %v743
    %936 = vst [vmem:[#allocation3 + $0x98] sm:$0xff] %v745
    %937 = vst [vmem:[#allocation3 + $0xa0] sm:$0xff] %v748
    %938 = vst [vmem:[#allocation3 + $0xa8] sm:$0xff] %v750
    %939 = vst [vmem:[#allocation3 + $0xb0] sm:$0xff] %v753
    %940 = vst [vmem:[#allocation3 + $0xb8] sm:$0xff] %v755
    %941 = vst [vmem:[#allocation3 + $0xc0] sm:$0xff] %v758
    %942 = vst [vmem:[#allocation3 + $0xc8] sm:$0xff] %v760
    %943 = vst [vmem:[#allocation3 + $0xd0] sm:$0xff] %v763
    %944 = vst [vmem:[#allocation3 + $0xd8] sm:$0xff] %v765
    %945 = vst [vmem:[#allocation3 + $0xe0] sm:$0xff] %v768
    %946 = vst [vmem:[#allocation3 + $0xe8] sm:$0xff] %v770
    %947 = vst [vmem:[#allocation3 + $0xf0] sm:$0xff] %v773
    %948 = vst [vmem:[#allocation3 + $0xf8] sm:$0xff] %v775
    %949 = vst [vmem:[#allocation3 + $0x100] sm:$0xff] %v778
    %950 = vst [vmem:[#allocation3 + $0x108] sm:$0xff] %v780
    %951 = vst [vmem:[#allocation3 + $0x110] sm:$0xff] %v783
    %952 = vst [vmem:[#allocation3 + $0x118] sm:$0xff] %v785
    %953 = vst [vmem:[#allocation3 + $0x120] sm:$0xff] %v788
    %954 = vst [vmem:[#allocation3 + $0x128] sm:$0xff] %v790
    %955 = vst [vmem:[#allocation3 + $0x130] sm:$0xff] %v793
    %956 = vst [vmem:[#allocation3 + $0x138] sm:$0xff] %v795
    %957 = vst [vmem:[#allocation3 + $0x140] sm:$0xff] %v798
    %958 = vst [vmem:[#allocation3 + $0x148] sm:$0xff] %v800
    %959 = vst [vmem:[#allocation3 + $0x150] sm:$0xff] %v803
    %960 = vst [vmem:[#allocation3 + $0x158] sm:$0xff] %v805
    %961 = vst [vmem:[#allocation3 + $0x160] sm:$0xff] %v808
    %962 = vst [vmem:[#allocation3 + $0x168] sm:$0xff] %v810
    %963 = vst [vmem:[#allocation3 + $0x170] sm:$0xff] %v813
    %964 = vst [vmem:[#allocation3 + $0x178] sm:$0xff] %v815
    %965 = vst [vmem:[#allocation3 + $0x180] sm:$0xff] %v818
    %966 = vst [vmem:[#allocation3 + $0x188] sm:$0xff] %v820
    %967 = vst [vmem:[#allocation3 + $0x190] sm:$0xff] %v823
    %968 = vst [vmem:[#allocation3 + $0x198] sm:$0xff] %v825
    %969 = vst [vmem:[#allocation3 + $0x1a0] sm:$0xff] %v828
    %970 = vst [vmem:[#allocation3 + $0x1a8] sm:$0xff] %v830
    %971 = vst [vmem:[#allocation3 + $0x1b0] sm:$0xff] %v833
    %972 = vst [vmem:[#allocation3 + $0x1b8] sm:$0xff] %v835
    %973 = vst [vmem:[#allocation3 + $0x1c0] sm:$0xff] %v838
    %974 = vst [vmem:[#allocation3 + $0x1c8] sm:$0xff] %v840
    %975 = vst [vmem:[#allocation3 + $0x1d0] sm:$0xff] %v843
    %976 = vst [vmem:[#allocation3 + $0x1d8] sm:$0xff] %v845
    %977 = vst [vmem:[#allocation3 + $0x1e0] sm:$0xff] %v848
    %978 = vst [vmem:[#allocation3 + $0x1e8] sm:$0xff] %v850
    %979 = vst [vmem:[#allocation3 + $0x1f0] sm:$0xff] %v853
    %980 = vst [vmem:[#allocation3 + $0x1f8] sm:$0xff] %v855
    %981 = vst [vmem:[#allocation3 + $0x200] sm:$0xff] %v858
    %982 = vst [vmem:[#allocation3 + $0x208] sm:$0xff] %v860
    %983 = vst [vmem:[#allocation3 + $0x210] sm:$0xff] %v863
    %984 = vst [vmem:[#allocation3 + $0x218] sm:$0xff] %v865
    %985 = vst [vmem:[#allocation3 + $0x220] sm:$0xff] %v868
    %986 = vst [vmem:[#allocation3 + $0x228] sm:$0xff] %v870
    %987 = vst [vmem:[#allocation3 + $0x230] sm:$0xff] %v873
    %988 = vst [vmem:[#allocation3 + $0x238] sm:$0xff] %v875
    %989 = vst [vmem:[#allocation3 + $0x240] sm:$0xff] %v878
    %990 = vst [vmem:[#allocation3 + $0x248] sm:$0xff] %v880
    %991 = vst [vmem:[#allocation3 + $0x250] sm:$0xff] %v883
    %992 = vst [vmem:[#allocation3 + $0x258] sm:$0xff] %v885
    %993 = vst [vmem:[#allocation3 + $0x260] sm:$0xff] %v888
    %994 = vst [vmem:[#allocation3 + $0x268] sm:$0xff] %v890
    %995 = vst [vmem:[#allocation3 + $0x270] sm:$0xff] %v893
    %996 = vst [vmem:[#allocation3 + $0x278] sm:$0xff] %v895
    %997 = vst [vmem:[#allocation3 + $0x280] sm:$0xff] %v898
    %998 = vst [vmem:[#allocation3 + $0x288] sm:$0xff] %v900
    %999 = vst [vmem:[#allocation3 + $0x290] sm:$0xff] %v903
    %1000 = vst [vmem:[#allocation3 + $0x298] sm:$0xff] %v905
    %1001 = vst [vmem:[#allocation3 + $0x2a0] sm:$0xff] %v908
    %1002 = vst [vmem:[#allocation3 + $0x2a8] sm:$0xff] %v910
    %1003 = vst [vmem:[#allocation3 + $0x2b0] sm:$0xff] %v913
    %1004 = vst [vmem:[#allocation3 + $0x2b8] sm:$0xff] %v915
    %v1005 = vld [vmem:[#allocation2] sm:$0xf]
    %v1006 = vld [vmem:[#allocation2 + $0x4] sm:$0xf]
    %v1007 = vld [vmem:[#allocation2 + $0x8] sm:$0xf]
    %v1008 = vld [vmem:[#allocation2 + $0xc] sm:$0xf]
    %v1009 = vld [vmem:[#allocation2 + $0x10] sm:$0xf]
    %v1010 = vld [vmem:[#allocation2 + $0x14] sm:$0xf]
    %v1011 = vld [vmem:[#allocation2 + $0x18] sm:$0xf]
    %v1012 = vld [vmem:[#allocation2 + $0x1c] sm:$0xf]
    %v1013 = vld [vmem:[#allocation2 + $0x20] sm:$0xf]
    %v1014 = vld [vmem:[#allocation2 + $0x24] sm:$0xf]
    %v1015 = vld [vmem:[#allocation2 + $0x28] sm:$0xf]
    %v1016 = vld [vmem:[#allocation2 + $0x2c] sm:$0xf]
    %v1017 = vld [vmem:[#allocation2 + $0x30] sm:$0xf]
    %v1018 = vld [vmem:[#allocation2 + $0x34] sm:$0xf]
    %v1019 = vld [vmem:[#allocation2 + $0x38] sm:$0xf]
    %v1020 = vld [vmem:[#allocation2 + $0x3c] sm:$0xf]
    %v1021 = vld [vmem:[#allocation2 + $0x40] sm:$0xf]
    %v1022 = vld [vmem:[#allocation2 + $0x44] sm:$0xf]
    %v1023 = vld [vmem:[#allocation2 + $0x48] sm:$0xf]
    %v1024 = vld [vmem:[#allocation2 + $0x4c] sm:$0xf]
    %v1025 = vld [vmem:[#allocation2 + $0x50] sm:$0xf]
    %v1026 = vld [vmem:[#allocation2 + $0x54] sm:$0xf]
    %v1027 = vld [vmem:[#allocation2 + $0x58] sm:$0xf]
    %v1028 = vld [vmem:[#allocation2 + $0x5c] sm:$0xf]
    %v1029 = vld [vmem:[#allocation2 + $0x60] sm:$0xf]
    %v1030 = vld [vmem:[#allocation2 + $0x64] sm:$0xf]
    %v1031 = vld [vmem:[#allocation2 + $0x68] sm:$0xf]
    %v1032 = vld [vmem:[#allocation2 + $0x6c] sm:$0xf]
    %v1033 = vld [vmem:[#allocation2 + $0x70] sm:$0xf]
    %v1034 = vld [vmem:[#allocation2 + $0x74] sm:$0xf]
    %v1035 = vld [vmem:[#allocation2 + $0x78] sm:$0xf]
    %v1036 = vld [vmem:[#allocation2 + $0x7c] sm:$0xf]
    %v1037 = vld [vmem:[#allocation2 + $0x80] sm:$0xf]
    %v1038 = vld [vmem:[#allocation2 + $0x84] sm:$0xf]
    %v1039 = vld [vmem:[#allocation2 + $0x88] sm:$0xf]
    %v1040 = vld [vmem:[#allocation2 + $0x8c] sm:$0xf]
    %v1041 = vld [vmem:[#allocation2 + $0x90] sm:$0xf]
    %v1042 = vld [vmem:[#allocation2 + $0x94] sm:$0xf]
    %v1043 = vld [vmem:[#allocation2 + $0x98] sm:$0xf]
    %v1044 = vld [vmem:[#allocation2 + $0x9c] sm:$0xf]
    %v1045 = vld [vmem:[#allocation2 + $0xa0] sm:$0xf]
    %v1046 = vld [vmem:[#allocation2 + $0xa4] sm:$0xf]
    %v1047 = vld [vmem:[#allocation2 + $0xa8] sm:$0xf]
    %v1048 = vld [vmem:[#allocation2 + $0xac] sm:$0xf]
    %v1049 = vld [vmem:[#allocation2 + $0xb0] sm:$0xf]
    %v1050 = vld [vmem:[#allocation2 + $0xb4] sm:$0xf]
    %v1051 = vld [vmem:[#allocation2 + $0xb8] sm:$0xf]
    %v1052 = vld [vmem:[#allocation2 + $0xbc] sm:$0xf]
    %v1053 = vld [vmem:[#allocation2 + $0xc0] sm:$0xf]
    %v1054 = vld [vmem:[#allocation2 + $0xc4] sm:$0xf]
    %v1055 = vld [vmem:[#allocation2 + $0xc8] sm:$0xf]
    %v1056 = vld [vmem:[#allocation2 + $0xcc] sm:$0xf]
    %v1057 = vld [vmem:[#allocation2 + $0xd0] sm:$0xf]
    %v1058 = vld [vmem:[#allocation2 + $0xd4] sm:$0xf]
    %v1059 = vld [vmem:[#allocation2 + $0xd8] sm:$0xf]
    %v1060 = vld [vmem:[#allocation2 + $0xdc] sm:$0xf]
    %v1061 = vld [vmem:[#allocation2 + $0xe0] sm:$0xf]
    %v1062 = vld [vmem:[#allocation2 + $0xe4] sm:$0xf]
    %v1063 = vld [vmem:[#allocation2 + $0xe8] sm:$0xf]
    %v1064 = vld [vmem:[#allocation2 + $0xec] sm:$0xf]
    %v1065 = vld [vmem:[#allocation2 + $0xf0] sm:$0xf]
    %v1066 = vld [vmem:[#allocation2 + $0xf4] sm:$0xf]
    %v1067 = vld [vmem:[#allocation2 + $0xf8] sm:$0xf]
    %v1068 = vld [vmem:[#allocation2 + $0xfc] sm:$0xf]
    %v1069 = vld [vmem:[#allocation2 + $0x100] sm:$0xf]
    %v1070 = vld [vmem:[#allocation2 + $0x104] sm:$0xf]
    %v1071 = vld [vmem:[#allocation2 + $0x108] sm:$0xf]
    %v1072 = vld [vmem:[#allocation2 + $0x10c] sm:$0xf]
    %v1073 = vld [vmem:[#allocation2 + $0x110] sm:$0xf]
    %v1074 = vld [vmem:[#allocation2 + $0x114] sm:$0xf]
    %v1075 = vld [vmem:[#allocation2 + $0x118] sm:$0xf]
    %v1076 = vld [vmem:[#allocation2 + $0x11c] sm:$0xf]
    %v1077 = vld [vmem:[#allocation2 + $0x120] sm:$0xf]
    %v1078 = vld [vmem:[#allocation2 + $0x124] sm:$0xf]
    %v1079 = vld [vmem:[#allocation2 + $0x128] sm:$0xf]
    %v1080 = vld [vmem:[#allocation2 + $0x12c] sm:$0xf]
    %v1081 = vld [vmem:[#allocation2 + $0x130] sm:$0xf]
    %v1082 = vld [vmem:[#allocation2 + $0x134] sm:$0xf]
    %v1083 = vld [vmem:[#allocation2 + $0x138] sm:$0xf]
    %v1084 = vld [vmem:[#allocation2 + $0x13c] sm:$0xf]
    %v1085 = vld [vmem:[#allocation2 + $0x140] sm:$0xf]
    %v1086 = vld [vmem:[#allocation2 + $0x144] sm:$0xf]
    %v1087 = vld [vmem:[#allocation2 + $0x148] sm:$0xf]
    %v1088 = vld [vmem:[#allocation2 + $0x14c] sm:$0xf]
    %v1089 = vld [vmem:[#allocation2 + $0x150] sm:$0xf]
    %v1090 = vld [vmem:[#allocation2 + $0x154] sm:$0xf]
    %v1091 = vld [vmem:[#allocation2 + $0x158] sm:$0xf]
    %v1092 = vld [vmem:[#allocation2 + $0x15c] sm:$0xf]
    %v1093 = vld [vmem:[#allocation2 + $0x160] sm:$0x1]
    %s1094 = scalar_lea.vmem %s2, 2
    %v1095 = vld [vmem:[%s1094] sm:$0x3]
    %v1185 = vunpack.c.l.b16 %v1005
    %v1186 = vunpack.c.l.b16 %v1006
    %v1187 = vunpack.c.l.b16 %v1007
    %v1188 = vunpack.c.l.b16 %v1008
    %v1189 = vunpack.c.l.b16 %v1009
    %v1190 = vunpack.c.l.b16 %v1010
    %v1191 = vunpack.c.l.b16 %v1011
    %v1192 = vunpack.c.l.b16 %v1012
    %v1193 = vunpack.c.l.b16 %v1013
    %v1194 = vunpack.c.l.b16 %v1014
    %v1195 = vunpack.c.l.b16 %v1015
    %v1196 = vunpack.c.l.b16 %v1016
    %v1197 = vunpack.c.l.b16 %v1017
    %v1198 = vunpack.c.l.b16 %v1018
    %v1199 = vunpack.c.l.b16 %v1019
    %v1200 = vunpack.c.l.b16 %v1020
    %v1201 = vunpack.c.l.b16 %v1021
    %v1202 = vunpack.c.l.b16 %v1022
    %v1203 = vunpack.c.l.b16 %v1023
    %v1204 = vunpack.c.l.b16 %v1024
    %v1205 = vunpack.c.l.b16 %v1025
    %v1206 = vunpack.c.l.b16 %v1026
    %v1207 = vunpack.c.l.b16 %v1027
    %v1208 = vunpack.c.l.b16 %v1028
    %v1209 = vunpack.c.l.b16 %v1029
    %v1210 = vunpack.c.l.b16 %v1030
    %v1211 = vunpack.c.l.b16 %v1031
    %v1212 = vunpack.c.l.b16 %v1032
    %v1213 = vunpack.c.l.b16 %v1033
    %v1214 = vunpack.c.l.b16 %v1034
    %v1215 = vunpack.c.l.b16 %v1035
    %v1216 = vunpack.c.l.b16 %v1036
    %v1217 = vunpack.c.l.b16 %v1037
    %v1218 = vunpack.c.l.b16 %v1038
    %v1219 = vunpack.c.l.b16 %v1039
    %v1220 = vunpack.c.l.b16 %v1040
    %v1221 = vunpack.c.l.b16 %v1041
    %v1222 = vunpack.c.l.b16 %v1042
    %v1223 = vunpack.c.l.b16 %v1043
    %v1224 = vunpack.c.l.b16 %v1044
    %v1225 = vunpack.c.l.b16 %v1045
    %v1226 = vunpack.c.l.b16 %v1046
    %v1227 = vunpack.c.l.b16 %v1047
    %v1228 = vunpack.c.l.b16 %v1048
    %v1229 = vunpack.c.l.b16 %v1049
    %v1230 = vunpack.c.l.b16 %v1050
    %v1231 = vunpack.c.l.b16 %v1051
    %v1232 = vunpack.c.l.b16 %v1052
    %v1233 = vunpack.c.l.b16 %v1053
    %v1234 = vunpack.c.l.b16 %v1054
    %v1235 = vunpack.c.l.b16 %v1055
    %v1236 = vunpack.c.l.b16 %v1056
    %v1237 = vunpack.c.l.b16 %v1057
    %v1238 = vunpack.c.l.b16 %v1058
    %v1239 = vunpack.c.l.b16 %v1059
    %v1240 = vunpack.c.l.b16 %v1060
    %v1241 = vunpack.c.l.b16 %v1061
    %v1242 = vunpack.c.l.b16 %v1062
    %v1243 = vunpack.c.l.b16 %v1063
    %v1244 = vunpack.c.l.b16 %v1064
    %v1245 = vunpack.c.l.b16 %v1065
    %v1246 = vunpack.c.l.b16 %v1066
    %v1247 = vunpack.c.l.b16 %v1067
    %v1248 = vunpack.c.l.b16 %v1068
    %v1249 = vunpack.c.l.b16 %v1069
    %v1250 = vunpack.c.l.b16 %v1070
    %v1251 = vunpack.c.l.b16 %v1071
    %v1252 = vunpack.c.l.b16 %v1072
    %v1253 = vunpack.c.l.b16 %v1073
    %v1254 = vunpack.c.l.b16 %v1074
    %v1255 = vunpack.c.l.b16 %v1075
    %v1256 = vunpack.c.l.b16 %v1076
    %v1257 = vunpack.c.l.b16 %v1077
    %v1258 = vunpack.c.l.b16 %v1078
    %v1259 = vunpack.c.l.b16 %v1079
    %v1260 = vunpack.c.l.b16 %v1080
    %v1261 = vunpack.c.l.b16 %v1081
    %v1262 = vunpack.c.l.b16 %v1082
    %v1263 = vunpack.c.l.b16 %v1083
    %v1264 = vunpack.c.l.b16 %v1084
    %v1265 = vunpack.c.l.b16 %v1085
    %v1266 = vunpack.c.l.b16 %v1086
    %v1267 = vunpack.c.l.b16 %v1087
    %v1268 = vunpack.c.l.b16 %v1088
    %v1269 = vunpack.c.l.b16 %v1089
    %v1270 = vunpack.c.l.b16 %v1090
    %v1271 = vunpack.c.l.b16 %v1091
    %v1272 = vunpack.c.l.b16 %v1092
    %v1273 = vunpack.c.l.b16 %v1093
    %v1274 = vpack.c.b16 %v1186, %v1185
    %v1275 = vpack.c.b16 %v1188, %v1187
    %v1276 = vpack.c.b16 %v1190, %v1189
    %v1277 = vpack.c.b16 %v1192, %v1191
    %v1278 = vpack.c.b16 %v1194, %v1193
    %v1279 = vpack.c.b16 %v1196, %v1195
    %v1280 = vpack.c.b16 %v1198, %v1197
    %v1281 = vpack.c.b16 %v1200, %v1199
    %v1282 = vpack.c.b16 %v1202, %v1201
    %v1283 = vpack.c.b16 %v1204, %v1203
    %v1284 = vpack.c.b16 %v1206, %v1205
    %v1285 = vpack.c.b16 %v1208, %v1207
    %v1286 = vpack.c.b16 %v1210, %v1209
    %v1287 = vpack.c.b16 %v1212, %v1211
    %v1288 = vpack.c.b16 %v1214, %v1213
    %v1289 = vpack.c.b16 %v1216, %v1215
    %v1290 = vpack.c.b16 %v1218, %v1217
    %v1291 = vpack.c.b16 %v1220, %v1219
    %v1292 = vpack.c.b16 %v1222, %v1221
    %v1293 = vpack.c.b16 %v1224, %v1223
    %v1294 = vpack.c.b16 %v1226, %v1225
    %v1295 = vpack.c.b16 %v1228, %v1227
    %v1296 = vpack.c.b16 %v1230, %v1229
    %v1297 = vpack.c.b16 %v1232, %v1231
    %v1298 = vpack.c.b16 %v1234, %v1233
    %v1299 = vpack.c.b16 %v1236, %v1235
    %v1300 = vpack.c.b16 %v1238, %v1237
    %v1301 = vpack.c.b16 %v1240, %v1239
    %v1302 = vpack.c.b16 %v1242, %v1241
    %v1303 = vpack.c.b16 %v1244, %v1243
    %v1304 = vpack.c.b16 %v1246, %v1245
    %v1305 = vpack.c.b16 %v1248, %v1247
    %v1306 = vpack.c.b16 %v1250, %v1249
    %v1307 = vpack.c.b16 %v1252, %v1251
    %v1308 = vpack.c.b16 %v1254, %v1253
    %v1309 = vpack.c.b16 %v1256, %v1255
    %v1310 = vpack.c.b16 %v1258, %v1257
    %v1311 = vpack.c.b16 %v1260, %v1259
    %v1312 = vpack.c.b16 %v1262, %v1261
    %v1313 = vpack.c.b16 %v1264, %v1263
    %v1314 = vpack.c.b16 %v1266, %v1265
    %v1315 = vpack.c.b16 %v1268, %v1267
    %v1316 = vpack.c.b16 %v1270, %v1269
    %v1317 = vpack.c.b16 %v1272, %v1271
    %v1318 = vpack.c.b16 %v1273, %v1273
    %vm1319 = vsmask.f32 7424
    %v1321 = vshrl.u32 %v1274, 16
    %v1323 = vshll.u32 %v1274, 16
    %v1325 = vrot.slane %v1323, 1
    %v1326 = vor.u32 %v1321, %v1325
    %v1328 = vshll.u32 %v1275, 16
    %v1330 = vrot.slane %v1328, 1
    %v1331 = vsel %vm1319, %v1326, %v1330
    %v1332 = vshrl.u32 %v1275, 16
    %v1334 = vor.u32 %v1332, %v1330
    %v1336 = vshll.u32 %v1276, 16
    %v1338 = vrot.slane %v1336, 1
    %v1339 = vsel %vm1319, %v1334, %v1338
    %v1340 = vshrl.u32 %v1276, 16
    %v1342 = vor.u32 %v1340, %v1338
    %v1344 = vshll.u32 %v1277, 16
    %v1346 = vrot.slane %v1344, 1
    %v1347 = vsel %vm1319, %v1342, %v1346
    %v1348 = vshrl.u32 %v1277, 16
    %v1350 = vor.u32 %v1348, %v1346
    %v1352 = vshll.u32 %v1278, 16
    %v1354 = vrot.slane %v1352, 1
    %v1355 = vsel %vm1319, %v1350, %v1354
    %v1356 = vshrl.u32 %v1278, 16
    %v1358 = vor.u32 %v1356, %v1354
    %v1360 = vshll.u32 %v1279, 16
    %v1362 = vrot.slane %v1360, 1
    %v1363 = vsel %vm1319, %v1358, %v1362
    %v1364 = vshrl.u32 %v1279, 16
    %v1366 = vor.u32 %v1364, %v1362
    %v1368 = vshll.u32 %v1280, 16
    %v1370 = vrot.slane %v1368, 1
    %v1371 = vsel %vm1319, %v1366, %v1370
    %v1372 = vshrl.u32 %v1280, 16
    %v1374 = vor.u32 %v1372, %v1370
    %v1376 = vshll.u32 %v1281, 16
    %v1378 = vrot.slane %v1376, 1
    %v1379 = vsel %vm1319, %v1374, %v1378
    %v1380 = vshrl.u32 %v1281, 16
    %v1382 = vor.u32 %v1380, %v1378
    %v1384 = vshll.u32 %v1282, 16
    %v1386 = vrot.slane %v1384, 1
    %v1387 = vsel %vm1319, %v1382, %v1386
    %v1388 = vshrl.u32 %v1282, 16
    %v1390 = vor.u32 %v1388, %v1386
    %v1392 = vshll.u32 %v1283, 16
    %v1394 = vrot.slane %v1392, 1
    %v1395 = vsel %vm1319, %v1390, %v1394
    %v1396 = vshrl.u32 %v1283, 16
    %v1398 = vor.u32 %v1396, %v1394
    %v1400 = vshll.u32 %v1284, 16
    %v1402 = vrot.slane %v1400, 1
    %v1403 = vsel %vm1319, %v1398, %v1402
    %v1404 = vshrl.u32 %v1284, 16
    %v1406 = vor.u32 %v1404, %v1402
    %v1408 = vshll.u32 %v1285, 16
    %v1410 = vrot.slane %v1408, 1
    %v1411 = vsel %vm1319, %v1406, %v1410
    %v1412 = vshrl.u32 %v1285, 16
    %v1414 = vor.u32 %v1412, %v1410
    %v1416 = vshll.u32 %v1286, 16
    %v1418 = vrot.slane %v1416, 1
    %v1419 = vsel %vm1319, %v1414, %v1418
    %v1420 = vshrl.u32 %v1286, 16
    %v1422 = vor.u32 %v1420, %v1418
    %v1424 = vshll.u32 %v1287, 16
    %v1426 = vrot.slane %v1424, 1
    %v1427 = vsel %vm1319, %v1422, %v1426
    %v1428 = vshrl.u32 %v1287, 16
    %v1430 = vor.u32 %v1428, %v1426
    %v1432 = vshll.u32 %v1288, 16
    %v1434 = vrot.slane %v1432, 1
    %v1435 = vsel %vm1319, %v1430, %v1434
    %v1436 = vshrl.u32 %v1288, 16
    %v1438 = vor.u32 %v1436, %v1434
    %v1440 = vshll.u32 %v1289, 16
    %v1442 = vrot.slane %v1440, 1
    %v1443 = vsel %vm1319, %v1438, %v1442
    %v1444 = vshrl.u32 %v1289, 16
    %v1446 = vor.u32 %v1444, %v1442
    %v1448 = vshll.u32 %v1290, 16
    %v1450 = vrot.slane %v1448, 1
    %v1451 = vsel %vm1319, %v1446, %v1450
    %v1452 = vshrl.u32 %v1290, 16
    %v1454 = vor.u32 %v1452, %v1450
    %v1456 = vshll.u32 %v1291, 16
    %v1458 = vrot.slane %v1456, 1
    %v1459 = vsel %vm1319, %v1454, %v1458
    %v1460 = vshrl.u32 %v1291, 16
    %v1462 = vor.u32 %v1460, %v1458
    %v1464 = vshll.u32 %v1292, 16
    %v1466 = vrot.slane %v1464, 1
    %v1467 = vsel %vm1319, %v1462, %v1466
    %v1468 = vshrl.u32 %v1292, 16
    %v1470 = vor.u32 %v1468, %v1466
    %v1472 = vshll.u32 %v1293, 16
    %v1474 = vrot.slane %v1472, 1
    %v1475 = vsel %vm1319, %v1470, %v1474
    %v1476 = vshrl.u32 %v1293, 16
    %v1478 = vor.u32 %v1476, %v1474
    %v1480 = vshll.u32 %v1294, 16
    %v1482 = vrot.slane %v1480, 1
    %v1483 = vsel %vm1319, %v1478, %v1482
    %v1484 = vshrl.u32 %v1294, 16
    %v1486 = vor.u32 %v1484, %v1482
    %v1488 = vshll.u32 %v1295, 16
    %v1490 = vrot.slane %v1488, 1
    %v1491 = vsel %vm1319, %v1486, %v1490
    %v1492 = vshrl.u32 %v1295, 16
    %v1494 = vor.u32 %v1492, %v1490
    %v1496 = vshll.u32 %v1296, 16
    %v1498 = vrot.slane %v1496, 1
    %v1499 = vsel %vm1319, %v1494, %v1498
    %v1500 = vshrl.u32 %v1296, 16
    %v1502 = vor.u32 %v1500, %v1498
    %v1504 = vshll.u32 %v1297, 16
    %v1506 = vrot.slane %v1504, 1
    %v1507 = vsel %vm1319, %v1502, %v1506
    %v1508 = vshrl.u32 %v1297, 16
    %v1510 = vor.u32 %v1508, %v1506
    %v1512 = vshll.u32 %v1298, 16
    %v1514 = vrot.slane %v1512, 1
    %v1515 = vsel %vm1319, %v1510, %v1514
    %v1516 = vshrl.u32 %v1298, 16
    %v1518 = vor.u32 %v1516, %v1514
    %v1520 = vshll.u32 %v1299, 16
    %v1522 = vrot.slane %v1520, 1
    %v1523 = vsel %vm1319, %v1518, %v1522
    %v1524 = vshrl.u32 %v1299, 16
    %v1526 = vor.u32 %v1524, %v1522
    %v1528 = vshll.u32 %v1300, 16
    %v1530 = vrot.slane %v1528, 1
    %v1531 = vsel %vm1319, %v1526, %v1530
    %v1532 = vshrl.u32 %v1300, 16
    %v1534 = vor.u32 %v1532, %v1530
    %v1536 = vshll.u32 %v1301, 16
    %v1538 = vrot.slane %v1536, 1
    %v1539 = vsel %vm1319, %v1534, %v1538
    %v1540 = vshrl.u32 %v1301, 16
    %v1542 = vor.u32 %v1540, %v1538
    %v1544 = vshll.u32 %v1302, 16
    %v1546 = vrot.slane %v1544, 1
    %v1547 = vsel %vm1319, %v1542, %v1546
    %v1548 = vshrl.u32 %v1302, 16
    %v1550 = vor.u32 %v1548, %v1546
    %v1552 = vshll.u32 %v1303, 16
    %v1554 = vrot.slane %v1552, 1
    %v1555 = vsel %vm1319, %v1550, %v1554
    %v1556 = vshrl.u32 %v1303, 16
    %v1558 = vor.u32 %v1556, %v1554
    %v1560 = vshll.u32 %v1304, 16
    %v1562 = vrot.slane %v1560, 1
    %v1563 = vsel %vm1319, %v1558, %v1562
    %v1564 = vshrl.u32 %v1304, 16
    %v1566 = vor.u32 %v1564, %v1562
    %v1568 = vshll.u32 %v1305, 16
    %v1570 = vrot.slane %v1568, 1
    %v1571 = vsel %vm1319, %v1566, %v1570
    %v1572 = vshrl.u32 %v1305, 16
    %v1574 = vor.u32 %v1572, %v1570
    %v1576 = vshll.u32 %v1306, 16
    %v1578 = vrot.slane %v1576, 1
    %v1579 = vsel %vm1319, %v1574, %v1578
    %v1580 = vshrl.u32 %v1306, 16
    %v1582 = vor.u32 %v1580, %v1578
    %v1584 = vshll.u32 %v1307, 16
    %v1586 = vrot.slane %v1584, 1
    %v1587 = vsel %vm1319, %v1582, %v1586
    %v1588 = vshrl.u32 %v1307, 16
    %v1590 = vor.u32 %v1588, %v1586
    %v1592 = vshll.u32 %v1308, 16
    %v1594 = vrot.slane %v1592, 1
    %v1595 = vsel %vm1319, %v1590, %v1594
    %v1596 = vshrl.u32 %v1308, 16
    %v1598 = vor.u32 %v1596, %v1594
    %v1600 = vshll.u32 %v1309, 16
    %v1602 = vrot.slane %v1600, 1
    %v1603 = vsel %vm1319, %v1598, %v1602
    %v1604 = vshrl.u32 %v1309, 16
    %v1606 = vor.u32 %v1604, %v1602
    %v1608 = vshll.u32 %v1310, 16
    %v1610 = vrot.slane %v1608, 1
    %v1611 = vsel %vm1319, %v1606, %v1610
    %v1612 = vshrl.u32 %v1310, 16
    %v1614 = vor.u32 %v1612, %v1610
    %v1616 = vshll.u32 %v1311, 16
    %v1618 = vrot.slane %v1616, 1
    %v1619 = vsel %vm1319, %v1614, %v1618
    %v1620 = vshrl.u32 %v1311, 16
    %v1622 = vor.u32 %v1620, %v1618
    %v1624 = vshll.u32 %v1312, 16
    %v1626 = vrot.slane %v1624, 1
    %v1627 = vsel %vm1319, %v1622, %v1626
    %v1628 = vshrl.u32 %v1312, 16
    %v1630 = vor.u32 %v1628, %v1626
    %v1632 = vshll.u32 %v1313, 16
    %v1634 = vrot.slane %v1632, 1
    %v1635 = vsel %vm1319, %v1630, %v1634
    %v1636 = vshrl.u32 %v1313, 16
    %v1638 = vor.u32 %v1636, %v1634
    %v1640 = vshll.u32 %v1314, 16
    %v1642 = vrot.slane %v1640, 1
    %v1643 = vsel %vm1319, %v1638, %v1642
    %v1644 = vshrl.u32 %v1314, 16
    %v1646 = vor.u32 %v1644, %v1642
    %v1648 = vshll.u32 %v1315, 16
    %v1650 = vrot.slane %v1648, 1
    %v1651 = vsel %vm1319, %v1646, %v1650
    %v1652 = vshrl.u32 %v1315, 16
    %v1654 = vor.u32 %v1652, %v1650
    %v1656 = vshll.u32 %v1316, 16
    %v1658 = vrot.slane %v1656, 1
    %v1659 = vsel %vm1319, %v1654, %v1658
    %v1660 = vshrl.u32 %v1316, 16
    %v1662 = vor.u32 %v1660, %v1658
    %v1664 = vshll.u32 %v1317, 16
    %v1666 = vrot.slane %v1664, 1
    %v1667 = vsel %vm1319, %v1662, %v1666
    %v1668 = vshrl.u32 %v1317, 16
    %v1670 = vor.u32 %v1668, %v1666
    %v1672 = vshll.u32 %v1318, 16
    %v1674 = vrot.slane %v1672, 1
    %v1675 = vsel %vm1319, %v1670, %v1674
    %v1677 = vsel %vm551, %v1331, 0
    %v1680 = vsel %vm551, %v1339, 0
    %v1683 = vsel %vm551, %v1347, 0
    %v1686 = vsel %vm551, %v1355, 0
    %v1689 = vsel %vm551, %v1363, 0
    %v1692 = vsel %vm551, %v1371, 0
    %v1695 = vsel %vm551, %v1379, 0
    %v1698 = vsel %vm551, %v1387, 0
    %v1701 = vsel %vm551, %v1395, 0
    %v1704 = vsel %vm551, %v1403, 0
    %v1707 = vsel %vm551, %v1411, 0
    %v1710 = vsel %vm551, %v1419, 0
    %v1713 = vsel %vm551, %v1427, 0
    %v1716 = vsel %vm551, %v1435, 0
    %v1719 = vsel %vm551, %v1443, 0
    %v1722 = vsel %vm551, %v1451, 0
    %v1725 = vsel %vm551, %v1459, 0
    %v1728 = vsel %vm551, %v1467, 0
    %v1731 = vsel %vm551, %v1475, 0
    %v1734 = vsel %vm551, %v1483, 0
    %v1737 = vsel %vm551, %v1491, 0
    %v1740 = vsel %vm551, %v1499, 0
    %v1743 = vsel %vm551, %v1507, 0
    %v1746 = vsel %vm551, %v1515, 0
    %v1749 = vsel %vm551, %v1523, 0
    %v1752 = vsel %vm551, %v1531, 0
    %v1755 = vsel %vm551, %v1539, 0
    %v1758 = vsel %vm551, %v1547, 0
    %v1761 = vsel %vm551, %v1555, 0
    %v1764 = vsel %vm551, %v1563, 0
    %v1767 = vsel %vm551, %v1571, 0
    %v1770 = vsel %vm551, %v1579, 0
    %v1773 = vsel %vm551, %v1587, 0
    %v1776 = vsel %vm551, %v1595, 0
    %v1779 = vsel %vm551, %v1603, 0
    %v1782 = vsel %vm551, %v1611, 0
    %v1785 = vsel %vm551, %v1619, 0
    %v1788 = vsel %vm551, %v1627, 0
    %v1791 = vsel %vm551, %v1635, 0
    %v1794 = vsel %vm551, %v1643, 0
    %v1797 = vsel %vm551, %v1651, 0
    %v1800 = vsel %vm551, %v1659, 0
    %v1803 = vsel %vm551, %v1667, 0
    %v1806 = vsel %vm551, %v1675, 0
    %v1809 = vsel %vm684, %v1095, 0
    %1811 = vmatpush.bf16.msra.mxu0 0
    %1812 = vmatpush.bf16.msra.mxu0 0
    %1813 = vmatpush.bf16.msra.mxu0 0
    %1814 = vmatpush.bf16.msra.mxu0 0
    %1815 = vmatpush.bf16.msra.mxu0 0
    %1816 = vmatpush.bf16.msra.mxu0 0
    %1817 = vmatpush.bf16.msra.mxu0 0
    %1818 = vmatpush.bf16.msra.mxu0 %v1809
    %1819 = vmatmul.bf16.gmra.mxu0 %v1677
    %v1820 = vpop.f32.mrf.mxu0
    %v1821 = vadd.f32 0.0, %v1820
    %v1822 = vpop.f32.mrf.mxu0
    %v1823 = vadd.f32 0.0, %v1822
    %1824 = vmatmul.bf16.gmra.mxu0 %v1680
    %v1825 = vpop.f32.mrf.mxu0
    %v1826 = vadd.f32 0.0, %v1825
    %v1827 = vpop.f32.mrf.mxu0
    %v1828 = vadd.f32 0.0, %v1827
    %1829 = vmatmul.bf16.gmra.mxu0 %v1683
    %v1830 = vpop.f32.mrf.mxu0
    %v1831 = vadd.f32 0.0, %v1830
    %v1832 = vpop.f32.mrf.mxu0
    %v1833 = vadd.f32 0.0, %v1832
    %1834 = vmatmul.bf16.gmra.mxu0 %v1686
    %v1835 = vpop.f32.mrf.mxu0
    %v1836 = vadd.f32 0.0, %v1835
    %v1837 = vpop.f32.mrf.mxu0
    %v1838 = vadd.f32 0.0, %v1837
    %1839 = vmatmul.bf16.gmra.mxu0 %v1689
    %v1840 = vpop.f32.mrf.mxu0
    %v1841 = vadd.f32 0.0, %v1840
    %v1842 = vpop.f32.mrf.mxu0
    %v1843 = vadd.f32 0.0, %v1842
    %1844 = vmatmul.bf16.gmra.mxu0 %v1692
    %v1845 = vpop.f32.mrf.mxu0
    %v1846 = vadd.f32 0.0, %v1845
    %v1847 = vpop.f32.mrf.mxu0
    %v1848 = vadd.f32 0.0, %v1847
    %1849 = vmatmul.bf16.gmra.mxu0 %v1695
    %v1850 = vpop.f32.mrf.mxu0
    %v1851 = vadd.f32 0.0, %v1850
    %v1852 = vpop.f32.mrf.mxu0
    %v1853 = vadd.f32 0.0, %v1852
    %1854 = vmatmul.bf16.gmra.mxu0 %v1698
    %v1855 = vpop.f32.mrf.mxu0
    %v1856 = vadd.f32 0.0, %v1855
    %v1857 = vpop.f32.mrf.mxu0
    %v1858 = vadd.f32 0.0, %v1857
    %1859 = vmatmul.bf16.gmra.mxu0 %v1701
    %v1860 = vpop.f32.mrf.mxu0
    %v1861 = vadd.f32 0.0, %v1860
    %v1862 = vpop.f32.mrf.mxu0
    %v1863 = vadd.f32 0.0, %v1862
    %1864 = vmatmul.bf16.gmra.mxu0 %v1704
    %v1865 = vpop.f32.mrf.mxu0
    %v1866 = vadd.f32 0.0, %v1865
    %v1867 = vpop.f32.mrf.mxu0
    %v1868 = vadd.f32 0.0, %v1867
    %1869 = vmatmul.bf16.gmra.mxu0 %v1707
    %v1870 = vpop.f32.mrf.mxu0
    %v1871 = vadd.f32 0.0, %v1870
    %v1872 = vpop.f32.mrf.mxu0
    %v1873 = vadd.f32 0.0, %v1872
    %1874 = vmatmul.bf16.gmra.mxu0 %v1710
    %v1875 = vpop.f32.mrf.mxu0
    %v1876 = vadd.f32 0.0, %v1875
    %v1877 = vpop.f32.mrf.mxu0
    %v1878 = vadd.f32 0.0, %v1877
    %1879 = vmatmul.bf16.gmra.mxu0 %v1713
    %v1880 = vpop.f32.mrf.mxu0
    %v1881 = vadd.f32 0.0, %v1880
    %v1882 = vpop.f32.mrf.mxu0
    %v1883 = vadd.f32 0.0, %v1882
    %1884 = vmatmul.bf16.gmra.mxu0 %v1716
    %v1885 = vpop.f32.mrf.mxu0
    %v1886 = vadd.f32 0.0, %v1885
    %v1887 = vpop.f32.mrf.mxu0
    %v1888 = vadd.f32 0.0, %v1887
    %1889 = vmatmul.bf16.gmra.mxu0 %v1719
    %v1890 = vpop.f32.mrf.mxu0
    %v1891 = vadd.f32 0.0, %v1890
    %v1892 = vpop.f32.mrf.mxu0
    %v1893 = vadd.f32 0.0, %v1892
    %1894 = vmatmul.bf16.gmra.mxu0 %v1722
    %v1895 = vpop.f32.mrf.mxu0
    %v1896 = vadd.f32 0.0, %v1895
    %v1897 = vpop.f32.mrf.mxu0
    %v1898 = vadd.f32 0.0, %v1897
    %1899 = vmatmul.bf16.gmra.mxu0 %v1725
    %v1900 = vpop.f32.mrf.mxu0
    %v1901 = vadd.f32 0.0, %v1900
    %v1902 = vpop.f32.mrf.mxu0
    %v1903 = vadd.f32 0.0, %v1902
    %1904 = vmatmul.bf16.gmra.mxu0 %v1728
    %v1905 = vpop.f32.mrf.mxu0
    %v1906 = vadd.f32 0.0, %v1905
    %v1907 = vpop.f32.mrf.mxu0
    %v1908 = vadd.f32 0.0, %v1907
    %1909 = vmatmul.bf16.gmra.mxu0 %v1731
    %v1910 = vpop.f32.mrf.mxu0
    %v1911 = vadd.f32 0.0, %v1910
    %v1912 = vpop.f32.mrf.mxu0
    %v1913 = vadd.f32 0.0, %v1912
    %1914 = vmatmul.bf16.gmra.mxu0 %v1734
    %v1915 = vpop.f32.mrf.mxu0
    %v1916 = vadd.f32 0.0, %v1915
    %v1917 = vpop.f32.mrf.mxu0
    %v1918 = vadd.f32 0.0, %v1917
    %1919 = vmatmul.bf16.gmra.mxu0 %v1737
    %v1920 = vpop.f32.mrf.mxu0
    %v1921 = vadd.f32 0.0, %v1920
    %v1922 = vpop.f32.mrf.mxu0
    %v1923 = vadd.f32 0.0, %v1922
    %1924 = vmatmul.bf16.gmra.mxu0 %v1740
    %v1925 = vpop.f32.mrf.mxu0
    %v1926 = vadd.f32 0.0, %v1925
    %v1927 = vpop.f32.mrf.mxu0
    %v1928 = vadd.f32 0.0, %v1927
    %1929 = vmatmul.bf16.gmra.mxu0 %v1743
    %v1930 = vpop.f32.mrf.mxu0
    %v1931 = vadd.f32 0.0, %v1930
    %v1932 = vpop.f32.mrf.mxu0
    %v1933 = vadd.f32 0.0, %v1932
    %1934 = vmatmul.bf16.gmra.mxu0 %v1746
    %v1935 = vpop.f32.mrf.mxu0
    %v1936 = vadd.f32 0.0, %v1935
    %v1937 = vpop.f32.mrf.mxu0
    %v1938 = vadd.f32 0.0, %v1937
    %1939 = vmatmul.bf16.gmra.mxu0 %v1749
    %v1940 = vpop.f32.mrf.mxu0
    %v1941 = vadd.f32 0.0, %v1940
    %v1942 = vpop.f32.mrf.mxu0
    %v1943 = vadd.f32 0.0, %v1942
    %1944 = vmatmul.bf16.gmra.mxu0 %v1752
    %v1945 = vpop.f32.mrf.mxu0
    %v1946 = vadd.f32 0.0, %v1945
    %v1947 = vpop.f32.mrf.mxu0
    %v1948 = vadd.f32 0.0, %v1947
    %1949 = vmatmul.bf16.gmra.mxu0 %v1755
    %v1950 = vpop.f32.mrf.mxu0
    %v1951 = vadd.f32 0.0, %v1950
    %v1952 = vpop.f32.mrf.mxu0
    %v1953 = vadd.f32 0.0, %v1952
    %1954 = vmatmul.bf16.gmra.mxu0 %v1758
    %v1955 = vpop.f32.mrf.mxu0
    %v1956 = vadd.f32 0.0, %v1955
    %v1957 = vpop.f32.mrf.mxu0
    %v1958 = vadd.f32 0.0, %v1957
    %1959 = vmatmul.bf16.gmra.mxu0 %v1761
    %v1960 = vpop.f32.mrf.mxu0
    %v1961 = vadd.f32 0.0, %v1960
    %v1962 = vpop.f32.mrf.mxu0
    %v1963 = vadd.f32 0.0, %v1962
    %1964 = vmatmul.bf16.gmra.mxu0 %v1764
    %v1965 = vpop.f32.mrf.mxu0
    %v1966 = vadd.f32 0.0, %v1965
    %v1967 = vpop.f32.mrf.mxu0
    %v1968 = vadd.f32 0.0, %v1967
    %1969 = vmatmul.bf16.gmra.mxu0 %v1767
    %v1970 = vpop.f32.mrf.mxu0
    %v1971 = vadd.f32 0.0, %v1970
    %v1972 = vpop.f32.mrf.mxu0
    %v1973 = vadd.f32 0.0, %v1972
    %1974 = vmatmul.bf16.gmra.mxu0 %v1770
    %v1975 = vpop.f32.mrf.mxu0
    %v1976 = vadd.f32 0.0, %v1975
    %v1977 = vpop.f32.mrf.mxu0
    %v1978 = vadd.f32 0.0, %v1977
    %1979 = vmatmul.bf16.gmra.mxu0 %v1773
    %v1980 = vpop.f32.mrf.mxu0
    %v1981 = vadd.f32 0.0, %v1980
    %v1982 = vpop.f32.mrf.mxu0
    %v1983 = vadd.f32 0.0, %v1982
    %1984 = vmatmul.bf16.gmra.mxu0 %v1776
    %v1985 = vpop.f32.mrf.mxu0
    %v1986 = vadd.f32 0.0, %v1985
    %v1987 = vpop.f32.mrf.mxu0
    %v1988 = vadd.f32 0.0, %v1987
    %1989 = vmatmul.bf16.gmra.mxu0 %v1779
    %v1990 = vpop.f32.mrf.mxu0
    %v1991 = vadd.f32 0.0, %v1990
    %v1992 = vpop.f32.mrf.mxu0
    %v1993 = vadd.f32 0.0, %v1992
    %1994 = vmatmul.bf16.gmra.mxu0 %v1782
    %v1995 = vpop.f32.mrf.mxu0
    %v1996 = vadd.f32 0.0, %v1995
    %v1997 = vpop.f32.mrf.mxu0
    %v1998 = vadd.f32 0.0, %v1997
    %1999 = vmatmul.bf16.gmra.mxu0 %v1785
    %v2000 = vpop.f32.mrf.mxu0
    %v2001 = vadd.f32 0.0, %v2000
    %v2002 = vpop.f32.mrf.mxu0
    %v2003 = vadd.f32 0.0, %v2002
    %2004 = vmatmul.bf16.gmra.mxu0 %v1788
    %v2005 = vpop.f32.mrf.mxu0
    %v2006 = vadd.f32 0.0, %v2005
    %v2007 = vpop.f32.mrf.mxu0
    %v2008 = vadd.f32 0.0, %v2007
    %2009 = vmatmul.bf16.gmra.mxu0 %v1791
    %v2010 = vpop.f32.mrf.mxu0
    %v2011 = vadd.f32 0.0, %v2010
    %v2012 = vpop.f32.mrf.mxu0
    %v2013 = vadd.f32 0.0, %v2012
    %2014 = vmatmul.bf16.gmra.mxu0 %v1794
    %v2015 = vpop.f32.mrf.mxu0
    %v2016 = vadd.f32 0.0, %v2015
    %v2017 = vpop.f32.mrf.mxu0
    %v2018 = vadd.f32 0.0, %v2017
    %2019 = vmatmul.bf16.gmra.mxu0 %v1797
    %v2020 = vpop.f32.mrf.mxu0
    %v2021 = vadd.f32 0.0, %v2020
    %v2022 = vpop.f32.mrf.mxu0
    %v2023 = vadd.f32 0.0, %v2022
    %2024 = vmatmul.bf16.gmra.mxu0 %v1800
    %v2025 = vpop.f32.mrf.mxu0
    %v2026 = vadd.f32 0.0, %v2025
    %v2027 = vpop.f32.mrf.mxu0
    %v2028 = vadd.f32 0.0, %v2027
    %2029 = vmatmul.bf16.gmra.mxu0 %v1803
    %v2030 = vpop.f32.mrf.mxu0
    %v2031 = vadd.f32 0.0, %v2030
    %v2032 = vpop.f32.mrf.mxu0
    %v2033 = vadd.f32 0.0, %v2032
    %2034 = vmatmul.bf16.gmra.mxu0 %v1806
    %v2035 = vpop.f32.mrf.mxu0
    %v2036 = vadd.f32 0.0, %v2035
    %v2037 = vpop.f32.mrf.mxu0
    %v2038 = vadd.f32 0.0, %v2037
    %2039 = vdwg.mxu0
    %v2040 = vld [vmem:[#allocation3] sm:$0xff]
    %v2041 = vld [vmem:[#allocation3 + $0x8] sm:$0xff]
    %v2042 = vld [vmem:[#allocation3 + $0x10] sm:$0xff]
    %v2043 = vld [vmem:[#allocation3 + $0x18] sm:$0xff]
    %v2044 = vld [vmem:[#allocation3 + $0x20] sm:$0xff]
    %v2045 = vld [vmem:[#allocation3 + $0x28] sm:$0xff]
    %v2046 = vld [vmem:[#allocation3 + $0x30] sm:$0xff]
    %v2047 = vld [vmem:[#allocation3 + $0x38] sm:$0xff]
    %v2048 = vld [vmem:[#allocation3 + $0x40] sm:$0xff]
    %v2049 = vld [vmem:[#allocation3 + $0x48] sm:$0xff]
    %v2050 = vld [vmem:[#allocation3 + $0x50] sm:$0xff]
    %v2051 = vld [vmem:[#allocation3 + $0x58] sm:$0xff]
    %v2052 = vld [vmem:[#allocation3 + $0x60] sm:$0xff]
    %v2053 = vld [vmem:[#allocation3 + $0x68] sm:$0xff]
    %v2054 = vld [vmem:[#allocation3 + $0x70] sm:$0xff]
    %v2055 = vld [vmem:[#allocation3 + $0x78] sm:$0xff]
    %v2056 = vld [vmem:[#allocation3 + $0x80] sm:$0xff]
    %v2057 = vld [vmem:[#allocation3 + $0x88] sm:$0xff]
    %v2058 = vld [vmem:[#allocation3 + $0x90] sm:$0xff]
    %v2059 = vld [vmem:[#allocation3 + $0x98] sm:$0xff]
    %v2060 = vld [vmem:[#allocation3 + $0xa0] sm:$0xff]
    %v2061 = vld [vmem:[#allocation3 + $0xa8] sm:$0xff]
    %v2062 = vld [vmem:[#allocation3 + $0xb0] sm:$0xff]
    %v2063 = vld [vmem:[#allocation3 + $0xb8] sm:$0xff]
    %v2064 = vld [vmem:[#allocation3 + $0xc0] sm:$0xff]
    %v2065 = vld [vmem:[#allocation3 + $0xc8] sm:$0xff]
    %v2066 = vld [vmem:[#allocation3 + $0xd0] sm:$0xff]
    %v2067 = vld [vmem:[#allocation3 + $0xd8] sm:$0xff]
    %v2068 = vld [vmem:[#allocation3 + $0xe0] sm:$0xff]
    %v2069 = vld [vmem:[#allocation3 + $0xe8] sm:$0xff]
    %v2070 = vld [vmem:[#allocation3 + $0xf0] sm:$0xff]
    %v2071 = vld [vmem:[#allocation3 + $0xf8] sm:$0xff]
    %v2072 = vld [vmem:[#allocation3 + $0x100] sm:$0xff]
    %v2073 = vld [vmem:[#allocation3 + $0x108] sm:$0xff]
    %v2074 = vld [vmem:[#allocation3 + $0x110] sm:$0xff]
    %v2075 = vld [vmem:[#allocation3 + $0x118] sm:$0xff]
    %v2076 = vld [vmem:[#allocation3 + $0x120] sm:$0xff]
    %v2077 = vld [vmem:[#allocation3 + $0x128] sm:$0xff]
    %v2078 = vld [vmem:[#allocation3 + $0x130] sm:$0xff]
    %v2079 = vld [vmem:[#allocation3 + $0x138] sm:$0xff]
    %v2080 = vld [vmem:[#allocation3 + $0x140] sm:$0xff]
    %v2081 = vld [vmem:[#allocation3 + $0x148] sm:$0xff]
    %v2082 = vld [vmem:[#allocation3 + $0x150] sm:$0xff]
    %v2083 = vld [vmem:[#allocation3 + $0x158] sm:$0xff]
    %v2084 = vld [vmem:[#allocation3 + $0x160] sm:$0xff]
    %v2085 = vld [vmem:[#allocation3 + $0x168] sm:$0xff]
    %v2086 = vld [vmem:[#allocation3 + $0x170] sm:$0xff]
    %v2087 = vld [vmem:[#allocation3 + $0x178] sm:$0xff]
    %v2088 = vld [vmem:[#allocation3 + $0x180] sm:$0xff]
    %v2089 = vld [vmem:[#allocation3 + $0x188] sm:$0xff]
    %v2090 = vld [vmem:[#allocation3 + $0x190] sm:$0xff]
    %v2091 = vld [vmem:[#allocation3 + $0x198] sm:$0xff]
    %v2092 = vld [vmem:[#allocation3 + $0x1a0] sm:$0xff]
    %v2093 = vld [vmem:[#allocation3 + $0x1a8] sm:$0xff]
    %v2094 = vld [vmem:[#allocation3 + $0x1b0] sm:$0xff]
    %v2095 = vld [vmem:[#allocation3 + $0x1b8] sm:$0xff]
    %v2096 = vld [vmem:[#allocation3 + $0x1c0] sm:$0xff]
    %v2097 = vld [vmem:[#allocation3 + $0x1c8] sm:$0xff]
    %v2098 = vld [vmem:[#allocation3 + $0x1d0] sm:$0xff]
    %v2099 = vld [vmem:[#allocation3 + $0x1d8] sm:$0xff]
    %v2100 = vld [vmem:[#allocation3 + $0x1e0] sm:$0xff]
    %v2101 = vld [vmem:[#allocation3 + $0x1e8] sm:$0xff]
    %v2102 = vld [vmem:[#allocation3 + $0x1f0] sm:$0xff]
    %v2103 = vld [vmem:[#allocation3 + $0x1f8] sm:$0xff]
    %v2104 = vld [vmem:[#allocation3 + $0x200] sm:$0xff]
    %v2105 = vld [vmem:[#allocation3 + $0x208] sm:$0xff]
    %v2106 = vld [vmem:[#allocation3 + $0x210] sm:$0xff]
    %v2107 = vld [vmem:[#allocation3 + $0x218] sm:$0xff]
    %v2108 = vld [vmem:[#allocation3 + $0x220] sm:$0xff]
    %v2109 = vld [vmem:[#allocation3 + $0x228] sm:$0xff]
    %v2110 = vld [vmem:[#allocation3 + $0x230] sm:$0xff]
    %v2111 = vld [vmem:[#allocation3 + $0x238] sm:$0xff]
    %v2112 = vld [vmem:[#allocation3 + $0x240] sm:$0xff]
    %v2113 = vld [vmem:[#allocation3 + $0x248] sm:$0xff]
    %v2114 = vld [vmem:[#allocation3 + $0x250] sm:$0xff]
    %v2115 = vld [vmem:[#allocation3 + $0x258] sm:$0xff]
    %v2116 = vld [vmem:[#allocation3 + $0x260] sm:$0xff]
    %v2117 = vld [vmem:[#allocation3 + $0x268] sm:$0xff]
    %v2118 = vld [vmem:[#allocation3 + $0x270] sm:$0xff]
    %v2119 = vld [vmem:[#allocation3 + $0x278] sm:$0xff]
    %v2120 = vld [vmem:[#allocation3 + $0x280] sm:$0xff]
    %v2121 = vld [vmem:[#allocation3 + $0x288] sm:$0xff]
    %v2122 = vld [vmem:[#allocation3 + $0x290] sm:$0xff]
    %v2123 = vld [vmem:[#allocation3 + $0x298] sm:$0xff]
    %v2124 = vld [vmem:[#allocation3 + $0x2a0] sm:$0xff]
    %v2125 = vld [vmem:[#allocation3 + $0x2a8] sm:$0xff]
    %v2126 = vld [vmem:[#allocation3 + $0x2b0] sm:$0xff]
    %v2127 = vld [vmem:[#allocation3 + $0x2b8] sm:$0xff]
    %v2128 = vadd.f32 %v2040, %v1821
    %v2129 = vadd.f32 %v2041, %v1823
    %v2130 = vadd.f32 %v2042, %v1826
    %v2131 = vadd.f32 %v2043, %v1828
    %v2132 = vadd.f32 %v2044, %v1831
    %v2133 = vadd.f32 %v2045, %v1833
    %v2134 = vadd.f32 %v2046, %v1836
    %v2135 = vadd.f32 %v2047, %v1838
    %v2136 = vadd.f32 %v2048, %v1841
    %v2137 = vadd.f32 %v2049, %v1843
    %v2138 = vadd.f32 %v2050, %v1846
    %v2139 = vadd.f32 %v2051, %v1848
    %v2140 = vadd.f32 %v2052, %v1851
    %v2141 = vadd.f32 %v2053, %v1853
    %v2142 = vadd.f32 %v2054, %v1856
    %v2143 = vadd.f32 %v2055, %v1858
    %v2144 = vadd.f32 %v2056, %v1861
    %v2145 = vadd.f32 %v2057, %v1863
    %v2146 = vadd.f32 %v2058, %v1866
    %v2147 = vadd.f32 %v2059, %v1868
    %v2148 = vadd.f32 %v2060, %v1871
    %v2149 = vadd.f32 %v2061, %v1873
    %v2150 = vadd.f32 %v2062, %v1876
    %v2151 = vadd.f32 %v2063, %v1878
    %v2152 = vadd.f32 %v2064, %v1881
    %v2153 = vadd.f32 %v2065, %v1883
    %v2154 = vadd.f32 %v2066, %v1886
    %v2155 = vadd.f32 %v2067, %v1888
    %v2156 = vadd.f32 %v2068, %v1891
    %v2157 = vadd.f32 %v2069, %v1893
    %v2158 = vadd.f32 %v2070, %v1896
    %v2159 = vadd.f32 %v2071, %v1898
    %v2160 = vadd.f32 %v2072, %v1901
    %v2161 = vadd.f32 %v2073, %v1903
    %v2162 = vadd.f32 %v2074, %v1906
    %v2163 = vadd.f32 %v2075, %v1908
    %v2164 = vadd.f32 %v2076, %v1911
    %v2165 = vadd.f32 %v2077, %v1913
    %v2166 = vadd.f32 %v2078, %v1916
    %v2167 = vadd.f32 %v2079, %v1918
    %v2168 = vadd.f32 %v2080, %v1921
    %v2169 = vadd.f32 %v2081, %v1923
    %v2170 = vadd.f32 %v2082, %v1926
    %v2171 = vadd.f32 %v2083, %v1928
    %v2172 = vadd.f32 %v2084, %v1931
    %v2173 = vadd.f32 %v2085, %v1933
    %v2174 = vadd.f32 %v2086, %v1936
    %v2175 = vadd.f32 %v2087, %v1938
    %v2176 = vadd.f32 %v2088, %v1941
    %v2177 = vadd.f32 %v2089, %v1943
    %v2178 = vadd.f32 %v2090, %v1946
    %v2179 = vadd.f32 %v2091, %v1948
    %v2180 = vadd.f32 %v2092, %v1951
    %v2181 = vadd.f32 %v2093, %v1953
    %v2182 = vadd.f32 %v2094, %v1956
    %v2183 = vadd.f32 %v2095, %v1958
    %v2184 = vadd.f32 %v2096, %v1961
    %v2185 = vadd.f32 %v2097, %v1963
    %v2186 = vadd.f32 %v2098, %v1966
    %v2187 = vadd.f32 %v2099, %v1968
    %v2188 = vadd.f32 %v2100, %v1971
    %v2189 = vadd.f32 %v2101, %v1973
    %v2190 = vadd.f32 %v2102, %v1976
    %v2191 = vadd.f32 %v2103, %v1978
    %v2192 = vadd.f32 %v2104, %v1981
    %v2193 = vadd.f32 %v2105, %v1983
    %v2194 = vadd.f32 %v2106, %v1986
    %v2195 = vadd.f32 %v2107, %v1988
    %v2196 = vadd.f32 %v2108, %v1991
    %v2197 = vadd.f32 %v2109, %v1993
    %v2198 = vadd.f32 %v2110, %v1996
    %v2199 = vadd.f32 %v2111, %v1998
    %v2200 = vadd.f32 %v2112, %v2001
    %v2201 = vadd.f32 %v2113, %v2003
    %v2202 = vadd.f32 %v2114, %v2006
    %v2203 = vadd.f32 %v2115, %v2008
    %v2204 = vadd.f32 %v2116, %v2011
    %v2205 = vadd.f32 %v2117, %v2013
    %v2206 = vadd.f32 %v2118, %v2016
    %v2207 = vadd.f32 %v2119, %v2018
    %v2208 = vadd.f32 %v2120, %v2021
    %v2209 = vadd.f32 %v2121, %v2023
    %v2210 = vadd.f32 %v2122, %v2026
    %v2211 = vadd.f32 %v2123, %v2028
    %v2212 = vadd.f32 %v2124, %v2031
    %v2213 = vadd.f32 %v2125, %v2033
    %v2214 = vadd.f32 %v2126, %v2036
    %v2215 = vadd.f32 %v2127, %v2038
    %2216 = vst [vmem:[#allocation3] sm:$0xff] %v2128
    %2217 = vst [vmem:[#allocation3 + $0x8] sm:$0xff] %v2129
    %2218 = vst [vmem:[#allocation3 + $0x10] sm:$0xff] %v2130
    %2219 = vst [vmem:[#allocation3 + $0x18] sm:$0xff] %v2131
    %2220 = vst [vmem:[#allocation3 + $0x20] sm:$0xff] %v2132
    %2221 = vst [vmem:[#allocation3 + $0x28] sm:$0xff] %v2133
    %2222 = vst [vmem:[#allocation3 + $0x30] sm:$0xff] %v2134
    %2223 = vst [vmem:[#allocation3 + $0x38] sm:$0xff] %v2135
    %2224 = vst [vmem:[#allocation3 + $0x40] sm:$0xff] %v2136
    %2225 = vst [vmem:[#allocation3 + $0x48] sm:$0xff] %v2137
    %2226 = vst [vmem:[#allocation3 + $0x50] sm:$0xff] %v2138
    %2227 = vst [vmem:[#allocation3 + $0x58] sm:$0xff] %v2139
    %2228 = vst [vmem:[#allocation3 + $0x60] sm:$0xff] %v2140
    %2229 = vst [vmem:[#allocation3 + $0x68] sm:$0xff] %v2141
    %2230 = vst [vmem:[#allocation3 + $0x70] sm:$0xff] %v2142
    %2231 = vst [vmem:[#allocation3 + $0x78] sm:$0xff] %v2143
    %2232 = vst [vmem:[#allocation3 + $0x80] sm:$0xff] %v2144
    %2233 = vst [vmem:[#allocation3 + $0x88] sm:$0xff] %v2145
    %2234 = vst [vmem:[#allocation3 + $0x90] sm:$0xff] %v2146
    %2235 = vst [vmem:[#allocation3 + $0x98] sm:$0xff] %v2147
    %2236 = vst [vmem:[#allocation3 + $0xa0] sm:$0xff] %v2148
    %2237 = vst [vmem:[#allocation3 + $0xa8] sm:$0xff] %v2149
    %2238 = vst [vmem:[#allocation3 + $0xb0] sm:$0xff] %v2150
    %2239 = vst [vmem:[#allocation3 + $0xb8] sm:$0xff] %v2151
    %2240 = vst [vmem:[#allocation3 + $0xc0] sm:$0xff] %v2152
    %2241 = vst [vmem:[#allocation3 + $0xc8] sm:$0xff] %v2153
    %2242 = vst [vmem:[#allocation3 + $0xd0] sm:$0xff] %v2154
    %2243 = vst [vmem:[#allocation3 + $0xd8] sm:$0xff] %v2155
    %2244 = vst [vmem:[#allocation3 + $0xe0] sm:$0xff] %v2156
    %2245 = vst [vmem:[#allocation3 + $0xe8] sm:$0xff] %v2157
    %2246 = vst [vmem:[#allocation3 + $0xf0] sm:$0xff] %v2158
    %2247 = vst [vmem:[#allocation3 + $0xf8] sm:$0xff] %v2159
    %2248 = vst [vmem:[#allocation3 + $0x100] sm:$0xff] %v2160
    %2249 = vst [vmem:[#allocation3 + $0x108] sm:$0xff] %v2161
    %2250 = vst [vmem:[#allocation3 + $0x110] sm:$0xff] %v2162
    %2251 = vst [vmem:[#allocation3 + $0x118] sm:$0xff] %v2163
    %2252 = vst [vmem:[#allocation3 + $0x120] sm:$0xff] %v2164
    %2253 = vst [vmem:[#allocation3 + $0x128] sm:$0xff] %v2165
    %2254 = vst [vmem:[#allocation3 + $0x130] sm:$0xff] %v2166
    %2255 = vst [vmem:[#allocation3 + $0x138] sm:$0xff] %v2167
    %2256 = vst [vmem:[#allocation3 + $0x140] sm:$0xff] %v2168
    %2257 = vst [vmem:[#allocation3 + $0x148] sm:$0xff] %v2169
    %2258 = vst [vmem:[#allocation3 + $0x150] sm:$0xff] %v2170
    %2259 = vst [vmem:[#allocation3 + $0x158] sm:$0xff] %v2171
    %2260 = vst [vmem:[#allocation3 + $0x160] sm:$0xff] %v2172
    %2261 = vst [vmem:[#allocation3 + $0x168] sm:$0xff] %v2173
    %2262 = vst [vmem:[#allocation3 + $0x170] sm:$0xff] %v2174
    %2263 = vst [vmem:[#allocation3 + $0x178] sm:$0xff] %v2175
    %2264 = vst [vmem:[#allocation3 + $0x180] sm:$0xff] %v2176
    %2265 = vst [vmem:[#allocation3 + $0x188] sm:$0xff] %v2177
    %2266 = vst [vmem:[#allocation3 + $0x190] sm:$0xff] %v2178
    %2267 = vst [vmem:[#allocation3 + $0x198] sm:$0xff] %v2179
    %2268 = vst [vmem:[#allocation3 + $0x1a0] sm:$0xff] %v2180
    %2269 = vst [vmem:[#allocation3 + $0x1a8] sm:$0xff] %v2181
    %2270 = vst [vmem:[#allocation3 + $0x1b0] sm:$0xff] %v2182
    %2271 = vst [vmem:[#allocation3 + $0x1b8] sm:$0xff] %v2183
    %2272 = vst [vmem:[#allocation3 + $0x1c0] sm:$0xff] %v2184
    %2273 = vst [vmem:[#allocation3 + $0x1c8] sm:$0xff] %v2185
    %2274 = vst [vmem:[#allocation3 + $0x1d0] sm:$0xff] %v2186
    %2275 = vst [vmem:[#allocation3 + $0x1d8] sm:$0xff] %v2187
    %2276 = vst [vmem:[#allocation3 + $0x1e0] sm:$0xff] %v2188
    %2277 = vst [vmem:[#allocation3 + $0x1e8] sm:$0xff] %v2189
    %2278 = vst [vmem:[#allocation3 + $0x1f0] sm:$0xff] %v2190
    %2279 = vst [vmem:[#allocation3 + $0x1f8] sm:$0xff] %v2191
    %2280 = vst [vmem:[#allocation3 + $0x200] sm:$0xff] %v2192
    %2281 = vst [vmem:[#allocation3 + $0x208] sm:$0xff] %v2193
    %2282 = vst [vmem:[#allocation3 + $0x210] sm:$0xff] %v2194
    %2283 = vst [vmem:[#allocation3 + $0x218] sm:$0xff] %v2195
    %2284 = vst [vmem:[#allocation3 + $0x220] sm:$0xff] %v2196
    %2285 = vst [vmem:[#allocation3 + $0x228] sm:$0xff] %v2197
    %2286 = vst [vmem:[#allocation3 + $0x230] sm:$0xff] %v2198
    %2287 = vst [vmem:[#allocation3 + $0x238] sm:$0xff] %v2199
    %2288 = vst [vmem:[#allocation3 + $0x240] sm:$0xff] %v2200
    %2289 = vst [vmem:[#allocation3 + $0x248] sm:$0xff] %v2201
    %2290 = vst [vmem:[#allocation3 + $0x250] sm:$0xff] %v2202
    %2291 = vst [vmem:[#allocation3 + $0x258] sm:$0xff] %v2203
    %2292 = vst [vmem:[#allocation3 + $0x260] sm:$0xff] %v2204
    %2293 = vst [vmem:[#allocation3 + $0x268] sm:$0xff] %v2205
    %2294 = vst [vmem:[#allocation3 + $0x270] sm:$0xff] %v2206
    %2295 = vst [vmem:[#allocation3 + $0x278] sm:$0xff] %v2207
    %2296 = vst [vmem:[#allocation3 + $0x280] sm:$0xff] %v2208
    %2297 = vst [vmem:[#allocation3 + $0x288] sm:$0xff] %v2209
    %2298 = vst [vmem:[#allocation3 + $0x290] sm:$0xff] %v2210
    %2299 = vst [vmem:[#allocation3 + $0x298] sm:$0xff] %v2211
    %2300 = vst [vmem:[#allocation3 + $0x2a0] sm:$0xff] %v2212
    %2301 = vst [vmem:[#allocation3 + $0x2a8] sm:$0xff] %v2213
    %2302 = vst [vmem:[#allocation3 + $0x2b0] sm:$0xff] %v2214
    %2303 = vst [vmem:[#allocation3 + $0x2b8] sm:$0xff] %v2215
    %v2304 = vld [vmem:[#allocation2] sm:$0xe]
    %v2305 = vld [vmem:[#allocation2 + $0x4] sm:$0xf]
    %v2306 = vld [vmem:[#allocation2 + $0x8] sm:$0xf]
    %v2307 = vld [vmem:[#allocation2 + $0xc] sm:$0xf]
    %v2308 = vld [vmem:[#allocation2 + $0x10] sm:$0xf]
    %v2309 = vld [vmem:[#allocation2 + $0x14] sm:$0xf]
    %v2310 = vld [vmem:[#allocation2 + $0x18] sm:$0xf]
    %v2311 = vld [vmem:[#allocation2 + $0x1c] sm:$0xf]
    %v2312 = vld [vmem:[#allocation2 + $0x20] sm:$0xf]
    %v2313 = vld [vmem:[#allocation2 + $0x24] sm:$0xf]
    %v2314 = vld [vmem:[#allocation2 + $0x28] sm:$0xf]
    %v2315 = vld [vmem:[#allocation2 + $0x2c] sm:$0xf]
    %v2316 = vld [vmem:[#allocation2 + $0x30] sm:$0xf]
    %v2317 = vld [vmem:[#allocation2 + $0x34] sm:$0xf]
    %v2318 = vld [vmem:[#allocation2 + $0x38] sm:$0xf]
    %v2319 = vld [vmem:[#allocation2 + $0x3c] sm:$0xf]
    %v2320 = vld [vmem:[#allocation2 + $0x40] sm:$0xf]
    %v2321 = vld [vmem:[#allocation2 + $0x44] sm:$0xf]
    %v2322 = vld [vmem:[#allocation2 + $0x48] sm:$0xf]
    %v2323 = vld [vmem:[#allocation2 + $0x4c] sm:$0xf]
    %v2324 = vld [vmem:[#allocation2 + $0x50] sm:$0xf]
    %v2325 = vld [vmem:[#allocation2 + $0x54] sm:$0xf]
    %v2326 = vld [vmem:[#allocation2 + $0x58] sm:$0xf]
    %v2327 = vld [vmem:[#allocation2 + $0x5c] sm:$0xf]
    %v2328 = vld [vmem:[#allocation2 + $0x60] sm:$0xf]
    %v2329 = vld [vmem:[#allocation2 + $0x64] sm:$0xf]
    %v2330 = vld [vmem:[#allocation2 + $0x68] sm:$0xf]
    %v2331 = vld [vmem:[#allocation2 + $0x6c] sm:$0xf]
    %v2332 = vld [vmem:[#allocation2 + $0x70] sm:$0xf]
    %v2333 = vld [vmem:[#allocation2 + $0x74] sm:$0xf]
    %v2334 = vld [vmem:[#allocation2 + $0x78] sm:$0xf]
    %v2335 = vld [vmem:[#allocation2 + $0x7c] sm:$0xf]
    %v2336 = vld [vmem:[#allocation2 + $0x80] sm:$0xf]
    %v2337 = vld [vmem:[#allocation2 + $0x84] sm:$0xf]
    %v2338 = vld [vmem:[#allocation2 + $0x88] sm:$0xf]
    %v2339 = vld [vmem:[#allocation2 + $0x8c] sm:$0xf]
    %v2340 = vld [vmem:[#allocation2 + $0x90] sm:$0xf]
    %v2341 = vld [vmem:[#allocation2 + $0x94] sm:$0xf]
    %v2342 = vld [vmem:[#allocation2 + $0x98] sm:$0xf]
    %v2343 = vld [vmem:[#allocation2 + $0x9c] sm:$0xf]
    %v2344 = vld [vmem:[#allocation2 + $0xa0] sm:$0xf]
    %v2345 = vld [vmem:[#allocation2 + $0xa4] sm:$0xf]
    %v2346 = vld [vmem:[#allocation2 + $0xa8] sm:$0xf]
    %v2347 = vld [vmem:[#allocation2 + $0xac] sm:$0xf]
    %v2348 = vld [vmem:[#allocation2 + $0xb0] sm:$0xf]
    %v2349 = vld [vmem:[#allocation2 + $0xb4] sm:$0xf]
    %v2350 = vld [vmem:[#allocation2 + $0xb8] sm:$0xf]
    %v2351 = vld [vmem:[#allocation2 + $0xbc] sm:$0xf]
    %v2352 = vld [vmem:[#allocation2 + $0xc0] sm:$0xf]
    %v2353 = vld [vmem:[#allocation2 + $0xc4] sm:$0xf]
    %v2354 = vld [vmem:[#allocation2 + $0xc8] sm:$0xf]
    %v2355 = vld [vmem:[#allocation2 + $0xcc] sm:$0xf]
    %v2356 = vld [vmem:[#allocation2 + $0xd0] sm:$0xf]
    %v2357 = vld [vmem:[#allocation2 + $0xd4] sm:$0xf]
    %v2358 = vld [vmem:[#allocation2 + $0xd8] sm:$0xf]
    %v2359 = vld [vmem:[#allocation2 + $0xdc] sm:$0xf]
    %v2360 = vld [vmem:[#allocation2 + $0xe0] sm:$0xf]
    %v2361 = vld [vmem:[#allocation2 + $0xe4] sm:$0xf]
    %v2362 = vld [vmem:[#allocation2 + $0xe8] sm:$0xf]
    %v2363 = vld [vmem:[#allocation2 + $0xec] sm:$0xf]
    %v2364 = vld [vmem:[#allocation2 + $0xf0] sm:$0xf]
    %v2365 = vld [vmem:[#allocation2 + $0xf4] sm:$0xf]
    %v2366 = vld [vmem:[#allocation2 + $0xf8] sm:$0xf]
    %v2367 = vld [vmem:[#allocation2 + $0xfc] sm:$0xf]
    %v2368 = vld [vmem:[#allocation2 + $0x100] sm:$0xf]
    %v2369 = vld [vmem:[#allocation2 + $0x104] sm:$0xf]
    %v2370 = vld [vmem:[#allocation2 + $0x108] sm:$0xf]
    %v2371 = vld [vmem:[#allocation2 + $0x10c] sm:$0xf]
    %v2372 = vld [vmem:[#allocation2 + $0x110] sm:$0xf]
    %v2373 = vld [vmem:[#allocation2 + $0x114] sm:$0xf]
    %v2374 = vld [vmem:[#allocation2 + $0x118] sm:$0xf]
    %v2375 = vld [vmem:[#allocation2 + $0x11c] sm:$0xf]
    %v2376 = vld [vmem:[#allocation2 + $0x120] sm:$0xf]
    %v2377 = vld [vmem:[#allocation2 + $0x124] sm:$0xf]
    %v2378 = vld [vmem:[#allocation2 + $0x128] sm:$0xf]
    %v2379 = vld [vmem:[#allocation2 + $0x12c] sm:$0xf]
    %v2380 = vld [vmem:[#allocation2 + $0x130] sm:$0xf]
    %v2381 = vld [vmem:[#allocation2 + $0x134] sm:$0xf]
    %v2382 = vld [vmem:[#allocation2 + $0x138] sm:$0xf]
    %v2383 = vld [vmem:[#allocation2 + $0x13c] sm:$0xf]
    %v2384 = vld [vmem:[#allocation2 + $0x140] sm:$0xf]
    %v2385 = vld [vmem:[#allocation2 + $0x144] sm:$0xf]
    %v2386 = vld [vmem:[#allocation2 + $0x148] sm:$0xf]
    %v2387 = vld [vmem:[#allocation2 + $0x14c] sm:$0xf]
    %v2388 = vld [vmem:[#allocation2 + $0x150] sm:$0xf]
    %v2389 = vld [vmem:[#allocation2 + $0x154] sm:$0xf]
    %v2390 = vld [vmem:[#allocation2 + $0x158] sm:$0xf]
    %v2391 = vld [vmem:[#allocation2 + $0x15c] sm:$0xf]
    %v2392 = vld [vmem:[#allocation2 + $0x160] sm:$0x1]
    %s2393 = scalar_lea.vmem %s2, 4
    %v2394 = vld [vmem:[%s2393] sm:$0x3]
    %v2484 = vunpack.c.l.b16 %v2304
    %v2485 = vunpack.c.l.b16 %v2305
    %v2486 = vunpack.c.l.b16 %v2306
    %v2487 = vunpack.c.l.b16 %v2307
    %v2488 = vunpack.c.l.b16 %v2308
    %v2489 = vunpack.c.l.b16 %v2309
    %v2490 = vunpack.c.l.b16 %v2310
    %v2491 = vunpack.c.l.b16 %v2311
    %v2492 = vunpack.c.l.b16 %v2312
    %v2493 = vunpack.c.l.b16 %v2313
    %v2494 = vunpack.c.l.b16 %v2314
    %v2495 = vunpack.c.l.b16 %v2315
    %v2496 = vunpack.c.l.b16 %v2316
    %v2497 = vunpack.c.l.b16 %v2317
    %v2498 = vunpack.c.l.b16 %v2318
    %v2499 = vunpack.c.l.b16 %v2319
    %v2500 = vunpack.c.l.b16 %v2320
    %v2501 = vunpack.c.l.b16 %v2321
    %v2502 = vunpack.c.l.b16 %v2322
    %v2503 = vunpack.c.l.b16 %v2323
    %v2504 = vunpack.c.l.b16 %v2324
    %v2505 = vunpack.c.l.b16 %v2325
    %v2506 = vunpack.c.l.b16 %v2326
    %v2507 = vunpack.c.l.b16 %v2327
    %v2508 = vunpack.c.l.b16 %v2328
    %v2509 = vunpack.c.l.b16 %v2329
    %v2510 = vunpack.c.l.b16 %v2330
    %v2511 = vunpack.c.l.b16 %v2331
    %v2512 = vunpack.c.l.b16 %v2332
    %v2513 = vunpack.c.l.b16 %v2333
    %v2514 = vunpack.c.l.b16 %v2334
    %v2515 = vunpack.c.l.b16 %v2335
    %v2516 = vunpack.c.l.b16 %v2336
    %v2517 = vunpack.c.l.b16 %v2337
    %v2518 = vunpack.c.l.b16 %v2338
    %v2519 = vunpack.c.l.b16 %v2339
    %v2520 = vunpack.c.l.b16 %v2340
    %v2521 = vunpack.c.l.b16 %v2341
    %v2522 = vunpack.c.l.b16 %v2342
    %v2523 = vunpack.c.l.b16 %v2343
    %v2524 = vunpack.c.l.b16 %v2344
    %v2525 = vunpack.c.l.b16 %v2345
    %v2526 = vunpack.c.l.b16 %v2346
    %v2527 = vunpack.c.l.b16 %v2347
    %v2528 = vunpack.c.l.b16 %v2348
    %v2529 = vunpack.c.l.b16 %v2349
    %v2530 = vunpack.c.l.b16 %v2350
    %v2531 = vunpack.c.l.b16 %v2351
    %v2532 = vunpack.c.l.b16 %v2352
    %v2533 = vunpack.c.l.b16 %v2353
    %v2534 = vunpack.c.l.b16 %v2354
    %v2535 = vunpack.c.l.b16 %v2355
    %v2536 = vunpack.c.l.b16 %v2356
    %v2537 = vunpack.c.l.b16 %v2357
    %v2538 = vunpack.c.l.b16 %v2358
    %v2539 = vunpack.c.l.b16 %v2359
    %v2540 = vunpack.c.l.b16 %v2360
    %v2541 = vunpack.c.l.b16 %v2361
    %v2542 = vunpack.c.l.b16 %v2362
    %v2543 = vunpack.c.l.b16 %v2363
    %v2544 = vunpack.c.l.b16 %v2364
    %v2545 = vunpack.c.l.b16 %v2365
    %v2546 = vunpack.c.l.b16 %v2366
    %v2547 = vunpack.c.l.b16 %v2367
    %v2548 = vunpack.c.l.b16 %v2368
    %v2549 = vunpack.c.l.b16 %v2369
    %v2550 = vunpack.c.l.b16 %v2370
    %v2551 = vunpack.c.l.b16 %v2371
    %v2552 = vunpack.c.l.b16 %v2372
    %v2553 = vunpack.c.l.b16 %v2373
    %v2554 = vunpack.c.l.b16 %v2374
    %v2555 = vunpack.c.l.b16 %v2375
    %v2556 = vunpack.c.l.b16 %v2376
    %v2557 = vunpack.c.l.b16 %v2377
    %v2558 = vunpack.c.l.b16 %v2378
    %v2559 = vunpack.c.l.b16 %v2379
    %v2560 = vunpack.c.l.b16 %v2380
    %v2561 = vunpack.c.l.b16 %v2381
    %v2562 = vunpack.c.l.b16 %v2382
    %v2563 = vunpack.c.l.b16 %v2383
    %v2564 = vunpack.c.l.b16 %v2384
    %v2565 = vunpack.c.l.b16 %v2385
    %v2566 = vunpack.c.l.b16 %v2386
    %v2567 = vunpack.c.l.b16 %v2387
    %v2568 = vunpack.c.l.b16 %v2388
    %v2569 = vunpack.c.l.b16 %v2389
    %v2570 = vunpack.c.l.b16 %v2390
    %v2571 = vunpack.c.l.b16 %v2391
    %v2572 = vunpack.c.l.b16 %v2392
    %v2573 = vpack.c.b16 %v2485, %v2484
    %v2574 = vpack.c.b16 %v2487, %v2486
    %v2575 = vpack.c.b16 %v2489, %v2488
    %v2576 = vpack.c.b16 %v2491, %v2490
    %v2577 = vpack.c.b16 %v2493, %v2492
    %v2578 = vpack.c.b16 %v2495, %v2494
    %v2579 = vpack.c.b16 %v2497, %v2496
    %v2580 = vpack.c.b16 %v2499, %v2498
    %v2581 = vpack.c.b16 %v2501, %v2500
    %v2582 = vpack.c.b16 %v2503, %v2502
    %v2583 = vpack.c.b16 %v2505, %v2504
    %v2584 = vpack.c.b16 %v2507, %v2506
    %v2585 = vpack.c.b16 %v2509, %v2508
    %v2586 = vpack.c.b16 %v2511, %v2510
    %v2587 = vpack.c.b16 %v2513, %v2512
    %v2588 = vpack.c.b16 %v2515, %v2514
    %v2589 = vpack.c.b16 %v2517, %v2516
    %v2590 = vpack.c.b16 %v2519, %v2518
    %v2591 = vpack.c.b16 %v2521, %v2520
    %v2592 = vpack.c.b16 %v2523, %v2522
    %v2593 = vpack.c.b16 %v2525, %v2524
    %v2594 = vpack.c.b16 %v2527, %v2526
    %v2595 = vpack.c.b16 %v2529, %v2528
    %v2596 = vpack.c.b16 %v2531, %v2530
    %v2597 = vpack.c.b16 %v2533, %v2532
    %v2598 = vpack.c.b16 %v2535, %v2534
    %v2599 = vpack.c.b16 %v2537, %v2536
    %v2600 = vpack.c.b16 %v2539, %v2538
    %v2601 = vpack.c.b16 %v2541, %v2540
    %v2602 = vpack.c.b16 %v2543, %v2542
    %v2603 = vpack.c.b16 %v2545, %v2544
    %v2604 = vpack.c.b16 %v2547, %v2546
    %v2605 = vpack.c.b16 %v2549, %v2548
    %v2606 = vpack.c.b16 %v2551, %v2550
    %v2607 = vpack.c.b16 %v2553, %v2552
    %v2608 = vpack.c.b16 %v2555, %v2554
    %v2609 = vpack.c.b16 %v2557, %v2556
    %v2610 = vpack.c.b16 %v2559, %v2558
    %v2611 = vpack.c.b16 %v2561, %v2560
    %v2612 = vpack.c.b16 %v2563, %v2562
    %v2613 = vpack.c.b16 %v2565, %v2564
    %v2614 = vpack.c.b16 %v2567, %v2566
    %v2615 = vpack.c.b16 %v2569, %v2568
    %v2616 = vpack.c.b16 %v2571, %v2570
    %v2617 = vpack.c.b16 %v2572, %v2572
    %vm2618 = vcmask 1046528
    %v2619 = vrot.slane %v2573, 1
    %v2620 = vrot.slane %v2574, 1
    %v2621 = vsel %vm2618, %v2619, %v2620
    %v2622 = vrot.slane %v2575, 1
    %v2623 = vsel %vm2618, %v2620, %v2622
    %v2624 = vrot.slane %v2576, 1
    %v2625 = vsel %vm2618, %v2622, %v2624
    %v2626 = vrot.slane %v2577, 1
    %v2627 = vsel %vm2618, %v2624, %v2626
    %v2628 = vrot.slane %v2578, 1
    %v2629 = vsel %vm2618, %v2626, %v2628
    %v2630 = vrot.slane %v2579, 1
    %v2631 = vsel %vm2618, %v2628, %v2630
    %v2632 = vrot.slane %v2580, 1
    %v2633 = vsel %vm2618, %v2630, %v2632
    %v2634 = vrot.slane %v2581, 1
    %v2635 = vsel %vm2618, %v2632, %v2634
    %v2636 = vrot.slane %v2582, 1
    %v2637 = vsel %vm2618, %v2634, %v2636
    %v2638 = vrot.slane %v2583, 1
    %v2639 = vsel %vm2618, %v2636, %v2638
    %v2640 = vrot.slane %v2584, 1
    %v2641 = vsel %vm2618, %v2638, %v2640
    %v2642 = vrot.slane %v2585, 1
    %v2643 = vsel %vm2618, %v2640, %v2642
    %v2644 = vrot.slane %v2586, 1
    %v2645 = vsel %vm2618, %v2642, %v2644
    %v2646 = vrot.slane %v2587, 1
    %v2647 = vsel %vm2618, %v2644, %v2646
    %v2648 = vrot.slane %v2588, 1
    %v2649 = vsel %vm2618, %v2646, %v2648
    %v2650 = vrot.slane %v2589, 1
    %v2651 = vsel %vm2618, %v2648, %v2650
    %v2652 = vrot.slane %v2590, 1
    %v2653 = vsel %vm2618, %v2650, %v2652
    %v2654 = vrot.slane %v2591, 1
    %v2655 = vsel %vm2618, %v2652, %v2654
    %v2656 = vrot.slane %v2592, 1
    %v2657 = vsel %vm2618, %v2654, %v2656
    %v2658 = vrot.slane %v2593, 1
    %v2659 = vsel %vm2618, %v2656, %v2658
    %v2660 = vrot.slane %v2594, 1
    %v2661 = vsel %vm2618, %v2658, %v2660
    %v2662 = vrot.slane %v2595, 1
    %v2663 = vsel %vm2618, %v2660, %v2662
    %v2664 = vrot.slane %v2596, 1
    %v2665 = vsel %vm2618, %v2662, %v2664
    %v2666 = vrot.slane %v2597, 1
    %v2667 = vsel %vm2618, %v2664, %v2666
    %v2668 = vrot.slane %v2598, 1
    %v2669 = vsel %vm2618, %v2666, %v2668
    %v2670 = vrot.slane %v2599, 1
    %v2671 = vsel %vm2618, %v2668, %v2670
    %v2672 = vrot.slane %v2600, 1
    %v2673 = vsel %vm2618, %v2670, %v2672
    %v2674 = vrot.slane %v2601, 1
    %v2675 = vsel %vm2618, %v2672, %v2674
    %v2676 = vrot.slane %v2602, 1
    %v2677 = vsel %vm2618, %v2674, %v2676
    %v2678 = vrot.slane %v2603, 1
    %v2679 = vsel %vm2618, %v2676, %v2678
    %v2680 = vrot.slane %v2604, 1
    %v2681 = vsel %vm2618, %v2678, %v2680
    %v2682 = vrot.slane %v2605, 1
    %v2683 = vsel %vm2618, %v2680, %v2682
    %v2684 = vrot.slane %v2606, 1
    %v2685 = vsel %vm2618, %v2682, %v2684
    %v2686 = vrot.slane %v2607, 1
    %v2687 = vsel %vm2618, %v2684, %v2686
    %v2688 = vrot.slane %v2608, 1
    %v2689 = vsel %vm2618, %v2686, %v2688
    %v2690 = vrot.slane %v2609, 1
    %v2691 = vsel %vm2618, %v2688, %v2690
    %v2692 = vrot.slane %v2610, 1
    %v2693 = vsel %vm2618, %v2690, %v2692
    %v2694 = vrot.slane %v2611, 1
    %v2695 = vsel %vm2618, %v2692, %v2694
    %v2696 = vrot.slane %v2612, 1
    %v2697 = vsel %vm2618, %v2694, %v2696
    %v2698 = vrot.slane %v2613, 1
    %v2699 = vsel %vm2618, %v2696, %v2698
    %v2700 = vrot.slane %v2614, 1
    %v2701 = vsel %vm2618, %v2698, %v2700
    %v2702 = vrot.slane %v2615, 1
    %v2703 = vsel %vm2618, %v2700, %v2702
    %v2704 = vrot.slane %v2616, 1
    %v2705 = vsel %vm2618, %v2702, %v2704
    %v2706 = vrot.slane %v2617, 1
    %v2707 = vsel %vm2618, %v2704, %v2706
    %v2709 = vsel %vm551, %v2621, 0
    %v2712 = vsel %vm551, %v2623, 0
    %v2715 = vsel %vm551, %v2625, 0
    %v2718 = vsel %vm551, %v2627, 0
    %v2721 = vsel %vm551, %v2629, 0
    %v2724 = vsel %vm551, %v2631, 0
    %v2727 = vsel %vm551, %v2633, 0
    %v2730 = vsel %vm551, %v2635, 0
    %v2733 = vsel %vm551, %v2637, 0
    %v2736 = vsel %vm551, %v2639, 0
    %v2739 = vsel %vm551, %v2641, 0
    %v2742 = vsel %vm551, %v2643, 0
    %v2745 = vsel %vm551, %v2645, 0
    %v2748 = vsel %vm551, %v2647, 0
    %v2751 = vsel %vm551, %v2649, 0
    %v2754 = vsel %vm551, %v2651, 0
    %v2757 = vsel %vm551, %v2653, 0
    %v2760 = vsel %vm551, %v2655, 0
    %v2763 = vsel %vm551, %v2657, 0
    %v2766 = vsel %vm551, %v2659, 0
    %v2769 = vsel %vm551, %v2661, 0
    %v2772 = vsel %vm551, %v2663, 0
    %v2775 = vsel %vm551, %v2665, 0
    %v2778 = vsel %vm551, %v2667, 0
    %v2781 = vsel %vm551, %v2669, 0
    %v2784 = vsel %vm551, %v2671, 0
    %v2787 = vsel %vm551, %v2673, 0
    %v2790 = vsel %vm551, %v2675, 0
    %v2793 = vsel %vm551, %v2677, 0
    %v2796 = vsel %vm551, %v2679, 0
    %v2799 = vsel %vm551, %v2681, 0
    %v2802 = vsel %vm551, %v2683, 0
    %v2805 = vsel %vm551, %v2685, 0
    %v2808 = vsel %vm551, %v2687, 0
    %v2811 = vsel %vm551, %v2689, 0
    %v2814 = vsel %vm551, %v2691, 0
    %v2817 = vsel %vm551, %v2693, 0
    %v2820 = vsel %vm551, %v2695, 0
    %v2823 = vsel %vm551, %v2697, 0
    %v2826 = vsel %vm551, %v2699, 0
    %v2829 = vsel %vm551, %v2701, 0
    %v2832 = vsel %vm551, %v2703, 0
    %v2835 = vsel %vm551, %v2705, 0
    %v2838 = vsel %vm551, %v2707, 0
    %v2841 = vsel %vm684, %v2394, 0
    %2843 = vmatpush.bf16.msra.mxu0 0
    %2844 = vmatpush.bf16.msra.mxu0 0
    %2845 = vmatpush.bf16.msra.mxu0 0
    %2846 = vmatpush.bf16.msra.mxu0 0
    %2847 = vmatpush.bf16.msra.mxu0 0
    %2848 = vmatpush.bf16.msra.mxu0 0
    %2849 = vmatpush.bf16.msra.mxu0 0
    %2850 = vmatpush.bf16.msra.mxu0 %v2841
    %2851 = vmatmul.bf16.gmra.mxu0 %v2709
    %v2852 = vpop.f32.mrf.mxu0
    %v2853 = vadd.f32 0.0, %v2852
    %v2854 = vpop.f32.mrf.mxu0
    %v2855 = vadd.f32 0.0, %v2854
    %2856 = vmatmul.bf16.gmra.mxu0 %v2712
    %v2857 = vpop.f32.mrf.mxu0
    %v2858 = vadd.f32 0.0, %v2857
    %v2859 = vpop.f32.mrf.mxu0
    %v2860 = vadd.f32 0.0, %v2859
    %2861 = vmatmul.bf16.gmra.mxu0 %v2715
    %v2862 = vpop.f32.mrf.mxu0
    %v2863 = vadd.f32 0.0, %v2862
    %v2864 = vpop.f32.mrf.mxu0
    %v2865 = vadd.f32 0.0, %v2864
    %2866 = vmatmul.bf16.gmra.mxu0 %v2718
    %v2867 = vpop.f32.mrf.mxu0
    %v2868 = vadd.f32 0.0, %v2867
    %v2869 = vpop.f32.mrf.mxu0
    %v2870 = vadd.f32 0.0, %v2869
    %2871 = vmatmul.bf16.gmra.mxu0 %v2721
    %v2872 = vpop.f32.mrf.mxu0
    %v2873 = vadd.f32 0.0, %v2872
    %v2874 = vpop.f32.mrf.mxu0
    %v2875 = vadd.f32 0.0, %v2874
    %2876 = vmatmul.bf16.gmra.mxu0 %v2724
    %v2877 = vpop.f32.mrf.mxu0
    %v2878 = vadd.f32 0.0, %v2877
    %v2879 = vpop.f32.mrf.mxu0
    %v2880 = vadd.f32 0.0, %v2879
    %2881 = vmatmul.bf16.gmra.mxu0 %v2727
    %v2882 = vpop.f32.mrf.mxu0
    %v2883 = vadd.f32 0.0, %v2882
    %v2884 = vpop.f32.mrf.mxu0
    %v2885 = vadd.f32 0.0, %v2884
    %2886 = vmatmul.bf16.gmra.mxu0 %v2730
    %v2887 = vpop.f32.mrf.mxu0
    %v2888 = vadd.f32 0.0, %v2887
    %v2889 = vpop.f32.mrf.mxu0
    %v2890 = vadd.f32 0.0, %v2889
    %2891 = vmatmul.bf16.gmra.mxu0 %v2733
    %v2892 = vpop.f32.mrf.mxu0
    %v2893 = vadd.f32 0.0, %v2892
    %v2894 = vpop.f32.mrf.mxu0
    %v2895 = vadd.f32 0.0, %v2894
    %2896 = vmatmul.bf16.gmra.mxu0 %v2736
    %v2897 = vpop.f32.mrf.mxu0
    %v2898 = vadd.f32 0.0, %v2897
    %v2899 = vpop.f32.mrf.mxu0
    %v2900 = vadd.f32 0.0, %v2899
    %2901 = vmatmul.bf16.gmra.mxu0 %v2739
    %v2902 = vpop.f32.mrf.mxu0
    %v2903 = vadd.f32 0.0, %v2902
    %v2904 = vpop.f32.mrf.mxu0
    %v2905 = vadd.f32 0.0, %v2904
    %2906 = vmatmul.bf16.gmra.mxu0 %v2742
    %v2907 = vpop.f32.mrf.mxu0
    %v2908 = vadd.f32 0.0, %v2907
    %v2909 = vpop.f32.mrf.mxu0
    %v2910 = vadd.f32 0.0, %v2909
    %2911 = vmatmul.bf16.gmra.mxu0 %v2745
    %v2912 = vpop.f32.mrf.mxu0
    %v2913 = vadd.f32 0.0, %v2912
    %v2914 = vpop.f32.mrf.mxu0
    %v2915 = vadd.f32 0.0, %v2914
    %2916 = vmatmul.bf16.gmra.mxu0 %v2748
    %v2917 = vpop.f32.mrf.mxu0
    %v2918 = vadd.f32 0.0, %v2917
    %v2919 = vpop.f32.mrf.mxu0
    %v2920 = vadd.f32 0.0, %v2919
    %2921 = vmatmul.bf16.gmra.mxu0 %v2751
    %v2922 = vpop.f32.mrf.mxu0
    %v2923 = vadd.f32 0.0, %v2922
    %v2924 = vpop.f32.mrf.mxu0
    %v2925 = vadd.f32 0.0, %v2924
    %2926 = vmatmul.bf16.gmra.mxu0 %v2754
    %v2927 = vpop.f32.mrf.mxu0
    %v2928 = vadd.f32 0.0, %v2927
    %v2929 = vpop.f32.mrf.mxu0
    %v2930 = vadd.f32 0.0, %v2929
    %2931 = vmatmul.bf16.gmra.mxu0 %v2757
    %v2932 = vpop.f32.mrf.mxu0
    %v2933 = vadd.f32 0.0, %v2932
    %v2934 = vpop.f32.mrf.mxu0
    %v2935 = vadd.f32 0.0, %v2934
    %2936 = vmatmul.bf16.gmra.mxu0 %v2760
    %v2937 = vpop.f32.mrf.mxu0
    %v2938 = vadd.f32 0.0, %v2937
    %v2939 = vpop.f32.mrf.mxu0
    %v2940 = vadd.f32 0.0, %v2939
    %2941 = vmatmul.bf16.gmra.mxu0 %v2763
    %v2942 = vpop.f32.mrf.mxu0
    %v2943 = vadd.f32 0.0, %v2942
    %v2944 = vpop.f32.mrf.mxu0
    %v2945 = vadd.f32 0.0, %v2944
    %2946 = vmatmul.bf16.gmra.mxu0 %v2766
    %v2947 = vpop.f32.mrf.mxu0
    %v2948 = vadd.f32 0.0, %v2947
    %v2949 = vpop.f32.mrf.mxu0
    %v2950 = vadd.f32 0.0, %v2949
    %2951 = vmatmul.bf16.gmra.mxu0 %v2769
    %v2952 = vpop.f32.mrf.mxu0
    %v2953 = vadd.f32 0.0, %v2952
    %v2954 = vpop.f32.mrf.mxu0
    %v2955 = vadd.f32 0.0, %v2954
    %2956 = vmatmul.bf16.gmra.mxu0 %v2772
    %v2957 = vpop.f32.mrf.mxu0
    %v2958 = vadd.f32 0.0, %v2957
    %v2959 = vpop.f32.mrf.mxu0
    %v2960 = vadd.f32 0.0, %v2959
    %2961 = vmatmul.bf16.gmra.mxu0 %v2775
    %v2962 = vpop.f32.mrf.mxu0
    %v2963 = vadd.f32 0.0, %v2962
    %v2964 = vpop.f32.mrf.mxu0
    %v2965 = vadd.f32 0.0, %v2964
    %2966 = vmatmul.bf16.gmra.mxu0 %v2778
    %v2967 = vpop.f32.mrf.mxu0
    %v2968 = vadd.f32 0.0, %v2967
    %v2969 = vpop.f32.mrf.mxu0
    %v2970 = vadd.f32 0.0, %v2969
    %2971 = vmatmul.bf16.gmra.mxu0 %v2781
    %v2972 = vpop.f32.mrf.mxu0
    %v2973 = vadd.f32 0.0, %v2972
    %v2974 = vpop.f32.mrf.mxu0
    %v2975 = vadd.f32 0.0, %v2974
    %2976 = vmatmul.bf16.gmra.mxu0 %v2784
    %v2977 = vpop.f32.mrf.mxu0
    %v2978 = vadd.f32 0.0, %v2977
    %v2979 = vpop.f32.mrf.mxu0
    %v2980 = vadd.f32 0.0, %v2979
    %2981 = vmatmul.bf16.gmra.mxu0 %v2787
    %v2982 = vpop.f32.mrf.mxu0
    %v2983 = vadd.f32 0.0, %v2982
    %v2984 = vpop.f32.mrf.mxu0
    %v2985 = vadd.f32 0.0, %v2984
    %2986 = vmatmul.bf16.gmra.mxu0 %v2790
    %v2987 = vpop.f32.mrf.mxu0
    %v2988 = vadd.f32 0.0, %v2987
    %v2989 = vpop.f32.mrf.mxu0
    %v2990 = vadd.f32 0.0, %v2989
    %2991 = vmatmul.bf16.gmra.mxu0 %v2793
    %v2992 = vpop.f32.mrf.mxu0
    %v2993 = vadd.f32 0.0, %v2992
    %v2994 = vpop.f32.mrf.mxu0
    %v2995 = vadd.f32 0.0, %v2994
    %2996 = vmatmul.bf16.gmra.mxu0 %v2796
    %v2997 = vpop.f32.mrf.mxu0
    %v2998 = vadd.f32 0.0, %v2997
    %v2999 = vpop.f32.mrf.mxu0
    %v3000 = vadd.f32 0.0, %v2999
    %3001 = vmatmul.bf16.gmra.mxu0 %v2799
    %v3002 = vpop.f32.mrf.mxu0
    %v3003 = vadd.f32 0.0, %v3002
    %v3004 = vpop.f32.mrf.mxu0
    %v3005 = vadd.f32 0.0, %v3004
    %3006 = vmatmul.bf16.gmra.mxu0 %v2802
    %v3007 = vpop.f32.mrf.mxu0
    %v3008 = vadd.f32 0.0, %v3007
    %v3009 = vpop.f32.mrf.mxu0
    %v3010 = vadd.f32 0.0, %v3009
    %3011 = vmatmul.bf16.gmra.mxu0 %v2805
    %v3012 = vpop.f32.mrf.mxu0
    %v3013 = vadd.f32 0.0, %v3012
    %v3014 = vpop.f32.mrf.mxu0
    %v3015 = vadd.f32 0.0, %v3014
    %3016 = vmatmul.bf16.gmra.mxu0 %v2808
    %v3017 = vpop.f32.mrf.mxu0
    %v3018 = vadd.f32 0.0, %v3017
    %v3019 = vpop.f32.mrf.mxu0
    %v3020 = vadd.f32 0.0, %v3019
    %3021 = vmatmul.bf16.gmra.mxu0 %v2811
    %v3022 = vpop.f32.mrf.mxu0
    %v3023 = vadd.f32 0.0, %v3022
    %v3024 = vpop.f32.mrf.mxu0
    %v3025 = vadd.f32 0.0, %v3024
    %3026 = vmatmul.bf16.gmra.mxu0 %v2814
    %v3027 = vpop.f32.mrf.mxu0
    %v3028 = vadd.f32 0.0, %v3027
    %v3029 = vpop.f32.mrf.mxu0
    %v3030 = vadd.f32 0.0, %v3029
    %3031 = vmatmul.bf16.gmra.mxu0 %v2817
    %v3032 = vpop.f32.mrf.mxu0
    %v3033 = vadd.f32 0.0, %v3032
    %v3034 = vpop.f32.mrf.mxu0
    %v3035 = vadd.f32 0.0, %v3034
    %3036 = vmatmul.bf16.gmra.mxu0 %v2820
    %v3037 = vpop.f32.mrf.mxu0
    %v3038 = vadd.f32 0.0, %v3037
    %v3039 = vpop.f32.mrf.mxu0
    %v3040 = vadd.f32 0.0, %v3039
    %3041 = vmatmul.bf16.gmra.mxu0 %v2823
    %v3042 = vpop.f32.mrf.mxu0
    %v3043 = vadd.f32 0.0, %v3042
    %v3044 = vpop.f32.mrf.mxu0
    %v3045 = vadd.f32 0.0, %v3044
    %3046 = vmatmul.bf16.gmra.mxu0 %v2826
    %v3047 = vpop.f32.mrf.mxu0
    %v3048 = vadd.f32 0.0, %v3047
    %v3049 = vpop.f32.mrf.mxu0
    %v3050 = vadd.f32 0.0, %v3049
    %3051 = vmatmul.bf16.gmra.mxu0 %v2829
    %v3052 = vpop.f32.mrf.mxu0
    %v3053 = vadd.f32 0.0, %v3052
    %v3054 = vpop.f32.mrf.mxu0
    %v3055 = vadd.f32 0.0, %v3054
    %3056 = vmatmul.bf16.gmra.mxu0 %v2832
    %v3057 = vpop.f32.mrf.mxu0
    %v3058 = vadd.f32 0.0, %v3057
    %v3059 = vpop.f32.mrf.mxu0
    %v3060 = vadd.f32 0.0, %v3059
    %3061 = vmatmul.bf16.gmra.mxu0 %v2835
    %v3062 = vpop.f32.mrf.mxu0
    %v3063 = vadd.f32 0.0, %v3062
    %v3064 = vpop.f32.mrf.mxu0
    %v3065 = vadd.f32 0.0, %v3064
    %3066 = vmatmul.bf16.gmra.mxu0 %v2838
    %v3067 = vpop.f32.mrf.mxu0
    %v3068 = vadd.f32 0.0, %v3067
    %v3069 = vpop.f32.mrf.mxu0
    %v3070 = vadd.f32 0.0, %v3069
    %3071 = vdwg.mxu0
    %v3072 = vld [vmem:[#allocation3] sm:$0xff]
    %v3073 = vld [vmem:[#allocation3 + $0x8] sm:$0xff]
    %v3074 = vld [vmem:[#allocation3 + $0x10] sm:$0xff]
    %v3075 = vld [vmem:[#allocation3 + $0x18] sm:$0xff]
    %v3076 = vld [vmem:[#allocation3 + $0x20] sm:$0xff]
    %v3077 = vld [vmem:[#allocation3 + $0x28] sm:$0xff]
    %v3078 = vld [vmem:[#allocation3 + $0x30] sm:$0xff]
    %v3079 = vld [vmem:[#allocation3 + $0x38] sm:$0xff]
    %v3080 = vld [vmem:[#allocation3 + $0x40] sm:$0xff]
    %v3081 = vld [vmem:[#allocation3 + $0x48] sm:$0xff]
    %v3082 = vld [vmem:[#allocation3 + $0x50] sm:$0xff]
    %v3083 = vld [vmem:[#allocation3 + $0x58] sm:$0xff]
    %v3084 = vld [vmem:[#allocation3 + $0x60] sm:$0xff]
    %v3085 = vld [vmem:[#allocation3 + $0x68] sm:$0xff]
    %v3086 = vld [vmem:[#allocation3 + $0x70] sm:$0xff]
    %v3087 = vld [vmem:[#allocation3 + $0x78] sm:$0xff]
    %v3088 = vld [vmem:[#allocation3 + $0x80] sm:$0xff]
    %v3089 = vld [vmem:[#allocation3 + $0x88] sm:$0xff]
    %v3090 = vld [vmem:[#allocation3 + $0x90] sm:$0xff]
    %v3091 = vld [vmem:[#allocation3 + $0x98] sm:$0xff]
    %v3092 = vld [vmem:[#allocation3 + $0xa0] sm:$0xff]
    %v3093 = vld [vmem:[#allocation3 + $0xa8] sm:$0xff]
    %v3094 = vld [vmem:[#allocation3 + $0xb0] sm:$0xff]
    %v3095 = vld [vmem:[#allocation3 + $0xb8] sm:$0xff]
    %v3096 = vld [vmem:[#allocation3 + $0xc0] sm:$0xff]
    %v3097 = vld [vmem:[#allocation3 + $0xc8] sm:$0xff]
    %v3098 = vld [vmem:[#allocation3 + $0xd0] sm:$0xff]
    %v3099 = vld [vmem:[#allocation3 + $0xd8] sm:$0xff]
    %v3100 = vld [vmem:[#allocation3 + $0xe0] sm:$0xff]
    %v3101 = vld [vmem:[#allocation3 + $0xe8] sm:$0xff]
    %v3102 = vld [vmem:[#allocation3 + $0xf0] sm:$0xff]
    %v3103 = vld [vmem:[#allocation3 + $0xf8] sm:$0xff]
    %v3104 = vld [vmem:[#allocation3 + $0x100] sm:$0xff]
    %v3105 = vld [vmem:[#allocation3 + $0x108] sm:$0xff]
    %v3106 = vld [vmem:[#allocation3 + $0x110] sm:$0xff]
    %v3107 = vld [vmem:[#allocation3 + $0x118] sm:$0xff]
    %v3108 = vld [vmem:[#allocation3 + $0x120] sm:$0xff]
    %v3109 = vld [vmem:[#allocation3 + $0x128] sm:$0xff]
    %v3110 = vld [vmem:[#allocation3 + $0x130] sm:$0xff]
    %v3111 = vld [vmem:[#allocation3 + $0x138] sm:$0xff]
    %v3112 = vld [vmem:[#allocation3 + $0x140] sm:$0xff]
    %v3113 = vld [vmem:[#allocation3 + $0x148] sm:$0xff]
    %v3114 = vld [vmem:[#allocation3 + $0x150] sm:$0xff]
    %v3115 = vld [vmem:[#allocation3 + $0x158] sm:$0xff]
    %v3116 = vld [vmem:[#allocation3 + $0x160] sm:$0xff]
    %v3117 = vld [vmem:[#allocation3 + $0x168] sm:$0xff]
    %v3118 = vld [vmem:[#allocation3 + $0x170] sm:$0xff]
    %v3119 = vld [vmem:[#allocation3 + $0x178] sm:$0xff]
    %v3120 = vld [vmem:[#allocation3 + $0x180] sm:$0xff]
    %v3121 = vld [vmem:[#allocation3 + $0x188] sm:$0xff]
    %v3122 = vld [vmem:[#allocation3 + $0x190] sm:$0xff]
    %v3123 = vld [vmem:[#allocation3 + $0x198] sm:$0xff]
    %v3124 = vld [vmem:[#allocation3 + $0x1a0] sm:$0xff]
    %v3125 = vld [vmem:[#allocation3 + $0x1a8] sm:$0xff]
    %v3126 = vld [vmem:[#allocation3 + $0x1b0] sm:$0xff]
    %v3127 = vld [vmem:[#allocation3 + $0x1b8] sm:$0xff]
    %v3128 = vld [vmem:[#allocation3 + $0x1c0] sm:$0xff]
    %v3129 = vld [vmem:[#allocation3 + $0x1c8] sm:$0xff]
    %v3130 = vld [vmem:[#allocation3 + $0x1d0] sm:$0xff]
    %v3131 = vld [vmem:[#allocation3 + $0x1d8] sm:$0xff]
    %v3132 = vld [vmem:[#allocation3 + $0x1e0] sm:$0xff]
    %v3133 = vld [vmem:[#allocation3 + $0x1e8] sm:$0xff]
    %v3134 = vld [vmem:[#allocation3 + $0x1f0] sm:$0xff]
    %v3135 = vld [vmem:[#allocation3 + $0x1f8] sm:$0xff]
    %v3136 = vld [vmem:[#allocation3 + $0x200] sm:$0xff]
    %v3137 = vld [vmem:[#allocation3 + $0x208] sm:$0xff]
    %v3138 = vld [vmem:[#allocation3 + $0x210] sm:$0xff]
    %v3139 = vld [vmem:[#allocation3 + $0x218] sm:$0xff]
    %v3140 = vld [vmem:[#allocation3 + $0x220] sm:$0xff]
    %v3141 = vld [vmem:[#allocation3 + $0x228] sm:$0xff]
    %v3142 = vld [vmem:[#allocation3 + $0x230] sm:$0xff]
    %v3143 = vld [vmem:[#allocation3 + $0x238] sm:$0xff]
    %v3144 = vld [vmem:[#allocation3 + $0x240] sm:$0xff]
    %v3145 = vld [vmem:[#allocation3 + $0x248] sm:$0xff]
    %v3146 = vld [vmem:[#allocation3 + $0x250] sm:$0xff]
    %v3147 = vld [vmem:[#allocation3 + $0x258] sm:$0xff]
    %v3148 = vld [vmem:[#allocation3 + $0x260] sm:$0xff]
    %v3149 = vld [vmem:[#allocation3 + $0x268] sm:$0xff]
    %v3150 = vld [vmem:[#allocation3 + $0x270] sm:$0xff]
    %v3151 = vld [vmem:[#allocation3 + $0x278] sm:$0xff]
    %v3152 = vld [vmem:[#allocation3 + $0x280] sm:$0xff]
    %v3153 = vld [vmem:[#allocation3 + $0x288] sm:$0xff]
    %v3154 = vld [vmem:[#allocation3 + $0x290] sm:$0xff]
    %v3155 = vld [vmem:[#allocation3 + $0x298] sm:$0xff]
    %v3156 = vld [vmem:[#allocation3 + $0x2a0] sm:$0xff]
    %v3157 = vld [vmem:[#allocation3 + $0x2a8] sm:$0xff]
    %v3158 = vld [vmem:[#allocation3 + $0x2b0] sm:$0xff]
    %v3159 = vld [vmem:[#allocation3 + $0x2b8] sm:$0xff]
    %v3160 = vadd.f32 %v3072, %v2853
    %v3161 = vadd.f32 %v3073, %v2855
    %v3162 = vadd.f32 %v3074, %v2858
    %v3163 = vadd.f32 %v3075, %v2860
    %v3164 = vadd.f32 %v3076, %v2863
    %v3165 = vadd.f32 %v3077, %v2865
    %v3166 = vadd.f32 %v3078, %v2868
    %v3167 = vadd.f32 %v3079, %v2870
    %v3168 = vadd.f32 %v3080, %v2873
    %v3169 = vadd.f32 %v3081, %v2875
    %v3170 = vadd.f32 %v3082, %v2878
    %v3171 = vadd.f32 %v3083, %v2880
    %v3172 = vadd.f32 %v3084, %v2883
    %v3173 = vadd.f32 %v3085, %v2885
    %v3174 = vadd.f32 %v3086, %v2888
    %v3175 = vadd.f32 %v3087, %v2890
    %v3176 = vadd.f32 %v3088, %v2893
    %v3177 = vadd.f32 %v3089, %v2895
    %v3178 = vadd.f32 %v3090, %v2898
    %v3179 = vadd.f32 %v3091, %v2900
    %v3180 = vadd.f32 %v3092, %v2903
    %v3181 = vadd.f32 %v3093, %v2905
    %v3182 = vadd.f32 %v3094, %v2908
    %v3183 = vadd.f32 %v3095, %v2910
    %v3184 = vadd.f32 %v3096, %v2913
    %v3185 = vadd.f32 %v3097, %v2915
    %v3186 = vadd.f32 %v3098, %v2918
    %v3187 = vadd.f32 %v3099, %v2920
    %v3188 = vadd.f32 %v3100, %v2923
    %v3189 = vadd.f32 %v3101, %v2925
    %v3190 = vadd.f32 %v3102, %v2928
    %v3191 = vadd.f32 %v3103, %v2930
    %v3192 = vadd.f32 %v3104, %v2933
    %v3193 = vadd.f32 %v3105, %v2935
    %v3194 = vadd.f32 %v3106, %v2938
    %v3195 = vadd.f32 %v3107, %v2940
    %v3196 = vadd.f32 %v3108, %v2943
    %v3197 = vadd.f32 %v3109, %v2945
    %v3198 = vadd.f32 %v3110, %v2948
    %v3199 = vadd.f32 %v3111, %v2950
    %v3200 = vadd.f32 %v3112, %v2953
    %v3201 = vadd.f32 %v3113, %v2955
    %v3202 = vadd.f32 %v3114, %v2958
    %v3203 = vadd.f32 %v3115, %v2960
    %v3204 = vadd.f32 %v3116, %v2963
    %v3205 = vadd.f32 %v3117, %v2965
    %v3206 = vadd.f32 %v3118, %v2968
    %v3207 = vadd.f32 %v3119, %v2970
    %v3208 = vadd.f32 %v3120, %v2973
    %v3209 = vadd.f32 %v3121, %v2975
    %v3210 = vadd.f32 %v3122, %v2978
    %v3211 = vadd.f32 %v3123, %v2980
    %v3212 = vadd.f32 %v3124, %v2983
    %v3213 = vadd.f32 %v3125, %v2985
    %v3214 = vadd.f32 %v3126, %v2988
    %v3215 = vadd.f32 %v3127, %v2990
    %v3216 = vadd.f32 %v3128, %v2993
    %v3217 = vadd.f32 %v3129, %v2995
    %v3218 = vadd.f32 %v3130, %v2998
    %v3219 = vadd.f32 %v3131, %v3000
    %v3220 = vadd.f32 %v3132, %v3003
    %v3221 = vadd.f32 %v3133, %v3005
    %v3222 = vadd.f32 %v3134, %v3008
    %v3223 = vadd.f32 %v3135, %v3010
    %v3224 = vadd.f32 %v3136, %v3013
    %v3225 = vadd.f32 %v3137, %v3015
    %v3226 = vadd.f32 %v3138, %v3018
    %v3227 = vadd.f32 %v3139, %v3020
    %v3228 = vadd.f32 %v3140, %v3023
    %v3229 = vadd.f32 %v3141, %v3025
    %v3230 = vadd.f32 %v3142, %v3028
    %v3231 = vadd.f32 %v3143, %v3030
    %v3232 = vadd.f32 %v3144, %v3033
    %v3233 = vadd.f32 %v3145, %v3035
    %v3234 = vadd.f32 %v3146, %v3038
    %v3235 = vadd.f32 %v3147, %v3040
    %v3236 = vadd.f32 %v3148, %v3043
    %v3237 = vadd.f32 %v3149, %v3045
    %v3238 = vadd.f32 %v3150, %v3048
    %v3239 = vadd.f32 %v3151, %v3050
    %v3240 = vadd.f32 %v3152, %v3053
    %v3241 = vadd.f32 %v3153, %v3055
    %v3242 = vadd.f32 %v3154, %v3058
    %v3243 = vadd.f32 %v3155, %v3060
    %v3244 = vadd.f32 %v3156, %v3063
    %v3245 = vadd.f32 %v3157, %v3065
    %v3246 = vadd.f32 %v3158, %v3068
    %v3247 = vadd.f32 %v3159, %v3070
    %3248 = vst [vmem:[#allocation3] sm:$0xff] %v3160
    %3249 = vst [vmem:[#allocation3 + $0x8] sm:$0xff] %v3161
    %3250 = vst [vmem:[#allocation3 + $0x10] sm:$0xff] %v3162
    %3251 = vst [vmem:[#allocation3 + $0x18] sm:$0xff] %v3163
    %3252 = vst [vmem:[#allocation3 + $0x20] sm:$0xff] %v3164
    %3253 = vst [vmem:[#allocation3 + $0x28] sm:$0xff] %v3165
    %3254 = vst [vmem:[#allocation3 + $0x30] sm:$0xff] %v3166
    %3255 = vst [vmem:[#allocation3 + $0x38] sm:$0xff] %v3167
    %3256 = vst [vmem:[#allocation3 + $0x40] sm:$0xff] %v3168
    %3257 = vst [vmem:[#allocation3 + $0x48] sm:$0xff] %v3169
    %3258 = vst [vmem:[#allocation3 + $0x50] sm:$0xff] %v3170
    %3259 = vst [vmem:[#allocation3 + $0x58] sm:$0xff] %v3171
    %3260 = vst [vmem:[#allocation3 + $0x60] sm:$0xff] %v3172
    %3261 = vst [vmem:[#allocation3 + $0x68] sm:$0xff] %v3173
    %3262 = vst [vmem:[#allocation3 + $0x70] sm:$0xff] %v3174
    %3263 = vst [vmem:[#allocation3 + $0x78] sm:$0xff] %v3175
    %3264 = vst [vmem:[#allocation3 + $0x80] sm:$0xff] %v3176
    %3265 = vst [vmem:[#allocation3 + $0x88] sm:$0xff] %v3177
    %3266 = vst [vmem:[#allocation3 + $0x90] sm:$0xff] %v3178
    %3267 = vst [vmem:[#allocation3 + $0x98] sm:$0xff] %v3179
    %3268 = vst [vmem:[#allocation3 + $0xa0] sm:$0xff] %v3180
    %3269 = vst [vmem:[#allocation3 + $0xa8] sm:$0xff] %v3181
    %3270 = vst [vmem:[#allocation3 + $0xb0] sm:$0xff] %v3182
    %3271 = vst [vmem:[#allocation3 + $0xb8] sm:$0xff] %v3183
    %3272 = vst [vmem:[#allocation3 + $0xc0] sm:$0xff] %v3184
    %3273 = vst [vmem:[#allocation3 + $0xc8] sm:$0xff] %v3185
    %3274 = vst [vmem:[#allocation3 + $0xd0] sm:$0xff] %v3186
    %3275 = vst [vmem:[#allocation3 + $0xd8] sm:$0xff] %v3187
    %3276 = vst [vmem:[#allocation3 + $0xe0] sm:$0xff] %v3188
    %3277 = vst [vmem:[#allocation3 + $0xe8] sm:$0xff] %v3189
    %3278 = vst [vmem:[#allocation3 + $0xf0] sm:$0xff] %v3190
    %3279 = vst [vmem:[#allocation3 + $0xf8] sm:$0xff] %v3191
    %3280 = vst [vmem:[#allocation3 + $0x100] sm:$0xff] %v3192
    %3281 = vst [vmem:[#allocation3 + $0x108] sm:$0xff] %v3193
    %3282 = vst [vmem:[#allocation3 + $0x110] sm:$0xff] %v3194
    %3283 = vst [vmem:[#allocation3 + $0x118] sm:$0xff] %v3195
    %3284 = vst [vmem:[#allocation3 + $0x120] sm:$0xff] %v3196
    %3285 = vst [vmem:[#allocation3 + $0x128] sm:$0xff] %v3197
    %3286 = vst [vmem:[#allocation3 + $0x130] sm:$0xff] %v3198
    %3287 = vst [vmem:[#allocation3 + $0x138] sm:$0xff] %v3199
    %3288 = vst [vmem:[#allocation3 + $0x140] sm:$0xff] %v3200
    %3289 = vst [vmem:[#allocation3 + $0x148] sm:$0xff] %v3201
    %3290 = vst [vmem:[#allocation3 + $0x150] sm:$0xff] %v3202
    %3291 = vst [vmem:[#allocation3 + $0x158] sm:$0xff] %v3203
    %3292 = vst [vmem:[#allocation3 + $0x160] sm:$0xff] %v3204
    %3293 = vst [vmem:[#allocation3 + $0x168] sm:$0xff] %v3205
    %3294 = vst [vmem:[#allocation3 + $0x170] sm:$0xff] %v3206
    %3295 = vst [vmem:[#allocation3 + $0x178] sm:$0xff] %v3207
    %3296 = vst [vmem:[#allocation3 + $0x180] sm:$0xff] %v3208
    %3297 = vst [vmem:[#allocation3 + $0x188] sm:$0xff] %v3209
    %3298 = vst [vmem:[#allocation3 + $0x190] sm:$0xff] %v3210
    %3299 = vst [vmem:[#allocation3 + $0x198] sm:$0xff] %v3211
    %3300 = vst [vmem:[#allocation3 + $0x1a0] sm:$0xff] %v3212
    %3301 = vst [vmem:[#allocation3 + $0x1a8] sm:$0xff] %v3213
    %3302 = vst [vmem:[#allocation3 + $0x1b0] sm:$0xff] %v3214
    %3303 = vst [vmem:[#allocation3 + $0x1b8] sm:$0xff] %v3215
    %3304 = vst [vmem:[#allocation3 + $0x1c0] sm:$0xff] %v3216
    %3305 = vst [vmem:[#allocation3 + $0x1c8] sm:$0xff] %v3217
    %3306 = vst [vmem:[#allocation3 + $0x1d0] sm:$0xff] %v3218
    %3307 = vst [vmem:[#allocation3 + $0x1d8] sm:$0xff] %v3219
    %3308 = vst [vmem:[#allocation3 + $0x1e0] sm:$0xff] %v3220
    %3309 = vst [vmem:[#allocation3 + $0x1e8] sm:$0xff] %v3221
    %3310 = vst [vmem:[#allocation3 + $0x1f0] sm:$0xff] %v3222
    %3311 = vst [vmem:[#allocation3 + $0x1f8] sm:$0xff] %v3223
    %3312 = vst [vmem:[#allocation3 + $0x200] sm:$0xff] %v3224
    %3313 = vst [vmem:[#allocation3 + $0x208] sm:$0xff] %v3225
    %3314 = vst [vmem:[#allocation3 + $0x210] sm:$0xff] %v3226
    %3315 = vst [vmem:[#allocation3 + $0x218] sm:$0xff] %v3227
    %3316 = vst [vmem:[#allocation3 + $0x220] sm:$0xff] %v3228
    %3317 = vst [vmem:[#allocation3 + $0x228] sm:$0xff] %v3229
    %3318 = vst [vmem:[#allocation3 + $0x230] sm:$0xff] %v3230
    %3319 = vst [vmem:[#allocation3 + $0x238] sm:$0xff] %v3231
    %3320 = vst [vmem:[#allocation3 + $0x240] sm:$0xff] %v3232
    %3321 = vst [vmem:[#allocation3 + $0x248] sm:$0xff] %v3233
    %3322 = vst [vmem:[#allocation3 + $0x250] sm:$0xff] %v3234
    %3323 = vst [vmem:[#allocation3 + $0x258] sm:$0xff] %v3235
    %3324 = vst [vmem:[#allocation3 + $0x260] sm:$0xff] %v3236
    %3325 = vst [vmem:[#allocation3 + $0x268] sm:$0xff] %v3237
    %3326 = vst [vmem:[#allocation3 + $0x270] sm:$0xff] %v3238
    %3327 = vst [vmem:[#allocation3 + $0x278] sm:$0xff] %v3239
    %3328 = vst [vmem:[#allocation3 + $0x280] sm:$0xff] %v3240
    %3329 = vst [vmem:[#allocation3 + $0x288] sm:$0xff] %v3241
    %3330 = vst [vmem:[#allocation3 + $0x290] sm:$0xff] %v3242
    %3331 = vst [vmem:[#allocation3 + $0x298] sm:$0xff] %v3243
    %3332 = vst [vmem:[#allocation3 + $0x2a0] sm:$0xff] %v3244
    %3333 = vst [vmem:[#allocation3 + $0x2a8] sm:$0xff] %v3245
    %3334 = vst [vmem:[#allocation3 + $0x2b0] sm:$0xff] %v3246
    %3335 = vst [vmem:[#allocation3 + $0x2b8] sm:$0xff] %v3247
    %v3336 = vld [vmem:[#allocation2 + $0x8] sm:$0xe]
    %v3337 = vld [vmem:[#allocation2 + $0xc] sm:$0xf]
    %v3338 = vld [vmem:[#allocation2 + $0x10] sm:$0xf]
    %v3339 = vld [vmem:[#allocation2 + $0x14] sm:$0xf]
    %v3340 = vld [vmem:[#allocation2 + $0x18] sm:$0xf]
    %v3341 = vld [vmem:[#allocation2 + $0x1c] sm:$0xf]
    %v3342 = vld [vmem:[#allocation2 + $0x20] sm:$0xf]
    %v3343 = vld [vmem:[#allocation2 + $0x24] sm:$0xf]
    %v3344 = vld [vmem:[#allocation2 + $0x28] sm:$0xf]
    %v3345 = vld [vmem:[#allocation2 + $0x2c] sm:$0xf]
    %v3346 = vld [vmem:[#allocation2 + $0x30] sm:$0xf]
    %v3347 = vld [vmem:[#allocation2 + $0x34] sm:$0xf]
    %v3348 = vld [vmem:[#allocation2 + $0x38] sm:$0xf]
    %v3349 = vld [vmem:[#allocation2 + $0x3c] sm:$0xf]
    %v3350 = vld [vmem:[#allocation2 + $0x40] sm:$0xf]
    %v3351 = vld [vmem:[#allocation2 + $0x44] sm:$0xf]
    %v3352 = vld [vmem:[#allocation2 + $0x48] sm:$0xf]
    %v3353 = vld [vmem:[#allocation2 + $0x4c] sm:$0xf]
    %v3354 = vld [vmem:[#allocation2 + $0x50] sm:$0xf]
    %v3355 = vld [vmem:[#allocation2 + $0x54] sm:$0xf]
    %v3356 = vld [vmem:[#allocation2 + $0x58] sm:$0xf]
    %v3357 = vld [vmem:[#allocation2 + $0x5c] sm:$0xf]
    %v3358 = vld [vmem:[#allocation2 + $0x60] sm:$0xf]
    %v3359 = vld [vmem:[#allocation2 + $0x64] sm:$0xf]
    %v3360 = vld [vmem:[#allocation2 + $0x68] sm:$0xf]
    %v3361 = vld [vmem:[#allocation2 + $0x6c] sm:$0xf]
    %v3362 = vld [vmem:[#allocation2 + $0x70] sm:$0xf]
    %v3363 = vld [vmem:[#allocation2 + $0x74] sm:$0xf]
    %v3364 = vld [vmem:[#allocation2 + $0x78] sm:$0xf]
    %v3365 = vld [vmem:[#allocation2 + $0x7c] sm:$0xf]
    %v3366 = vld [vmem:[#allocation2 + $0x80] sm:$0xf]
    %v3367 = vld [vmem:[#allocation2 + $0x84] sm:$0xf]
    %v3368 = vld [vmem:[#allocation2 + $0x88] sm:$0xf]
    %v3369 = vld [vmem:[#allocation2 + $0x8c] sm:$0xf]
    %v3370 = vld [vmem:[#allocation2 + $0x90] sm:$0xf]
    %v3371 = vld [vmem:[#allocation2 + $0x94] sm:$0xf]
    %v3372 = vld [vmem:[#allocation2 + $0x98] sm:$0xf]
    %v3373 = vld [vmem:[#allocation2 + $0x9c] sm:$0xf]
    %v3374 = vld [vmem:[#allocation2 + $0xa0] sm:$0xf]
    %v3375 = vld [vmem:[#allocation2 + $0xa4] sm:$0xf]
    %v3376 = vld [vmem:[#allocation2 + $0xa8] sm:$0xf]
    %v3377 = vld [vmem:[#allocation2 + $0xac] sm:$0xf]
    %v3378 = vld [vmem:[#allocation2 + $0xb0] sm:$0xf]
    %v3379 = vld [vmem:[#allocation2 + $0xb4] sm:$0xf]
    %v3380 = vld [vmem:[#allocation2 + $0xb8] sm:$0xf]
    %v3381 = vld [vmem:[#allocation2 + $0xbc] sm:$0xf]
    %v3382 = vld [vmem:[#allocation2 + $0xc0] sm:$0xf]
    %v3383 = vld [vmem:[#allocation2 + $0xc4] sm:$0xf]
    %v3384 = vld [vmem:[#allocation2 + $0xc8] sm:$0xf]
    %v3385 = vld [vmem:[#allocation2 + $0xcc] sm:$0xf]
    %v3386 = vld [vmem:[#allocation2 + $0xd0] sm:$0xf]
    %v3387 = vld [vmem:[#allocation2 + $0xd4] sm:$0xf]
    %v3388 = vld [vmem:[#allocation2 + $0xd8] sm:$0xf]
    %v3389 = vld [vmem:[#allocation2 + $0xdc] sm:$0xf]
    %v3390 = vld [vmem:[#allocation2 + $0xe0] sm:$0xf]
    %v3391 = vld [vmem:[#allocation2 + $0xe4] sm:$0xf]
    %v3392 = vld [vmem:[#allocation2 + $0xe8] sm:$0xf]
    %v3393 = vld [vmem:[#allocation2 + $0xec] sm:$0xf]
    %v3394 = vld [vmem:[#allocation2 + $0xf0] sm:$0xf]
    %v3395 = vld [vmem:[#allocation2 + $0xf4] sm:$0xf]
    %v3396 = vld [vmem:[#allocation2 + $0xf8] sm:$0xf]
    %v3397 = vld [vmem:[#allocation2 + $0xfc] sm:$0xf]
    %v3398 = vld [vmem:[#allocation2 + $0x100] sm:$0xf]
    %v3399 = vld [vmem:[#allocation2 + $0x104] sm:$0xf]
    %v3400 = vld [vmem:[#allocation2 + $0x108] sm:$0xf]
    %v3401 = vld [vmem:[#allocation2 + $0x10c] sm:$0xf]
    %v3402 = vld [vmem:[#allocation2 + $0x110] sm:$0xf]
    %v3403 = vld [vmem:[#allocation2 + $0x114] sm:$0xf]
    %v3404 = vld [vmem:[#allocation2 + $0x118] sm:$0xf]
    %v3405 = vld [vmem:[#allocation2 + $0x11c] sm:$0xf]
    %v3406 = vld [vmem:[#allocation2 + $0x120] sm:$0xf]
    %v3407 = vld [vmem:[#allocation2 + $0x124] sm:$0xf]
    %v3408 = vld [vmem:[#allocation2 + $0x128] sm:$0xf]
    %v3409 = vld [vmem:[#allocation2 + $0x12c] sm:$0xf]
    %v3410 = vld [vmem:[#allocation2 + $0x130] sm:$0xf]
    %v3411 = vld [vmem:[#allocation2 + $0x134] sm:$0xf]
    %v3412 = vld [vmem:[#allocation2 + $0x138] sm:$0xf]
    %v3413 = vld [vmem:[#allocation2 + $0x13c] sm:$0xf]
    %v3414 = vld [vmem:[#allocation2 + $0x140] sm:$0xf]
    %v3415 = vld [vmem:[#allocation2 + $0x144] sm:$0xf]
    %v3416 = vld [vmem:[#allocation2 + $0x148] sm:$0xf]
    %v3417 = vld [vmem:[#allocation2 + $0x14c] sm:$0xf]
    %v3418 = vld [vmem:[#allocation2 + $0x150] sm:$0xf]
    %v3419 = vld [vmem:[#allocation2 + $0x154] sm:$0xf]
    %v3420 = vld [vmem:[#allocation2 + $0x158] sm:$0xf]
    %v3421 = vld [vmem:[#allocation2 + $0x15c] sm:$0xf]
    %v3422 = vld [vmem:[#allocation2 + $0x160] sm:$0xf]
    %v3423 = vld [vmem:[#allocation2 + $0x164] sm:$0xf]
    %v3424 = vld [vmem:[#allocation2 + $0x168] sm:$0x1]
    %s3425 = scalar_lea.vmem %s2, 6
    %v3426 = vld [vmem:[%s3425] sm:$0x3]
    %v3516 = vunpack.c.l.b16 %v3336
    %v3517 = vunpack.c.l.b16 %v3337
    %v3518 = vunpack.c.l.b16 %v3338
    %v3519 = vunpack.c.l.b16 %v3339
    %v3520 = vunpack.c.l.b16 %v3340
    %v3521 = vunpack.c.l.b16 %v3341
    %v3522 = vunpack.c.l.b16 %v3342
    %v3523 = vunpack.c.l.b16 %v3343
    %v3524 = vunpack.c.l.b16 %v3344
    %v3525 = vunpack.c.l.b16 %v3345
    %v3526 = vunpack.c.l.b16 %v3346
    %v3527 = vunpack.c.l.b16 %v3347
    %v3528 = vunpack.c.l.b16 %v3348
    %v3529 = vunpack.c.l.b16 %v3349
    %v3530 = vunpack.c.l.b16 %v3350
    %v3531 = vunpack.c.l.b16 %v3351
    %v3532 = vunpack.c.l.b16 %v3352
    %v3533 = vunpack.c.l.b16 %v3353
    %v3534 = vunpack.c.l.b16 %v3354
    %v3535 = vunpack.c.l.b16 %v3355
    %v3536 = vunpack.c.l.b16 %v3356
    %v3537 = vunpack.c.l.b16 %v3357
    %v3538 = vunpack.c.l.b16 %v3358
    %v3539 = vunpack.c.l.b16 %v3359
    %v3540 = vunpack.c.l.b16 %v3360
    %v3541 = vunpack.c.l.b16 %v3361
    %v3542 = vunpack.c.l.b16 %v3362
    %v3543 = vunpack.c.l.b16 %v3363
    %v3544 = vunpack.c.l.b16 %v3364
    %v3545 = vunpack.c.l.b16 %v3365
    %v3546 = vunpack.c.l.b16 %v3366
    %v3547 = vunpack.c.l.b16 %v3367
    %v3548 = vunpack.c.l.b16 %v3368
    %v3549 = vunpack.c.l.b16 %v3369
    %v3550 = vunpack.c.l.b16 %v3370
    %v3551 = vunpack.c.l.b16 %v3371
    %v3552 = vunpack.c.l.b16 %v3372
    %v3553 = vunpack.c.l.b16 %v3373
    %v3554 = vunpack.c.l.b16 %v3374
    %v3555 = vunpack.c.l.b16 %v3375
    %v3556 = vunpack.c.l.b16 %v3376
    %v3557 = vunpack.c.l.b16 %v3377
    %v3558 = vunpack.c.l.b16 %v3378
    %v3559 = vunpack.c.l.b16 %v3379
    %v3560 = vunpack.c.l.b16 %v3380
    %v3561 = vunpack.c.l.b16 %v3381
    %v3562 = vunpack.c.l.b16 %v3382
    %v3563 = vunpack.c.l.b16 %v3383
    %v3564 = vunpack.c.l.b16 %v3384
    %v3565 = vunpack.c.l.b16 %v3385
    %v3566 = vunpack.c.l.b16 %v3386
    %v3567 = vunpack.c.l.b16 %v3387
    %v3568 = vunpack.c.l.b16 %v3388
    %v3569 = vunpack.c.l.b16 %v3389
    %v3570 = vunpack.c.l.b16 %v3390
    %v3571 = vunpack.c.l.b16 %v3391
    %v3572 = vunpack.c.l.b16 %v3392
    %v3573 = vunpack.c.l.b16 %v3393
    %v3574 = vunpack.c.l.b16 %v3394
    %v3575 = vunpack.c.l.b16 %v3395
    %v3576 = vunpack.c.l.b16 %v3396
    %v3577 = vunpack.c.l.b16 %v3397
    %v3578 = vunpack.c.l.b16 %v3398
    %v3579 = vunpack.c.l.b16 %v3399
    %v3580 = vunpack.c.l.b16 %v3400
    %v3581 = vunpack.c.l.b16 %v3401
    %v3582 = vunpack.c.l.b16 %v3402
    %v3583 = vunpack.c.l.b16 %v3403
    %v3584 = vunpack.c.l.b16 %v3404
    %v3585 = vunpack.c.l.b16 %v3405
    %v3586 = vunpack.c.l.b16 %v3406
    %v3587 = vunpack.c.l.b16 %v3407
    %v3588 = vunpack.c.l.b16 %v3408
    %v3589 = vunpack.c.l.b16 %v3409
    %v3590 = vunpack.c.l.b16 %v3410
    %v3591 = vunpack.c.l.b16 %v3411
    %v3592 = vunpack.c.l.b16 %v3412
    %v3593 = vunpack.c.l.b16 %v3413
    %v3594 = vunpack.c.l.b16 %v3414
    %v3595 = vunpack.c.l.b16 %v3415
    %v3596 = vunpack.c.l.b16 %v3416
    %v3597 = vunpack.c.l.b16 %v3417
    %v3598 = vunpack.c.l.b16 %v3418
    %v3599 = vunpack.c.l.b16 %v3419
    %v3600 = vunpack.c.l.b16 %v3420
    %v3601 = vunpack.c.l.b16 %v3421
    %v3602 = vunpack.c.l.b16 %v3422
    %v3603 = vunpack.c.l.b16 %v3423
    %v3604 = vunpack.c.l.b16 %v3424
    %v3605 = vpack.c.b16 %v3517, %v3516
    %v3606 = vpack.c.b16 %v3519, %v3518
    %v3607 = vpack.c.b16 %v3521, %v3520
    %v3608 = vpack.c.b16 %v3523, %v3522
    %v3609 = vpack.c.b16 %v3525, %v3524
    %v3610 = vpack.c.b16 %v3527, %v3526
    %v3611 = vpack.c.b16 %v3529, %v3528
    %v3612 = vpack.c.b16 %v3531, %v3530
    %v3613 = vpack.c.b16 %v3533, %v3532
    %v3614 = vpack.c.b16 %v3535, %v3534
    %v3615 = vpack.c.b16 %v3537, %v3536
    %v3616 = vpack.c.b16 %v3539, %v3538
    %v3617 = vpack.c.b16 %v3541, %v3540
    %v3618 = vpack.c.b16 %v3543, %v3542
    %v3619 = vpack.c.b16 %v3545, %v3544
    %v3620 = vpack.c.b16 %v3547, %v3546
    %v3621 = vpack.c.b16 %v3549, %v3548
    %v3622 = vpack.c.b16 %v3551, %v3550
    %v3623 = vpack.c.b16 %v3553, %v3552
    %v3624 = vpack.c.b16 %v3555, %v3554
    %v3625 = vpack.c.b16 %v3557, %v3556
    %v3626 = vpack.c.b16 %v3559, %v3558
    %v3627 = vpack.c.b16 %v3561, %v3560
    %v3628 = vpack.c.b16 %v3563, %v3562
    %v3629 = vpack.c.b16 %v3565, %v3564
    %v3630 = vpack.c.b16 %v3567, %v3566
    %v3631 = vpack.c.b16 %v3569, %v3568
    %v3632 = vpack.c.b16 %v3571, %v3570
    %v3633 = vpack.c.b16 %v3573, %v3572
    %v3634 = vpack.c.b16 %v3575, %v3574
    %v3635 = vpack.c.b16 %v3577, %v3576
    %v3636 = vpack.c.b16 %v3579, %v3578
    %v3637 = vpack.c.b16 %v3581, %v3580
    %v3638 = vpack.c.b16 %v3583, %v3582
    %v3639 = vpack.c.b16 %v3585, %v3584
    %v3640 = vpack.c.b16 %v3587, %v3586
    %v3641 = vpack.c.b16 %v3589, %v3588
    %v3642 = vpack.c.b16 %v3591, %v3590
    %v3643 = vpack.c.b16 %v3593, %v3592
    %v3644 = vpack.c.b16 %v3595, %v3594
    %v3645 = vpack.c.b16 %v3597, %v3596
    %v3646 = vpack.c.b16 %v3599, %v3598
    %v3647 = vpack.c.b16 %v3601, %v3600
    %v3648 = vpack.c.b16 %v3603, %v3602
    %v3649 = vpack.c.b16 %v3604, %v3604
    %v3650 = vrot.slane %v3605, 1
    %v3651 = vrot.slane %v3606, 1
    %v3652 = vsel %vm2618, %v3650, %v3651
    %v3653 = vrot.slane %v3607, 1
    %v3654 = vsel %vm2618, %v3651, %v3653
    %v3655 = vrot.slane %v3608, 1
    %v3656 = vsel %vm2618, %v3653, %v3655
    %v3657 = vrot.slane %v3609, 1
    %v3658 = vsel %vm2618, %v3655, %v3657
    %v3659 = vrot.slane %v3610, 1
    %v3660 = vsel %vm2618, %v3657, %v3659
    %v3661 = vrot.slane %v3611, 1
    %v3662 = vsel %vm2618, %v3659, %v3661
    %v3663 = vrot.slane %v3612, 1
    %v3664 = vsel %vm2618, %v3661, %v3663
    %v3665 = vrot.slane %v3613, 1
    %v3666 = vsel %vm2618, %v3663, %v3665
    %v3667 = vrot.slane %v3614, 1
    %v3668 = vsel %vm2618, %v3665, %v3667
    %v3669 = vrot.slane %v3615, 1
    %v3670 = vsel %vm2618, %v3667, %v3669
    %v3671 = vrot.slane %v3616, 1
    %v3672 = vsel %vm2618, %v3669, %v3671
    %v3673 = vrot.slane %v3617, 1
    %v3674 = vsel %vm2618, %v3671, %v3673
    %v3675 = vrot.slane %v3618, 1
    %v3676 = vsel %vm2618, %v3673, %v3675
    %v3677 = vrot.slane %v3619, 1
    %v3678 = vsel %vm2618, %v3675, %v3677
    %v3679 = vrot.slane %v3620, 1
    %v3680 = vsel %vm2618, %v3677, %v3679
    %v3681 = vrot.slane %v3621, 1
    %v3682 = vsel %vm2618, %v3679, %v3681
    %v3683 = vrot.slane %v3622, 1
    %v3684 = vsel %vm2618, %v3681, %v3683
    %v3685 = vrot.slane %v3623, 1
    %v3686 = vsel %vm2618, %v3683, %v3685
    %v3687 = vrot.slane %v3624, 1
    %v3688 = vsel %vm2618, %v3685, %v3687
    %v3689 = vrot.slane %v3625, 1
    %v3690 = vsel %vm2618, %v3687, %v3689
    %v3691 = vrot.slane %v3626, 1
    %v3692 = vsel %vm2618, %v3689, %v3691
    %v3693 = vrot.slane %v3627, 1
    %v3694 = vsel %vm2618, %v3691, %v3693
    %v3695 = vrot.slane %v3628, 1
    %v3696 = vsel %vm2618, %v3693, %v3695
    %v3697 = vrot.slane %v3629, 1
    %v3698 = vsel %vm2618, %v3695, %v3697
    %v3699 = vrot.slane %v3630, 1
    %v3700 = vsel %vm2618, %v3697, %v3699
    %v3701 = vrot.slane %v3631, 1
    %v3702 = vsel %vm2618, %v3699, %v3701
    %v3703 = vrot.slane %v3632, 1
    %v3704 = vsel %vm2618, %v3701, %v3703
    %v3705 = vrot.slane %v3633, 1
    %v3706 = vsel %vm2618, %v3703, %v3705
    %v3707 = vrot.slane %v3634, 1
    %v3708 = vsel %vm2618, %v3705, %v3707
    %v3709 = vrot.slane %v3635, 1
    %v3710 = vsel %vm2618, %v3707, %v3709
    %v3711 = vrot.slane %v3636, 1
    %v3712 = vsel %vm2618, %v3709, %v3711
    %v3713 = vrot.slane %v3637, 1
    %v3714 = vsel %vm2618, %v3711, %v3713
    %v3715 = vrot.slane %v3638, 1
    %v3716 = vsel %vm2618, %v3713, %v3715
    %v3717 = vrot.slane %v3639, 1
    %v3718 = vsel %vm2618, %v3715, %v3717
    %v3719 = vrot.slane %v3640, 1
    %v3720 = vsel %vm2618, %v3717, %v3719
    %v3721 = vrot.slane %v3641, 1
    %v3722 = vsel %vm2618, %v3719, %v3721
    %v3723 = vrot.slane %v3642, 1
    %v3724 = vsel %vm2618, %v3721, %v3723
    %v3725 = vrot.slane %v3643, 1
    %v3726 = vsel %vm2618, %v3723, %v3725
    %v3727 = vrot.slane %v3644, 1
    %v3728 = vsel %vm2618, %v3725, %v3727
    %v3729 = vrot.slane %v3645, 1
    %v3730 = vsel %vm2618, %v3727, %v3729
    %v3731 = vrot.slane %v3646, 1
    %v3732 = vsel %vm2618, %v3729, %v3731
    %v3733 = vrot.slane %v3647, 1
    %v3734 = vsel %vm2618, %v3731, %v3733
    %v3735 = vrot.slane %v3648, 1
    %v3736 = vsel %vm2618, %v3733, %v3735
    %v3737 = vrot.slane %v3649, 1
    %v3738 = vsel %vm2618, %v3735, %v3737
    %v3740 = vsel %vm551, %v3652, 0
    %v3743 = vsel %vm551, %v3654, 0
    %v3746 = vsel %vm551, %v3656, 0
    %v3749 = vsel %vm551, %v3658, 0
    %v3752 = vsel %vm551, %v3660, 0
    %v3755 = vsel %vm551, %v3662, 0
    %v3758 = vsel %vm551, %v3664, 0
    %v3761 = vsel %vm551, %v3666, 0
    %v3764 = vsel %vm551, %v3668, 0
    %v3767 = vsel %vm551, %v3670, 0
    %v3770 = vsel %vm551, %v3672, 0
    %v3773 = vsel %vm551, %v3674, 0
    %v3776 = vsel %vm551, %v3676, 0
    %v3779 = vsel %vm551, %v3678, 0
    %v3782 = vsel %vm551, %v3680, 0
    %v3785 = vsel %vm551, %v3682, 0
    %v3788 = vsel %vm551, %v3684, 0
    %v3791 = vsel %vm551, %v3686, 0
    %v3794 = vsel %vm551, %v3688, 0
    %v3797 = vsel %vm551, %v3690, 0
    %v3800 = vsel %vm551, %v3692, 0
    %v3803 = vsel %vm551, %v3694, 0
    %v3806 = vsel %vm551, %v3696, 0
    %v3809 = vsel %vm551, %v3698, 0
    %v3812 = vsel %vm551, %v3700, 0
    %v3815 = vsel %vm551, %v3702, 0
    %v3818 = vsel %vm551, %v3704, 0
    %v3821 = vsel %vm551, %v3706, 0
    %v3824 = vsel %vm551, %v3708, 0
    %v3827 = vsel %vm551, %v3710, 0
    %v3830 = vsel %vm551, %v3712, 0
    %v3833 = vsel %vm551, %v3714, 0
    %v3836 = vsel %vm551, %v3716, 0
    %v3839 = vsel %vm551, %v3718, 0
    %v3842 = vsel %vm551, %v3720, 0
    %v3845 = vsel %vm551, %v3722, 0
    %v3848 = vsel %vm551, %v3724, 0
    %v3851 = vsel %vm551, %v3726, 0
    %v3854 = vsel %vm551, %v3728, 0
    %v3857 = vsel %vm551, %v3730, 0
    %v3860 = vsel %vm551, %v3732, 0
    %v3863 = vsel %vm551, %v3734, 0
    %v3866 = vsel %vm551, %v3736, 0
    %v3869 = vsel %vm551, %v3738, 0
    %v3872 = vsel %vm684, %v3426, 0
    %3874 = vmatpush.bf16.msra.mxu0 0
    %3875 = vmatpush.bf16.msra.mxu0 0
    %3876 = vmatpush.bf16.msra.mxu0 0
    %3877 = vmatpush.bf16.msra.mxu0 0
    %3878 = vmatpush.bf16.msra.mxu0 0
    %3879 = vmatpush.bf16.msra.mxu0 0
    %3880 = vmatpush.bf16.msra.mxu0 0
    %3881 = vmatpush.bf16.msra.mxu0 %v3872
    %3882 = vmatmul.bf16.gmra.mxu0 %v3740
    %v3883 = vpop.f32.mrf.mxu0
    %v3884 = vadd.f32 0.0, %v3883
    %v3885 = vpop.f32.mrf.mxu0
    %v3886 = vadd.f32 0.0, %v3885
    %3887 = vmatmul.bf16.gmra.mxu0 %v3743
    %v3888 = vpop.f32.mrf.mxu0
    %v3889 = vadd.f32 0.0, %v3888
    %v3890 = vpop.f32.mrf.mxu0
    %v3891 = vadd.f32 0.0, %v3890
    %3892 = vmatmul.bf16.gmra.mxu0 %v3746
    %v3893 = vpop.f32.mrf.mxu0
    %v3894 = vadd.f32 0.0, %v3893
    %v3895 = vpop.f32.mrf.mxu0
    %v3896 = vadd.f32 0.0, %v3895
    %3897 = vmatmul.bf16.gmra.mxu0 %v3749
    %v3898 = vpop.f32.mrf.mxu0
    %v3899 = vadd.f32 0.0, %v3898
    %v3900 = vpop.f32.mrf.mxu0
    %v3901 = vadd.f32 0.0, %v3900
    %3902 = vmatmul.bf16.gmra.mxu0 %v3752
    %v3903 = vpop.f32.mrf.mxu0
    %v3904 = vadd.f32 0.0, %v3903
    %v3905 = vpop.f32.mrf.mxu0
    %v3906 = vadd.f32 0.0, %v3905
    %3907 = vmatmul.bf16.gmra.mxu0 %v3755
    %v3908 = vpop.f32.mrf.mxu0
    %v3909 = vadd.f32 0.0, %v3908
    %v3910 = vpop.f32.mrf.mxu0
    %v3911 = vadd.f32 0.0, %v3910
    %3912 = vmatmul.bf16.gmra.mxu0 %v3758
    %v3913 = vpop.f32.mrf.mxu0
    %v3914 = vadd.f32 0.0, %v3913
    %v3915 = vpop.f32.mrf.mxu0
    %v3916 = vadd.f32 0.0, %v3915
    %3917 = vmatmul.bf16.gmra.mxu0 %v3761
    %v3918 = vpop.f32.mrf.mxu0
    %v3919 = vadd.f32 0.0, %v3918
    %v3920 = vpop.f32.mrf.mxu0
    %v3921 = vadd.f32 0.0, %v3920
    %3922 = vmatmul.bf16.gmra.mxu0 %v3764
    %v3923 = vpop.f32.mrf.mxu0
    %v3924 = vadd.f32 0.0, %v3923
    %v3925 = vpop.f32.mrf.mxu0
    %v3926 = vadd.f32 0.0, %v3925
    %3927 = vmatmul.bf16.gmra.mxu0 %v3767
    %v3928 = vpop.f32.mrf.mxu0
    %v3929 = vadd.f32 0.0, %v3928
    %v3930 = vpop.f32.mrf.mxu0
    %v3931 = vadd.f32 0.0, %v3930
    %3932 = vmatmul.bf16.gmra.mxu0 %v3770
    %v3933 = vpop.f32.mrf.mxu0
    %v3934 = vadd.f32 0.0, %v3933
    %v3935 = vpop.f32.mrf.mxu0
    %v3936 = vadd.f32 0.0, %v3935
    %3937 = vmatmul.bf16.gmra.mxu0 %v3773
    %v3938 = vpop.f32.mrf.mxu0
    %v3939 = vadd.f32 0.0, %v3938
    %v3940 = vpop.f32.mrf.mxu0
    %v3941 = vadd.f32 0.0, %v3940
    %3942 = vmatmul.bf16.gmra.mxu0 %v3776
    %v3943 = vpop.f32.mrf.mxu0
    %v3944 = vadd.f32 0.0, %v3943
    %v3945 = vpop.f32.mrf.mxu0
    %v3946 = vadd.f32 0.0, %v3945
    %3947 = vmatmul.bf16.gmra.mxu0 %v3779
    %v3948 = vpop.f32.mrf.mxu0
    %v3949 = vadd.f32 0.0, %v3948
    %v3950 = vpop.f32.mrf.mxu0
    %v3951 = vadd.f32 0.0, %v3950
    %3952 = vmatmul.bf16.gmra.mxu0 %v3782
    %v3953 = vpop.f32.mrf.mxu0
    %v3954 = vadd.f32 0.0, %v3953
    %v3955 = vpop.f32.mrf.mxu0
    %v3956 = vadd.f32 0.0, %v3955
    %3957 = vmatmul.bf16.gmra.mxu0 %v3785
    %v3958 = vpop.f32.mrf.mxu0
    %v3959 = vadd.f32 0.0, %v3958
    %v3960 = vpop.f32.mrf.mxu0
    %v3961 = vadd.f32 0.0, %v3960
    %3962 = vmatmul.bf16.gmra.mxu0 %v3788
    %v3963 = vpop.f32.mrf.mxu0
    %v3964 = vadd.f32 0.0, %v3963
    %v3965 = vpop.f32.mrf.mxu0
    %v3966 = vadd.f32 0.0, %v3965
    %3967 = vmatmul.bf16.gmra.mxu0 %v3791
    %v3968 = vpop.f32.mrf.mxu0
    %v3969 = vadd.f32 0.0, %v3968
    %v3970 = vpop.f32.mrf.mxu0
    %v3971 = vadd.f32 0.0, %v3970
    %3972 = vmatmul.bf16.gmra.mxu0 %v3794
    %v3973 = vpop.f32.mrf.mxu0
    %v3974 = vadd.f32 0.0, %v3973
    %v3975 = vpop.f32.mrf.mxu0
    %v3976 = vadd.f32 0.0, %v3975
    %3977 = vmatmul.bf16.gmra.mxu0 %v3797
    %v3978 = vpop.f32.mrf.mxu0
    %v3979 = vadd.f32 0.0, %v3978
    %v3980 = vpop.f32.mrf.mxu0
    %v3981 = vadd.f32 0.0, %v3980
    %3982 = vmatmul.bf16.gmra.mxu0 %v3800
    %v3983 = vpop.f32.mrf.mxu0
    %v3984 = vadd.f32 0.0, %v3983
    %v3985 = vpop.f32.mrf.mxu0
    %v3986 = vadd.f32 0.0, %v3985
    %3987 = vmatmul.bf16.gmra.mxu0 %v3803
    %v3988 = vpop.f32.mrf.mxu0
    %v3989 = vadd.f32 0.0, %v3988
    %v3990 = vpop.f32.mrf.mxu0
    %v3991 = vadd.f32 0.0, %v3990
    %3992 = vmatmul.bf16.gmra.mxu0 %v3806
    %v3993 = vpop.f32.mrf.mxu0
    %v3994 = vadd.f32 0.0, %v3993
    %v3995 = vpop.f32.mrf.mxu0
    %v3996 = vadd.f32 0.0, %v3995
    %3997 = vmatmul.bf16.gmra.mxu0 %v3809
    %v3998 = vpop.f32.mrf.mxu0
    %v3999 = vadd.f32 0.0, %v3998
    %v4000 = vpop.f32.mrf.mxu0
    %v4001 = vadd.f32 0.0, %v4000
    %4002 = vmatmul.bf16.gmra.mxu0 %v3812
    %v4003 = vpop.f32.mrf.mxu0
    %v4004 = vadd.f32 0.0, %v4003
    %v4005 = vpop.f32.mrf.mxu0
    %v4006 = vadd.f32 0.0, %v4005
    %4007 = vmatmul.bf16.gmra.mxu0 %v3815
    %v4008 = vpop.f32.mrf.mxu0
    %v4009 = vadd.f32 0.0, %v4008
    %v4010 = vpop.f32.mrf.mxu0
    %v4011 = vadd.f32 0.0, %v4010
    %4012 = vmatmul.bf16.gmra.mxu0 %v3818
    %v4013 = vpop.f32.mrf.mxu0
    %v4014 = vadd.f32 0.0, %v4013
    %v4015 = vpop.f32.mrf.mxu0
    %v4016 = vadd.f32 0.0, %v4015
    %4017 = vmatmul.bf16.gmra.mxu0 %v3821
    %v4018 = vpop.f32.mrf.mxu0
    %v4019 = vadd.f32 0.0, %v4018
    %v4020 = vpop.f32.mrf.mxu0
    %v4021 = vadd.f32 0.0, %v4020
    %4022 = vmatmul.bf16.gmra.mxu0 %v3824
    %v4023 = vpop.f32.mrf.mxu0
    %v4024 = vadd.f32 0.0, %v4023
    %v4025 = vpop.f32.mrf.mxu0
    %v4026 = vadd.f32 0.0, %v4025
    %4027 = vmatmul.bf16.gmra.mxu0 %v3827
    %v4028 = vpop.f32.mrf.mxu0
    %v4029 = vadd.f32 0.0, %v4028
    %v4030 = vpop.f32.mrf.mxu0
    %v4031 = vadd.f32 0.0, %v4030
    %4032 = vmatmul.bf16.gmra.mxu0 %v3830
    %v4033 = vpop.f32.mrf.mxu0
    %v4034 = vadd.f32 0.0, %v4033
    %v4035 = vpop.f32.mrf.mxu0
    %v4036 = vadd.f32 0.0, %v4035
    %4037 = vmatmul.bf16.gmra.mxu0 %v3833
    %v4038 = vpop.f32.mrf.mxu0
    %v4039 = vadd.f32 0.0, %v4038
    %v4040 = vpop.f32.mrf.mxu0
    %v4041 = vadd.f32 0.0, %v4040
    %4042 = vmatmul.bf16.gmra.mxu0 %v3836
    %v4043 = vpop.f32.mrf.mxu0
    %v4044 = vadd.f32 0.0, %v4043
    %v4045 = vpop.f32.mrf.mxu0
    %v4046 = vadd.f32 0.0, %v4045
    %4047 = vmatmul.bf16.gmra.mxu0 %v3839
    %v4048 = vpop.f32.mrf.mxu0
    %v4049 = vadd.f32 0.0, %v4048
    %v4050 = vpop.f32.mrf.mxu0
    %v4051 = vadd.f32 0.0, %v4050
    %4052 = vmatmul.bf16.gmra.mxu0 %v3842
    %v4053 = vpop.f32.mrf.mxu0
    %v4054 = vadd.f32 0.0, %v4053
    %v4055 = vpop.f32.mrf.mxu0
    %v4056 = vadd.f32 0.0, %v4055
    %4057 = vmatmul.bf16.gmra.mxu0 %v3845
    %v4058 = vpop.f32.mrf.mxu0
    %v4059 = vadd.f32 0.0, %v4058
    %v4060 = vpop.f32.mrf.mxu0
    %v4061 = vadd.f32 0.0, %v4060
    %4062 = vmatmul.bf16.gmra.mxu0 %v3848
    %v4063 = vpop.f32.mrf.mxu0
    %v4064 = vadd.f32 0.0, %v4063
    %v4065 = vpop.f32.mrf.mxu0
    %v4066 = vadd.f32 0.0, %v4065
    %4067 = vmatmul.bf16.gmra.mxu0 %v3851
    %v4068 = vpop.f32.mrf.mxu0
    %v4069 = vadd.f32 0.0, %v4068
    %v4070 = vpop.f32.mrf.mxu0
    %v4071 = vadd.f32 0.0, %v4070
    %4072 = vmatmul.bf16.gmra.mxu0 %v3854
    %v4073 = vpop.f32.mrf.mxu0
    %v4074 = vadd.f32 0.0, %v4073
    %v4075 = vpop.f32.mrf.mxu0
    %v4076 = vadd.f32 0.0, %v4075
    %4077 = vmatmul.bf16.gmra.mxu0 %v3857
    %v4078 = vpop.f32.mrf.mxu0
    %v4079 = vadd.f32 0.0, %v4078
    %v4080 = vpop.f32.mrf.mxu0
    %v4081 = vadd.f32 0.0, %v4080
    %4082 = vmatmul.bf16.gmra.mxu0 %v3860
    %v4083 = vpop.f32.mrf.mxu0
    %v4084 = vadd.f32 0.0, %v4083
    %v4085 = vpop.f32.mrf.mxu0
    %v4086 = vadd.f32 0.0, %v4085
    %4087 = vmatmul.bf16.gmra.mxu0 %v3863
    %v4088 = vpop.f32.mrf.mxu0
    %v4089 = vadd.f32 0.0, %v4088
    %v4090 = vpop.f32.mrf.mxu0
    %v4091 = vadd.f32 0.0, %v4090
    %4092 = vmatmul.bf16.gmra.mxu0 %v3866
    %v4093 = vpop.f32.mrf.mxu0
    %v4094 = vadd.f32 0.0, %v4093
    %v4095 = vpop.f32.mrf.mxu0
    %v4096 = vadd.f32 0.0, %v4095
    %4097 = vmatmul.bf16.gmra.mxu0 %v3869
    %v4098 = vpop.f32.mrf.mxu0
    %v4099 = vadd.f32 0.0, %v4098
    %v4100 = vpop.f32.mrf.mxu0
    %v4101 = vadd.f32 0.0, %v4100
    %4102 = vdwg.mxu0
    %v4103 = vld [vmem:[#allocation3] sm:$0xff]
    %v4104 = vld [vmem:[#allocation3 + $0x8] sm:$0xff]
    %v4105 = vld [vmem:[#allocation3 + $0x10] sm:$0xff]
    %v4106 = vld [vmem:[#allocation3 + $0x18] sm:$0xff]
    %v4107 = vld [vmem:[#allocation3 + $0x20] sm:$0xff]
    %v4108 = vld [vmem:[#allocation3 + $0x28] sm:$0xff]
    %v4109 = vld [vmem:[#allocation3 + $0x30] sm:$0xff]
    %v4110 = vld [vmem:[#allocation3 + $0x38] sm:$0xff]
    %v4111 = vld [vmem:[#allocation3 + $0x40] sm:$0xff]
    %v4112 = vld [vmem:[#allocation3 + $0x48] sm:$0xff]
    %v4113 = vld [vmem:[#allocation3 + $0x50] sm:$0xff]
    %v4114 = vld [vmem:[#allocation3 + $0x58] sm:$0xff]
    %v4115 = vld [vmem:[#allocation3 + $0x60] sm:$0xff]
    %v4116 = vld [vmem:[#allocation3 + $0x68] sm:$0xff]
    %v4117 = vld [vmem:[#allocation3 + $0x70] sm:$0xff]
    %v4118 = vld [vmem:[#allocation3 + $0x78] sm:$0xff]
    %v4119 = vld [vmem:[#allocation3 + $0x80] sm:$0xff]
    %v4120 = vld [vmem:[#allocation3 + $0x88] sm:$0xff]
    %v4121 = vld [vmem:[#allocation3 + $0x90] sm:$0xff]
    %v4122 = vld [vmem:[#allocation3 + $0x98] sm:$0xff]
    %v4123 = vld [vmem:[#allocation3 + $0xa0] sm:$0xff]
    %v4124 = vld [vmem:[#allocation3 + $0xa8] sm:$0xff]
    %v4125 = vld [vmem:[#allocation3 + $0xb0] sm:$0xff]
    %v4126 = vld [vmem:[#allocation3 + $0xb8] sm:$0xff]
    %v4127 = vld [vmem:[#allocation3 + $0xc0] sm:$0xff]
    %v4128 = vld [vmem:[#allocation3 + $0xc8] sm:$0xff]
    %v4129 = vld [vmem:[#allocation3 + $0xd0] sm:$0xff]
    %v4130 = vld [vmem:[#allocation3 + $0xd8] sm:$0xff]
    %v4131 = vld [vmem:[#allocation3 + $0xe0] sm:$0xff]
    %v4132 = vld [vmem:[#allocation3 + $0xe8] sm:$0xff]
    %v4133 = vld [vmem:[#allocation3 + $0xf0] sm:$0xff]
    %v4134 = vld [vmem:[#allocation3 + $0xf8] sm:$0xff]
    %v4135 = vld [vmem:[#allocation3 + $0x100] sm:$0xff]
    %v4136 = vld [vmem:[#allocation3 + $0x108] sm:$0xff]
    %v4137 = vld [vmem:[#allocation3 + $0x110] sm:$0xff]
    %v4138 = vld [vmem:[#allocation3 + $0x118] sm:$0xff]
    %v4139 = vld [vmem:[#allocation3 + $0x120] sm:$0xff]
    %v4140 = vld [vmem:[#allocation3 + $0x128] sm:$0xff]
    %v4141 = vld [vmem:[#allocation3 + $0x130] sm:$0xff]
    %v4142 = vld [vmem:[#allocation3 + $0x138] sm:$0xff]
    %v4143 = vld [vmem:[#allocation3 + $0x140] sm:$0xff]
    %v4144 = vld [vmem:[#allocation3 + $0x148] sm:$0xff]
    %v4145 = vld [vmem:[#allocation3 + $0x150] sm:$0xff]
    %v4146 = vld [vmem:[#allocation3 + $0x158] sm:$0xff]
    %v4147 = vld [vmem:[#allocation3 + $0x160] sm:$0xff]
    %v4148 = vld [vmem:[#allocation3 + $0x168] sm:$0xff]
    %v4149 = vld [vmem:[#allocation3 + $0x170] sm:$0xff]
    %v4150 = vld [vmem:[#allocation3 + $0x178] sm:$0xff]
    %v4151 = vld [vmem:[#allocation3 + $0x180] sm:$0xff]
    %v4152 = vld [vmem:[#allocation3 + $0x188] sm:$0xff]
    %v4153 = vld [vmem:[#allocation3 + $0x190] sm:$0xff]
    %v4154 = vld [vmem:[#allocation3 + $0x198] sm:$0xff]
    %v4155 = vld [vmem:[#allocation3 + $0x1a0] sm:$0xff]
    %v4156 = vld [vmem:[#allocation3 + $0x1a8] sm:$0xff]
    %v4157 = vld [vmem:[#allocation3 + $0x1b0] sm:$0xff]
    %v4158 = vld [vmem:[#allocation3 + $0x1b8] sm:$0xff]
    %v4159 = vld [vmem:[#allocation3 + $0x1c0] sm:$0xff]
    %v4160 = vld [vmem:[#allocation3 + $0x1c8] sm:$0xff]
    %v4161 = vld [vmem:[#allocation3 + $0x1d0] sm:$0xff]
    %v4162 = vld [vmem:[#allocation3 + $0x1d8] sm:$0xff]
    %v4163 = vld [vmem:[#allocation3 + $0x1e0] sm:$0xff]
    %v4164 = vld [vmem:[#allocation3 + $0x1e8] sm:$0xff]
    %v4165 = vld [vmem:[#allocation3 + $0x1f0] sm:$0xff]
    %v4166 = vld [vmem:[#allocation3 + $0x1f8] sm:$0xff]
    %v4167 = vld [vmem:[#allocation3 + $0x200] sm:$0xff]
    %v4168 = vld [vmem:[#allocation3 + $0x208] sm:$0xff]
    %v4169 = vld [vmem:[#allocation3 + $0x210] sm:$0xff]
    %v4170 = vld [vmem:[#allocation3 + $0x218] sm:$0xff]
    %v4171 = vld [vmem:[#allocation3 + $0x220] sm:$0xff]
    %v4172 = vld [vmem:[#allocation3 + $0x228] sm:$0xff]
    %v4173 = vld [vmem:[#allocation3 + $0x230] sm:$0xff]
    %v4174 = vld [vmem:[#allocation3 + $0x238] sm:$0xff]
    %v4175 = vld [vmem:[#allocation3 + $0x240] sm:$0xff]
    %v4176 = vld [vmem:[#allocation3 + $0x248] sm:$0xff]
    %v4177 = vld [vmem:[#allocation3 + $0x250] sm:$0xff]
    %v4178 = vld [vmem:[#allocation3 + $0x258] sm:$0xff]
    %v4179 = vld [vmem:[#allocation3 + $0x260] sm:$0xff]
    %v4180 = vld [vmem:[#allocation3 + $0x268] sm:$0xff]
    %v4181 = vld [vmem:[#allocation3 + $0x270] sm:$0xff]
    %v4182 = vld [vmem:[#allocation3 + $0x278] sm:$0xff]
    %v4183 = vld [vmem:[#allocation3 + $0x280] sm:$0xff]
    %v4184 = vld [vmem:[#allocation3 + $0x288] sm:$0xff]
    %v4185 = vld [vmem:[#allocation3 + $0x290] sm:$0xff]
    %v4186 = vld [vmem:[#allocation3 + $0x298] sm:$0xff]
    %v4187 = vld [vmem:[#allocation3 + $0x2a0] sm:$0xff]
    %v4188 = vld [vmem:[#allocation3 + $0x2a8] sm:$0xff]
    %v4189 = vld [vmem:[#allocation3 + $0x2b0] sm:$0xff]
    %v4190 = vld [vmem:[#allocation3 + $0x2b8] sm:$0xff]
    %v4191 = vadd.f32 %v4103, %v3884
    %v4192 = vadd.f32 %v4104, %v3886
    %v4193 = vadd.f32 %v4105, %v3889
    %v4194 = vadd.f32 %v4106, %v3891
    %v4195 = vadd.f32 %v4107, %v3894
    %v4196 = vadd.f32 %v4108, %v3896
    %v4197 = vadd.f32 %v4109, %v3899
    %v4198 = vadd.f32 %v4110, %v3901
    %v4199 = vadd.f32 %v4111, %v3904
    %v4200 = vadd.f32 %v4112, %v3906
    %v4201 = vadd.f32 %v4113, %v3909
    %v4202 = vadd.f32 %v4114, %v3911
    %v4203 = vadd.f32 %v4115, %v3914
    %v4204 = vadd.f32 %v4116, %v3916
    %v4205 = vadd.f32 %v4117, %v3919
    %v4206 = vadd.f32 %v4118, %v3921
    %v4207 = vadd.f32 %v4119, %v3924
    %v4208 = vadd.f32 %v4120, %v3926
    %v4209 = vadd.f32 %v4121, %v3929
    %v4210 = vadd.f32 %v4122, %v3931
    %v4211 = vadd.f32 %v4123, %v3934
    %v4212 = vadd.f32 %v4124, %v3936
    %v4213 = vadd.f32 %v4125, %v3939
    %v4214 = vadd.f32 %v4126, %v3941
    %v4215 = vadd.f32 %v4127, %v3944
    %v4216 = vadd.f32 %v4128, %v3946
    %v4217 = vadd.f32 %v4129, %v3949
    %v4218 = vadd.f32 %v4130, %v3951
    %v4219 = vadd.f32 %v4131, %v3954
    %v4220 = vadd.f32 %v4132, %v3956
    %v4221 = vadd.f32 %v4133, %v3959
    %v4222 = vadd.f32 %v4134, %v3961
    %v4223 = vadd.f32 %v4135, %v3964
    %v4224 = vadd.f32 %v4136, %v3966
    %v4225 = vadd.f32 %v4137, %v3969
    %v4226 = vadd.f32 %v4138, %v3971
    %v4227 = vadd.f32 %v4139, %v3974
    %v4228 = vadd.f32 %v4140, %v3976
    %v4229 = vadd.f32 %v4141, %v3979
    %v4230 = vadd.f32 %v4142, %v3981
    %v4231 = vadd.f32 %v4143, %v3984
    %v4232 = vadd.f32 %v4144, %v3986
    %v4233 = vadd.f32 %v4145, %v3989
    %v4234 = vadd.f32 %v4146, %v3991
    %v4235 = vadd.f32 %v4147, %v3994
    %v4236 = vadd.f32 %v4148, %v3996
    %v4237 = vadd.f32 %v4149, %v3999
    %v4238 = vadd.f32 %v4150, %v4001
    %v4239 = vadd.f32 %v4151, %v4004
    %v4240 = vadd.f32 %v4152, %v4006
    %v4241 = vadd.f32 %v4153, %v4009
    %v4242 = vadd.f32 %v4154, %v4011
    %v4243 = vadd.f32 %v4155, %v4014
    %v4244 = vadd.f32 %v4156, %v4016
    %v4245 = vadd.f32 %v4157, %v4019
    %v4246 = vadd.f32 %v4158, %v4021
    %v4247 = vadd.f32 %v4159, %v4024
    %v4248 = vadd.f32 %v4160, %v4026
    %v4249 = vadd.f32 %v4161, %v4029
    %v4250 = vadd.f32 %v4162, %v4031
    %v4251 = vadd.f32 %v4163, %v4034
    %v4252 = vadd.f32 %v4164, %v4036
    %v4253 = vadd.f32 %v4165, %v4039
    %v4254 = vadd.f32 %v4166, %v4041
    %v4255 = vadd.f32 %v4167, %v4044
    %v4256 = vadd.f32 %v4168, %v4046
    %v4257 = vadd.f32 %v4169, %v4049
    %v4258 = vadd.f32 %v4170, %v4051
    %v4259 = vadd.f32 %v4171, %v4054
    %v4260 = vadd.f32 %v4172, %v4056
    %v4261 = vadd.f32 %v4173, %v4059
    %v4262 = vadd.f32 %v4174, %v4061
    %v4263 = vadd.f32 %v4175, %v4064
    %v4264 = vadd.f32 %v4176, %v4066
    %v4265 = vadd.f32 %v4177, %v4069
    %v4266 = vadd.f32 %v4178, %v4071
    %v4267 = vadd.f32 %v4179, %v4074
    %v4268 = vadd.f32 %v4180, %v4076
    %v4269 = vadd.f32 %v4181, %v4079
    %v4270 = vadd.f32 %v4182, %v4081
    %v4271 = vadd.f32 %v4183, %v4084
    %v4272 = vadd.f32 %v4184, %v4086
    %v4273 = vadd.f32 %v4185, %v4089
    %v4274 = vadd.f32 %v4186, %v4091
    %v4275 = vadd.f32 %v4187, %v4094
    %v4276 = vadd.f32 %v4188, %v4096
    %v4277 = vadd.f32 %v4189, %v4099
    %v4278 = vadd.f32 %v4190, %v4101
    %4279 = vst [vmem:[#allocation3] sm:$0xff] %v4191
    %4280 = vst [vmem:[#allocation3 + $0x8] sm:$0xff] %v4192
    %4281 = vst [vmem:[#allocation3 + $0x10] sm:$0xff] %v4193
    %4282 = vst [vmem:[#allocation3 + $0x18] sm:$0xff] %v4194
    %4283 = vst [vmem:[#allocation3 + $0x20] sm:$0xff] %v4195
    %4284 = vst [vmem:[#allocation3 + $0x28] sm:$0xff] %v4196
    %4285 = vst [vmem:[#allocation3 + $0x30] sm:$0xff] %v4197
    %4286 = vst [vmem:[#allocation3 + $0x38] sm:$0xff] %v4198
    %4287 = vst [vmem:[#allocation3 + $0x40] sm:$0xff] %v4199
    %4288 = vst [vmem:[#allocation3 + $0x48] sm:$0xff] %v4200
    %4289 = vst [vmem:[#allocation3 + $0x50] sm:$0xff] %v4201
    %4290 = vst [vmem:[#allocation3 + $0x58] sm:$0xff] %v4202
    %4291 = vst [vmem:[#allocation3 + $0x60] sm:$0xff] %v4203
    %4292 = vst [vmem:[#allocation3 + $0x68] sm:$0xff] %v4204
    %4293 = vst [vmem:[#allocation3 + $0x70] sm:$0xff] %v4205
    %4294 = vst [vmem:[#allocation3 + $0x78] sm:$0xff] %v4206
    %4295 = vst [vmem:[#allocation3 + $0x80] sm:$0xff] %v4207
    %4296 = vst [vmem:[#allocation3 + $0x88] sm:$0xff] %v4208
    %4297 = vst [vmem:[#allocation3 + $0x90] sm:$0xff] %v4209
    %4298 = vst [vmem:[#allocation3 + $0x98] sm:$0xff] %v4210
    %4299 = vst [vmem:[#allocation3 + $0xa0] sm:$0xff] %v4211
    %4300 = vst [vmem:[#allocation3 + $0xa8] sm:$0xff] %v4212
    %4301 = vst [vmem:[#allocation3 + $0xb0] sm:$0xff] %v4213
    %4302 = vst [vmem:[#allocation3 + $0xb8] sm:$0xff] %v4214
    %4303 = vst [vmem:[#allocation3 + $0xc0] sm:$0xff] %v4215
    %4304 = vst [vmem:[#allocation3 + $0xc8] sm:$0xff] %v4216
    %4305 = vst [vmem:[#allocation3 + $0xd0] sm:$0xff] %v4217
    %4306 = vst [vmem:[#allocation3 + $0xd8] sm:$0xff] %v4218
    %4307 = vst [vmem:[#allocation3 + $0xe0] sm:$0xff] %v4219
    %4308 = vst [vmem:[#allocation3 + $0xe8] sm:$0xff] %v4220
    %4309 = vst [vmem:[#allocation3 + $0xf0] sm:$0xff] %v4221
    %4310 = vst [vmem:[#allocation3 + $0xf8] sm:$0xff] %v4222
    %4311 = vst [vmem:[#allocation3 + $0x100] sm:$0xff] %v4223
    %4312 = vst [vmem:[#allocation3 + $0x108] sm:$0xff] %v4224
    %4313 = vst [vmem:[#allocation3 + $0x110] sm:$0xff] %v4225
    %4314 = vst [vmem:[#allocation3 + $0x118] sm:$0xff] %v4226
    %4315 = vst [vmem:[#allocation3 + $0x120] sm:$0xff] %v4227
    %4316 = vst [vmem:[#allocation3 + $0x128] sm:$0xff] %v4228
    %4317 = vst [vmem:[#allocation3 + $0x130] sm:$0xff] %v4229
    %4318 = vst [vmem:[#allocation3 + $0x138] sm:$0xff] %v4230
    %4319 = vst [vmem:[#allocation3 + $0x140] sm:$0xff] %v4231
    %4320 = vst [vmem:[#allocation3 + $0x148] sm:$0xff] %v4232
    %4321 = vst [vmem:[#allocation3 + $0x150] sm:$0xff] %v4233
    %4322 = vst [vmem:[#allocation3 + $0x158] sm:$0xff] %v4234
    %4323 = vst [vmem:[#allocation3 + $0x160] sm:$0xff] %v4235
    %4324 = vst [vmem:[#allocation3 + $0x168] sm:$0xff] %v4236
    %4325 = vst [vmem:[#allocation3 + $0x170] sm:$0xff] %v4237
    %4326 = vst [vmem:[#allocation3 + $0x178] sm:$0xff] %v4238
    %4327 = vst [vmem:[#allocation3 + $0x180] sm:$0xff] %v4239
    %4328 = vst [vmem:[#allocation3 + $0x188] sm:$0xff] %v4240
    %4329 = vst [vmem:[#allocation3 + $0x190] sm:$0xff] %v4241
    %4330 = vst [vmem:[#allocation3 + $0x198] sm:$0xff] %v4242
    %4331 = vst [vmem:[#allocation3 + $0x1a0] sm:$0xff] %v4243
    %4332 = vst [vmem:[#allocation3 + $0x1a8] sm:$0xff] %v4244
    %4333 = vst [vmem:[#allocation3 + $0x1b0] sm:$0xff] %v4245
    %4334 = vst [vmem:[#allocation3 + $0x1b8] sm:$0xff] %v4246
    %4335 = vst [vmem:[#allocation3 + $0x1c0] sm:$0xff] %v4247
    %4336 = vst [vmem:[#allocation3 + $0x1c8] sm:$0xff] %v4248
    %4337 = vst [vmem:[#allocation3 + $0x1d0] sm:$0xff] %v4249
    %4338 = vst [vmem:[#allocation3 + $0x1d8] sm:$0xff] %v4250
    %4339 = vst [vmem:[#allocation3 + $0x1e0] sm:$0xff] %v4251
    %4340 = vst [vmem:[#allocation3 + $0x1e8] sm:$0xff] %v4252
    %4341 = vst [vmem:[#allocation3 + $0x1f0] sm:$0xff] %v4253
    %4342 = vst [vmem:[#allocation3 + $0x1f8] sm:$0xff] %v4254
    %4343 = vst [vmem:[#allocation3 + $0x200] sm:$0xff] %v4255
    %4344 = vst [vmem:[#allocation3 + $0x208] sm:$0xff] %v4256
    %4345 = vst [vmem:[#allocation3 + $0x210] sm:$0xff] %v4257
    %4346 = vst [vmem:[#allocation3 + $0x218] sm:$0xff] %v4258
    %4347 = vst [vmem:[#allocation3 + $0x220] sm:$0xff] %v4259
    %4348 = vst [vmem:[#allocation3 + $0x228] sm:$0xff] %v4260
    %4349 = vst [vmem:[#allocation3 + $0x230] sm:$0xff] %v4261
    %4350 = vst [vmem:[#allocation3 + $0x238] sm:$0xff] %v4262
    %4351 = vst [vmem:[#allocation3 + $0x240] sm:$0xff] %v4263
    %4352 = vst [vmem:[#allocation3 + $0x248] sm:$0xff] %v4264
    %4353 = vst [vmem:[#allocation3 + $0x250] sm:$0xff] %v4265
    %4354 = vst [vmem:[#allocation3 + $0x258] sm:$0xff] %v4266
    %4355 = vst [vmem:[#allocation3 + $0x260] sm:$0xff] %v4267
    %4356 = vst [vmem:[#allocation3 + $0x268] sm:$0xff] %v4268
    %4357 = vst [vmem:[#allocation3 + $0x270] sm:$0xff] %v4269
    %4358 = vst [vmem:[#allocation3 + $0x278] sm:$0xff] %v4270
    %4359 = vst [vmem:[#allocation3 + $0x280] sm:$0xff] %v4271
    %4360 = vst [vmem:[#allocation3 + $0x288] sm:$0xff] %v4272
    %4361 = vst [vmem:[#allocation3 + $0x290] sm:$0xff] %v4273
    %4362 = vst [vmem:[#allocation3 + $0x298] sm:$0xff] %v4274
    %4363 = vst [vmem:[#allocation3 + $0x2a0] sm:$0xff] %v4275
    %4364 = vst [vmem:[#allocation3 + $0x2a8] sm:$0xff] %v4276
    %4365 = vst [vmem:[#allocation3 + $0x2b0] sm:$0xff] %v4277
    %4366 = vst [vmem:[#allocation3 + $0x2b8] sm:$0xff] %v4278
    %v4367 = vld [vmem:[#allocation2 + $0x8] sm:$0xe]
    %v4368 = vld [vmem:[#allocation2 + $0xc] sm:$0xf]
    %v4369 = vld [vmem:[#allocation2 + $0x10] sm:$0xf]
    %v4370 = vld [vmem:[#allocation2 + $0x14] sm:$0xf]
    %v4371 = vld [vmem:[#allocation2 + $0x18] sm:$0xf]
    %v4372 = vld [vmem:[#allocation2 + $0x1c] sm:$0xf]
    %v4373 = vld [vmem:[#allocation2 + $0x20] sm:$0xf]
    %v4374 = vld [vmem:[#allocation2 + $0x24] sm:$0xf]
    %v4375 = vld [vmem:[#allocation2 + $0x28] sm:$0xf]
    %v4376 = vld [vmem:[#allocation2 + $0x2c] sm:$0xf]
    %v4377 = vld [vmem:[#allocation2 + $0x30] sm:$0xf]
    %v4378 = vld [vmem:[#allocation2 + $0x34] sm:$0xf]
    %v4379 = vld [vmem:[#allocation2 + $0x38] sm:$0xf]
    %v4380 = vld [vmem:[#allocation2 + $0x3c] sm:$0xf]
    %v4381 = vld [vmem:[#allocation2 + $0x40] sm:$0xf]
    %v4382 = vld [vmem:[#allocation2 + $0x44] sm:$0xf]
    %v4383 = vld [vmem:[#allocation2 + $0x48] sm:$0xf]
    %v4384 = vld [vmem:[#allocation2 + $0x4c] sm:$0xf]
    %v4385 = vld [vmem:[#allocation2 + $0x50] sm:$0xf]
    %v4386 = vld [vmem:[#allocation2 + $0x54] sm:$0xf]
    %v4387 = vld [vmem:[#allocation2 + $0x58] sm:$0xf]
    %v4388 = vld [vmem:[#allocation2 + $0x5c] sm:$0xf]
    %v4389 = vld [vmem:[#allocation2 + $0x60] sm:$0xf]
    %v4390 = vld [vmem:[#allocation2 + $0x64] sm:$0xf]
    %v4391 = vld [vmem:[#allocation2 + $0x68] sm:$0xf]
    %v4392 = vld [vmem:[#allocation2 + $0x6c] sm:$0xf]
    %v4393 = vld [vmem:[#allocation2 + $0x70] sm:$0xf]
    %v4394 = vld [vmem:[#allocation2 + $0x74] sm:$0xf]
    %v4395 = vld [vmem:[#allocation2 + $0x78] sm:$0xf]
    %v4396 = vld [vmem:[#allocation2 + $0x7c] sm:$0xf]
    %v4397 = vld [vmem:[#allocation2 + $0x80] sm:$0xf]
    %v4398 = vld [vmem:[#allocation2 + $0x84] sm:$0xf]
    %v4399 = vld [vmem:[#allocation2 + $0x88] sm:$0xf]
    %v4400 = vld [vmem:[#allocation2 + $0x8c] sm:$0xf]
    %v4401 = vld [vmem:[#allocation2 + $0x90] sm:$0xf]
    %v4402 = vld [vmem:[#allocation2 + $0x94] sm:$0xf]
    %v4403 = vld [vmem:[#allocation2 + $0x98] sm:$0xf]
    %v4404 = vld [vmem:[#allocation2 + $0x9c] sm:$0xf]
    %v4405 = vld [vmem:[#allocation2 + $0xa0] sm:$0xf]
    %v4406 = vld [vmem:[#allocation2 + $0xa4] sm:$0xf]
    %v4407 = vld [vmem:[#allocation2 + $0xa8] sm:$0xf]
    %v4408 = vld [vmem:[#allocation2 + $0xac] sm:$0xf]
    %v4409 = vld [vmem:[#allocation2 + $0xb0] sm:$0xf]
    %v4410 = vld [vmem:[#allocation2 + $0xb4] sm:$0xf]
    %v4411 = vld [vmem:[#allocation2 + $0xb8] sm:$0xf]
    %v4412 = vld [vmem:[#allocation2 + $0xbc] sm:$0xf]
    %v4413 = vld [vmem:[#allocation2 + $0xc0] sm:$0xf]
    %v4414 = vld [vmem:[#allocation2 + $0xc4] sm:$0xf]
    %v4415 = vld [vmem:[#allocation2 + $0xc8] sm:$0xf]
    %v4416 = vld [vmem:[#allocation2 + $0xcc] sm:$0xf]
    %v4417 = vld [vmem:[#allocation2 + $0xd0] sm:$0xf]
    %v4418 = vld [vmem:[#allocation2 + $0xd4] sm:$0xf]
    %v4419 = vld [vmem:[#allocation2 + $0xd8] sm:$0xf]
    %v4420 = vld [vmem:[#allocation2 + $0xdc] sm:$0xf]
    %v4421 = vld [vmem:[#allocation2 + $0xe0] sm:$0xf]
    %v4422 = vld [vmem:[#allocation2 + $0xe4] sm:$0xf]
    %v4423 = vld [vmem:[#allocation2 + $0xe8] sm:$0xf]
    %v4424 = vld [vmem:[#allocation2 + $0xec] sm:$0xf]
    %v4425 = vld [vmem:[#allocation2 + $0xf0] sm:$0xf]
    %v4426 = vld [vmem:[#allocation2 + $0xf4] sm:$0xf]
    %v4427 = vld [vmem:[#allocation2 + $0xf8] sm:$0xf]
    %v4428 = vld [vmem:[#allocation2 + $0xfc] sm:$0xf]
    %v4429 = vld [vmem:[#allocation2 + $0x100] sm:$0xf]
    %v4430 = vld [vmem:[#allocation2 + $0x104] sm:$0xf]
    %v4431 = vld [vmem:[#allocation2 + $0x108] sm:$0xf]
    %v4432 = vld [vmem:[#allocation2 + $0x10c] sm:$0xf]
    %v4433 = vld [vmem:[#allocation2 + $0x110] sm:$0xf]
    %v4434 = vld [vmem:[#allocation2 + $0x114] sm:$0xf]
    %v4435 = vld [vmem:[#allocation2 + $0x118] sm:$0xf]
    %v4436 = vld [vmem:[#allocation2 + $0x11c] sm:$0xf]
    %v4437 = vld [vmem:[#allocation2 + $0x120] sm:$0xf]
    %v4438 = vld [vmem:[#allocation2 + $0x124] sm:$0xf]
    %v4439 = vld [vmem:[#allocation2 + $0x128] sm:$0xf]
    %v4440 = vld [vmem:[#allocation2 + $0x12c] sm:$0xf]
    %v4441 = vld [vmem:[#allocation2 + $0x130] sm:$0xf]
    %v4442 = vld [vmem:[#allocation2 + $0x134] sm:$0xf]
    %v4443 = vld [vmem:[#allocation2 + $0x138] sm:$0xf]
    %v4444 = vld [vmem:[#allocation2 + $0x13c] sm:$0xf]
    %v4445 = vld [vmem:[#allocation2 + $0x140] sm:$0xf]
    %v4446 = vld [vmem:[#allocation2 + $0x144] sm:$0xf]
    %v4447 = vld [vmem:[#allocation2 + $0x148] sm:$0xf]
    %v4448 = vld [vmem:[#allocation2 + $0x14c] sm:$0xf]
    %v4449 = vld [vmem:[#allocation2 + $0x150] sm:$0xf]
    %v4450 = vld [vmem:[#allocation2 + $0x154] sm:$0xf]
    %v4451 = vld [vmem:[#allocation2 + $0x158] sm:$0xf]
    %v4452 = vld [vmem:[#allocation2 + $0x15c] sm:$0xf]
    %v4453 = vld [vmem:[#allocation2 + $0x160] sm:$0xf]
    %v4454 = vld [vmem:[#allocation2 + $0x164] sm:$0xf]
    %v4455 = vld [vmem:[#allocation2 + $0x168] sm:$0x3]
    %s4456 = scalar_lea.vmem %s2, 8
    %v4457 = vld [vmem:[%s4456] sm:$0x3]
    %v4547 = vunpack.c.l.b16 %v4367
    %v4548 = vunpack.c.l.b16 %v4368
    %v4549 = vunpack.c.l.b16 %v4369
    %v4550 = vunpack.c.l.b16 %v4370
    %v4551 = vunpack.c.l.b16 %v4371
    %v4552 = vunpack.c.l.b16 %v4372
    %v4553 = vunpack.c.l.b16 %v4373
    %v4554 = vunpack.c.l.b16 %v4374
    %v4555 = vunpack.c.l.b16 %v4375
    %v4556 = vunpack.c.l.b16 %v4376
    %v4557 = vunpack.c.l.b16 %v4377
    %v4558 = vunpack.c.l.b16 %v4378
    %v4559 = vunpack.c.l.b16 %v4379
    %v4560 = vunpack.c.l.b16 %v4380
    %v4561 = vunpack.c.l.b16 %v4381
    %v4562 = vunpack.c.l.b16 %v4382
    %v4563 = vunpack.c.l.b16 %v4383
    %v4564 = vunpack.c.l.b16 %v4384
    %v4565 = vunpack.c.l.b16 %v4385
    %v4566 = vunpack.c.l.b16 %v4386
    %v4567 = vunpack.c.l.b16 %v4387
    %v4568 = vunpack.c.l.b16 %v4388
    %v4569 = vunpack.c.l.b16 %v4389
    %v4570 = vunpack.c.l.b16 %v4390
    %v4571 = vunpack.c.l.b16 %v4391
    %v4572 = vunpack.c.l.b16 %v4392
    %v4573 = vunpack.c.l.b16 %v4393
    %v4574 = vunpack.c.l.b16 %v4394
    %v4575 = vunpack.c.l.b16 %v4395
    %v4576 = vunpack.c.l.b16 %v4396
    %v4577 = vunpack.c.l.b16 %v4397
    %v4578 = vunpack.c.l.b16 %v4398
    %v4579 = vunpack.c.l.b16 %v4399
    %v4580 = vunpack.c.l.b16 %v4400
    %v4581 = vunpack.c.l.b16 %v4401
    %v4582 = vunpack.c.l.b16 %v4402
    %v4583 = vunpack.c.l.b16 %v4403
    %v4584 = vunpack.c.l.b16 %v4404
    %v4585 = vunpack.c.l.b16 %v4405
    %v4586 = vunpack.c.l.b16 %v4406
    %v4587 = vunpack.c.l.b16 %v4407
    %v4588 = vunpack.c.l.b16 %v4408
    %v4589 = vunpack.c.l.b16 %v4409
    %v4590 = vunpack.c.l.b16 %v4410
    %v4591 = vunpack.c.l.b16 %v4411
    %v4592 = vunpack.c.l.b16 %v4412
    %v4593 = vunpack.c.l.b16 %v4413
    %v4594 = vunpack.c.l.b16 %v4414
    %v4595 = vunpack.c.l.b16 %v4415
    %v4596 = vunpack.c.l.b16 %v4416
    %v4597 = vunpack.c.l.b16 %v4417
    %v4598 = vunpack.c.l.b16 %v4418
    %v4599 = vunpack.c.l.b16 %v4419
    %v4600 = vunpack.c.l.b16 %v4420
    %v4601 = vunpack.c.l.b16 %v4421
    %v4602 = vunpack.c.l.b16 %v4422
    %v4603 = vunpack.c.l.b16 %v4423
    %v4604 = vunpack.c.l.b16 %v4424
    %v4605 = vunpack.c.l.b16 %v4425
    %v4606 = vunpack.c.l.b16 %v4426
    %v4607 = vunpack.c.l.b16 %v4427
    %v4608 = vunpack.c.l.b16 %v4428
    %v4609 = vunpack.c.l.b16 %v4429
    %v4610 = vunpack.c.l.b16 %v4430
    %v4611 = vunpack.c.l.b16 %v4431
    %v4612 = vunpack.c.l.b16 %v4432
    %v4613 = vunpack.c.l.b16 %v4433
    %v4614 = vunpack.c.l.b16 %v4434
    %v4615 = vunpack.c.l.b16 %v4435
    %v4616 = vunpack.c.l.b16 %v4436
    %v4617 = vunpack.c.l.b16 %v4437
    %v4618 = vunpack.c.l.b16 %v4438
    %v4619 = vunpack.c.l.b16 %v4439
    %v4620 = vunpack.c.l.b16 %v4440
    %v4621 = vunpack.c.l.b16 %v4441
    %v4622 = vunpack.c.l.b16 %v4442
    %v4623 = vunpack.c.l.b16 %v4443
    %v4624 = vunpack.c.l.b16 %v4444
    %v4625 = vunpack.c.l.b16 %v4445
    %v4626 = vunpack.c.l.b16 %v4446
    %v4627 = vunpack.c.l.b16 %v4447
    %v4628 = vunpack.c.l.b16 %v4448
    %v4629 = vunpack.c.l.b16 %v4449
    %v4630 = vunpack.c.l.b16 %v4450
    %v4631 = vunpack.c.l.b16 %v4451
    %v4632 = vunpack.c.l.b16 %v4452
    %v4633 = vunpack.c.l.b16 %v4453
    %v4634 = vunpack.c.l.b16 %v4454
    %v4635 = vunpack.c.l.b16 %v4455
    %v4636 = vpack.c.b16 %v4548, %v4547
    %v4637 = vpack.c.b16 %v4550, %v4549
    %v4638 = vpack.c.b16 %v4552, %v4551
    %v4639 = vpack.c.b16 %v4554, %v4553
    %v4640 = vpack.c.b16 %v4556, %v4555
    %v4641 = vpack.c.b16 %v4558, %v4557
    %v4642 = vpack.c.b16 %v4560, %v4559
    %v4643 = vpack.c.b16 %v4562, %v4561
    %v4644 = vpack.c.b16 %v4564, %v4563
    %v4645 = vpack.c.b16 %v4566, %v4565
    %v4646 = vpack.c.b16 %v4568, %v4567
    %v4647 = vpack.c.b16 %v4570, %v4569
    %v4648 = vpack.c.b16 %v4572, %v4571
    %v4649 = vpack.c.b16 %v4574, %v4573
    %v4650 = vpack.c.b16 %v4576, %v4575
    %v4651 = vpack.c.b16 %v4578, %v4577
    %v4652 = vpack.c.b16 %v4580, %v4579
    %v4653 = vpack.c.b16 %v4582, %v4581
    %v4654 = vpack.c.b16 %v4584, %v4583
    %v4655 = vpack.c.b16 %v4586, %v4585
    %v4656 = vpack.c.b16 %v4588, %v4587
    %v4657 = vpack.c.b16 %v4590, %v4589
    %v4658 = vpack.c.b16 %v4592, %v4591
    %v4659 = vpack.c.b16 %v4594, %v4593
    %v4660 = vpack.c.b16 %v4596, %v4595
    %v4661 = vpack.c.b16 %v4598, %v4597
    %v4662 = vpack.c.b16 %v4600, %v4599
    %v4663 = vpack.c.b16 %v4602, %v4601
    %v4664 = vpack.c.b16 %v4604, %v4603
    %v4665 = vpack.c.b16 %v4606, %v4605
    %v4666 = vpack.c.b16 %v4608, %v4607
    %v4667 = vpack.c.b16 %v4610, %v4609
    %v4668 = vpack.c.b16 %v4612, %v4611
    %v4669 = vpack.c.b16 %v4614, %v4613
    %v4670 = vpack.c.b16 %v4616, %v4615
    %v4671 = vpack.c.b16 %v4618, %v4617
    %v4672 = vpack.c.b16 %v4620, %v4619
    %v4673 = vpack.c.b16 %v4622, %v4621
    %v4674 = vpack.c.b16 %v4624, %v4623
    %v4675 = vpack.c.b16 %v4626, %v4625
    %v4676 = vpack.c.b16 %v4628, %v4627
    %v4677 = vpack.c.b16 %v4630, %v4629
    %v4678 = vpack.c.b16 %v4632, %v4631
    %v4679 = vpack.c.b16 %v4634, %v4633
    %v4680 = vpack.c.b16 %v4635, %v4635
    %vm4681 = vsmask.f32 6400
    %v4683 = vshrl.u32 %v4636, 16
    %v4685 = vrot.slane %v4683, 1
    %v4686 = vshll.u32 %v4636, 16
    %v4688 = vrot.slane %v4686, 2
    %v4689 = vor.u32 %v4685, %v4688
    %v4691 = vshrl.u32 %v4637, 16
    %v4693 = vrot.slane %v4691, 1
    %v4694 = vshll.u32 %v4637, 16
    %v4696 = vrot.slane %v4694, 2
    %v4697 = vor.u32 %v4693, %v4696
    %v4698 = vsel %vm4681, %v4689, %v4697
    %v4700 = vshrl.u32 %v4638, 16
    %v4702 = vrot.slane %v4700, 1
    %v4703 = vshll.u32 %v4638, 16
    %v4705 = vrot.slane %v4703, 2
    %v4706 = vor.u32 %v4702, %v4705
    %v4707 = vsel %vm4681, %v4697, %v4706
    %v4709 = vshrl.u32 %v4639, 16
    %v4711 = vrot.slane %v4709, 1
    %v4712 = vshll.u32 %v4639, 16
    %v4714 = vrot.slane %v4712, 2
    %v4715 = vor.u32 %v4711, %v4714
    %v4716 = vsel %vm4681, %v4706, %v4715
    %v4718 = vshrl.u32 %v4640, 16
    %v4720 = vrot.slane %v4718, 1
    %v4721 = vshll.u32 %v4640, 16
    %v4723 = vrot.slane %v4721, 2
    %v4724 = vor.u32 %v4720, %v4723
    %v4725 = vsel %vm4681, %v4715, %v4724
    %v4727 = vshrl.u32 %v4641, 16
    %v4729 = vrot.slane %v4727, 1
    %v4730 = vshll.u32 %v4641, 16
    %v4732 = vrot.slane %v4730, 2
    %v4733 = vor.u32 %v4729, %v4732
    %v4734 = vsel %vm4681, %v4724, %v4733
    %v4736 = vshrl.u32 %v4642, 16
    %v4738 = vrot.slane %v4736, 1
    %v4739 = vshll.u32 %v4642, 16
    %v4741 = vrot.slane %v4739, 2
    %v4742 = vor.u32 %v4738, %v4741
    %v4743 = vsel %vm4681, %v4733, %v4742
    %v4745 = vshrl.u32 %v4643, 16
    %v4747 = vrot.slane %v4745, 1
    %v4748 = vshll.u32 %v4643, 16
    %v4750 = vrot.slane %v4748, 2
    %v4751 = vor.u32 %v4747, %v4750
    %v4752 = vsel %vm4681, %v4742, %v4751
    %v4754 = vshrl.u32 %v4644, 16
    %v4756 = vrot.slane %v4754, 1
    %v4757 = vshll.u32 %v4644, 16
    %v4759 = vrot.slane %v4757, 2
    %v4760 = vor.u32 %v4756, %v4759
    %v4761 = vsel %vm4681, %v4751, %v4760
    %v4763 = vshrl.u32 %v4645, 16
    %v4765 = vrot.slane %v4763, 1
    %v4766 = vshll.u32 %v4645, 16
    %v4768 = vrot.slane %v4766, 2
    %v4769 = vor.u32 %v4765, %v4768
    %v4770 = vsel %vm4681, %v4760, %v4769
    %v4772 = vshrl.u32 %v4646, 16
    %v4774 = vrot.slane %v4772, 1
    %v4775 = vshll.u32 %v4646, 16
    %v4777 = vrot.slane %v4775, 2
    %v4778 = vor.u32 %v4774, %v4777
    %v4779 = vsel %vm4681, %v4769, %v4778
    %v4781 = vshrl.u32 %v4647, 16
    %v4783 = vrot.slane %v4781, 1
    %v4784 = vshll.u32 %v4647, 16
    %v4786 = vrot.slane %v4784, 2
    %v4787 = vor.u32 %v4783, %v4786
    %v4788 = vsel %vm4681, %v4778, %v4787
    %v4790 = vshrl.u32 %v4648, 16
    %v4792 = vrot.slane %v4790, 1
    %v4793 = vshll.u32 %v4648, 16
    %v4795 = vrot.slane %v4793, 2
    %v4796 = vor.u32 %v4792, %v4795
    %v4797 = vsel %vm4681, %v4787, %v4796
    %v4799 = vshrl.u32 %v4649, 16
    %v4801 = vrot.slane %v4799, 1
    %v4802 = vshll.u32 %v4649, 16
    %v4804 = vrot.slane %v4802, 2
    %v4805 = vor.u32 %v4801, %v4804
    %v4806 = vsel %vm4681, %v4796, %v4805
    %v4808 = vshrl.u32 %v4650, 16
    %v4810 = vrot.slane %v4808, 1
    %v4811 = vshll.u32 %v4650, 16
    %v4813 = vrot.slane %v4811, 2
    %v4814 = vor.u32 %v4810, %v4813
    %v4815 = vsel %vm4681, %v4805, %v4814
    %v4817 = vshrl.u32 %v4651, 16
    %v4819 = vrot.slane %v4817, 1
    %v4820 = vshll.u32 %v4651, 16
    %v4822 = vrot.slane %v4820, 2
    %v4823 = vor.u32 %v4819, %v4822
    %v4824 = vsel %vm4681, %v4814, %v4823
    %v4826 = vshrl.u32 %v4652, 16
    %v4828 = vrot.slane %v4826, 1
    %v4829 = vshll.u32 %v4652, 16
    %v4831 = vrot.slane %v4829, 2
    %v4832 = vor.u32 %v4828, %v4831
    %v4833 = vsel %vm4681, %v4823, %v4832
    %v4835 = vshrl.u32 %v4653, 16
    %v4837 = vrot.slane %v4835, 1
    %v4838 = vshll.u32 %v4653, 16
    %v4840 = vrot.slane %v4838, 2
    %v4841 = vor.u32 %v4837, %v4840
    %v4842 = vsel %vm4681, %v4832, %v4841
    %v4844 = vshrl.u32 %v4654, 16
    %v4846 = vrot.slane %v4844, 1
    %v4847 = vshll.u32 %v4654, 16
    %v4849 = vrot.slane %v4847, 2
    %v4850 = vor.u32 %v4846, %v4849
    %v4851 = vsel %vm4681, %v4841, %v4850
    %v4853 = vshrl.u32 %v4655, 16
    %v4855 = vrot.slane %v4853, 1
    %v4856 = vshll.u32 %v4655, 16
    %v4858 = vrot.slane %v4856, 2
    %v4859 = vor.u32 %v4855, %v4858
    %v4860 = vsel %vm4681, %v4850, %v4859
    %v4862 = vshrl.u32 %v4656, 16
    %v4864 = vrot.slane %v4862, 1
    %v4865 = vshll.u32 %v4656, 16
    %v4867 = vrot.slane %v4865, 2
    %v4868 = vor.u32 %v4864, %v4867
    %v4869 = vsel %vm4681, %v4859, %v4868
    %v4871 = vshrl.u32 %v4657, 16
    %v4873 = vrot.slane %v4871, 1
    %v4874 = vshll.u32 %v4657, 16
    %v4876 = vrot.slane %v4874, 2
    %v4877 = vor.u32 %v4873, %v4876
    %v4878 = vsel %vm4681, %v4868, %v4877
    %v4880 = vshrl.u32 %v4658, 16
    %v4882 = vrot.slane %v4880, 1
    %v4883 = vshll.u32 %v4658, 16
    %v4885 = vrot.slane %v4883, 2
    %v4886 = vor.u32 %v4882, %v4885
    %v4887 = vsel %vm4681, %v4877, %v4886
    %v4889 = vshrl.u32 %v4659, 16
    %v4891 = vrot.slane %v4889, 1
    %v4892 = vshll.u32 %v4659, 16
    %v4894 = vrot.slane %v4892, 2
    %v4895 = vor.u32 %v4891, %v4894
    %v4896 = vsel %vm4681, %v4886, %v4895
    %v4898 = vshrl.u32 %v4660, 16
    %v4900 = vrot.slane %v4898, 1
    %v4901 = vshll.u32 %v4660, 16
    %v4903 = vrot.slane %v4901, 2
    %v4904 = vor.u32 %v4900, %v4903
    %v4905 = vsel %vm4681, %v4895, %v4904
    %v4907 = vshrl.u32 %v4661, 16
    %v4909 = vrot.slane %v4907, 1
    %v4910 = vshll.u32 %v4661, 16
    %v4912 = vrot.slane %v4910, 2
    %v4913 = vor.u32 %v4909, %v4912
    %v4914 = vsel %vm4681, %v4904, %v4913
    %v4916 = vshrl.u32 %v4662, 16
    %v4918 = vrot.slane %v4916, 1
    %v4919 = vshll.u32 %v4662, 16
    %v4921 = vrot.slane %v4919, 2
    %v4922 = vor.u32 %v4918, %v4921
    %v4923 = vsel %vm4681, %v4913, %v4922
    %v4925 = vshrl.u32 %v4663, 16
    %v4927 = vrot.slane %v4925, 1
    %v4928 = vshll.u32 %v4663, 16
    %v4930 = vrot.slane %v4928, 2
    %v4931 = vor.u32 %v4927, %v4930
    %v4932 = vsel %vm4681, %v4922, %v4931
    %v4934 = vshrl.u32 %v4664, 16
    %v4936 = vrot.slane %v4934, 1
    %v4937 = vshll.u32 %v4664, 16
    %v4939 = vrot.slane %v4937, 2
    %v4940 = vor.u32 %v4936, %v4939
    %v4941 = vsel %vm4681, %v4931, %v4940
    %v4943 = vshrl.u32 %v4665, 16
    %v4945 = vrot.slane %v4943, 1
    %v4946 = vshll.u32 %v4665, 16
    %v4948 = vrot.slane %v4946, 2
    %v4949 = vor.u32 %v4945, %v4948
    %v4950 = vsel %vm4681, %v4940, %v4949
    %v4952 = vshrl.u32 %v4666, 16
    %v4954 = vrot.slane %v4952, 1
    %v4955 = vshll.u32 %v4666, 16
    %v4957 = vrot.slane %v4955, 2
    %v4958 = vor.u32 %v4954, %v4957
    %v4959 = vsel %vm4681, %v4949, %v4958
    %v4961 = vshrl.u32 %v4667, 16
    %v4963 = vrot.slane %v4961, 1
    %v4964 = vshll.u32 %v4667, 16
    %v4966 = vrot.slane %v4964, 2
    %v4967 = vor.u32 %v4963, %v4966
    %v4968 = vsel %vm4681, %v4958, %v4967
    %v4970 = vshrl.u32 %v4668, 16
    %v4972 = vrot.slane %v4970, 1
    %v4973 = vshll.u32 %v4668, 16
    %v4975 = vrot.slane %v4973, 2
    %v4976 = vor.u32 %v4972, %v4975
    %v4977 = vsel %vm4681, %v4967, %v4976
    %v4979 = vshrl.u32 %v4669, 16
    %v4981 = vrot.slane %v4979, 1
    %v4982 = vshll.u32 %v4669, 16
    %v4984 = vrot.slane %v4982, 2
    %v4985 = vor.u32 %v4981, %v4984
    %v4986 = vsel %vm4681, %v4976, %v4985
    %v4988 = vshrl.u32 %v4670, 16
    %v4990 = vrot.slane %v4988, 1
    %v4991 = vshll.u32 %v4670, 16
    %v4993 = vrot.slane %v4991, 2
    %v4994 = vor.u32 %v4990, %v4993
    %v4995 = vsel %vm4681, %v4985, %v4994
    %v4997 = vshrl.u32 %v4671, 16
    %v4999 = vrot.slane %v4997, 1
    %v5000 = vshll.u32 %v4671, 16
    %v5002 = vrot.slane %v5000, 2
    %v5003 = vor.u32 %v4999, %v5002
    %v5004 = vsel %vm4681, %v4994, %v5003
    %v5006 = vshrl.u32 %v4672, 16
    %v5008 = vrot.slane %v5006, 1
    %v5009 = vshll.u32 %v4672, 16
    %v5011 = vrot.slane %v5009, 2
    %v5012 = vor.u32 %v5008, %v5011
    %v5013 = vsel %vm4681, %v5003, %v5012
    %v5015 = vshrl.u32 %v4673, 16
    %v5017 = vrot.slane %v5015, 1
    %v5018 = vshll.u32 %v4673, 16
    %v5020 = vrot.slane %v5018, 2
    %v5021 = vor.u32 %v5017, %v5020
    %v5022 = vsel %vm4681, %v5012, %v5021
    %v5024 = vshrl.u32 %v4674, 16
    %v5026 = vrot.slane %v5024, 1
    %v5027 = vshll.u32 %v4674, 16
    %v5029 = vrot.slane %v5027, 2
    %v5030 = vor.u32 %v5026, %v5029
    %v5031 = vsel %vm4681, %v5021, %v5030
    %v5033 = vshrl.u32 %v4675, 16
    %v5035 = vrot.slane %v5033, 1
    %v5036 = vshll.u32 %v4675, 16
    %v5038 = vrot.slane %v5036, 2
    %v5039 = vor.u32 %v5035, %v5038
    %v5040 = vsel %vm4681, %v5030, %v5039
    %v5042 = vshrl.u32 %v4676, 16
    %v5044 = vrot.slane %v5042, 1
    %v5045 = vshll.u32 %v4676, 16
    %v5047 = vrot.slane %v5045, 2
    %v5048 = vor.u32 %v5044, %v5047
    %v5049 = vsel %vm4681, %v5039, %v5048
    %v5051 = vshrl.u32 %v4677, 16
    %v5053 = vrot.slane %v5051, 1
    %v5054 = vshll.u32 %v4677, 16
    %v5056 = vrot.slane %v5054, 2
    %v5057 = vor.u32 %v5053, %v5056
    %v5058 = vsel %vm4681, %v5048, %v5057
    %v5060 = vshrl.u32 %v4678, 16
    %v5062 = vrot.slane %v5060, 1
    %v5063 = vshll.u32 %v4678, 16
    %v5065 = vrot.slane %v5063, 2
    %v5066 = vor.u32 %v5062, %v5065
    %v5067 = vsel %vm4681, %v5057, %v5066
    %v5069 = vshrl.u32 %v4679, 16
    %v5071 = vrot.slane %v5069, 1
    %v5072 = vshll.u32 %v4679, 16
    %v5074 = vrot.slane %v5072, 2
    %v5075 = vor.u32 %v5071, %v5074
    %v5076 = vsel %vm4681, %v5066, %v5075
    %v5078 = vshrl.u32 %v4680, 16
    %v5080 = vrot.slane %v5078, 1
    %v5081 = vshll.u32 %v4680, 16
    %v5083 = vrot.slane %v5081, 2
    %v5084 = vor.u32 %v5080, %v5083
    %v5085 = vsel %vm4681, %v5075, %v5084
    %v5087 = vsel %vm551, %v4698, 0
    %v5090 = vsel %vm551, %v4707, 0
    %v5093 = vsel %vm551, %v4716, 0
    %v5096 = vsel %vm551, %v4725, 0
    %v5099 = vsel %vm551, %v4734, 0
    %v5102 = vsel %vm551, %v4743, 0
    %v5105 = vsel %vm551, %v4752, 0
    %v5108 = vsel %vm551, %v4761, 0
    %v5111 = vsel %vm551, %v4770, 0
    %v5114 = vsel %vm551, %v4779, 0
    %v5117 = vsel %vm551, %v4788, 0
    %v5120 = vsel %vm551, %v4797, 0
    %v5123 = vsel %vm551, %v4806, 0
    %v5126 = vsel %vm551, %v4815, 0
    %v5129 = vsel %vm551, %v4824, 0
    %v5132 = vsel %vm551, %v4833, 0
    %v5135 = vsel %vm551, %v4842, 0
    %v5138 = vsel %vm551, %v4851, 0
    %v5141 = vsel %vm551, %v4860, 0
    %v5144 = vsel %vm551, %v4869, 0
    %v5147 = vsel %vm551, %v4878, 0
    %v5150 = vsel %vm551, %v4887, 0
    %v5153 = vsel %vm551, %v4896, 0
    %v5156 = vsel %vm551, %v4905, 0
    %v5159 = vsel %vm551, %v4914, 0
    %v5162 = vsel %vm551, %v4923, 0
    %v5165 = vsel %vm551, %v4932, 0
    %v5168 = vsel %vm551, %v4941, 0
    %v5171 = vsel %vm551, %v4950, 0
    %v5174 = vsel %vm551, %v4959, 0
    %v5177 = vsel %vm551, %v4968, 0
    %v5180 = vsel %vm551, %v4977, 0
    %v5183 = vsel %vm551, %v4986, 0
    %v5186 = vsel %vm551, %v4995, 0
    %v5189 = vsel %vm551, %v5004, 0
    %v5192 = vsel %vm551, %v5013, 0
    %v5195 = vsel %vm551, %v5022, 0
    %v5198 = vsel %vm551, %v5031, 0
    %v5201 = vsel %vm551, %v5040, 0
    %v5204 = vsel %vm551, %v5049, 0
    %v5207 = vsel %vm551, %v5058, 0
    %v5210 = vsel %vm551, %v5067, 0
    %v5213 = vsel %vm551, %v5076, 0
    %v5216 = vsel %vm551, %v5085, 0
    %v5219 = vsel %vm684, %v4457, 0
    %5221 = vmatpush.bf16.msra.mxu0 0
    %5222 = vmatpush.bf16.msra.mxu0 0
    %5223 = vmatpush.bf16.msra.mxu0 0
    %5224 = vmatpush.bf16.msra.mxu0 0
    %5225 = vmatpush.bf16.msra.mxu0 0
    %5226 = vmatpush.bf16.msra.mxu0 0
    %5227 = vmatpush.bf16.msra.mxu0 0
    %5228 = vmatpush.bf16.msra.mxu0 %v5219
    %5229 = vmatmul.bf16.gmra.mxu0 %v5087
    %v5230 = vpop.f32.mrf.mxu0
    %v5231 = vadd.f32 0.0, %v5230
    %v5232 = vpop.f32.mrf.mxu0
    %v5233 = vadd.f32 0.0, %v5232
    %5234 = vmatmul.bf16.gmra.mxu0 %v5090
    %v5235 = vpop.f32.mrf.mxu0
    %v5236 = vadd.f32 0.0, %v5235
    %v5237 = vpop.f32.mrf.mxu0
    %v5238 = vadd.f32 0.0, %v5237
    %5239 = vmatmul.bf16.gmra.mxu0 %v5093
    %v5240 = vpop.f32.mrf.mxu0
    %v5241 = vadd.f32 0.0, %v5240
    %v5242 = vpop.f32.mrf.mxu0
    %v5243 = vadd.f32 0.0, %v5242
    %5244 = vmatmul.bf16.gmra.mxu0 %v5096
    %v5245 = vpop.f32.mrf.mxu0
    %v5246 = vadd.f32 0.0, %v5245
    %v5247 = vpop.f32.mrf.mxu0
    %v5248 = vadd.f32 0.0, %v5247
    %5249 = vmatmul.bf16.gmra.mxu0 %v5099
    %v5250 = vpop.f32.mrf.mxu0
    %v5251 = vadd.f32 0.0, %v5250
    %v5252 = vpop.f32.mrf.mxu0
    %v5253 = vadd.f32 0.0, %v5252
    %5254 = vmatmul.bf16.gmra.mxu0 %v5102
    %v5255 = vpop.f32.mrf.mxu0
    %v5256 = vadd.f32 0.0, %v5255
    %v5257 = vpop.f32.mrf.mxu0
    %v5258 = vadd.f32 0.0, %v5257
    %5259 = vmatmul.bf16.gmra.mxu0 %v5105
    %v5260 = vpop.f32.mrf.mxu0
    %v5261 = vadd.f32 0.0, %v5260
    %v5262 = vpop.f32.mrf.mxu0
    %v5263 = vadd.f32 0.0, %v5262
    %5264 = vmatmul.bf16.gmra.mxu0 %v5108
    %v5265 = vpop.f32.mrf.mxu0
    %v5266 = vadd.f32 0.0, %v5265
    %v5267 = vpop.f32.mrf.mxu0
    %v5268 = vadd.f32 0.0, %v5267
    %5269 = vmatmul.bf16.gmra.mxu0 %v5111
    %v5270 = vpop.f32.mrf.mxu0
    %v5271 = vadd.f32 0.0, %v5270
    %v5272 = vpop.f32.mrf.mxu0
    %v5273 = vadd.f32 0.0, %v5272
    %5274 = vmatmul.bf16.gmra.mxu0 %v5114
    %v5275 = vpop.f32.mrf.mxu0
    %v5276 = vadd.f32 0.0, %v5275
    %v5277 = vpop.f32.mrf.mxu0
    %v5278 = vadd.f32 0.0, %v5277
    %5279 = vmatmul.bf16.gmra.mxu0 %v5117
    %v5280 = vpop.f32.mrf.mxu0
    %v5281 = vadd.f32 0.0, %v5280
    %v5282 = vpop.f32.mrf.mxu0
    %v5283 = vadd.f32 0.0, %v5282
    %5284 = vmatmul.bf16.gmra.mxu0 %v5120
    %v5285 = vpop.f32.mrf.mxu0
    %v5286 = vadd.f32 0.0, %v5285
    %v5287 = vpop.f32.mrf.mxu0
    %v5288 = vadd.f32 0.0, %v5287
    %5289 = vmatmul.bf16.gmra.mxu0 %v5123
    %v5290 = vpop.f32.mrf.mxu0
    %v5291 = vadd.f32 0.0, %v5290
    %v5292 = vpop.f32.mrf.mxu0
    %v5293 = vadd.f32 0.0, %v5292
    %5294 = vmatmul.bf16.gmra.mxu0 %v5126
    %v5295 = vpop.f32.mrf.mxu0
    %v5296 = vadd.f32 0.0, %v5295
    %v5297 = vpop.f32.mrf.mxu0
    %v5298 = vadd.f32 0.0, %v5297
    %5299 = vmatmul.bf16.gmra.mxu0 %v5129
    %v5300 = vpop.f32.mrf.mxu0
    %v5301 = vadd.f32 0.0, %v5300
    %v5302 = vpop.f32.mrf.mxu0
    %v5303 = vadd.f32 0.0, %v5302
    %5304 = vmatmul.bf16.gmra.mxu0 %v5132
    %v5305 = vpop.f32.mrf.mxu0
    %v5306 = vadd.f32 0.0, %v5305
    %v5307 = vpop.f32.mrf.mxu0
    %v5308 = vadd.f32 0.0, %v5307
    %5309 = vmatmul.bf16.gmra.mxu0 %v5135
    %v5310 = vpop.f32.mrf.mxu0
    %v5311 = vadd.f32 0.0, %v5310
    %v5312 = vpop.f32.mrf.mxu0
    %v5313 = vadd.f32 0.0, %v5312
    %5314 = vmatmul.bf16.gmra.mxu0 %v5138
    %v5315 = vpop.f32.mrf.mxu0
    %v5316 = vadd.f32 0.0, %v5315
    %v5317 = vpop.f32.mrf.mxu0
    %v5318 = vadd.f32 0.0, %v5317
    %5319 = vmatmul.bf16.gmra.mxu0 %v5141
    %v5320 = vpop.f32.mrf.mxu0
    %v5321 = vadd.f32 0.0, %v5320
    %v5322 = vpop.f32.mrf.mxu0
    %v5323 = vadd.f32 0.0, %v5322
    %5324 = vmatmul.bf16.gmra.mxu0 %v5144
    %v5325 = vpop.f32.mrf.mxu0
    %v5326 = vadd.f32 0.0, %v5325
    %v5327 = vpop.f32.mrf.mxu0
    %v5328 = vadd.f32 0.0, %v5327
    %5329 = vmatmul.bf16.gmra.mxu0 %v5147
    %v5330 = vpop.f32.mrf.mxu0
    %v5331 = vadd.f32 0.0, %v5330
    %v5332 = vpop.f32.mrf.mxu0
    %v5333 = vadd.f32 0.0, %v5332
    %5334 = vmatmul.bf16.gmra.mxu0 %v5150
    %v5335 = vpop.f32.mrf.mxu0
    %v5336 = vadd.f32 0.0, %v5335
    %v5337 = vpop.f32.mrf.mxu0
    %v5338 = vadd.f32 0.0, %v5337
    %5339 = vmatmul.bf16.gmra.mxu0 %v5153
    %v5340 = vpop.f32.mrf.mxu0
    %v5341 = vadd.f32 0.0, %v5340
    %v5342 = vpop.f32.mrf.mxu0
    %v5343 = vadd.f32 0.0, %v5342
    %5344 = vmatmul.bf16.gmra.mxu0 %v5156
    %v5345 = vpop.f32.mrf.mxu0
    %v5346 = vadd.f32 0.0, %v5345
    %v5347 = vpop.f32.mrf.mxu0
    %v5348 = vadd.f32 0.0, %v5347
    %5349 = vmatmul.bf16.gmra.mxu0 %v5159
    %v5350 = vpop.f32.mrf.mxu0
    %v5351 = vadd.f32 0.0, %v5350
    %v5352 = vpop.f32.mrf.mxu0
    %v5353 = vadd.f32 0.0, %v5352
    %5354 = vmatmul.bf16.gmra.mxu0 %v5162
    %v5355 = vpop.f32.mrf.mxu0
    %v5356 = vadd.f32 0.0, %v5355
    %v5357 = vpop.f32.mrf.mxu0
    %v5358 = vadd.f32 0.0, %v5357
    %5359 = vmatmul.bf16.gmra.mxu0 %v5165
    %v5360 = vpop.f32.mrf.mxu0
    %v5361 = vadd.f32 0.0, %v5360
    %v5362 = vpop.f32.mrf.mxu0
    %v5363 = vadd.f32 0.0, %v5362
    %5364 = vmatmul.bf16.gmra.mxu0 %v5168
    %v5365 = vpop.f32.mrf.mxu0
    %v5366 = vadd.f32 0.0, %v5365
    %v5367 = vpop.f32.mrf.mxu0
    %v5368 = vadd.f32 0.0, %v5367
    %5369 = vmatmul.bf16.gmra.mxu0 %v5171
    %v5370 = vpop.f32.mrf.mxu0
    %v5371 = vadd.f32 0.0, %v5370
    %v5372 = vpop.f32.mrf.mxu0
    %v5373 = vadd.f32 0.0, %v5372
    %5374 = vmatmul.bf16.gmra.mxu0 %v5174
    %v5375 = vpop.f32.mrf.mxu0
    %v5376 = vadd.f32 0.0, %v5375
    %v5377 = vpop.f32.mrf.mxu0
    %v5378 = vadd.f32 0.0, %v5377
    %5379 = vmatmul.bf16.gmra.mxu0 %v5177
    %v5380 = vpop.f32.mrf.mxu0
    %v5381 = vadd.f32 0.0, %v5380
    %v5382 = vpop.f32.mrf.mxu0
    %v5383 = vadd.f32 0.0, %v5382
    %5384 = vmatmul.bf16.gmra.mxu0 %v5180
    %v5385 = vpop.f32.mrf.mxu0
    %v5386 = vadd.f32 0.0, %v5385
    %v5387 = vpop.f32.mrf.mxu0
    %v5388 = vadd.f32 0.0, %v5387
    %5389 = vmatmul.bf16.gmra.mxu0 %v5183
    %v5390 = vpop.f32.mrf.mxu0
    %v5391 = vadd.f32 0.0, %v5390
    %v5392 = vpop.f32.mrf.mxu0
    %v5393 = vadd.f32 0.0, %v5392
    %5394 = vmatmul.bf16.gmra.mxu0 %v5186
    %v5395 = vpop.f32.mrf.mxu0
    %v5396 = vadd.f32 0.0, %v5395
    %v5397 = vpop.f32.mrf.mxu0
    %v5398 = vadd.f32 0.0, %v5397
    %5399 = vmatmul.bf16.gmra.mxu0 %v5189
    %v5400 = vpop.f32.mrf.mxu0
    %v5401 = vadd.f32 0.0, %v5400
    %v5402 = vpop.f32.mrf.mxu0
    %v5403 = vadd.f32 0.0, %v5402
    %5404 = vmatmul.bf16.gmra.mxu0 %v5192
    %v5405 = vpop.f32.mrf.mxu0
    %v5406 = vadd.f32 0.0, %v5405
    %v5407 = vpop.f32.mrf.mxu0
    %v5408 = vadd.f32 0.0, %v5407
    %5409 = vmatmul.bf16.gmra.mxu0 %v5195
    %v5410 = vpop.f32.mrf.mxu0
    %v5411 = vadd.f32 0.0, %v5410
    %v5412 = vpop.f32.mrf.mxu0
    %v5413 = vadd.f32 0.0, %v5412
    %5414 = vmatmul.bf16.gmra.mxu0 %v5198
    %v5415 = vpop.f32.mrf.mxu0
    %v5416 = vadd.f32 0.0, %v5415
    %v5417 = vpop.f32.mrf.mxu0
    %v5418 = vadd.f32 0.0, %v5417
    %5419 = vmatmul.bf16.gmra.mxu0 %v5201
    %v5420 = vpop.f32.mrf.mxu0
    %v5421 = vadd.f32 0.0, %v5420
    %v5422 = vpop.f32.mrf.mxu0
    %v5423 = vadd.f32 0.0, %v5422
    %5424 = vmatmul.bf16.gmra.mxu0 %v5204
    %v5425 = vpop.f32.mrf.mxu0
    %v5426 = vadd.f32 0.0, %v5425
    %v5427 = vpop.f32.mrf.mxu0
    %v5428 = vadd.f32 0.0, %v5427
    %5429 = vmatmul.bf16.gmra.mxu0 %v5207
    %v5430 = vpop.f32.mrf.mxu0
    %v5431 = vadd.f32 0.0, %v5430
    %v5432 = vpop.f32.mrf.mxu0
    %v5433 = vadd.f32 0.0, %v5432
    %5434 = vmatmul.bf16.gmra.mxu0 %v5210
    %v5435 = vpop.f32.mrf.mxu0
    %v5436 = vadd.f32 0.0, %v5435
    %v5437 = vpop.f32.mrf.mxu0
    %v5438 = vadd.f32 0.0, %v5437
    %5439 = vmatmul.bf16.gmra.mxu0 %v5213
    %v5440 = vpop.f32.mrf.mxu0
    %v5441 = vadd.f32 0.0, %v5440
    %v5442 = vpop.f32.mrf.mxu0
    %v5443 = vadd.f32 0.0, %v5442
    %5444 = vmatmul.bf16.gmra.mxu0 %v5216
    %v5445 = vpop.f32.mrf.mxu0
    %v5446 = vadd.f32 0.0, %v5445
    %v5447 = vpop.f32.mrf.mxu0
    %v5448 = vadd.f32 0.0, %v5447
    %5449 = vdwg.mxu0
    %v5450 = vld [vmem:[#allocation3] sm:$0xff]
    %v5451 = vld [vmem:[#allocation3 + $0x8] sm:$0xff]
    %v5452 = vld [vmem:[#allocation3 + $0x10] sm:$0xff]
    %v5453 = vld [vmem:[#allocation3 + $0x18] sm:$0xff]
    %v5454 = vld [vmem:[#allocation3 + $0x20] sm:$0xff]
    %v5455 = vld [vmem:[#allocation3 + $0x28] sm:$0xff]
    %v5456 = vld [vmem:[#allocation3 + $0x30] sm:$0xff]
    %v5457 = vld [vmem:[#allocation3 + $0x38] sm:$0xff]
    %v5458 = vld [vmem:[#allocation3 + $0x40] sm:$0xff]
    %v5459 = vld [vmem:[#allocation3 + $0x48] sm:$0xff]
    %v5460 = vld [vmem:[#allocation3 + $0x50] sm:$0xff]
    %v5461 = vld [vmem:[#allocation3 + $0x58] sm:$0xff]
    %v5462 = vld [vmem:[#allocation3 + $0x60] sm:$0xff]
    %v5463 = vld [vmem:[#allocation3 + $0x68] sm:$0xff]
    %v5464 = vld [vmem:[#allocation3 + $0x70] sm:$0xff]
    %v5465 = vld [vmem:[#allocation3 + $0x78] sm:$0xff]
    %v5466 = vld [vmem:[#allocation3 + $0x80] sm:$0xff]
    %v5467 = vld [vmem:[#allocation3 + $0x88] sm:$0xff]
    %v5468 = vld [vmem:[#allocation3 + $0x90] sm:$0xff]
    %v5469 = vld [vmem:[#allocation3 + $0x98] sm:$0xff]
    %v5470 = vld [vmem:[#allocation3 + $0xa0] sm:$0xff]
    %v5471 = vld [vmem:[#allocation3 + $0xa8] sm:$0xff]
    %v5472 = vld [vmem:[#allocation3 + $0xb0] sm:$0xff]
    %v5473 = vld [vmem:[#allocation3 + $0xb8] sm:$0xff]
    %v5474 = vld [vmem:[#allocation3 + $0xc0] sm:$0xff]
    %v5475 = vld [vmem:[#allocation3 + $0xc8] sm:$0xff]
    %v5476 = vld [vmem:[#allocation3 + $0xd0] sm:$0xff]
    %v5477 = vld [vmem:[#allocation3 + $0xd8] sm:$0xff]
    %v5478 = vld [vmem:[#allocation3 + $0xe0] sm:$0xff]
    %v5479 = vld [vmem:[#allocation3 + $0xe8] sm:$0xff]
    %v5480 = vld [vmem:[#allocation3 + $0xf0] sm:$0xff]
    %v5481 = vld [vmem:[#allocation3 + $0xf8] sm:$0xff]
    %v5482 = vld [vmem:[#allocation3 + $0x100] sm:$0xff]
    %v5483 = vld [vmem:[#allocation3 + $0x108] sm:$0xff]
    %v5484 = vld [vmem:[#allocation3 + $0x110] sm:$0xff]
    %v5485 = vld [vmem:[#allocation3 + $0x118] sm:$0xff]
    %v5486 = vld [vmem:[#allocation3 + $0x120] sm:$0xff]
    %v5487 = vld [vmem:[#allocation3 + $0x128] sm:$0xff]
    %v5488 = vld [vmem:[#allocation3 + $0x130] sm:$0xff]
    %v5489 = vld [vmem:[#allocation3 + $0x138] sm:$0xff]
    %v5490 = vld [vmem:[#allocation3 + $0x140] sm:$0xff]
    %v5491 = vld [vmem:[#allocation3 + $0x148] sm:$0xff]
    %v5492 = vld [vmem:[#allocation3 + $0x150] sm:$0xff]
    %v5493 = vld [vmem:[#allocation3 + $0x158] sm:$0xff]
    %v5494 = vld [vmem:[#allocation3 + $0x160] sm:$0xff]
    %v5495 = vld [vmem:[#allocation3 + $0x168] sm:$0xff]
    %v5496 = vld [vmem:[#allocation3 + $0x170] sm:$0xff]
    %v5497 = vld [vmem:[#allocation3 + $0x178] sm:$0xff]
    %v5498 = vld [vmem:[#allocation3 + $0x180] sm:$0xff]
    %v5499 = vld [vmem:[#allocation3 + $0x188] sm:$0xff]
    %v5500 = vld [vmem:[#allocation3 + $0x190] sm:$0xff]
    %v5501 = vld [vmem:[#allocation3 + $0x198] sm:$0xff]
    %v5502 = vld [vmem:[#allocation3 + $0x1a0] sm:$0xff]
    %v5503 = vld [vmem:[#allocation3 + $0x1a8] sm:$0xff]
    %v5504 = vld [vmem:[#allocation3 + $0x1b0] sm:$0xff]
    %v5505 = vld [vmem:[#allocation3 + $0x1b8] sm:$0xff]
    %v5506 = vld [vmem:[#allocation3 + $0x1c0] sm:$0xff]
    %v5507 = vld [vmem:[#allocation3 + $0x1c8] sm:$0xff]
    %v5508 = vld [vmem:[#allocation3 + $0x1d0] sm:$0xff]
    %v5509 = vld [vmem:[#allocation3 + $0x1d8] sm:$0xff]
    %v5510 = vld [vmem:[#allocation3 + $0x1e0] sm:$0xff]
    %v5511 = vld [vmem:[#allocation3 + $0x1e8] sm:$0xff]
    %v5512 = vld [vmem:[#allocation3 + $0x1f0] sm:$0xff]
    %v5513 = vld [vmem:[#allocation3 + $0x1f8] sm:$0xff]
    %v5514 = vld [vmem:[#allocation3 + $0x200] sm:$0xff]
    %v5515 = vld [vmem:[#allocation3 + $0x208] sm:$0xff]
    %v5516 = vld [vmem:[#allocation3 + $0x210] sm:$0xff]
    %v5517 = vld [vmem:[#allocation3 + $0x218] sm:$0xff]
    %v5518 = vld [vmem:[#allocation3 + $0x220] sm:$0xff]
    %v5519 = vld [vmem:[#allocation3 + $0x228] sm:$0xff]
    %v5520 = vld [vmem:[#allocation3 + $0x230] sm:$0xff]
    %v5521 = vld [vmem:[#allocation3 + $0x238] sm:$0xff]
    %v5522 = vld [vmem:[#allocation3 + $0x240] sm:$0xff]
    %v5523 = vld [vmem:[#allocation3 + $0x248] sm:$0xff]
    %v5524 = vld [vmem:[#allocation3 + $0x250] sm:$0xff]
    %v5525 = vld [vmem:[#allocation3 + $0x258] sm:$0xff]
    %v5526 = vld [vmem:[#allocation3 + $0x260] sm:$0xff]
    %v5527 = vld [vmem:[#allocation3 + $0x268] sm:$0xff]
    %v5528 = vld [vmem:[#allocation3 + $0x270] sm:$0xff]
    %v5529 = vld [vmem:[#allocation3 + $0x278] sm:$0xff]
    %v5530 = vld [vmem:[#allocation3 + $0x280] sm:$0xff]
    %v5531 = vld [vmem:[#allocation3 + $0x288] sm:$0xff]
    %v5532 = vld [vmem:[#allocation3 + $0x290] sm:$0xff]
    %v5533 = vld [vmem:[#allocation3 + $0x298] sm:$0xff]
    %v5534 = vld [vmem:[#allocation3 + $0x2a0] sm:$0xff]
    %v5535 = vld [vmem:[#allocation3 + $0x2a8] sm:$0xff]
    %v5536 = vld [vmem:[#allocation3 + $0x2b0] sm:$0xff]
    %v5537 = vld [vmem:[#allocation3 + $0x2b8] sm:$0xff]
    %v5538 = vadd.f32 %v5450, %v5231
    %v5539 = vadd.f32 %v5451, %v5233
    %v5540 = vadd.f32 %v5452, %v5236
    %v5541 = vadd.f32 %v5453, %v5238
    %v5542 = vadd.f32 %v5454, %v5241
    %v5543 = vadd.f32 %v5455, %v5243
    %v5544 = vadd.f32 %v5456, %v5246
    %v5545 = vadd.f32 %v5457, %v5248
    %v5546 = vadd.f32 %v5458, %v5251
    %v5547 = vadd.f32 %v5459, %v5253
    %v5548 = vadd.f32 %v5460, %v5256
    %v5549 = vadd.f32 %v5461, %v5258
    %v5550 = vadd.f32 %v5462, %v5261
    %v5551 = vadd.f32 %v5463, %v5263
    %v5552 = vadd.f32 %v5464, %v5266
    %v5553 = vadd.f32 %v5465, %v5268
    %v5554 = vadd.f32 %v5466, %v5271
    %v5555 = vadd.f32 %v5467, %v5273
    %v5556 = vadd.f32 %v5468, %v5276
    %v5557 = vadd.f32 %v5469, %v5278
    %v5558 = vadd.f32 %v5470, %v5281
    %v5559 = vadd.f32 %v5471, %v5283
    %v5560 = vadd.f32 %v5472, %v5286
    %v5561 = vadd.f32 %v5473, %v5288
    %v5562 = vadd.f32 %v5474, %v5291
    %v5563 = vadd.f32 %v5475, %v5293
    %v5564 = vadd.f32 %v5476, %v5296
    %v5565 = vadd.f32 %v5477, %v5298
    %v5566 = vadd.f32 %v5478, %v5301
    %v5567 = vadd.f32 %v5479, %v5303
    %v5568 = vadd.f32 %v5480, %v5306
    %v5569 = vadd.f32 %v5481, %v5308
    %v5570 = vadd.f32 %v5482, %v5311
    %v5571 = vadd.f32 %v5483, %v5313
    %v5572 = vadd.f32 %v5484, %v5316
    %v5573 = vadd.f32 %v5485, %v5318
    %v5574 = vadd.f32 %v5486, %v5321
    %v5575 = vadd.f32 %v5487, %v5323
    %v5576 = vadd.f32 %v5488, %v5326
    %v5577 = vadd.f32 %v5489, %v5328
    %v5578 = vadd.f32 %v5490, %v5331
    %v5579 = vadd.f32 %v5491, %v5333
    %v5580 = vadd.f32 %v5492, %v5336
    %v5581 = vadd.f32 %v5493, %v5338
    %v5582 = vadd.f32 %v5494, %v5341
    %v5583 = vadd.f32 %v5495, %v5343
    %v5584 = vadd.f32 %v5496, %v5346
    %v5585 = vadd.f32 %v5497, %v5348
    %v5586 = vadd.f32 %v5498, %v5351
    %v5587 = vadd.f32 %v5499, %v5353
    %v5588 = vadd.f32 %v5500, %v5356
    %v5589 = vadd.f32 %v5501, %v5358
    %v5590 = vadd.f32 %v5502, %v5361
    %v5591 = vadd.f32 %v5503, %v5363
    %v5592 = vadd.f32 %v5504, %v5366
    %v5593 = vadd.f32 %v5505, %v5368
    %v5594 = vadd.f32 %v5506, %v5371
    %v5595 = vadd.f32 %v5507, %v5373
    %v5596 = vadd.f32 %v5508, %v5376
    %v5597 = vadd.f32 %v5509, %v5378
    %v5598 = vadd.f32 %v5510, %v5381
    %v5599 = vadd.f32 %v5511, %v5383
    %v5600 = vadd.f32 %v5512, %v5386
    %v5601 = vadd.f32 %v5513, %v5388
    %v5602 = vadd.f32 %v5514, %v5391
    %v5603 = vadd.f32 %v5515, %v5393
    %v5604 = vadd.f32 %v5516, %v5396
    %v5605 = vadd.f32 %v5517, %v5398
    %v5606 = vadd.f32 %v5518, %v5401
    %v5607 = vadd.f32 %v5519, %v5403
    %v5608 = vadd.f32 %v5520, %v5406
    %v5609 = vadd.f32 %v5521, %v5408
    %v5610 = vadd.f32 %v5522, %v5411
    %v5611 = vadd.f32 %v5523, %v5413
    %v5612 = vadd.f32 %v5524, %v5416
    %v5613 = vadd.f32 %v5525, %v5418
    %v5614 = vadd.f32 %v5526, %v5421
    %v5615 = vadd.f32 %v5527, %v5423
    %v5616 = vadd.f32 %v5528, %v5426
    %v5617 = vadd.f32 %v5529, %v5428
    %v5618 = vadd.f32 %v5530, %v5431
    %v5619 = vadd.f32 %v5531, %v5433
    %v5620 = vadd.f32 %v5532, %v5436
    %v5621 = vadd.f32 %v5533, %v5438
    %v5622 = vadd.f32 %v5534, %v5441
    %v5623 = vadd.f32 %v5535, %v5443
    %v5624 = vadd.f32 %v5536, %v5446
    %v5625 = vadd.f32 %v5537, %v5448
    %5626 = vst [vmem:[#allocation3] sm:$0xff] %v5538
    %5627 = vst [vmem:[#allocation3 + $0x8] sm:$0xff] %v5539
    %5628 = vst [vmem:[#allocation3 + $0x10] sm:$0xff] %v5540
    %5629 = vst [vmem:[#allocation3 + $0x18] sm:$0xff] %v5541
    %5630 = vst [vmem:[#allocation3 + $0x20] sm:$0xff] %v5542
    %5631 = vst [vmem:[#allocation3 + $0x28] sm:$0xff] %v5543
    %5632 = vst [vmem:[#allocation3 + $0x30] sm:$0xff] %v5544
    %5633 = vst [vmem:[#allocation3 + $0x38] sm:$0xff] %v5545
    %5634 = vst [vmem:[#allocation3 + $0x40] sm:$0xff] %v5546
    %5635 = vst [vmem:[#allocation3 + $0x48] sm:$0xff] %v5547
    %5636 = vst [vmem:[#allocation3 + $0x50] sm:$0xff] %v5548
    %5637 = vst [vmem:[#allocation3 + $0x58] sm:$0xff] %v5549
    %5638 = vst [vmem:[#allocation3 + $0x60] sm:$0xff] %v5550
    %5639 = vst [vmem:[#allocation3 + $0x68] sm:$0xff] %v5551
    %5640 = vst [vmem:[#allocation3 + $0x70] sm:$0xff] %v5552
    %5641 = vst [vmem:[#allocation3 + $0x78] sm:$0xff] %v5553
    %5642 = vst [vmem:[#allocation3 + $0x80] sm:$0xff] %v5554
    %5643 = vst [vmem:[#allocation3 + $0x88] sm:$0xff] %v5555
    %5644 = vst [vmem:[#allocation3 + $0x90] sm:$0xff] %v5556
    %5645 = vst [vmem:[#allocation3 + $0x98] sm:$0xff] %v5557
    %5646 = vst [vmem:[#allocation3 + $0xa0] sm:$0xff] %v5558
    %5647 = vst [vmem:[#allocation3 + $0xa8] sm:$0xff] %v5559
    %5648 = vst [vmem:[#allocation3 + $0xb0] sm:$0xff] %v5560
    %5649 = vst [vmem:[#allocation3 + $0xb8] sm:$0xff] %v5561
    %5650 = vst [vmem:[#allocation3 + $0xc0] sm:$0xff] %v5562
    %5651 = vst [vmem:[#allocation3 + $0xc8] sm:$0xff] %v5563
    %5652 = vst [vmem:[#allocation3 + $0xd0] sm:$0xff] %v5564
    %5653 = vst [vmem:[#allocation3 + $0xd8] sm:$0xff] %v5565
    %5654 = vst [vmem:[#allocation3 + $0xe0] sm:$0xff] %v5566
    %5655 = vst [vmem:[#allocation3 + $0xe8] sm:$0xff] %v5567
    %5656 = vst [vmem:[#allocation3 + $0xf0] sm:$0xff] %v5568
    %5657 = vst [vmem:[#allocation3 + $0xf8] sm:$0xff] %v5569
    %5658 = vst [vmem:[#allocation3 + $0x100] sm:$0xff] %v5570
    %5659 = vst [vmem:[#allocation3 + $0x108] sm:$0xff] %v5571
    %5660 = vst [vmem:[#allocation3 + $0x110] sm:$0xff] %v5572
    %5661 = vst [vmem:[#allocation3 + $0x118] sm:$0xff] %v5573
    %5662 = vst [vmem:[#allocation3 + $0x120] sm:$0xff] %v5574
    %5663 = vst [vmem:[#allocation3 + $0x128] sm:$0xff] %v5575
    %5664 = vst [vmem:[#allocation3 + $0x130] sm:$0xff] %v5576
    %5665 = vst [vmem:[#allocation3 + $0x138] sm:$0xff] %v5577
    %5666 = vst [vmem:[#allocation3 + $0x140] sm:$0xff] %v5578
    %5667 = vst [vmem:[#allocation3 + $0x148] sm:$0xff] %v5579
    %5668 = vst [vmem:[#allocation3 + $0x150] sm:$0xff] %v5580
    %5669 = vst [vmem:[#allocation3 + $0x158] sm:$0xff] %v5581
    %5670 = vst [vmem:[#allocation3 + $0x160] sm:$0xff] %v5582
    %5671 = vst [vmem:[#allocation3 + $0x168] sm:$0xff] %v5583
    %5672 = vst [vmem:[#allocation3 + $0x170] sm:$0xff] %v5584
    %5673 = vst [vmem:[#allocation3 + $0x178] sm:$0xff] %v5585
    %5674 = vst [vmem:[#allocation3 + $0x180] sm:$0xff] %v5586
    %5675 = vst [vmem:[#allocation3 + $0x188] sm:$0xff] %v5587
    %5676 = vst [vmem:[#allocation3 + $0x190] sm:$0xff] %v5588
    %5677 = vst [vmem:[#allocation3 + $0x198] sm:$0xff] %v5589
    %5678 = vst [vmem:[#allocation3 + $0x1a0] sm:$0xff] %v5590
    %5679 = vst [vmem:[#allocation3 + $0x1a8] sm:$0xff] %v5591
    %5680 = vst [vmem:[#allocation3 + $0x1b0] sm:$0xff] %v5592
    %5681 = vst [vmem:[#allocation3 + $0x1b8] sm:$0xff] %v5593
    %5682 = vst [vmem:[#allocation3 + $0x1c0] sm:$0xff] %v5594
    %5683 = vst [vmem:[#allocation3 + $0x1c8] sm:$0xff] %v5595
    %5684 = vst [vmem:[#allocation3 + $0x1d0] sm:$0xff] %v5596
    %5685 = vst [vmem:[#allocation3 + $0x1d8] sm:$0xff] %v5597
    %5686 = vst [vmem:[#allocation3 + $0x1e0] sm:$0xff] %v5598
    %5687 = vst [vmem:[#allocation3 + $0x1e8] sm:$0xff] %v5599
    %5688 = vst [vmem:[#allocation3 + $0x1f0] sm:$0xff] %v5600
    %5689 = vst [vmem:[#allocation3 + $0x1f8] sm:$0xff] %v5601
    %5690 = vst [vmem:[#allocation3 + $0x200] sm:$0xff] %v5602
    %5691 = vst [vmem:[#allocation3 + $0x208] sm:$0xff] %v5603
    %5692 = vst [vmem:[#allocation3 + $0x210] sm:$0xff] %v5604
    %5693 = vst [vmem:[#allocation3 + $0x218] sm:$0xff] %v5605
    %5694 = vst [vmem:[#allocation3 + $0x220] sm:$0xff] %v5606
    %5695 = vst [vmem:[#allocation3 + $0x228] sm:$0xff] %v5607
    %5696 = vst [vmem:[#allocation3 + $0x230] sm:$0xff] %v5608
    %5697 = vst [vmem:[#allocation3 + $0x238] sm:$0xff] %v5609
    %5698 = vst [vmem:[#allocation3 + $0x240] sm:$0xff] %v5610
    %5699 = vst [vmem:[#allocation3 + $0x248] sm:$0xff] %v5611
    %5700 = vst [vmem:[#allocation3 + $0x250] sm:$0xff] %v5612
    %5701 = vst [vmem:[#allocation3 + $0x258] sm:$0xff] %v5613
    %5702 = vst [vmem:[#allocation3 + $0x260] sm:$0xff] %v5614
    %5703 = vst [vmem:[#allocation3 + $0x268] sm:$0xff] %v5615
    %5704 = vst [vmem:[#allocation3 + $0x270] sm:$0xff] %v5616
    %5705 = vst [vmem:[#allocation3 + $0x278] sm:$0xff] %v5617
    %5706 = vst [vmem:[#allocation3 + $0x280] sm:$0xff] %v5618
    %5707 = vst [vmem:[#allocation3 + $0x288] sm:$0xff] %v5619
    %5708 = vst [vmem:[#allocation3 + $0x290] sm:$0xff] %v5620
    %5709 = vst [vmem:[#allocation3 + $0x298] sm:$0xff] %v5621
    %5710 = vst [vmem:[#allocation3 + $0x2a0] sm:$0xff] %v5622
    %5711 = vst [vmem:[#allocation3 + $0x2a8] sm:$0xff] %v5623
    %5712 = vst [vmem:[#allocation3 + $0x2b0] sm:$0xff] %v5624
    %5713 = vst [vmem:[#allocation3 + $0x2b8] sm:$0xff] %v5625
    %v5714 = vld [vmem:[#allocation2 + $0x8] sm:$0xc]
    %v5715 = vld [vmem:[#allocation2 + $0xc] sm:$0xf]
    %v5716 = vld [vmem:[#allocation2 + $0x10] sm:$0xf]
    %v5717 = vld [vmem:[#allocation2 + $0x14] sm:$0xf]
    %v5718 = vld [vmem:[#allocation2 + $0x18] sm:$0xf]
    %v5719 = vld [vmem:[#allocation2 + $0x1c] sm:$0xf]
    %v5720 = vld [vmem:[#allocation2 + $0x20] sm:$0xf]
    %v5721 = vld [vmem:[#allocation2 + $0x24] sm:$0xf]
    %v5722 = vld [vmem:[#allocation2 + $0x28] sm:$0xf]
    %v5723 = vld [vmem:[#allocation2 + $0x2c] sm:$0xf]
    %v5724 = vld [vmem:[#allocation2 + $0x30] sm:$0xf]
    %v5725 = vld [vmem:[#allocation2 + $0x34] sm:$0xf]
    %v5726 = vld [vmem:[#allocation2 + $0x38] sm:$0xf]
    %v5727 = vld [vmem:[#allocation2 + $0x3c] sm:$0xf]
    %v5728 = vld [vmem:[#allocation2 + $0x40] sm:$0xf]
    %v5729 = vld [vmem:[#allocation2 + $0x44] sm:$0xf]
    %v5730 = vld [vmem:[#allocation2 + $0x48] sm:$0xf]
    %v5731 = vld [vmem:[#allocation2 + $0x4c] sm:$0xf]
    %v5732 = vld [vmem:[#allocation2 + $0x50] sm:$0xf]
    %v5733 = vld [vmem:[#allocation2 + $0x54] sm:$0xf]
    %v5734 = vld [vmem:[#allocation2 + $0x58] sm:$0xf]
    %v5735 = vld [vmem:[#allocation2 + $0x5c] sm:$0xf]
    %v5736 = vld [vmem:[#allocation2 + $0x60] sm:$0xf]
    %v5737 = vld [vmem:[#allocation2 + $0x64] sm:$0xf]
    %v5738 = vld [vmem:[#allocation2 + $0x68] sm:$0xf]
    %v5739 = vld [vmem:[#allocation2 + $0x6c] sm:$0xf]
    %v5740 = vld [vmem:[#allocation2 + $0x70] sm:$0xf]
    %v5741 = vld [vmem:[#allocation2 + $0x74] sm:$0xf]
    %v5742 = vld [vmem:[#allocation2 + $0x78] sm:$0xf]
    %v5743 = vld [vmem:[#allocation2 + $0x7c] sm:$0xf]
    %v5744 = vld [vmem:[#allocation2 + $0x80] sm:$0xf]
    %v5745 = vld [vmem:[#allocation2 + $0x84] sm:$0xf]
    %v5746 = vld [vmem:[#allocation2 + $0x88] sm:$0xf]
    %v5747 = vld [vmem:[#allocation2 + $0x8c] sm:$0xf]
    %v5748 = vld [vmem:[#allocation2 + $0x90] sm:$0xf]
    %v5749 = vld [vmem:[#allocation2 + $0x94] sm:$0xf]
    %v5750 = vld [vmem:[#allocation2 + $0x98] sm:$0xf]
    %v5751 = vld [vmem:[#allocation2 + $0x9c] sm:$0xf]
    %v5752 = vld [vmem:[#allocation2 + $0xa0] sm:$0xf]
    %v5753 = vld [vmem:[#allocation2 + $0xa4] sm:$0xf]
    %v5754 = vld [vmem:[#allocation2 + $0xa8] sm:$0xf]
    %v5755 = vld [vmem:[#allocation2 + $0xac] sm:$0xf]
    %v5756 = vld [vmem:[#allocation2 + $0xb0] sm:$0xf]
    %v5757 = vld [vmem:[#allocation2 + $0xb4] sm:$0xf]
    %v5758 = vld [vmem:[#allocation2 + $0xb8] sm:$0xf]
    %v5759 = vld [vmem:[#allocation2 + $0xbc] sm:$0xf]
    %v5760 = vld [vmem:[#allocation2 + $0xc0] sm:$0xf]
    %v5761 = vld [vmem:[#allocation2 + $0xc4] sm:$0xf]
    %v5762 = vld [vmem:[#allocation2 + $0xc8] sm:$0xf]
    %v5763 = vld [vmem:[#allocation2 + $0xcc] sm:$0xf]
    %v5764 = vld [vmem:[#allocation2 + $0xd0] sm:$0xf]
    %v5765 = vld [vmem:[#allocation2 + $0xd4] sm:$0xf]
    %v5766 = vld [vmem:[#allocation2 + $0xd8] sm:$0xf]
    %v5767 = vld [vmem:[#allocation2 + $0xdc] sm:$0xf]
    %v5768 = vld [vmem:[#allocation2 + $0xe0] sm:$0xf]
    %v5769 = vld [vmem:[#allocation2 + $0xe4] sm:$0xf]
    %v5770 = vld [vmem:[#allocation2 + $0xe8] sm:$0xf]
    %v5771 = vld [vmem:[#allocation2 + $0xec] sm:$0xf]
    %v5772 = vld [vmem:[#allocation2 + $0xf0] sm:$0xf]
    %v5773 = vld [vmem:[#allocation2 + $0xf4] sm:$0xf]
    %v5774 = vld [vmem:[#allocation2 + $0xf8] sm:$0xf]
    %v5775 = vld [vmem:[#allocation2 + $0xfc] sm:$0xf]
    %v5776 = vld [vmem:[#allocation2 + $0x100] sm:$0xf]
    %v5777 = vld [vmem:[#allocation2 + $0x104] sm:$0xf]
    %v5778 = vld [vmem:[#allocation2 + $0x108] sm:$0xf]
    %v5779 = vld [vmem:[#allocation2 + $0x10c] sm:$0xf]
    %v5780 = vld [vmem:[#allocation2 + $0x110] sm:$0xf]
    %v5781 = vld [vmem:[#allocation2 + $0x114] sm:$0xf]
    %v5782 = vld [vmem:[#allocation2 + $0x118] sm:$0xf]
    %v5783 = vld [vmem:[#allocation2 + $0x11c] sm:$0xf]
    %v5784 = vld [vmem:[#allocation2 + $0x120] sm:$0xf]
    %v5785 = vld [vmem:[#allocation2 + $0x124] sm:$0xf]
    %v5786 = vld [vmem:[#allocation2 + $0x128] sm:$0xf]
    %v5787 = vld [vmem:[#allocation2 + $0x12c] sm:$0xf]
    %v5788 = vld [vmem:[#allocation2 + $0x130] sm:$0xf]
    %v5789 = vld [vmem:[#allocation2 + $0x134] sm:$0xf]
    %v5790 = vld [vmem:[#allocation2 + $0x138] sm:$0xf]
    %v5791 = vld [vmem:[#allocation2 + $0x13c] sm:$0xf]
    %v5792 = vld [vmem:[#allocation2 + $0x140] sm:$0xf]
    %v5793 = vld [vmem:[#allocation2 + $0x144] sm:$0xf]
    %v5794 = vld [vmem:[#allocation2 + $0x148] sm:$0xf]
    %v5795 = vld [vmem:[#allocation2 + $0x14c] sm:$0xf]
    %v5796 = vld [vmem:[#allocation2 + $0x150] sm:$0xf]
    %v5797 = vld [vmem:[#allocation2 + $0x154] sm:$0xf]
    %v5798 = vld [vmem:[#allocation2 + $0x158] sm:$0xf]
    %v5799 = vld [vmem:[#allocation2 + $0x15c] sm:$0xf]
    %v5800 = vld [vmem:[#allocation2 + $0x160] sm:$0xf]
    %v5801 = vld [vmem:[#allocation2 + $0x164] sm:$0xf]
    %v5802 = vld [vmem:[#allocation2 + $0x168] sm:$0x3]
    %s5803 = scalar_lea.vmem %s2, 10
    %v5804 = vld [vmem:[%s5803] sm:$0x3]
    %v5894 = vunpack.c.l.b16 %v5714
    %v5895 = vunpack.c.l.b16 %v5715
    %v5896 = vunpack.c.l.b16 %v5716
    %v5897 = vunpack.c.l.b16 %v5717
    %v5898 = vunpack.c.l.b16 %v5718
    %v5899 = vunpack.c.l.b16 %v5719
    %v5900 = vunpack.c.l.b16 %v5720
    %v5901 = vunpack.c.l.b16 %v5721
    %v5902 = vunpack.c.l.b16 %v5722
    %v5903 = vunpack.c.l.b16 %v5723
    %v5904 = vunpack.c.l.b16 %v5724
    %v5905 = vunpack.c.l.b16 %v5725
    %v5906 = vunpack.c.l.b16 %v5726
    %v5907 = vunpack.c.l.b16 %v5727
    %v5908 = vunpack.c.l.b16 %v5728
    %v5909 = vunpack.c.l.b16 %v5729
    %v5910 = vunpack.c.l.b16 %v5730
    %v5911 = vunpack.c.l.b16 %v5731
    %v5912 = vunpack.c.l.b16 %v5732
    %v5913 = vunpack.c.l.b16 %v5733
    %v5914 = vunpack.c.l.b16 %v5734
    %v5915 = vunpack.c.l.b16 %v5735
    %v5916 = vunpack.c.l.b16 %v5736
    %v5917 = vunpack.c.l.b16 %v5737
    %v5918 = vunpack.c.l.b16 %v5738
    %v5919 = vunpack.c.l.b16 %v5739
    %v5920 = vunpack.c.l.b16 %v5740
    %v5921 = vunpack.c.l.b16 %v5741
    %v5922 = vunpack.c.l.b16 %v5742
    %v5923 = vunpack.c.l.b16 %v5743
    %v5924 = vunpack.c.l.b16 %v5744
    %v5925 = vunpack.c.l.b16 %v5745
    %v5926 = vunpack.c.l.b16 %v5746
    %v5927 = vunpack.c.l.b16 %v5747
    %v5928 = vunpack.c.l.b16 %v5748
    %v5929 = vunpack.c.l.b16 %v5749
    %v5930 = vunpack.c.l.b16 %v5750
    %v5931 = vunpack.c.l.b16 %v5751
    %v5932 = vunpack.c.l.b16 %v5752
    %v5933 = vunpack.c.l.b16 %v5753
    %v5934 = vunpack.c.l.b16 %v5754
    %v5935 = vunpack.c.l.b16 %v5755
    %v5936 = vunpack.c.l.b16 %v5756
    %v5937 = vunpack.c.l.b16 %v5757
    %v5938 = vunpack.c.l.b16 %v5758
    %v5939 = vunpack.c.l.b16 %v5759
    %v5940 = vunpack.c.l.b16 %v5760
    %v5941 = vunpack.c.l.b16 %v5761
    %v5942 = vunpack.c.l.b16 %v5762
    %v5943 = vunpack.c.l.b16 %v5763
    %v5944 = vunpack.c.l.b16 %v5764
    %v5945 = vunpack.c.l.b16 %v5765
    %v5946 = vunpack.c.l.b16 %v5766
    %v5947 = vunpack.c.l.b16 %v5767
    %v5948 = vunpack.c.l.b16 %v5768
    %v5949 = vunpack.c.l.b16 %v5769
    %v5950 = vunpack.c.l.b16 %v5770
    %v5951 = vunpack.c.l.b16 %v5771
    %v5952 = vunpack.c.l.b16 %v5772
    %v5953 = vunpack.c.l.b16 %v5773
    %v5954 = vunpack.c.l.b16 %v5774
    %v5955 = vunpack.c.l.b16 %v5775
    %v5956 = vunpack.c.l.b16 %v5776
    %v5957 = vunpack.c.l.b16 %v5777
    %v5958 = vunpack.c.l.b16 %v5778
    %v5959 = vunpack.c.l.b16 %v5779
    %v5960 = vunpack.c.l.b16 %v5780
    %v5961 = vunpack.c.l.b16 %v5781
    %v5962 = vunpack.c.l.b16 %v5782
    %v5963 = vunpack.c.l.b16 %v5783
    %v5964 = vunpack.c.l.b16 %v5784
    %v5965 = vunpack.c.l.b16 %v5785
    %v5966 = vunpack.c.l.b16 %v5786
    %v5967 = vunpack.c.l.b16 %v5787
    %v5968 = vunpack.c.l.b16 %v5788
    %v5969 = vunpack.c.l.b16 %v5789
    %v5970 = vunpack.c.l.b16 %v5790
    %v5971 = vunpack.c.l.b16 %v5791
    %v5972 = vunpack.c.l.b16 %v5792
    %v5973 = vunpack.c.l.b16 %v5793
    %v5974 = vunpack.c.l.b16 %v5794
    %v5975 = vunpack.c.l.b16 %v5795
    %v5976 = vunpack.c.l.b16 %v5796
    %v5977 = vunpack.c.l.b16 %v5797
    %v5978 = vunpack.c.l.b16 %v5798
    %v5979 = vunpack.c.l.b16 %v5799
    %v5980 = vunpack.c.l.b16 %v5800
    %v5981 = vunpack.c.l.b16 %v5801
    %v5982 = vunpack.c.l.b16 %v5802
    %v5983 = vpack.c.b16 %v5895, %v5894
    %v5984 = vpack.c.b16 %v5897, %v5896
    %v5985 = vpack.c.b16 %v5899, %v5898
    %v5986 = vpack.c.b16 %v5901, %v5900
    %v5987 = vpack.c.b16 %v5903, %v5902
    %v5988 = vpack.c.b16 %v5905, %v5904
    %v5989 = vpack.c.b16 %v5907, %v5906
    %v5990 = vpack.c.b16 %v5909, %v5908
    %v5991 = vpack.c.b16 %v5911, %v5910
    %v5992 = vpack.c.b16 %v5913, %v5912
    %v5993 = vpack.c.b16 %v5915, %v5914
    %v5994 = vpack.c.b16 %v5917, %v5916
    %v5995 = vpack.c.b16 %v5919, %v5918
    %v5996 = vpack.c.b16 %v5921, %v5920
    %v5997 = vpack.c.b16 %v5923, %v5922
    %v5998 = vpack.c.b16 %v5925, %v5924
    %v5999 = vpack.c.b16 %v5927, %v5926
    %v6000 = vpack.c.b16 %v5929, %v5928
    %v6001 = vpack.c.b16 %v5931, %v5930
    %v6002 = vpack.c.b16 %v5933, %v5932
    %v6003 = vpack.c.b16 %v5935, %v5934
    %v6004 = vpack.c.b16 %v5937, %v5936
    %v6005 = vpack.c.b16 %v5939, %v5938
    %v6006 = vpack.c.b16 %v5941, %v5940
    %v6007 = vpack.c.b16 %v5943, %v5942
    %v6008 = vpack.c.b16 %v5945, %v5944
    %v6009 = vpack.c.b16 %v5947, %v5946
    %v6010 = vpack.c.b16 %v5949, %v5948
    %v6011 = vpack.c.b16 %v5951, %v5950
    %v6012 = vpack.c.b16 %v5953, %v5952
    %v6013 = vpack.c.b16 %v5955, %v5954
    %v6014 = vpack.c.b16 %v5957, %v5956
    %v6015 = vpack.c.b16 %v5959, %v5958
    %v6016 = vpack.c.b16 %v5961, %v5960
    %v6017 = vpack.c.b16 %v5963, %v5962
    %v6018 = vpack.c.b16 %v5965, %v5964
    %v6019 = vpack.c.b16 %v5967, %v5966
    %v6020 = vpack.c.b16 %v5969, %v5968
    %v6021 = vpack.c.b16 %v5971, %v5970
    %v6022 = vpack.c.b16 %v5973, %v5972
    %v6023 = vpack.c.b16 %v5975, %v5974
    %v6024 = vpack.c.b16 %v5977, %v5976
    %v6025 = vpack.c.b16 %v5979, %v5978
    %v6026 = vpack.c.b16 %v5981, %v5980
    %v6027 = vpack.c.b16 %v5982, %v5982
    %vm6028 = vcmask 1045504
    %v6029 = vrot.slane %v5983, 2
    %v6030 = vrot.slane %v5984, 2
    %v6031 = vsel %vm6028, %v6029, %v6030
    %v6032 = vrot.slane %v5985, 2
    %v6033 = vsel %vm6028, %v6030, %v6032
    %v6034 = vrot.slane %v5986, 2
    %v6035 = vsel %vm6028, %v6032, %v6034
    %v6036 = vrot.slane %v5987, 2
    %v6037 = vsel %vm6028, %v6034, %v6036
    %v6038 = vrot.slane %v5988, 2
    %v6039 = vsel %vm6028, %v6036, %v6038
    %v6040 = vrot.slane %v5989, 2
    %v6041 = vsel %vm6028, %v6038, %v6040
    %v6042 = vrot.slane %v5990, 2
    %v6043 = vsel %vm6028, %v6040, %v6042
    %v6044 = vrot.slane %v5991, 2
    %v6045 = vsel %vm6028, %v6042, %v6044
    %v6046 = vrot.slane %v5992, 2
    %v6047 = vsel %vm6028, %v6044, %v6046
    %v6048 = vrot.slane %v5993, 2
    %v6049 = vsel %vm6028, %v6046, %v6048
    %v6050 = vrot.slane %v5994, 2
    %v6051 = vsel %vm6028, %v6048, %v6050
    %v6052 = vrot.slane %v5995, 2
    %v6053 = vsel %vm6028, %v6050, %v6052
    %v6054 = vrot.slane %v5996, 2
    %v6055 = vsel %vm6028, %v6052, %v6054
    %v6056 = vrot.slane %v5997, 2
    %v6057 = vsel %vm6028, %v6054, %v6056
    %v6058 = vrot.slane %v5998, 2
    %v6059 = vsel %vm6028, %v6056, %v6058
    %v6060 = vrot.slane %v5999, 2
    %v6061 = vsel %vm6028, %v6058, %v6060
    %v6062 = vrot.slane %v6000, 2
    %v6063 = vsel %vm6028, %v6060, %v6062
    %v6064 = vrot.slane %v6001, 2
    %v6065 = vsel %vm6028, %v6062, %v6064
    %v6066 = vrot.slane %v6002, 2
    %v6067 = vsel %vm6028, %v6064, %v6066
    %v6068 = vrot.slane %v6003, 2
    %v6069 = vsel %vm6028, %v6066, %v6068
    %v6070 = vrot.slane %v6004, 2
    %v6071 = vsel %vm6028, %v6068, %v6070
    %v6072 = vrot.slane %v6005, 2
    %v6073 = vsel %vm6028, %v6070, %v6072
    %v6074 = vrot.slane %v6006, 2
    %v6075 = vsel %vm6028, %v6072, %v6074
    %v6076 = vrot.slane %v6007, 2
    %v6077 = vsel %vm6028, %v6074, %v6076
    %v6078 = vrot.slane %v6008, 2
    %v6079 = vsel %vm6028, %v6076, %v6078
    %v6080 = vrot.slane %v6009, 2
    %v6081 = vsel %vm6028, %v6078, %v6080
    %v6082 = vrot.slane %v6010, 2
    %v6083 = vsel %vm6028, %v6080, %v6082
    %v6084 = vrot.slane %v6011, 2
    %v6085 = vsel %vm6028, %v6082, %v6084
    %v6086 = vrot.slane %v6012, 2
    %v6087 = vsel %vm6028, %v6084, %v6086
    %v6088 = vrot.slane %v6013, 2
    %v6089 = vsel %vm6028, %v6086, %v6088
    %v6090 = vrot.slane %v6014, 2
    %v6091 = vsel %vm6028, %v6088, %v6090
    %v6092 = vrot.slane %v6015, 2
    %v6093 = vsel %vm6028, %v6090, %v6092
    %v6094 = vrot.slane %v6016, 2
    %v6095 = vsel %vm6028, %v6092, %v6094
    %v6096 = vrot.slane %v6017, 2
    %v6097 = vsel %vm6028, %v6094, %v6096
    %v6098 = vrot.slane %v6018, 2
    %v6099 = vsel %vm6028, %v6096, %v6098
    %v6100 = vrot.slane %v6019, 2
    %v6101 = vsel %vm6028, %v6098, %v6100
    %v6102 = vrot.slane %v6020, 2
    %v6103 = vsel %vm6028, %v6100, %v6102
    %v6104 = vrot.slane %v6021, 2
    %v6105 = vsel %vm6028, %v6102, %v6104
    %v6106 = vrot.slane %v6022, 2
    %v6107 = vsel %vm6028, %v6104, %v6106
    %v6108 = vrot.slane %v6023, 2
    %v6109 = vsel %vm6028, %v6106, %v6108
    %v6110 = vrot.slane %v6024, 2
    %v6111 = vsel %vm6028, %v6108, %v6110
    %v6112 = vrot.slane %v6025, 2
    %v6113 = vsel %vm6028, %v6110, %v6112
    %v6114 = vrot.slane %v6026, 2
    %v6115 = vsel %vm6028, %v6112, %v6114
    %v6116 = vrot.slane %v6027, 2
    %v6117 = vsel %vm6028, %v6114, %v6116
    %v6119 = vsel %vm551, %v6031, 0
    %v6122 = vsel %vm551, %v6033, 0
    %v6125 = vsel %vm551, %v6035, 0
    %v6128 = vsel %vm551, %v6037, 0
    %v6131 = vsel %vm551, %v6039, 0
    %v6134 = vsel %vm551, %v6041, 0
    %v6137 = vsel %vm551, %v6043, 0
    %v6140 = vsel %vm551, %v6045, 0
    %v6143 = vsel %vm551, %v6047, 0
    %v6146 = vsel %vm551, %v6049, 0
    %v6149 = vsel %vm551, %v6051, 0
    %v6152 = vsel %vm551, %v6053, 0
    %v6155 = vsel %vm551, %v6055, 0
    %v6158 = vsel %vm551, %v6057, 0
    %v6161 = vsel %vm551, %v6059, 0
    %v6164 = vsel %vm551, %v6061, 0
    %v6167 = vsel %vm551, %v6063, 0
    %v6170 = vsel %vm551, %v6065, 0
    %v6173 = vsel %vm551, %v6067, 0
    %v6176 = vsel %vm551, %v6069, 0
    %v6179 = vsel %vm551, %v6071, 0
    %v6182 = vsel %vm551, %v6073, 0
    %v6185 = vsel %vm551, %v6075, 0
    %v6188 = vsel %vm551, %v6077, 0
    %v6191 = vsel %vm551, %v6079, 0
    %v6194 = vsel %vm551, %v6081, 0
    %v6197 = vsel %vm551, %v6083, 0
    %v6200 = vsel %vm551, %v6085, 0
    %v6203 = vsel %vm551, %v6087, 0
    %v6206 = vsel %vm551, %v6089, 0
    %v6209 = vsel %vm551, %v6091, 0
    %v6212 = vsel %vm551, %v6093, 0
    %v6215 = vsel %vm551, %v6095, 0
    %v6218 = vsel %vm551, %v6097, 0
    %v6221 = vsel %vm551, %v6099, 0
    %v6224 = vsel %vm551, %v6101, 0
    %v6227 = vsel %vm551, %v6103, 0
    %v6230 = vsel %vm551, %v6105, 0
    %v6233 = vsel %vm551, %v6107, 0
    %v6236 = vsel %vm551, %v6109, 0
    %v6239 = vsel %vm551, %v6111, 0
    %v6242 = vsel %vm551, %v6113, 0
    %v6245 = vsel %vm551, %v6115, 0
    %v6248 = vsel %vm551, %v6117, 0
    %v6251 = vsel %vm684, %v5804, 0
    %6253 = vmatpush.bf16.msra.mxu0 0
    %6254 = vmatpush.bf16.msra.mxu0 0
    %6255 = vmatpush.bf16.msra.mxu0 0
    %6256 = vmatpush.bf16.msra.mxu0 0
    %6257 = vmatpush.bf16.msra.mxu0 0
    %6258 = vmatpush.bf16.msra.mxu0 0
    %6259 = vmatpush.bf16.msra.mxu0 0
    %6260 = vmatpush.bf16.msra.mxu0 %v6251
    %6261 = vmatmul.bf16.gmra.mxu0 %v6119
    %v6262 = vpop.f32.mrf.mxu0
    %v6263 = vadd.f32 0.0, %v6262
    %v6264 = vpop.f32.mrf.mxu0
    %v6265 = vadd.f32 0.0, %v6264
    %6266 = vmatmul.bf16.gmra.mxu0 %v6122
    %v6267 = vpop.f32.mrf.mxu0
    %v6268 = vadd.f32 0.0, %v6267
    %v6269 = vpop.f32.mrf.mxu0
    %v6270 = vadd.f32 0.0, %v6269
    %6271 = vmatmul.bf16.gmra.mxu0 %v6125
    %v6272 = vpop.f32.mrf.mxu0
    %v6273 = vadd.f32 0.0, %v6272
    %v6274 = vpop.f32.mrf.mxu0
    %v6275 = vadd.f32 0.0, %v6274
    %6276 = vmatmul.bf16.gmra.mxu0 %v6128
    %v6277 = vpop.f32.mrf.mxu0
    %v6278 = vadd.f32 0.0, %v6277
    %v6279 = vpop.f32.mrf.mxu0
    %v6280 = vadd.f32 0.0, %v6279
    %6281 = vmatmul.bf16.gmra.mxu0 %v6131
    %v6282 = vpop.f32.mrf.mxu0
    %v6283 = vadd.f32 0.0, %v6282
    %v6284 = vpop.f32.mrf.mxu0
    %v6285 = vadd.f32 0.0, %v6284
    %6286 = vmatmul.bf16.gmra.mxu0 %v6134
    %v6287 = vpop.f32.mrf.mxu0
    %v6288 = vadd.f32 0.0, %v6287
    %v6289 = vpop.f32.mrf.mxu0
    %v6290 = vadd.f32 0.0, %v6289
    %6291 = vmatmul.bf16.gmra.mxu0 %v6137
    %v6292 = vpop.f32.mrf.mxu0
    %v6293 = vadd.f32 0.0, %v6292
    %v6294 = vpop.f32.mrf.mxu0
    %v6295 = vadd.f32 0.0, %v6294
    %6296 = vmatmul.bf16.gmra.mxu0 %v6140
    %v6297 = vpop.f32.mrf.mxu0
    %v6298 = vadd.f32 0.0, %v6297
    %v6299 = vpop.f32.mrf.mxu0
    %v6300 = vadd.f32 0.0, %v6299
    %6301 = vmatmul.bf16.gmra.mxu0 %v6143
    %v6302 = vpop.f32.mrf.mxu0
    %v6303 = vadd.f32 0.0, %v6302
    %v6304 = vpop.f32.mrf.mxu0
    %v6305 = vadd.f32 0.0, %v6304
    %6306 = vmatmul.bf16.gmra.mxu0 %v6146
    %v6307 = vpop.f32.mrf.mxu0
    %v6308 = vadd.f32 0.0, %v6307
    %v6309 = vpop.f32.mrf.mxu0
    %v6310 = vadd.f32 0.0, %v6309
    %6311 = vmatmul.bf16.gmra.mxu0 %v6149
    %v6312 = vpop.f32.mrf.mxu0
    %v6313 = vadd.f32 0.0, %v6312
    %v6314 = vpop.f32.mrf.mxu0
    %v6315 = vadd.f32 0.0, %v6314
    %6316 = vmatmul.bf16.gmra.mxu0 %v6152
    %v6317 = vpop.f32.mrf.mxu0
    %v6318 = vadd.f32 0.0, %v6317
    %v6319 = vpop.f32.mrf.mxu0
    %v6320 = vadd.f32 0.0, %v6319
    %6321 = vmatmul.bf16.gmra.mxu0 %v6155
    %v6322 = vpop.f32.mrf.mxu0
    %v6323 = vadd.f32 0.0, %v6322
    %v6324 = vpop.f32.mrf.mxu0
    %v6325 = vadd.f32 0.0, %v6324
    %6326 = vmatmul.bf16.gmra.mxu0 %v6158
    %v6327 = vpop.f32.mrf.mxu0
    %v6328 = vadd.f32 0.0, %v6327
    %v6329 = vpop.f32.mrf.mxu0
    %v6330 = vadd.f32 0.0, %v6329
    %6331 = vmatmul.bf16.gmra.mxu0 %v6161
    %v6332 = vpop.f32.mrf.mxu0
    %v6333 = vadd.f32 0.0, %v6332
    %v6334 = vpop.f32.mrf.mxu0
    %v6335 = vadd.f32 0.0, %v6334
    %6336 = vmatmul.bf16.gmra.mxu0 %v6164
    %v6337 = vpop.f32.mrf.mxu0
    %v6338 = vadd.f32 0.0, %v6337
    %v6339 = vpop.f32.mrf.mxu0
    %v6340 = vadd.f32 0.0, %v6339
    %6341 = vmatmul.bf16.gmra.mxu0 %v6167
    %v6342 = vpop.f32.mrf.mxu0
    %v6343 = vadd.f32 0.0, %v6342
    %v6344 = vpop.f32.mrf.mxu0
    %v6345 = vadd.f32 0.0, %v6344
    %6346 = vmatmul.bf16.gmra.mxu0 %v6170
    %v6347 = vpop.f32.mrf.mxu0
    %v6348 = vadd.f32 0.0, %v6347
    %v6349 = vpop.f32.mrf.mxu0
    %v6350 = vadd.f32 0.0, %v6349
    %6351 = vmatmul.bf16.gmra.mxu0 %v6173
    %v6352 = vpop.f32.mrf.mxu0
    %v6353 = vadd.f32 0.0, %v6352
    %v6354 = vpop.f32.mrf.mxu0
    %v6355 = vadd.f32 0.0, %v6354
    %6356 = vmatmul.bf16.gmra.mxu0 %v6176
    %v6357 = vpop.f32.mrf.mxu0
    %v6358 = vadd.f32 0.0, %v6357
    %v6359 = vpop.f32.mrf.mxu0
    %v6360 = vadd.f32 0.0, %v6359
    %6361 = vmatmul.bf16.gmra.mxu0 %v6179
    %v6362 = vpop.f32.mrf.mxu0
    %v6363 = vadd.f32 0.0, %v6362
    %v6364 = vpop.f32.mrf.mxu0
    %v6365 = vadd.f32 0.0, %v6364
    %6366 = vmatmul.bf16.gmra.mxu0 %v6182
    %v6367 = vpop.f32.mrf.mxu0
    %v6368 = vadd.f32 0.0, %v6367
    %v6369 = vpop.f32.mrf.mxu0
    %v6370 = vadd.f32 0.0, %v6369
    %6371 = vmatmul.bf16.gmra.mxu0 %v6185
    %v6372 = vpop.f32.mrf.mxu0
    %v6373 = vadd.f32 0.0, %v6372
    %v6374 = vpop.f32.mrf.mxu0
    %v6375 = vadd.f32 0.0, %v6374
    %6376 = vmatmul.bf16.gmra.mxu0 %v6188
    %v6377 = vpop.f32.mrf.mxu0
    %v6378 = vadd.f32 0.0, %v6377
    %v6379 = vpop.f32.mrf.mxu0
    %v6380 = vadd.f32 0.0, %v6379
    %6381 = vmatmul.bf16.gmra.mxu0 %v6191
    %v6382 = vpop.f32.mrf.mxu0
    %v6383 = vadd.f32 0.0, %v6382
    %v6384 = vpop.f32.mrf.mxu0
    %v6385 = vadd.f32 0.0, %v6384
    %6386 = vmatmul.bf16.gmra.mxu0 %v6194
    %v6387 = vpop.f32.mrf.mxu0
    %v6388 = vadd.f32 0.0, %v6387
    %v6389 = vpop.f32.mrf.mxu0
    %v6390 = vadd.f32 0.0, %v6389
    %6391 = vmatmul.bf16.gmra.mxu0 %v6197
    %v6392 = vpop.f32.mrf.mxu0
    %v6393 = vadd.f32 0.0, %v6392
    %v6394 = vpop.f32.mrf.mxu0
    %v6395 = vadd.f32 0.0, %v6394
    %6396 = vmatmul.bf16.gmra.mxu0 %v6200
    %v6397 = vpop.f32.mrf.mxu0
    %v6398 = vadd.f32 0.0, %v6397
    %v6399 = vpop.f32.mrf.mxu0
    %v6400 = vadd.f32 0.0, %v6399
    %6401 = vmatmul.bf16.gmra.mxu0 %v6203
    %v6402 = vpop.f32.mrf.mxu0
    %v6403 = vadd.f32 0.0, %v6402
    %v6404 = vpop.f32.mrf.mxu0
    %v6405 = vadd.f32 0.0, %v6404
    %6406 = vmatmul.bf16.gmra.mxu0 %v6206
    %v6407 = vpop.f32.mrf.mxu0
    %v6408 = vadd.f32 0.0, %v6407
    %v6409 = vpop.f32.mrf.mxu0
    %v6410 = vadd.f32 0.0, %v6409
    %6411 = vmatmul.bf16.gmra.mxu0 %v6209
    %v6412 = vpop.f32.mrf.mxu0
    %v6413 = vadd.f32 0.0, %v6412
    %v6414 = vpop.f32.mrf.mxu0
    %v6415 = vadd.f32 0.0, %v6414
    %6416 = vmatmul.bf16.gmra.mxu0 %v6212
    %v6417 = vpop.f32.mrf.mxu0
    %v6418 = vadd.f32 0.0, %v6417
    %v6419 = vpop.f32.mrf.mxu0
    %v6420 = vadd.f32 0.0, %v6419
    %6421 = vmatmul.bf16.gmra.mxu0 %v6215
    %v6422 = vpop.f32.mrf.mxu0
    %v6423 = vadd.f32 0.0, %v6422
    %v6424 = vpop.f32.mrf.mxu0
    %v6425 = vadd.f32 0.0, %v6424
    %6426 = vmatmul.bf16.gmra.mxu0 %v6218
    %v6427 = vpop.f32.mrf.mxu0
    %v6428 = vadd.f32 0.0, %v6427
    %v6429 = vpop.f32.mrf.mxu0
    %v6430 = vadd.f32 0.0, %v6429
    %6431 = vmatmul.bf16.gmra.mxu0 %v6221
    %v6432 = vpop.f32.mrf.mxu0
    %v6433 = vadd.f32 0.0, %v6432
    %v6434 = vpop.f32.mrf.mxu0
    %v6435 = vadd.f32 0.0, %v6434
    %6436 = vmatmul.bf16.gmra.mxu0 %v6224
    %v6437 = vpop.f32.mrf.mxu0
    %v6438 = vadd.f32 0.0, %v6437
    %v6439 = vpop.f32.mrf.mxu0
    %v6440 = vadd.f32 0.0, %v6439
    %6441 = vmatmul.bf16.gmra.mxu0 %v6227
    %v6442 = vpop.f32.mrf.mxu0
    %v6443 = vadd.f32 0.0, %v6442
    %v6444 = vpop.f32.mrf.mxu0
    %v6445 = vadd.f32 0.0, %v6444
    %6446 = vmatmul.bf16.gmra.mxu0 %v6230
    %v6447 = vpop.f32.mrf.mxu0
    %v6448 = vadd.f32 0.0, %v6447
    %v6449 = vpop.f32.mrf.mxu0
    %v6450 = vadd.f32 0.0, %v6449
    %6451 = vmatmul.bf16.gmra.mxu0 %v6233
    %v6452 = vpop.f32.mrf.mxu0
    %v6453 = vadd.f32 0.0, %v6452
    %v6454 = vpop.f32.mrf.mxu0
    %v6455 = vadd.f32 0.0, %v6454
    %6456 = vmatmul.bf16.gmra.mxu0 %v6236
    %v6457 = vpop.f32.mrf.mxu0
    %v6458 = vadd.f32 0.0, %v6457
    %v6459 = vpop.f32.mrf.mxu0
    %v6460 = vadd.f32 0.0, %v6459
    %6461 = vmatmul.bf16.gmra.mxu0 %v6239
    %v6462 = vpop.f32.mrf.mxu0
    %v6463 = vadd.f32 0.0, %v6462
    %v6464 = vpop.f32.mrf.mxu0
    %v6465 = vadd.f32 0.0, %v6464
    %6466 = vmatmul.bf16.gmra.mxu0 %v6242
    %v6467 = vpop.f32.mrf.mxu0
    %v6468 = vadd.f32 0.0, %v6467
    %v6469 = vpop.f32.mrf.mxu0
    %v6470 = vadd.f32 0.0, %v6469
    %6471 = vmatmul.bf16.gmra.mxu0 %v6245
    %v6472 = vpop.f32.mrf.mxu0
    %v6473 = vadd.f32 0.0, %v6472
    %v6474 = vpop.f32.mrf.mxu0
    %v6475 = vadd.f32 0.0, %v6474
    %6476 = vmatmul.bf16.gmra.mxu0 %v6248
    %v6477 = vpop.f32.mrf.mxu0
    %v6478 = vadd.f32 0.0, %v6477
    %v6479 = vpop.f32.mrf.mxu0
    %v6480 = vadd.f32 0.0, %v6479
    %6481 = vdwg.mxu0
    %v6482 = vld [vmem:[#allocation3] sm:$0xff]
    %v6483 = vld [vmem:[#allocation3 + $0x8] sm:$0xff]
    %v6484 = vld [vmem:[#allocation3 + $0x10] sm:$0xff]
    %v6485 = vld [vmem:[#allocation3 + $0x18] sm:$0xff]
    %v6486 = vld [vmem:[#allocation3 + $0x20] sm:$0xff]
    %v6487 = vld [vmem:[#allocation3 + $0x28] sm:$0xff]
    %v6488 = vld [vmem:[#allocation3 + $0x30] sm:$0xff]
    %v6489 = vld [vmem:[#allocation3 + $0x38] sm:$0xff]
    %v6490 = vld [vmem:[#allocation3 + $0x40] sm:$0xff]
    %v6491 = vld [vmem:[#allocation3 + $0x48] sm:$0xff]
    %v6492 = vld [vmem:[#allocation3 + $0x50] sm:$0xff]
    %v6493 = vld [vmem:[#allocation3 + $0x58] sm:$0xff]
    %v6494 = vld [vmem:[#allocation3 + $0x60] sm:$0xff]
    %v6495 = vld [vmem:[#allocation3 + $0x68] sm:$0xff]
    %v6496 = vld [vmem:[#allocation3 + $0x70] sm:$0xff]
    %v6497 = vld [vmem:[#allocation3 + $0x78] sm:$0xff]
    %v6498 = vld [vmem:[#allocation3 + $0x80] sm:$0xff]
    %v6499 = vld [vmem:[#allocation3 + $0x88] sm:$0xff]
    %v6500 = vld [vmem:[#allocation3 + $0x90] sm:$0xff]
    %v6501 = vld [vmem:[#allocation3 + $0x98] sm:$0xff]
    %v6502 = vld [vmem:[#allocation3 + $0xa0] sm:$0xff]
    %v6503 = vld [vmem:[#allocation3 + $0xa8] sm:$0xff]
    %v6504 = vld [vmem:[#allocation3 + $0xb0] sm:$0xff]
    %v6505 = vld [vmem:[#allocation3 + $0xb8] sm:$0xff]
    %v6506 = vld [vmem:[#allocation3 + $0xc0] sm:$0xff]
    %v6507 = vld [vmem:[#allocation3 + $0xc8] sm:$0xff]
    %v6508 = vld [vmem:[#allocation3 + $0xd0] sm:$0xff]
    %v6509 = vld [vmem:[#allocation3 + $0xd8] sm:$0xff]
    %v6510 = vld [vmem:[#allocation3 + $0xe0] sm:$0xff]
    %v6511 = vld [vmem:[#allocation3 + $0xe8] sm:$0xff]
    %v6512 = vld [vmem:[#allocation3 + $0xf0] sm:$0xff]
    %v6513 = vld [vmem:[#allocation3 + $0xf8] sm:$0xff]
    %v6514 = vld [vmem:[#allocation3 + $0x100] sm:$0xff]
    %v6515 = vld [vmem:[#allocation3 + $0x108] sm:$0xff]
    %v6516 = vld [vmem:[#allocation3 + $0x110] sm:$0xff]
    %v6517 = vld [vmem:[#allocation3 + $0x118] sm:$0xff]
    %v6518 = vld [vmem:[#allocation3 + $0x120] sm:$0xff]
    %v6519 = vld [vmem:[#allocation3 + $0x128] sm:$0xff]
    %v6520 = vld [vmem:[#allocation3 + $0x130] sm:$0xff]
    %v6521 = vld [vmem:[#allocation3 + $0x138] sm:$0xff]
    %v6522 = vld [vmem:[#allocation3 + $0x140] sm:$0xff]
    %v6523 = vld [vmem:[#allocation3 + $0x148] sm:$0xff]
    %v6524 = vld [vmem:[#allocation3 + $0x150] sm:$0xff]
    %v6525 = vld [vmem:[#allocation3 + $0x158] sm:$0xff]
    %v6526 = vld [vmem:[#allocation3 + $0x160] sm:$0xff]
    %v6527 = vld [vmem:[#allocation3 + $0x168] sm:$0xff]
    %v6528 = vld [vmem:[#allocation3 + $0x170] sm:$0xff]
    %v6529 = vld [vmem:[#allocation3 + $0x178] sm:$0xff]
    %v6530 = vld [vmem:[#allocation3 + $0x180] sm:$0xff]
    %v6531 = vld [vmem:[#allocation3 + $0x188] sm:$0xff]
    %v6532 = vld [vmem:[#allocation3 + $0x190] sm:$0xff]
    %v6533 = vld [vmem:[#allocation3 + $0x198] sm:$0xff]
    %v6534 = vld [vmem:[#allocation3 + $0x1a0] sm:$0xff]
    %v6535 = vld [vmem:[#allocation3 + $0x1a8] sm:$0xff]
    %v6536 = vld [vmem:[#allocation3 + $0x1b0] sm:$0xff]
    %v6537 = vld [vmem:[#allocation3 + $0x1b8] sm:$0xff]
    %v6538 = vld [vmem:[#allocation3 + $0x1c0] sm:$0xff]
    %v6539 = vld [vmem:[#allocation3 + $0x1c8] sm:$0xff]
    %v6540 = vld [vmem:[#allocation3 + $0x1d0] sm:$0xff]
    %v6541 = vld [vmem:[#allocation3 + $0x1d8] sm:$0xff]
    %v6542 = vld [vmem:[#allocation3 + $0x1e0] sm:$0xff]
    %v6543 = vld [vmem:[#allocation3 + $0x1e8] sm:$0xff]
    %v6544 = vld [vmem:[#allocation3 + $0x1f0] sm:$0xff]
    %v6545 = vld [vmem:[#allocation3 + $0x1f8] sm:$0xff]
    %v6546 = vld [vmem:[#allocation3 + $0x200] sm:$0xff]
    %v6547 = vld [vmem:[#allocation3 + $0x208] sm:$0xff]
    %v6548 = vld [vmem:[#allocation3 + $0x210] sm:$0xff]
    %v6549 = vld [vmem:[#allocation3 + $0x218] sm:$0xff]
    %v6550 = vld [vmem:[#allocation3 + $0x220] sm:$0xff]
    %v6551 = vld [vmem:[#allocation3 + $0x228] sm:$0xff]
    %v6552 = vld [vmem:[#allocation3 + $0x230] sm:$0xff]
    %v6553 = vld [vmem:[#allocation3 + $0x238] sm:$0xff]
    %v6554 = vld [vmem:[#allocation3 + $0x240] sm:$0xff]
    %v6555 = vld [vmem:[#allocation3 + $0x248] sm:$0xff]
    %v6556 = vld [vmem:[#allocation3 + $0x250] sm:$0xff]
    %v6557 = vld [vmem:[#allocation3 + $0x258] sm:$0xff]
    %v6558 = vld [vmem:[#allocation3 + $0x260] sm:$0xff]
    %v6559 = vld [vmem:[#allocation3 + $0x268] sm:$0xff]
    %v6560 = vld [vmem:[#allocation3 + $0x270] sm:$0xff]
    %v6561 = vld [vmem:[#allocation3 + $0x278] sm:$0xff]
    %v6562 = vld [vmem:[#allocation3 + $0x280] sm:$0xff]
    %v6563 = vld [vmem:[#allocation3 + $0x288] sm:$0xff]
    %v6564 = vld [vmem:[#allocation3 + $0x290] sm:$0xff]
    %v6565 = vld [vmem:[#allocation3 + $0x298] sm:$0xff]
    %v6566 = vld [vmem:[#allocation3 + $0x2a0] sm:$0xff]
    %v6567 = vld [vmem:[#allocation3 + $0x2a8] sm:$0xff]
    %v6568 = vld [vmem:[#allocation3 + $0x2b0] sm:$0xff]
    %v6569 = vld [vmem:[#allocation3 + $0x2b8] sm:$0xff]
    %v6570 = vadd.f32 %v6482, %v6263
    %v6571 = vadd.f32 %v6483, %v6265
    %v6572 = vadd.f32 %v6484, %v6268
    %v6573 = vadd.f32 %v6485, %v6270
    %v6574 = vadd.f32 %v6486, %v6273
    %v6575 = vadd.f32 %v6487, %v6275
    %v6576 = vadd.f32 %v6488, %v6278
    %v6577 = vadd.f32 %v6489, %v6280
    %v6578 = vadd.f32 %v6490, %v6283
    %v6579 = vadd.f32 %v6491, %v6285
    %v6580 = vadd.f32 %v6492, %v6288
    %v6581 = vadd.f32 %v6493, %v6290
    %v6582 = vadd.f32 %v6494, %v6293
    %v6583 = vadd.f32 %v6495, %v6295
    %v6584 = vadd.f32 %v6496, %v6298
    %v6585 = vadd.f32 %v6497, %v6300
    %v6586 = vadd.f32 %v6498, %v6303
    %v6587 = vadd.f32 %v6499, %v6305
    %v6588 = vadd.f32 %v6500, %v6308
    %v6589 = vadd.f32 %v6501, %v6310
    %v6590 = vadd.f32 %v6502, %v6313
    %v6591 = vadd.f32 %v6503, %v6315
    %v6592 = vadd.f32 %v6504, %v6318
    %v6593 = vadd.f32 %v6505, %v6320
    %v6594 = vadd.f32 %v6506, %v6323
    %v6595 = vadd.f32 %v6507, %v6325
    %v6596 = vadd.f32 %v6508, %v6328
    %v6597 = vadd.f32 %v6509, %v6330
    %v6598 = vadd.f32 %v6510, %v6333
    %v6599 = vadd.f32 %v6511, %v6335
    %v6600 = vadd.f32 %v6512, %v6338
    %v6601 = vadd.f32 %v6513, %v6340
    %v6602 = vadd.f32 %v6514, %v6343
    %v6603 = vadd.f32 %v6515, %v6345
    %v6604 = vadd.f32 %v6516, %v6348
    %v6605 = vadd.f32 %v6517, %v6350
    %v6606 = vadd.f32 %v6518, %v6353
    %v6607 = vadd.f32 %v6519, %v6355
    %v6608 = vadd.f32 %v6520, %v6358
    %v6609 = vadd.f32 %v6521, %v6360
    %v6610 = vadd.f32 %v6522, %v6363
    %v6611 = vadd.f32 %v6523, %v6365
    %v6612 = vadd.f32 %v6524, %v6368
    %v6613 = vadd.f32 %v6525, %v6370
    %v6614 = vadd.f32 %v6526, %v6373
    %v6615 = vadd.f32 %v6527, %v6375
    %v6616 = vadd.f32 %v6528, %v6378
    %v6617 = vadd.f32 %v6529, %v6380
    %v6618 = vadd.f32 %v6530, %v6383
    %v6619 = vadd.f32 %v6531, %v6385
    %v6620 = vadd.f32 %v6532, %v6388
    %v6621 = vadd.f32 %v6533, %v6390
    %v6622 = vadd.f32 %v6534, %v6393
    %v6623 = vadd.f32 %v6535, %v6395
    %v6624 = vadd.f32 %v6536, %v6398
    %v6625 = vadd.f32 %v6537, %v6400
    %v6626 = vadd.f32 %v6538, %v6403
    %v6627 = vadd.f32 %v6539, %v6405
    %v6628 = vadd.f32 %v6540, %v6408
    %v6629 = vadd.f32 %v6541, %v6410
    %v6630 = vadd.f32 %v6542, %v6413
    %v6631 = vadd.f32 %v6543, %v6415
    %v6632 = vadd.f32 %v6544, %v6418
    %v6633 = vadd.f32 %v6545, %v6420
    %v6634 = vadd.f32 %v6546, %v6423
    %v6635 = vadd.f32 %v6547, %v6425
    %v6636 = vadd.f32 %v6548, %v6428
    %v6637 = vadd.f32 %v6549, %v6430
    %v6638 = vadd.f32 %v6550, %v6433
    %v6639 = vadd.f32 %v6551, %v6435
    %v6640 = vadd.f32 %v6552, %v6438
    %v6641 = vadd.f32 %v6553, %v6440
    %v6642 = vadd.f32 %v6554, %v6443
    %v6643 = vadd.f32 %v6555, %v6445
    %v6644 = vadd.f32 %v6556, %v6448
    %v6645 = vadd.f32 %v6557, %v6450
    %v6646 = vadd.f32 %v6558, %v6453
    %v6647 = vadd.f32 %v6559, %v6455
    %v6648 = vadd.f32 %v6560, %v6458
    %v6649 = vadd.f32 %v6561, %v6460
    %v6650 = vadd.f32 %v6562, %v6463
    %v6651 = vadd.f32 %v6563, %v6465
    %v6652 = vadd.f32 %v6564, %v6468
    %v6653 = vadd.f32 %v6565, %v6470
    %v6654 = vadd.f32 %v6566, %v6473
    %v6655 = vadd.f32 %v6567, %v6475
    %v6656 = vadd.f32 %v6568, %v6478
    %v6657 = vadd.f32 %v6569, %v6480
    %6658 = vst [vmem:[#allocation3] sm:$0xff] %v6570
    %6659 = vst [vmem:[#allocation3 + $0x8] sm:$0xff] %v6571
    %6660 = vst [vmem:[#allocation3 + $0x10] sm:$0xff] %v6572
    %6661 = vst [vmem:[#allocation3 + $0x18] sm:$0xff] %v6573
    %6662 = vst [vmem:[#allocation3 + $0x20] sm:$0xff] %v6574
    %6663 = vst [vmem:[#allocation3 + $0x28] sm:$0xff] %v6575
    %6664 = vst [vmem:[#allocation3 + $0x30] sm:$0xff] %v6576
    %6665 = vst [vmem:[#allocation3 + $0x38] sm:$0xff] %v6577
    %6666 = vst [vmem:[#allocation3 + $0x40] sm:$0xff] %v6578
    %6667 = vst [vmem:[#allocation3 + $0x48] sm:$0xff] %v6579
    %6668 = vst [vmem:[#allocation3 + $0x50] sm:$0xff] %v6580
    %6669 = vst [vmem:[#allocation3 + $0x58] sm:$0xff] %v6581
    %6670 = vst [vmem:[#allocation3 + $0x60] sm:$0xff] %v6582
    %6671 = vst [vmem:[#allocation3 + $0x68] sm:$0xff] %v6583
    %6672 = vst [vmem:[#allocation3 + $0x70] sm:$0xff] %v6584
    %6673 = vst [vmem:[#allocation3 + $0x78] sm:$0xff] %v6585
    %6674 = vst [vmem:[#allocation3 + $0x80] sm:$0xff] %v6586
    %6675 = vst [vmem:[#allocation3 + $0x88] sm:$0xff] %v6587
    %6676 = vst [vmem:[#allocation3 + $0x90] sm:$0xff] %v6588
    %6677 = vst [vmem:[#allocation3 + $0x98] sm:$0xff] %v6589
    %6678 = vst [vmem:[#allocation3 + $0xa0] sm:$0xff] %v6590
    %6679 = vst [vmem:[#allocation3 + $0xa8] sm:$0xff] %v6591
    %6680 = vst [vmem:[#allocation3 + $0xb0] sm:$0xff] %v6592
    %6681 = vst [vmem:[#allocation3 + $0xb8] sm:$0xff] %v6593
    %6682 = vst [vmem:[#allocation3 + $0xc0] sm:$0xff] %v6594
    %6683 = vst [vmem:[#allocation3 + $0xc8] sm:$0xff] %v6595
    %6684 = vst [vmem:[#allocation3 + $0xd0] sm:$0xff] %v6596
    %6685 = vst [vmem:[#allocation3 + $0xd8] sm:$0xff] %v6597
    %6686 = vst [vmem:[#allocation3 + $0xe0] sm:$0xff] %v6598
    %6687 = vst [vmem:[#allocation3 + $0xe8] sm:$0xff] %v6599
    %6688 = vst [vmem:[#allocation3 + $0xf0] sm:$0xff] %v6600
    %6689 = vst [vmem:[#allocation3 + $0xf8] sm:$0xff] %v6601
    %6690 = vst [vmem:[#allocation3 + $0x100] sm:$0xff] %v6602
    %6691 = vst [vmem:[#allocation3 + $0x108] sm:$0xff] %v6603
    %6692 = vst [vmem:[#allocation3 + $0x110] sm:$0xff] %v6604
    %6693 = vst [vmem:[#allocation3 + $0x118] sm:$0xff] %v6605
    %6694 = vst [vmem:[#allocation3 + $0x120] sm:$0xff] %v6606
    %6695 = vst [vmem:[#allocation3 + $0x128] sm:$0xff] %v6607
    %6696 = vst [vmem:[#allocation3 + $0x130] sm:$0xff] %v6608
    %6697 = vst [vmem:[#allocation3 + $0x138] sm:$0xff] %v6609
    %6698 = vst [vmem:[#allocation3 + $0x140] sm:$0xff] %v6610
    %6699 = vst [vmem:[#allocation3 + $0x148] sm:$0xff] %v6611
    %6700 = vst [vmem:[#allocation3 + $0x150] sm:$0xff] %v6612
    %6701 = vst [vmem:[#allocation3 + $0x158] sm:$0xff] %v6613
    %6702 = vst [vmem:[#allocation3 + $0x160] sm:$0xff] %v6614
    %6703 = vst [vmem:[#allocation3 + $0x168] sm:$0xff] %v6615
    %6704 = vst [vmem:[#allocation3 + $0x170] sm:$0xff] %v6616
    %6705 = vst [vmem:[#allocation3 + $0x178] sm:$0xff] %v6617
    %6706 = vst [vmem:[#allocation3 + $0x180] sm:$0xff] %v6618
    %6707 = vst [vmem:[#allocation3 + $0x188] sm:$0xff] %v6619
    %6708 = vst [vmem:[#allocation3 + $0x190] sm:$0xff] %v6620
    %6709 = vst [vmem:[#allocation3 + $0x198] sm:$0xff] %v6621
    %6710 = vst [vmem:[#allocation3 + $0x1a0] sm:$0xff] %v6622
    %6711 = vst [vmem:[#allocation3 + $0x1a8] sm:$0xff] %v6623
    %6712 = vst [vmem:[#allocation3 + $0x1b0] sm:$0xff] %v6624
    %6713 = vst [vmem:[#allocation3 + $0x1b8] sm:$0xff] %v6625
    %6714 = vst [vmem:[#allocation3 + $0x1c0] sm:$0xff] %v6626
    %6715 = vst [vmem:[#allocation3 + $0x1c8] sm:$0xff] %v6627
    %6716 = vst [vmem:[#allocation3 + $0x1d0] sm:$0xff] %v6628
    %6717 = vst [vmem:[#allocation3 + $0x1d8] sm:$0xff] %v6629
    %6718 = vst [vmem:[#allocation3 + $0x1e0] sm:$0xff] %v6630
    %6719 = vst [vmem:[#allocation3 + $0x1e8] sm:$0xff] %v6631
    %6720 = vst [vmem:[#allocation3 + $0x1f0] sm:$0xff] %v6632
    %6721 = vst [vmem:[#allocation3 + $0x1f8] sm:$0xff] %v6633
    %6722 = vst [vmem:[#allocation3 + $0x200] sm:$0xff] %v6634
    %6723 = vst [vmem:[#allocation3 + $0x208] sm:$0xff] %v6635
    %6724 = vst [vmem:[#allocation3 + $0x210] sm:$0xff] %v6636
    %6725 = vst [vmem:[#allocation3 + $0x218] sm:$0xff] %v6637
    %6726 = vst [vmem:[#allocation3 + $0x220] sm:$0xff] %v6638
    %6727 = vst [vmem:[#allocation3 + $0x228] sm:$0xff] %v6639
    %6728 = vst [vmem:[#allocation3 + $0x230] sm:$0xff] %v6640
    %6729 = vst [vmem:[#allocation3 + $0x238] sm:$0xff] %v6641
    %6730 = vst [vmem:[#allocation3 + $0x240] sm:$0xff] %v6642
    %6731 = vst [vmem:[#allocation3 + $0x248] sm:$0xff] %v6643
    %6732 = vst [vmem:[#allocation3 + $0x250] sm:$0xff] %v6644
    %6733 = vst [vmem:[#allocation3 + $0x258] sm:$0xff] %v6645
    %6734 = vst [vmem:[#allocation3 + $0x260] sm:$0xff] %v6646
    %6735 = vst [vmem:[#allocation3 + $0x268] sm:$0xff] %v6647
    %6736 = vst [vmem:[#allocation3 + $0x270] sm:$0xff] %v6648
    %6737 = vst [vmem:[#allocation3 + $0x278] sm:$0xff] %v6649
    %6738 = vst [vmem:[#allocation3 + $0x280] sm:$0xff] %v6650
    %6739 = vst [vmem:[#allocation3 + $0x288] sm:$0xff] %v6651
    %6740 = vst [vmem:[#allocation3 + $0x290] sm:$0xff] %v6652
    %6741 = vst [vmem:[#allocation3 + $0x298] sm:$0xff] %v6653
    %6742 = vst [vmem:[#allocation3 + $0x2a0] sm:$0xff] %v6654
    %6743 = vst [vmem:[#allocation3 + $0x2a8] sm:$0xff] %v6655
    %6744 = vst [vmem:[#allocation3 + $0x2b0] sm:$0xff] %v6656
    %6745 = vst [vmem:[#allocation3 + $0x2b8] sm:$0xff] %v6657
    %v6746 = vld [vmem:[#allocation2 + $0x10] sm:$0xc]
    %v6747 = vld [vmem:[#allocation2 + $0x14] sm:$0xf]
    %v6748 = vld [vmem:[#allocation2 + $0x18] sm:$0xf]
    %v6749 = vld [vmem:[#allocation2 + $0x1c] sm:$0xf]
    %v6750 = vld [vmem:[#allocation2 + $0x20] sm:$0xf]
    %v6751 = vld [vmem:[#allocation2 + $0x24] sm:$0xf]
    %v6752 = vld [vmem:[#allocation2 + $0x28] sm:$0xf]
    %v6753 = vld [vmem:[#allocation2 + $0x2c] sm:$0xf]
    %v6754 = vld [vmem:[#allocation2 + $0x30] sm:$0xf]
    %v6755 = vld [vmem:[#allocation2 + $0x34] sm:$0xf]
    %v6756 = vld [vmem:[#allocation2 + $0x38] sm:$0xf]
    %v6757 = vld [vmem:[#allocation2 + $0x3c] sm:$0xf]
    %v6758 = vld [vmem:[#allocation2 + $0x40] sm:$0xf]
    %v6759 = vld [vmem:[#allocation2 + $0x44] sm:$0xf]
    %v6760 = vld [vmem:[#allocation2 + $0x48] sm:$0xf]
    %v6761 = vld [vmem:[#allocation2 + $0x4c] sm:$0xf]
    %v6762 = vld [vmem:[#allocation2 + $0x50] sm:$0xf]
    %v6763 = vld [vmem:[#allocation2 + $0x54] sm:$0xf]
    %v6764 = vld [vmem:[#allocation2 + $0x58] sm:$0xf]
    %v6765 = vld [vmem:[#allocation2 + $0x5c] sm:$0xf]
    %v6766 = vld [vmem:[#allocation2 + $0x60] sm:$0xf]
    %v6767 = vld [vmem:[#allocation2 + $0x64] sm:$0xf]
    %v6768 = vld [vmem:[#allocation2 + $0x68] sm:$0xf]
    %v6769 = vld [vmem:[#allocation2 + $0x6c] sm:$0xf]
    %v6770 = vld [vmem:[#allocation2 + $0x70] sm:$0xf]
    %v6771 = vld [vmem:[#allocation2 + $0x74] sm:$0xf]
    %v6772 = vld [vmem:[#allocation2 + $0x78] sm:$0xf]
    %v6773 = vld [vmem:[#allocation2 + $0x7c] sm:$0xf]
    %v6774 = vld [vmem:[#allocation2 + $0x80] sm:$0xf]
    %v6775 = vld [vmem:[#allocation2 + $0x84] sm:$0xf]
    %v6776 = vld [vmem:[#allocation2 + $0x88] sm:$0xf]
    %v6777 = vld [vmem:[#allocation2 + $0x8c] sm:$0xf]
    %v6778 = vld [vmem:[#allocation2 + $0x90] sm:$0xf]
    %v6779 = vld [vmem:[#allocation2 + $0x94] sm:$0xf]
    %v6780 = vld [vmem:[#allocation2 + $0x98] sm:$0xf]
    %v6781 = vld [vmem:[#allocation2 + $0x9c] sm:$0xf]
    %v6782 = vld [vmem:[#allocation2 + $0xa0] sm:$0xf]
    %v6783 = vld [vmem:[#allocation2 + $0xa4] sm:$0xf]
    %v6784 = vld [vmem:[#allocation2 + $0xa8] sm:$0xf]
    %v6785 = vld [vmem:[#allocation2 + $0xac] sm:$0xf]
    %v6786 = vld [vmem:[#allocation2 + $0xb0] sm:$0xf]
    %v6787 = vld [vmem:[#allocation2 + $0xb4] sm:$0xf]
    %v6788 = vld [vmem:[#allocation2 + $0xb8] sm:$0xf]
    %v6789 = vld [vmem:[#allocation2 + $0xbc] sm:$0xf]
    %v6790 = vld [vmem:[#allocation2 + $0xc0] sm:$0xf]
    %v6791 = vld [vmem:[#allocation2 + $0xc4] sm:$0xf]
    %v6792 = vld [vmem:[#allocation2 + $0xc8] sm:$0xf]
    %v6793 = vld [vmem:[#allocation2 + $0xcc] sm:$0xf]
    %v6794 = vld [vmem:[#allocation2 + $0xd0] sm:$0xf]
    %v6795 = vld [vmem:[#allocation2 + $0xd4] sm:$0xf]
    %v6796 = vld [vmem:[#allocation2 + $0xd8] sm:$0xf]
    %v6797 = vld [vmem:[#allocation2 + $0xdc] sm:$0xf]
    %v6798 = vld [vmem:[#allocation2 + $0xe0] sm:$0xf]
    %v6799 = vld [vmem:[#allocation2 + $0xe4] sm:$0xf]
    %v6800 = vld [vmem:[#allocation2 + $0xe8] sm:$0xf]
    %v6801 = vld [vmem:[#allocation2 + $0xec] sm:$0xf]
    %v6802 = vld [vmem:[#allocation2 + $0xf0] sm:$0xf]
    %v6803 = vld [vmem:[#allocation2 + $0xf4] sm:$0xf]
    %v6804 = vld [vmem:[#allocation2 + $0xf8] sm:$0xf]
    %v6805 = vld [vmem:[#allocation2 + $0xfc] sm:$0xf]
    %v6806 = vld [vmem:[#allocation2 + $0x100] sm:$0xf]
    %v6807 = vld [vmem:[#allocation2 + $0x104] sm:$0xf]
    %v6808 = vld [vmem:[#allocation2 + $0x108] sm:$0xf]
    %v6809 = vld [vmem:[#allocation2 + $0x10c] sm:$0xf]
    %v6810 = vld [vmem:[#allocation2 + $0x110] sm:$0xf]
    %v6811 = vld [vmem:[#allocation2 + $0x114] sm:$0xf]
    %v6812 = vld [vmem:[#allocation2 + $0x118] sm:$0xf]
    %v6813 = vld [vmem:[#allocation2 + $0x11c] sm:$0xf]
    %v6814 = vld [vmem:[#allocation2 + $0x120] sm:$0xf]
    %v6815 = vld [vmem:[#allocation2 + $0x124] sm:$0xf]
    %v6816 = vld [vmem:[#allocation2 + $0x128] sm:$0xf]
    %v6817 = vld [vmem:[#allocation2 + $0x12c] sm:$0xf]
    %v6818 = vld [vmem:[#allocation2 + $0x130] sm:$0xf]
    %v6819 = vld [vmem:[#allocation2 + $0x134] sm:$0xf]
    %v6820 = vld [vmem:[#allocation2 + $0x138] sm:$0xf]
    %v6821 = vld [vmem:[#allocation2 + $0x13c] sm:$0xf]
    %v6822 = vld [vmem:[#allocation2 + $0x140] sm:$0xf]
    %v6823 = vld [vmem:[#allocation2 + $0x144] sm:$0xf]
    %v6824 = vld [vmem:[#allocation2 + $0x148] sm:$0xf]
    %v6825 = vld [vmem:[#allocation2 + $0x14c] sm:$0xf]
    %v6826 = vld [vmem:[#allocation2 + $0x150] sm:$0xf]
    %v6827 = vld [vmem:[#allocation2 + $0x154] sm:$0xf]
    %v6828 = vld [vmem:[#allocation2 + $0x158] sm:$0xf]
    %v6829 = vld [vmem:[#allocation2 + $0x15c] sm:$0xf]
    %v6830 = vld [vmem:[#allocation2 + $0x160] sm:$0xf]
    %v6831 = vld [vmem:[#allocation2 + $0x164] sm:$0xf]
    %v6832 = vld [vmem:[#allocation2 + $0x168] sm:$0xf]
    %v6833 = vld [vmem:[#allocation2 + $0x16c] sm:$0xf]
    %v6834 = vld [vmem:[#allocation2 + $0x170] sm:$0x3]
    %s6835 = scalar_lea.vmem %s2, 12
    %v6836 = vld [vmem:[%s6835] sm:$0x3]
    %v6926 = vunpack.c.l.b16 %v6746
    %v6927 = vunpack.c.l.b16 %v6747
    %v6928 = vunpack.c.l.b16 %v6748
    %v6929 = vunpack.c.l.b16 %v6749
    %v6930 = vunpack.c.l.b16 %v6750
    %v6931 = vunpack.c.l.b16 %v6751
    %v6932 = vunpack.c.l.b16 %v6752
    %v6933 = vunpack.c.l.b16 %v6753
    %v6934 = vunpack.c.l.b16 %v6754
    %v6935 = vunpack.c.l.b16 %v6755
    %v6936 = vunpack.c.l.b16 %v6756
    %v6937 = vunpack.c.l.b16 %v6757
    %v6938 = vunpack.c.l.b16 %v6758
    %v6939 = vunpack.c.l.b16 %v6759
    %v6940 = vunpack.c.l.b16 %v6760
    %v6941 = vunpack.c.l.b16 %v6761
    %v6942 = vunpack.c.l.b16 %v6762
    %v6943 = vunpack.c.l.b16 %v6763
    %v6944 = vunpack.c.l.b16 %v6764
    %v6945 = vunpack.c.l.b16 %v6765
    %v6946 = vunpack.c.l.b16 %v6766
    %v6947 = vunpack.c.l.b16 %v6767
    %v6948 = vunpack.c.l.b16 %v6768
    %v6949 = vunpack.c.l.b16 %v6769
    %v6950 = vunpack.c.l.b16 %v6770
    %v6951 = vunpack.c.l.b16 %v6771
    %v6952 = vunpack.c.l.b16 %v6772
    %v6953 = vunpack.c.l.b16 %v6773
    %v6954 = vunpack.c.l.b16 %v6774
    %v6955 = vunpack.c.l.b16 %v6775
    %v6956 = vunpack.c.l.b16 %v6776
    %v6957 = vunpack.c.l.b16 %v6777
    %v6958 = vunpack.c.l.b16 %v6778
    %v6959 = vunpack.c.l.b16 %v6779
    %v6960 = vunpack.c.l.b16 %v6780
    %v6961 = vunpack.c.l.b16 %v6781
    %v6962 = vunpack.c.l.b16 %v6782
    %v6963 = vunpack.c.l.b16 %v6783
    %v6964 = vunpack.c.l.b16 %v6784
    %v6965 = vunpack.c.l.b16 %v6785
    %v6966 = vunpack.c.l.b16 %v6786
    %v6967 = vunpack.c.l.b16 %v6787
    %v6968 = vunpack.c.l.b16 %v6788
    %v6969 = vunpack.c.l.b16 %v6789
    %v6970 = vunpack.c.l.b16 %v6790
    %v6971 = vunpack.c.l.b16 %v6791
    %v6972 = vunpack.c.l.b16 %v6792
    %v6973 = vunpack.c.l.b16 %v6793
    %v6974 = vunpack.c.l.b16 %v6794
    %v6975 = vunpack.c.l.b16 %v6795
    %v6976 = vunpack.c.l.b16 %v6796
    %v6977 = vunpack.c.l.b16 %v6797
    %v6978 = vunpack.c.l.b16 %v6798
    %v6979 = vunpack.c.l.b16 %v6799
    %v6980 = vunpack.c.l.b16 %v6800
    %v6981 = vunpack.c.l.b16 %v6801
    %v6982 = vunpack.c.l.b16 %v6802
    %v6983 = vunpack.c.l.b16 %v6803
    %v6984 = vunpack.c.l.b16 %v6804
    %v6985 = vunpack.c.l.b16 %v6805
    %v6986 = vunpack.c.l.b16 %v6806
    %v6987 = vunpack.c.l.b16 %v6807
    %v6988 = vunpack.c.l.b16 %v6808
    %v6989 = vunpack.c.l.b16 %v6809
    %v6990 = vunpack.c.l.b16 %v6810
    %v6991 = vunpack.c.l.b16 %v6811
    %v6992 = vunpack.c.l.b16 %v6812
    %v6993 = vunpack.c.l.b16 %v6813
    %v6994 = vunpack.c.l.b16 %v6814
    %v6995 = vunpack.c.l.b16 %v6815
    %v6996 = vunpack.c.l.b16 %v6816
    %v6997 = vunpack.c.l.b16 %v6817
    %v6998 = vunpack.c.l.b16 %v6818
    %v6999 = vunpack.c.l.b16 %v6819
    %v7000 = vunpack.c.l.b16 %v6820
    %v7001 = vunpack.c.l.b16 %v6821
    %v7002 = vunpack.c.l.b16 %v6822
    %v7003 = vunpack.c.l.b16 %v6823
    %v7004 = vunpack.c.l.b16 %v6824
    %v7005 = vunpack.c.l.b16 %v6825
    %v7006 = vunpack.c.l.b16 %v6826
    %v7007 = vunpack.c.l.b16 %v6827
    %v7008 = vunpack.c.l.b16 %v6828
    %v7009 = vunpack.c.l.b16 %v6829
    %v7010 = vunpack.c.l.b16 %v6830
    %v7011 = vunpack.c.l.b16 %v6831
    %v7012 = vunpack.c.l.b16 %v6832
    %v7013 = vunpack.c.l.b16 %v6833
    %v7014 = vunpack.c.l.b16 %v6834
    %v7015 = vpack.c.b16 %v6927, %v6926
    %v7016 = vpack.c.b16 %v6929, %v6928
    %v7017 = vpack.c.b16 %v6931, %v6930
    %v7018 = vpack.c.b16 %v6933, %v6932
    %v7019 = vpack.c.b16 %v6935, %v6934
    %v7020 = vpack.c.b16 %v6937, %v6936
    %v7021 = vpack.c.b16 %v6939, %v6938
    %v7022 = vpack.c.b16 %v6941, %v6940
    %v7023 = vpack.c.b16 %v6943, %v6942
    %v7024 = vpack.c.b16 %v6945, %v6944
    %v7025 = vpack.c.b16 %v6947, %v6946
    %v7026 = vpack.c.b16 %v6949, %v6948
    %v7027 = vpack.c.b16 %v6951, %v6950
    %v7028 = vpack.c.b16 %v6953, %v6952
    %v7029 = vpack.c.b16 %v6955, %v6954
    %v7030 = vpack.c.b16 %v6957, %v6956
    %v7031 = vpack.c.b16 %v6959, %v6958
    %v7032 = vpack.c.b16 %v6961, %v6960
    %v7033 = vpack.c.b16 %v6963, %v6962
    %v7034 = vpack.c.b16 %v6965, %v6964
    %v7035 = vpack.c.b16 %v6967, %v6966
    %v7036 = vpack.c.b16 %v6969, %v6968
    %v7037 = vpack.c.b16 %v6971, %v6970
    %v7038 = vpack.c.b16 %v6973, %v6972
    %v7039 = vpack.c.b16 %v6975, %v6974
    %v7040 = vpack.c.b16 %v6977, %v6976
    %v7041 = vpack.c.b16 %v6979, %v6978
    %v7042 = vpack.c.b16 %v6981, %v6980
    %v7043 = vpack.c.b16 %v6983, %v6982
    %v7044 = vpack.c.b16 %v6985, %v6984
    %v7045 = vpack.c.b16 %v6987, %v6986
    %v7046 = vpack.c.b16 %v6989, %v6988
    %v7047 = vpack.c.b16 %v6991, %v6990
    %v7048 = vpack.c.b16 %v6993, %v6992
    %v7049 = vpack.c.b16 %v6995, %v6994
    %v7050 = vpack.c.b16 %v6997, %v6996
    %v7051 = vpack.c.b16 %v6999, %v6998
    %v7052 = vpack.c.b16 %v7001, %v7000
    %v7053 = vpack.c.b16 %v7003, %v7002
    %v7054 = vpack.c.b16 %v7005, %v7004
    %v7055 = vpack.c.b16 %v7007, %v7006
    %v7056 = vpack.c.b16 %v7009, %v7008
    %v7057 = vpack.c.b16 %v7011, %v7010
    %v7058 = vpack.c.b16 %v7013, %v7012
    %v7059 = vpack.c.b16 %v7014, %v7014
    %v7060 = vrot.slane %v7015, 2
    %v7061 = vrot.slane %v7016, 2
    %v7062 = vsel %vm6028, %v7060, %v7061
    %v7063 = vrot.slane %v7017, 2
    %v7064 = vsel %vm6028, %v7061, %v7063
    %v7065 = vrot.slane %v7018, 2
    %v7066 = vsel %vm6028, %v7063, %v7065
    %v7067 = vrot.slane %v7019, 2
    %v7068 = vsel %vm6028, %v7065, %v7067
    %v7069 = vrot.slane %v7020, 2
    %v7070 = vsel %vm6028, %v7067, %v7069
    %v7071 = vrot.slane %v7021, 2
    %v7072 = vsel %vm6028, %v7069, %v7071
    %v7073 = vrot.slane %v7022, 2
    %v7074 = vsel %vm6028, %v7071, %v7073
    %v7075 = vrot.slane %v7023, 2
    %v7076 = vsel %vm6028, %v7073, %v7075
    %v7077 = vrot.slane %v7024, 2
    %v7078 = vsel %vm6028, %v7075, %v7077
    %v7079 = vrot.slane %v7025, 2
    %v7080 = vsel %vm6028, %v7077, %v7079
    %v7081 = vrot.slane %v7026, 2
    %v7082 = vsel %vm6028, %v7079, %v7081
    %v7083 = vrot.slane %v7027, 2
    %v7084 = vsel %vm6028, %v7081, %v7083
    %v7085 = vrot.slane %v7028, 2
    %v7086 = vsel %vm6028, %v7083, %v7085
    %v7087 = vrot.slane %v7029, 2
    %v7088 = vsel %vm6028, %v7085, %v7087
    %v7089 = vrot.slane %v7030, 2
    %v7090 = vsel %vm6028, %v7087, %v7089
    %v7091 = vrot.slane %v7031, 2
    %v7092 = vsel %vm6028, %v7089, %v7091
    %v7093 = vrot.slane %v7032, 2
    %v7094 = vsel %vm6028, %v7091, %v7093
    %v7095 = vrot.slane %v7033, 2
    %v7096 = vsel %vm6028, %v7093, %v7095
    %v7097 = vrot.slane %v7034, 2
    %v7098 = vsel %vm6028, %v7095, %v7097
    %v7099 = vrot.slane %v7035, 2
    %v7100 = vsel %vm6028, %v7097, %v7099
    %v7101 = vrot.slane %v7036, 2
    %v7102 = vsel %vm6028, %v7099, %v7101
    %v7103 = vrot.slane %v7037, 2
    %v7104 = vsel %vm6028, %v7101, %v7103
    %v7105 = vrot.slane %v7038, 2
    %v7106 = vsel %vm6028, %v7103, %v7105
    %v7107 = vrot.slane %v7039, 2
    %v7108 = vsel %vm6028, %v7105, %v7107
    %v7109 = vrot.slane %v7040, 2
    %v7110 = vsel %vm6028, %v7107, %v7109
    %v7111 = vrot.slane %v7041, 2
    %v7112 = vsel %vm6028, %v7109, %v7111
    %v7113 = vrot.slane %v7042, 2
    %v7114 = vsel %vm6028, %v7111, %v7113
    %v7115 = vrot.slane %v7043, 2
    %v7116 = vsel %vm6028, %v7113, %v7115
    %v7117 = vrot.slane %v7044, 2
    %v7118 = vsel %vm6028, %v7115, %v7117
    %v7119 = vrot.slane %v7045, 2
    %v7120 = vsel %vm6028, %v7117, %v7119
    %v7121 = vrot.slane %v7046, 2
    %v7122 = vsel %vm6028, %v7119, %v7121
    %v7123 = vrot.slane %v7047, 2
    %v7124 = vsel %vm6028, %v7121, %v7123
    %v7125 = vrot.slane %v7048, 2
    %v7126 = vsel %vm6028, %v7123, %v7125
    %v7127 = vrot.slane %v7049, 2
    %v7128 = vsel %vm6028, %v7125, %v7127
    %v7129 = vrot.slane %v7050, 2
    %v7130 = vsel %vm6028, %v7127, %v7129
    %v7131 = vrot.slane %v7051, 2
    %v7132 = vsel %vm6028, %v7129, %v7131
    %v7133 = vrot.slane %v7052, 2
    %v7134 = vsel %vm6028, %v7131, %v7133
    %v7135 = vrot.slane %v7053, 2
    %v7136 = vsel %vm6028, %v7133, %v7135
    %v7137 = vrot.slane %v7054, 2
    %v7138 = vsel %vm6028, %v7135, %v7137
    %v7139 = vrot.slane %v7055, 2
    %v7140 = vsel %vm6028, %v7137, %v7139
    %v7141 = vrot.slane %v7056, 2
    %v7142 = vsel %vm6028, %v7139, %v7141
    %v7143 = vrot.slane %v7057, 2
    %v7144 = vsel %vm6028, %v7141, %v7143
    %v7145 = vrot.slane %v7058, 2
    %v7146 = vsel %vm6028, %v7143, %v7145
    %v7147 = vrot.slane %v7059, 2
    %v7148 = vsel %vm6028, %v7145, %v7147
    %v7150 = vsel %vm551, %v7062, 0
    %v7153 = vsel %vm551, %v7064, 0
    %v7156 = vsel %vm551, %v7066, 0
    %v7159 = vsel %vm551, %v7068, 0
    %v7162 = vsel %vm551, %v7070, 0
    %v7165 = vsel %vm551, %v7072, 0
    %v7168 = vsel %vm551, %v7074, 0
    %v7171 = vsel %vm551, %v7076, 0
    %v7174 = vsel %vm551, %v7078, 0
    %v7177 = vsel %vm551, %v7080, 0
    %v7180 = vsel %vm551, %v7082, 0
    %v7183 = vsel %vm551, %v7084, 0
    %v7186 = vsel %vm551, %v7086, 0
    %v7189 = vsel %vm551, %v7088, 0
    %v7192 = vsel %vm551, %v7090, 0
    %v7195 = vsel %vm551, %v7092, 0
    %v7198 = vsel %vm551, %v7094, 0
    %v7201 = vsel %vm551, %v7096, 0
    %v7204 = vsel %vm551, %v7098, 0
    %v7207 = vsel %vm551, %v7100, 0
    %v7210 = vsel %vm551, %v7102, 0
    %v7213 = vsel %vm551, %v7104, 0
    %v7216 = vsel %vm551, %v7106, 0
    %v7219 = vsel %vm551, %v7108, 0
    %v7222 = vsel %vm551, %v7110, 0
    %v7225 = vsel %vm551, %v7112, 0
    %v7228 = vsel %vm551, %v7114, 0
    %v7231 = vsel %vm551, %v7116, 0
    %v7234 = vsel %vm551, %v7118, 0
    %v7237 = vsel %vm551, %v7120, 0
    %v7240 = vsel %vm551, %v7122, 0
    %v7243 = vsel %vm551, %v7124, 0
    %v7246 = vsel %vm551, %v7126, 0
    %v7249 = vsel %vm551, %v7128, 0
    %v7252 = vsel %vm551, %v7130, 0
    %v7255 = vsel %vm551, %v7132, 0
    %v7258 = vsel %vm551, %v7134, 0
    %v7261 = vsel %vm551, %v7136, 0
    %v7264 = vsel %vm551, %v7138, 0
    %v7267 = vsel %vm551, %v7140, 0
    %v7270 = vsel %vm551, %v7142, 0
    %v7273 = vsel %vm551, %v7144, 0
    %v7276 = vsel %vm551, %v7146, 0
    %v7279 = vsel %vm551, %v7148, 0
    %v7282 = vsel %vm684, %v6836, 0
    %7284 = vmatpush.bf16.msra.mxu0 0
    %7285 = vmatpush.bf16.msra.mxu0 0
    %7286 = vmatpush.bf16.msra.mxu0 0
    %7287 = vmatpush.bf16.msra.mxu0 0
    %7288 = vmatpush.bf16.msra.mxu0 0
    %7289 = vmatpush.bf16.msra.mxu0 0
    %7290 = vmatpush.bf16.msra.mxu0 0
    %7291 = vmatpush.bf16.msra.mxu0 %v7282
    %7292 = vmatmul.bf16.gmra.mxu0 %v7150
    %v7293 = vpop.f32.mrf.mxu0
    %v7294 = vadd.f32 0.0, %v7293
    %v7295 = vpop.f32.mrf.mxu0
    %v7296 = vadd.f32 0.0, %v7295
    %7297 = vmatmul.bf16.gmra.mxu0 %v7153
    %v7298 = vpop.f32.mrf.mxu0
    %v7299 = vadd.f32 0.0, %v7298
    %v7300 = vpop.f32.mrf.mxu0
    %v7301 = vadd.f32 0.0, %v7300
    %7302 = vmatmul.bf16.gmra.mxu0 %v7156
    %v7303 = vpop.f32.mrf.mxu0
    %v7304 = vadd.f32 0.0, %v7303
    %v7305 = vpop.f32.mrf.mxu0
    %v7306 = vadd.f32 0.0, %v7305
    %7307 = vmatmul.bf16.gmra.mxu0 %v7159
    %v7308 = vpop.f32.mrf.mxu0
    %v7309 = vadd.f32 0.0, %v7308
    %v7310 = vpop.f32.mrf.mxu0
    %v7311 = vadd.f32 0.0, %v7310
    %7312 = vmatmul.bf16.gmra.mxu0 %v7162
    %v7313 = vpop.f32.mrf.mxu0
    %v7314 = vadd.f32 0.0, %v7313
    %v7315 = vpop.f32.mrf.mxu0
    %v7316 = vadd.f32 0.0, %v7315
    %7317 = vmatmul.bf16.gmra.mxu0 %v7165
    %v7318 = vpop.f32.mrf.mxu0
    %v7319 = vadd.f32 0.0, %v7318
    %v7320 = vpop.f32.mrf.mxu0
    %v7321 = vadd.f32 0.0, %v7320
    %7322 = vmatmul.bf16.gmra.mxu0 %v7168
    %v7323 = vpop.f32.mrf.mxu0
    %v7324 = vadd.f32 0.0, %v7323
    %v7325 = vpop.f32.mrf.mxu0
    %v7326 = vadd.f32 0.0, %v7325
    %7327 = vmatmul.bf16.gmra.mxu0 %v7171
    %v7328 = vpop.f32.mrf.mxu0
    %v7329 = vadd.f32 0.0, %v7328
    %v7330 = vpop.f32.mrf.mxu0
    %v7331 = vadd.f32 0.0, %v7330
    %7332 = vmatmul.bf16.gmra.mxu0 %v7174
    %v7333 = vpop.f32.mrf.mxu0
    %v7334 = vadd.f32 0.0, %v7333
    %v7335 = vpop.f32.mrf.mxu0
    %v7336 = vadd.f32 0.0, %v7335
    %7337 = vmatmul.bf16.gmra.mxu0 %v7177
    %v7338 = vpop.f32.mrf.mxu0
    %v7339 = vadd.f32 0.0, %v7338
    %v7340 = vpop.f32.mrf.mxu0
    %v7341 = vadd.f32 0.0, %v7340
    %7342 = vmatmul.bf16.gmra.mxu0 %v7180
    %v7343 = vpop.f32.mrf.mxu0
    %v7344 = vadd.f32 0.0, %v7343
    %v7345 = vpop.f32.mrf.mxu0
    %v7346 = vadd.f32 0.0, %v7345
    %7347 = vmatmul.bf16.gmra.mxu0 %v7183
    %v7348 = vpop.f32.mrf.mxu0
    %v7349 = vadd.f32 0.0, %v7348
    %v7350 = vpop.f32.mrf.mxu0
    %v7351 = vadd.f32 0.0, %v7350
    %7352 = vmatmul.bf16.gmra.mxu0 %v7186
    %v7353 = vpop.f32.mrf.mxu0
    %v7354 = vadd.f32 0.0, %v7353
    %v7355 = vpop.f32.mrf.mxu0
    %v7356 = vadd.f32 0.0, %v7355
    %7357 = vmatmul.bf16.gmra.mxu0 %v7189
    %v7358 = vpop.f32.mrf.mxu0
    %v7359 = vadd.f32 0.0, %v7358
    %v7360 = vpop.f32.mrf.mxu0
    %v7361 = vadd.f32 0.0, %v7360
    %7362 = vmatmul.bf16.gmra.mxu0 %v7192
    %v7363 = vpop.f32.mrf.mxu0
    %v7364 = vadd.f32 0.0, %v7363
    %v7365 = vpop.f32.mrf.mxu0
    %v7366 = vadd.f32 0.0, %v7365
    %7367 = vmatmul.bf16.gmra.mxu0 %v7195
    %v7368 = vpop.f32.mrf.mxu0
    %v7369 = vadd.f32 0.0, %v7368
    %v7370 = vpop.f32.mrf.mxu0
    %v7371 = vadd.f32 0.0, %v7370
    %7372 = vmatmul.bf16.gmra.mxu0 %v7198
    %v7373 = vpop.f32.mrf.mxu0
    %v7374 = vadd.f32 0.0, %v7373
    %v7375 = vpop.f32.mrf.mxu0
    %v7376 = vadd.f32 0.0, %v7375
    %7377 = vmatmul.bf16.gmra.mxu0 %v7201
    %v7378 = vpop.f32.mrf.mxu0
    %v7379 = vadd.f32 0.0, %v7378
    %v7380 = vpop.f32.mrf.mxu0
    %v7381 = vadd.f32 0.0, %v7380
    %7382 = vmatmul.bf16.gmra.mxu0 %v7204
    %v7383 = vpop.f32.mrf.mxu0
    %v7384 = vadd.f32 0.0, %v7383
    %v7385 = vpop.f32.mrf.mxu0
    %v7386 = vadd.f32 0.0, %v7385
    %7387 = vmatmul.bf16.gmra.mxu0 %v7207
    %v7388 = vpop.f32.mrf.mxu0
    %v7389 = vadd.f32 0.0, %v7388
    %v7390 = vpop.f32.mrf.mxu0
    %v7391 = vadd.f32 0.0, %v7390
    %7392 = vmatmul.bf16.gmra.mxu0 %v7210
    %v7393 = vpop.f32.mrf.mxu0
    %v7394 = vadd.f32 0.0, %v7393
    %v7395 = vpop.f32.mrf.mxu0
    %v7396 = vadd.f32 0.0, %v7395
    %7397 = vmatmul.bf16.gmra.mxu0 %v7213
    %v7398 = vpop.f32.mrf.mxu0
    %v7399 = vadd.f32 0.0, %v7398
    %v7400 = vpop.f32.mrf.mxu0
    %v7401 = vadd.f32 0.0, %v7400
    %7402 = vmatmul.bf16.gmra.mxu0 %v7216
    %v7403 = vpop.f32.mrf.mxu0
    %v7404 = vadd.f32 0.0, %v7403
    %v7405 = vpop.f32.mrf.mxu0
    %v7406 = vadd.f32 0.0, %v7405
    %7407 = vmatmul.bf16.gmra.mxu0 %v7219
    %v7408 = vpop.f32.mrf.mxu0
    %v7409 = vadd.f32 0.0, %v7408
    %v7410 = vpop.f32.mrf.mxu0
    %v7411 = vadd.f32 0.0, %v7410
    %7412 = vmatmul.bf16.gmra.mxu0 %v7222
    %v7413 = vpop.f32.mrf.mxu0
    %v7414 = vadd.f32 0.0, %v7413
    %v7415 = vpop.f32.mrf.mxu0
    %v7416 = vadd.f32 0.0, %v7415
    %7417 = vmatmul.bf16.gmra.mxu0 %v7225
    %v7418 = vpop.f32.mrf.mxu0
    %v7419 = vadd.f32 0.0, %v7418
    %v7420 = vpop.f32.mrf.mxu0
    %v7421 = vadd.f32 0.0, %v7420
    %7422 = vmatmul.bf16.gmra.mxu0 %v7228
    %v7423 = vpop.f32.mrf.mxu0
    %v7424 = vadd.f32 0.0, %v7423
    %v7425 = vpop.f32.mrf.mxu0
    %v7426 = vadd.f32 0.0, %v7425
    %7427 = vmatmul.bf16.gmra.mxu0 %v7231
    %v7428 = vpop.f32.mrf.mxu0
    %v7429 = vadd.f32 0.0, %v7428
    %v7430 = vpop.f32.mrf.mxu0
    %v7431 = vadd.f32 0.0, %v7430
    %7432 = vmatmul.bf16.gmra.mxu0 %v7234
    %v7433 = vpop.f32.mrf.mxu0
    %v7434 = vadd.f32 0.0, %v7433
    %v7435 = vpop.f32.mrf.mxu0
    %v7436 = vadd.f32 0.0, %v7435
    %7437 = vmatmul.bf16.gmra.mxu0 %v7237
    %v7438 = vpop.f32.mrf.mxu0
    %v7439 = vadd.f32 0.0, %v7438
    %v7440 = vpop.f32.mrf.mxu0
    %v7441 = vadd.f32 0.0, %v7440
    %7442 = vmatmul.bf16.gmra.mxu0 %v7240
    %v7443 = vpop.f32.mrf.mxu0
    %v7444 = vadd.f32 0.0, %v7443
    %v7445 = vpop.f32.mrf.mxu0
    %v7446 = vadd.f32 0.0, %v7445
    %7447 = vmatmul.bf16.gmra.mxu0 %v7243
    %v7448 = vpop.f32.mrf.mxu0
    %v7449 = vadd.f32 0.0, %v7448
    %v7450 = vpop.f32.mrf.mxu0
    %v7451 = vadd.f32 0.0, %v7450
    %7452 = vmatmul.bf16.gmra.mxu0 %v7246
    %v7453 = vpop.f32.mrf.mxu0
    %v7454 = vadd.f32 0.0, %v7453
    %v7455 = vpop.f32.mrf.mxu0
    %v7456 = vadd.f32 0.0, %v7455
    %7457 = vmatmul.bf16.gmra.mxu0 %v7249
    %v7458 = vpop.f32.mrf.mxu0
    %v7459 = vadd.f32 0.0, %v7458
    %v7460 = vpop.f32.mrf.mxu0
    %v7461 = vadd.f32 0.0, %v7460
    %7462 = vmatmul.bf16.gmra.mxu0 %v7252
    %v7463 = vpop.f32.mrf.mxu0
    %v7464 = vadd.f32 0.0, %v7463
    %v7465 = vpop.f32.mrf.mxu0
    %v7466 = vadd.f32 0.0, %v7465
    %7467 = vmatmul.bf16.gmra.mxu0 %v7255
    %v7468 = vpop.f32.mrf.mxu0
    %v7469 = vadd.f32 0.0, %v7468
    %v7470 = vpop.f32.mrf.mxu0
    %v7471 = vadd.f32 0.0, %v7470
    %7472 = vmatmul.bf16.gmra.mxu0 %v7258
    %v7473 = vpop.f32.mrf.mxu0
    %v7474 = vadd.f32 0.0, %v7473
    %v7475 = vpop.f32.mrf.mxu0
    %v7476 = vadd.f32 0.0, %v7475
    %7477 = vmatmul.bf16.gmra.mxu0 %v7261
    %v7478 = vpop.f32.mrf.mxu0
    %v7479 = vadd.f32 0.0, %v7478
    %v7480 = vpop.f32.mrf.mxu0
    %v7481 = vadd.f32 0.0, %v7480
    %7482 = vmatmul.bf16.gmra.mxu0 %v7264
    %v7483 = vpop.f32.mrf.mxu0
    %v7484 = vadd.f32 0.0, %v7483
    %v7485 = vpop.f32.mrf.mxu0
    %v7486 = vadd.f32 0.0, %v7485
    %7487 = vmatmul.bf16.gmra.mxu0 %v7267
    %v7488 = vpop.f32.mrf.mxu0
    %v7489 = vadd.f32 0.0, %v7488
    %v7490 = vpop.f32.mrf.mxu0
    %v7491 = vadd.f32 0.0, %v7490
    %7492 = vmatmul.bf16.gmra.mxu0 %v7270
    %v7493 = vpop.f32.mrf.mxu0
    %v7494 = vadd.f32 0.0, %v7493
    %v7495 = vpop.f32.mrf.mxu0
    %v7496 = vadd.f32 0.0, %v7495
    %7497 = vmatmul.bf16.gmra.mxu0 %v7273
    %v7498 = vpop.f32.mrf.mxu0
    %v7499 = vadd.f32 0.0, %v7498
    %v7500 = vpop.f32.mrf.mxu0
    %v7501 = vadd.f32 0.0, %v7500
    %7502 = vmatmul.bf16.gmra.mxu0 %v7276
    %v7503 = vpop.f32.mrf.mxu0
    %v7504 = vadd.f32 0.0, %v7503
    %v7505 = vpop.f32.mrf.mxu0
    %v7506 = vadd.f32 0.0, %v7505
    %7507 = vmatmul.bf16.gmra.mxu0 %v7279
    %v7508 = vpop.f32.mrf.mxu0
    %v7509 = vadd.f32 0.0, %v7508
    %v7510 = vpop.f32.mrf.mxu0
    %v7511 = vadd.f32 0.0, %v7510
    %7512 = vdwg.mxu0
    %v7513 = vld [vmem:[#allocation3] sm:$0xff]
    %v7514 = vld [vmem:[#allocation3 + $0x8] sm:$0xff]
    %v7515 = vld [vmem:[#allocation3 + $0x10] sm:$0xff]
    %v7516 = vld [vmem:[#allocation3 + $0x18] sm:$0xff]
    %v7517 = vld [vmem:[#allocation3 + $0x20] sm:$0xff]
    %v7518 = vld [vmem:[#allocation3 + $0x28] sm:$0xff]
    %v7519 = vld [vmem:[#allocation3 + $0x30] sm:$0xff]
    %v7520 = vld [vmem:[#allocation3 + $0x38] sm:$0xff]
    %v7521 = vld [vmem:[#allocation3 + $0x40] sm:$0xff]
    %v7522 = vld [vmem:[#allocation3 + $0x48] sm:$0xff]
    %v7523 = vld [vmem:[#allocation3 + $0x50] sm:$0xff]
    %v7524 = vld [vmem:[#allocation3 + $0x58] sm:$0xff]
    %v7525 = vld [vmem:[#allocation3 + $0x60] sm:$0xff]
    %v7526 = vld [vmem:[#allocation3 + $0x68] sm:$0xff]
    %v7527 = vld [vmem:[#allocation3 + $0x70] sm:$0xff]
    %v7528 = vld [vmem:[#allocation3 + $0x78] sm:$0xff]
    %v7529 = vld [vmem:[#allocation3 + $0x80] sm:$0xff]
    %v7530 = vld [vmem:[#allocation3 + $0x88] sm:$0xff]
    %v7531 = vld [vmem:[#allocation3 + $0x90] sm:$0xff]
    %v7532 = vld [vmem:[#allocation3 + $0x98] sm:$0xff]
    %v7533 = vld [vmem:[#allocation3 + $0xa0] sm:$0xff]
    %v7534 = vld [vmem:[#allocation3 + $0xa8] sm:$0xff]
    %v7535 = vld [vmem:[#allocation3 + $0xb0] sm:$0xff]
    %v7536 = vld [vmem:[#allocation3 + $0xb8] sm:$0xff]
    %v7537 = vld [vmem:[#allocation3 + $0xc0] sm:$0xff]
    %v7538 = vld [vmem:[#allocation3 + $0xc8] sm:$0xff]
    %v7539 = vld [vmem:[#allocation3 + $0xd0] sm:$0xff]
    %v7540 = vld [vmem:[#allocation3 + $0xd8] sm:$0xff]
    %v7541 = vld [vmem:[#allocation3 + $0xe0] sm:$0xff]
    %v7542 = vld [vmem:[#allocation3 + $0xe8] sm:$0xff]
    %v7543 = vld [vmem:[#allocation3 + $0xf0] sm:$0xff]
    %v7544 = vld [vmem:[#allocation3 + $0xf8] sm:$0xff]
    %v7545 = vld [vmem:[#allocation3 + $0x100] sm:$0xff]
    %v7546 = vld [vmem:[#allocation3 + $0x108] sm:$0xff]
    %v7547 = vld [vmem:[#allocation3 + $0x110] sm:$0xff]
    %v7548 = vld [vmem:[#allocation3 + $0x118] sm:$0xff]
    %v7549 = vld [vmem:[#allocation3 + $0x120] sm:$0xff]
    %v7550 = vld [vmem:[#allocation3 + $0x128] sm:$0xff]
    %v7551 = vld [vmem:[#allocation3 + $0x130] sm:$0xff]
    %v7552 = vld [vmem:[#allocation3 + $0x138] sm:$0xff]
    %v7553 = vld [vmem:[#allocation3 + $0x140] sm:$0xff]
    %v7554 = vld [vmem:[#allocation3 + $0x148] sm:$0xff]
    %v7555 = vld [vmem:[#allocation3 + $0x150] sm:$0xff]
    %v7556 = vld [vmem:[#allocation3 + $0x158] sm:$0xff]
    %v7557 = vld [vmem:[#allocation3 + $0x160] sm:$0xff]
    %v7558 = vld [vmem:[#allocation3 + $0x168] sm:$0xff]
    %v7559 = vld [vmem:[#allocation3 + $0x170] sm:$0xff]
    %v7560 = vld [vmem:[#allocation3 + $0x178] sm:$0xff]
    %v7561 = vld [vmem:[#allocation3 + $0x180] sm:$0xff]
    %v7562 = vld [vmem:[#allocation3 + $0x188] sm:$0xff]
    %v7563 = vld [vmem:[#allocation3 + $0x190] sm:$0xff]
    %v7564 = vld [vmem:[#allocation3 + $0x198] sm:$0xff]
    %v7565 = vld [vmem:[#allocation3 + $0x1a0] sm:$0xff]
    %v7566 = vld [vmem:[#allocation3 + $0x1a8] sm:$0xff]
    %v7567 = vld [vmem:[#allocation3 + $0x1b0] sm:$0xff]
    %v7568 = vld [vmem:[#allocation3 + $0x1b8] sm:$0xff]
    %v7569 = vld [vmem:[#allocation3 + $0x1c0] sm:$0xff]
    %v7570 = vld [vmem:[#allocation3 + $0x1c8] sm:$0xff]
    %v7571 = vld [vmem:[#allocation3 + $0x1d0] sm:$0xff]
    %v7572 = vld [vmem:[#allocation3 + $0x1d8] sm:$0xff]
    %v7573 = vld [vmem:[#allocation3 + $0x1e0] sm:$0xff]
    %v7574 = vld [vmem:[#allocation3 + $0x1e8] sm:$0xff]
    %v7575 = vld [vmem:[#allocation3 + $0x1f0] sm:$0xff]
    %v7576 = vld [vmem:[#allocation3 + $0x1f8] sm:$0xff]
    %v7577 = vld [vmem:[#allocation3 + $0x200] sm:$0xff]
    %v7578 = vld [vmem:[#allocation3 + $0x208] sm:$0xff]
    %v7579 = vld [vmem:[#allocation3 + $0x210] sm:$0xff]
    %v7580 = vld [vmem:[#allocation3 + $0x218] sm:$0xff]
    %v7581 = vld [vmem:[#allocation3 + $0x220] sm:$0xff]
    %v7582 = vld [vmem:[#allocation3 + $0x228] sm:$0xff]
    %v7583 = vld [vmem:[#allocation3 + $0x230] sm:$0xff]
    %v7584 = vld [vmem:[#allocation3 + $0x238] sm:$0xff]
    %v7585 = vld [vmem:[#allocation3 + $0x240] sm:$0xff]
    %v7586 = vld [vmem:[#allocation3 + $0x248] sm:$0xff]
    %v7587 = vld [vmem:[#allocation3 + $0x250] sm:$0xff]
    %v7588 = vld [vmem:[#allocation3 + $0x258] sm:$0xff]
    %v7589 = vld [vmem:[#allocation3 + $0x260] sm:$0xff]
    %v7590 = vld [vmem:[#allocation3 + $0x268] sm:$0xff]
    %v7591 = vld [vmem:[#allocation3 + $0x270] sm:$0xff]
    %v7592 = vld [vmem:[#allocation3 + $0x278] sm:$0xff]
    %v7593 = vld [vmem:[#allocation3 + $0x280] sm:$0xff]
    %v7594 = vld [vmem:[#allocation3 + $0x288] sm:$0xff]
    %v7595 = vld [vmem:[#allocation3 + $0x290] sm:$0xff]
    %v7596 = vld [vmem:[#allocation3 + $0x298] sm:$0xff]
    %v7597 = vld [vmem:[#allocation3 + $0x2a0] sm:$0xff]
    %v7598 = vld [vmem:[#allocation3 + $0x2a8] sm:$0xff]
    %v7599 = vld [vmem:[#allocation3 + $0x2b0] sm:$0xff]
    %v7600 = vld [vmem:[#allocation3 + $0x2b8] sm:$0xff]
    %v7601 = vadd.f32 %v7513, %v7294
    %v7602 = vadd.f32 %v7514, %v7296
    %v7603 = vadd.f32 %v7515, %v7299
    %v7604 = vadd.f32 %v7516, %v7301
    %v7605 = vadd.f32 %v7517, %v7304
    %v7606 = vadd.f32 %v7518, %v7306
    %v7607 = vadd.f32 %v7519, %v7309
    %v7608 = vadd.f32 %v7520, %v7311
    %v7609 = vadd.f32 %v7521, %v7314
    %v7610 = vadd.f32 %v7522, %v7316
    %v7611 = vadd.f32 %v7523, %v7319
    %v7612 = vadd.f32 %v7524, %v7321
    %v7613 = vadd.f32 %v7525, %v7324
    %v7614 = vadd.f32 %v7526, %v7326
    %v7615 = vadd.f32 %v7527, %v7329
    %v7616 = vadd.f32 %v7528, %v7331
    %v7617 = vadd.f32 %v7529, %v7334
    %v7618 = vadd.f32 %v7530, %v7336
    %v7619 = vadd.f32 %v7531, %v7339
    %v7620 = vadd.f32 %v7532, %v7341
    %v7621 = vadd.f32 %v7533, %v7344
    %v7622 = vadd.f32 %v7534, %v7346
    %v7623 = vadd.f32 %v7535, %v7349
    %v7624 = vadd.f32 %v7536, %v7351
    %v7625 = vadd.f32 %v7537, %v7354
    %v7626 = vadd.f32 %v7538, %v7356
    %v7627 = vadd.f32 %v7539, %v7359
    %v7628 = vadd.f32 %v7540, %v7361
    %v7629 = vadd.f32 %v7541, %v7364
    %v7630 = vadd.f32 %v7542, %v7366
    %v7631 = vadd.f32 %v7543, %v7369
    %v7632 = vadd.f32 %v7544, %v7371
    %v7633 = vadd.f32 %v7545, %v7374
    %v7634 = vadd.f32 %v7546, %v7376
    %v7635 = vadd.f32 %v7547, %v7379
    %v7636 = vadd.f32 %v7548, %v7381
    %v7637 = vadd.f32 %v7549, %v7384
    %v7638 = vadd.f32 %v7550, %v7386
    %v7639 = vadd.f32 %v7551, %v7389
    %v7640 = vadd.f32 %v7552, %v7391
    %v7641 = vadd.f32 %v7553, %v7394
    %v7642 = vadd.f32 %v7554, %v7396
    %v7643 = vadd.f32 %v7555, %v7399
    %v7644 = vadd.f32 %v7556, %v7401
    %v7645 = vadd.f32 %v7557, %v7404
    %v7646 = vadd.f32 %v7558, %v7406
    %v7647 = vadd.f32 %v7559, %v7409
    %v7648 = vadd.f32 %v7560, %v7411
    %v7649 = vadd.f32 %v7561, %v7414
    %v7650 = vadd.f32 %v7562, %v7416
    %v7651 = vadd.f32 %v7563, %v7419
    %v7652 = vadd.f32 %v7564, %v7421
    %v7653 = vadd.f32 %v7565, %v7424
    %v7654 = vadd.f32 %v7566, %v7426
    %v7655 = vadd.f32 %v7567, %v7429
    %v7656 = vadd.f32 %v7568, %v7431
    %v7657 = vadd.f32 %v7569, %v7434
    %v7658 = vadd.f32 %v7570, %v7436
    %v7659 = vadd.f32 %v7571, %v7439
    %v7660 = vadd.f32 %v7572, %v7441
    %v7661 = vadd.f32 %v7573, %v7444
    %v7662 = vadd.f32 %v7574, %v7446
    %v7663 = vadd.f32 %v7575, %v7449
    %v7664 = vadd.f32 %v7576, %v7451
    %v7665 = vadd.f32 %v7577, %v7454
    %v7666 = vadd.f32 %v7578, %v7456
    %v7667 = vadd.f32 %v7579, %v7459
    %v7668 = vadd.f32 %v7580, %v7461
    %v7669 = vadd.f32 %v7581, %v7464
    %v7670 = vadd.f32 %v7582, %v7466
    %v7671 = vadd.f32 %v7583, %v7469
    %v7672 = vadd.f32 %v7584, %v7471
    %v7673 = vadd.f32 %v7585, %v7474
    %v7674 = vadd.f32 %v7586, %v7476
    %v7675 = vadd.f32 %v7587, %v7479
    %v7676 = vadd.f32 %v7588, %v7481
    %v7677 = vadd.f32 %v7589, %v7484
    %v7678 = vadd.f32 %v7590, %v7486
    %v7679 = vadd.f32 %v7591, %v7489
    %v7680 = vadd.f32 %v7592, %v7491
    %v7681 = vadd.f32 %v7593, %v7494
    %v7682 = vadd.f32 %v7594, %v7496
    %v7683 = vadd.f32 %v7595, %v7499
    %v7684 = vadd.f32 %v7596, %v7501
    %v7685 = vadd.f32 %v7597, %v7504
    %v7686 = vadd.f32 %v7598, %v7506
    %v7687 = vadd.f32 %v7599, %v7509
    %v7688 = vadd.f32 %v7600, %v7511
    %7689 = vst [vmem:[#allocation3] sm:$0xff] %v7601
    %7690 = vst [vmem:[#allocation3 + $0x8] sm:$0xff] %v7602
    %7691 = vst [vmem:[#allocation3 + $0x10] sm:$0xff] %v7603
    %7692 = vst [vmem:[#allocation3 + $0x18] sm:$0xff] %v7604
    %7693 = vst [vmem:[#allocation3 + $0x20] sm:$0xff] %v7605
    %7694 = vst [vmem:[#allocation3 + $0x28] sm:$0xff] %v7606
    %7695 = vst [vmem:[#allocation3 + $0x30] sm:$0xff] %v7607
    %7696 = vst [vmem:[#allocation3 + $0x38] sm:$0xff] %v7608
    %7697 = vst [vmem:[#allocation3 + $0x40] sm:$0xff] %v7609
    %7698 = vst [vmem:[#allocation3 + $0x48] sm:$0xff] %v7610
    %7699 = vst [vmem:[#allocation3 + $0x50] sm:$0xff] %v7611
    %7700 = vst [vmem:[#allocation3 + $0x58] sm:$0xff] %v7612
    %7701 = vst [vmem:[#allocation3 + $0x60] sm:$0xff] %v7613
    %7702 = vst [vmem:[#allocation3 + $0x68] sm:$0xff] %v7614
    %7703 = vst [vmem:[#allocation3 + $0x70] sm:$0xff] %v7615
    %7704 = vst [vmem:[#allocation3 + $0x78] sm:$0xff] %v7616
    %7705 = vst [vmem:[#allocation3 + $0x80] sm:$0xff] %v7617
    %7706 = vst [vmem:[#allocation3 + $0x88] sm:$0xff] %v7618
    %7707 = vst [vmem:[#allocation3 + $0x90] sm:$0xff] %v7619
    %7708 = vst [vmem:[#allocation3 + $0x98] sm:$0xff] %v7620
    %7709 = vst [vmem:[#allocation3 + $0xa0] sm:$0xff] %v7621
    %7710 = vst [vmem:[#allocation3 + $0xa8] sm:$0xff] %v7622
    %7711 = vst [vmem:[#allocation3 + $0xb0] sm:$0xff] %v7623
    %7712 = vst [vmem:[#allocation3 + $0xb8] sm:$0xff] %v7624
    %7713 = vst [vmem:[#allocation3 + $0xc0] sm:$0xff] %v7625
    %7714 = vst [vmem:[#allocation3 + $0xc8] sm:$0xff] %v7626
    %7715 = vst [vmem:[#allocation3 + $0xd0] sm:$0xff] %v7627
    %7716 = vst [vmem:[#allocation3 + $0xd8] sm:$0xff] %v7628
    %7717 = vst [vmem:[#allocation3 + $0xe0] sm:$0xff] %v7629
    %7718 = vst [vmem:[#allocation3 + $0xe8] sm:$0xff] %v7630
    %7719 = vst [vmem:[#allocation3 + $0xf0] sm:$0xff] %v7631
    %7720 = vst [vmem:[#allocation3 + $0xf8] sm:$0xff] %v7632
    %7721 = vst [vmem:[#allocation3 + $0x100] sm:$0xff] %v7633
    %7722 = vst [vmem:[#allocation3 + $0x108] sm:$0xff] %v7634
    %7723 = vst [vmem:[#allocation3 + $0x110] sm:$0xff] %v7635
    %7724 = vst [vmem:[#allocation3 + $0x118] sm:$0xff] %v7636
    %7725 = vst [vmem:[#allocation3 + $0x120] sm:$0xff] %v7637
    %7726 = vst [vmem:[#allocation3 + $0x128] sm:$0xff] %v7638
    %7727 = vst [vmem:[#allocation3 + $0x130] sm:$0xff] %v7639
    %7728 = vst [vmem:[#allocation3 + $0x138] sm:$0xff] %v7640
    %7729 = vst [vmem:[#allocation3 + $0x140] sm:$0xff] %v7641
    %7730 = vst [vmem:[#allocation3 + $0x148] sm:$0xff] %v7642
    %7731 = vst [vmem:[#allocation3 + $0x150] sm:$0xff] %v7643
    %7732 = vst [vmem:[#allocation3 + $0x158] sm:$0xff] %v7644
    %7733 = vst [vmem:[#allocation3 + $0x160] sm:$0xff] %v7645
    %7734 = vst [vmem:[#allocation3 + $0x168] sm:$0xff] %v7646
    %7735 = vst [vmem:[#allocation3 + $0x170] sm:$0xff] %v7647
    %7736 = vst [vmem:[#allocation3 + $0x178] sm:$0xff] %v7648
    %7737 = vst [vmem:[#allocation3 + $0x180] sm:$0xff] %v7649
    %7738 = vst [vmem:[#allocation3 + $0x188] sm:$0xff] %v7650
    %7739 = vst [vmem:[#allocation3 + $0x190] sm:$0xff] %v7651
    %7740 = vst [vmem:[#allocation3 + $0x198] sm:$0xff] %v7652
    %7741 = vst [vmem:[#allocation3 + $0x1a0] sm:$0xff] %v7653
    %7742 = vst [vmem:[#allocation3 + $0x1a8] sm:$0xff] %v7654
    %7743 = vst [vmem:[#allocation3 + $0x1b0] sm:$0xff] %v7655
    %7744 = vst [vmem:[#allocation3 + $0x1b8] sm:$0xff] %v7656
    %7745 = vst [vmem:[#allocation3 + $0x1c0] sm:$0xff] %v7657
    %7746 = vst [vmem:[#allocation3 + $0x1c8] sm:$0xff] %v7658
    %7747 = vst [vmem:[#allocation3 + $0x1d0] sm:$0xff] %v7659
    %7748 = vst [vmem:[#allocation3 + $0x1d8] sm:$0xff] %v7660
    %7749 = vst [vmem:[#allocation3 + $0x1e0] sm:$0xff] %v7661
    %7750 = vst [vmem:[#allocation3 + $0x1e8] sm:$0xff] %v7662
    %7751 = vst [vmem:[#allocation3 + $0x1f0] sm:$0xff] %v7663
    %7752 = vst [vmem:[#allocation3 + $0x1f8] sm:$0xff] %v7664
    %7753 = vst [vmem:[#allocation3 + $0x200] sm:$0xff] %v7665
    %7754 = vst [vmem:[#allocation3 + $0x208] sm:$0xff] %v7666
    %7755 = vst [vmem:[#allocation3 + $0x210] sm:$0xff] %v7667
    %7756 = vst [vmem:[#allocation3 + $0x218] sm:$0xff] %v7668
    %7757 = vst [vmem:[#allocation3 + $0x220] sm:$0xff] %v7669
    %7758 = vst [vmem:[#allocation3 + $0x228] sm:$0xff] %v7670
    %7759 = vst [vmem:[#allocation3 + $0x230] sm:$0xff] %v7671
    %7760 = vst [vmem:[#allocation3 + $0x238] sm:$0xff] %v7672
    %7761 = vst [vmem:[#allocation3 + $0x240] sm:$0xff] %v7673
    %7762 = vst [vmem:[#allocation3 + $0x248] sm:$0xff] %v7674
    %7763 = vst [vmem:[#allocation3 + $0x250] sm:$0xff] %v7675
    %7764 = vst [vmem:[#allocation3 + $0x258] sm:$0xff] %v7676
    %7765 = vst [vmem:[#allocation3 + $0x260] sm:$0xff] %v7677
    %7766 = vst [vmem:[#allocation3 + $0x268] sm:$0xff] %v7678
    %7767 = vst [vmem:[#allocation3 + $0x270] sm:$0xff] %v7679
    %7768 = vst [vmem:[#allocation3 + $0x278] sm:$0xff] %v7680
    %7769 = vst [vmem:[#allocation3 + $0x280] sm:$0xff] %v7681
    %7770 = vst [vmem:[#allocation3 + $0x288] sm:$0xff] %v7682
    %7771 = vst [vmem:[#allocation3 + $0x290] sm:$0xff] %v7683
    %7772 = vst [vmem:[#allocation3 + $0x298] sm:$0xff] %v7684
    %7773 = vst [vmem:[#allocation3 + $0x2a0] sm:$0xff] %v7685
    %7774 = vst [vmem:[#allocation3 + $0x2a8] sm:$0xff] %v7686
    %7775 = vst [vmem:[#allocation3 + $0x2b0] sm:$0xff] %v7687
    %7776 = vst [vmem:[#allocation3 + $0x2b8] sm:$0xff] %v7688
    %v7777 = vld [vmem:[#allocation2 + $0x10] sm:$0xc]
    %v7778 = vld [vmem:[#allocation2 + $0x14] sm:$0xf]
    %v7779 = vld [vmem:[#allocation2 + $0x18] sm:$0xf]
    %v7780 = vld [vmem:[#allocation2 + $0x1c] sm:$0xf]
    %v7781 = vld [vmem:[#allocation2 + $0x20] sm:$0xf]
    %v7782 = vld [vmem:[#allocation2 + $0x24] sm:$0xf]
    %v7783 = vld [vmem:[#allocation2 + $0x28] sm:$0xf]
    %v7784 = vld [vmem:[#allocation2 + $0x2c] sm:$0xf]
    %v7785 = vld [vmem:[#allocation2 + $0x30] sm:$0xf]
    %v7786 = vld [vmem:[#allocation2 + $0x34] sm:$0xf]
    %v7787 = vld [vmem:[#allocation2 + $0x38] sm:$0xf]
    %v7788 = vld [vmem:[#allocation2 + $0x3c] sm:$0xf]
    %v7789 = vld [vmem:[#allocation2 + $0x40] sm:$0xf]
    %v7790 = vld [vmem:[#allocation2 + $0x44] sm:$0xf]
    %v7791 = vld [vmem:[#allocation2 + $0x48] sm:$0xf]
    %v7792 = vld [vmem:[#allocation2 + $0x4c] sm:$0xf]
    %v7793 = vld [vmem:[#allocation2 + $0x50] sm:$0xf]
    %v7794 = vld [vmem:[#allocation2 + $0x54] sm:$0xf]
    %v7795 = vld [vmem:[#allocation2 + $0x58] sm:$0xf]
    %v7796 = vld [vmem:[#allocation2 + $0x5c] sm:$0xf]
    %v7797 = vld [vmem:[#allocation2 + $0x60] sm:$0xf]
    %v7798 = vld [vmem:[#allocation2 + $0x64] sm:$0xf]
    %v7799 = vld [vmem:[#allocation2 + $0x68] sm:$0xf]
    %v7800 = vld [vmem:[#allocation2 + $0x6c] sm:$0xf]
    %v7801 = vld [vmem:[#allocation2 + $0x70] sm:$0xf]
    %v7802 = vld [vmem:[#allocation2 + $0x74] sm:$0xf]
    %v7803 = vld [vmem:[#allocation2 + $0x78] sm:$0xf]
    %v7804 = vld [vmem:[#allocation2 + $0x7c] sm:$0xf]
    %v7805 = vld [vmem:[#allocation2 + $0x80] sm:$0xf]
    %v7806 = vld [vmem:[#allocation2 + $0x84] sm:$0xf]
    %v7807 = vld [vmem:[#allocation2 + $0x88] sm:$0xf]
    %v7808 = vld [vmem:[#allocation2 + $0x8c] sm:$0xf]
    %v7809 = vld [vmem:[#allocation2 + $0x90] sm:$0xf]
    %v7810 = vld [vmem:[#allocation2 + $0x94] sm:$0xf]
    %v7811 = vld [vmem:[#allocation2 + $0x98] sm:$0xf]
    %v7812 = vld [vmem:[#allocation2 + $0x9c] sm:$0xf]
    %v7813 = vld [vmem:[#allocation2 + $0xa0] sm:$0xf]
    %v7814 = vld [vmem:[#allocation2 + $0xa4] sm:$0xf]
    %v7815 = vld [vmem:[#allocation2 + $0xa8] sm:$0xf]
    %v7816 = vld [vmem:[#allocation2 + $0xac] sm:$0xf]
    %v7817 = vld [vmem:[#allocation2 + $0xb0] sm:$0xf]
    %v7818 = vld [vmem:[#allocation2 + $0xb4] sm:$0xf]
    %v7819 = vld [vmem:[#allocation2 + $0xb8] sm:$0xf]
    %v7820 = vld [vmem:[#allocation2 + $0xbc] sm:$0xf]
    %v7821 = vld [vmem:[#allocation2 + $0xc0] sm:$0xf]
    %v7822 = vld [vmem:[#allocation2 + $0xc4] sm:$0xf]
    %v7823 = vld [vmem:[#allocation2 + $0xc8] sm:$0xf]
    %v7824 = vld [vmem:[#allocation2 + $0xcc] sm:$0xf]
    %v7825 = vld [vmem:[#allocation2 + $0xd0] sm:$0xf]
    %v7826 = vld [vmem:[#allocation2 + $0xd4] sm:$0xf]
    %v7827 = vld [vmem:[#allocation2 + $0xd8] sm:$0xf]
    %v7828 = vld [vmem:[#allocation2 + $0xdc] sm:$0xf]
    %v7829 = vld [vmem:[#allocation2 + $0xe0] sm:$0xf]
    %v7830 = vld [vmem:[#allocation2 + $0xe4] sm:$0xf]
    %v7831 = vld [vmem:[#allocation2 + $0xe8] sm:$0xf]
    %v7832 = vld [vmem:[#allocation2 + $0xec] sm:$0xf]
    %v7833 = vld [vmem:[#allocation2 + $0xf0] sm:$0xf]
    %v7834 = vld [vmem:[#allocation2 + $0xf4] sm:$0xf]
    %v7835 = vld [vmem:[#allocation2 + $0xf8] sm:$0xf]
    %v7836 = vld [vmem:[#allocation2 + $0xfc] sm:$0xf]
    %v7837 = vld [vmem:[#allocation2 + $0x100] sm:$0xf]
    %v7838 = vld [vmem:[#allocation2 + $0x104] sm:$0xf]
    %v7839 = vld [vmem:[#allocation2 + $0x108] sm:$0xf]
    %v7840 = vld [vmem:[#allocation2 + $0x10c] sm:$0xf]
    %v7841 = vld [vmem:[#allocation2 + $0x110] sm:$0xf]
    %v7842 = vld [vmem:[#allocation2 + $0x114] sm:$0xf]
    %v7843 = vld [vmem:[#allocation2 + $0x118] sm:$0xf]
    %v7844 = vld [vmem:[#allocation2 + $0x11c] sm:$0xf]
    %v7845 = vld [vmem:[#allocation2 + $0x120] sm:$0xf]
    %v7846 = vld [vmem:[#allocation2 + $0x124] sm:$0xf]
    %v7847 = vld [vmem:[#allocation2 + $0x128] sm:$0xf]
    %v7848 = vld [vmem:[#allocation2 + $0x12c] sm:$0xf]
    %v7849 = vld [vmem:[#allocation2 + $0x130] sm:$0xf]
    %v7850 = vld [vmem:[#allocation2 + $0x134] sm:$0xf]
    %v7851 = vld [vmem:[#allocation2 + $0x138] sm:$0xf]
    %v7852 = vld [vmem:[#allocation2 + $0x13c] sm:$0xf]
    %v7853 = vld [vmem:[#allocation2 + $0x140] sm:$0xf]
    %v7854 = vld [vmem:[#allocation2 + $0x144] sm:$0xf]
    %v7855 = vld [vmem:[#allocation2 + $0x148] sm:$0xf]
    %v7856 = vld [vmem:[#allocation2 + $0x14c] sm:$0xf]
    %v7857 = vld [vmem:[#allocation2 + $0x150] sm:$0xf]
    %v7858 = vld [vmem:[#allocation2 + $0x154] sm:$0xf]
    %v7859 = vld [vmem:[#allocation2 + $0x158] sm:$0xf]
    %v7860 = vld [vmem:[#allocation2 + $0x15c] sm:$0xf]
    %v7861 = vld [vmem:[#allocation2 + $0x160] sm:$0xf]
    %v7862 = vld [vmem:[#allocation2 + $0x164] sm:$0xf]
    %v7863 = vld [vmem:[#allocation2 + $0x168] sm:$0xf]
    %v7864 = vld [vmem:[#allocation2 + $0x16c] sm:$0xf]
    %v7865 = vld [vmem:[#allocation2 + $0x170] sm:$0x7]
    %s7866 = scalar_lea.vmem %s2, 14
    %v7867 = vld [vmem:[%s7866] sm:$0x3]
    %v7957 = vunpack.c.l.b16 %v7777
    %v7958 = vunpack.c.l.b16 %v7778
    %v7959 = vunpack.c.l.b16 %v7779
    %v7960 = vunpack.c.l.b16 %v7780
    %v7961 = vunpack.c.l.b16 %v7781
    %v7962 = vunpack.c.l.b16 %v7782
    %v7963 = vunpack.c.l.b16 %v7783
    %v7964 = vunpack.c.l.b16 %v7784
    %v7965 = vunpack.c.l.b16 %v7785
    %v7966 = vunpack.c.l.b16 %v7786
    %v7967 = vunpack.c.l.b16 %v7787
    %v7968 = vunpack.c.l.b16 %v7788
    %v7969 = vunpack.c.l.b16 %v7789
    %v7970 = vunpack.c.l.b16 %v7790
    %v7971 = vunpack.c.l.b16 %v7791
    %v7972 = vunpack.c.l.b16 %v7792
    %v7973 = vunpack.c.l.b16 %v7793
    %v7974 = vunpack.c.l.b16 %v7794
    %v7975 = vunpack.c.l.b16 %v7795
    %v7976 = vunpack.c.l.b16 %v7796
    %v7977 = vunpack.c.l.b16 %v7797
    %v7978 = vunpack.c.l.b16 %v7798
    %v7979 = vunpack.c.l.b16 %v7799
    %v7980 = vunpack.c.l.b16 %v7800
    %v7981 = vunpack.c.l.b16 %v7801
    %v7982 = vunpack.c.l.b16 %v7802
    %v7983 = vunpack.c.l.b16 %v7803
    %v7984 = vunpack.c.l.b16 %v7804
    %v7985 = vunpack.c.l.b16 %v7805
    %v7986 = vunpack.c.l.b16 %v7806
    %v7987 = vunpack.c.l.b16 %v7807
    %v7988 = vunpack.c.l.b16 %v7808
    %v7989 = vunpack.c.l.b16 %v7809
    %v7990 = vunpack.c.l.b16 %v7810
    %v7991 = vunpack.c.l.b16 %v7811
    %v7992 = vunpack.c.l.b16 %v7812
    %v7993 = vunpack.c.l.b16 %v7813
    %v7994 = vunpack.c.l.b16 %v7814
    %v7995 = vunpack.c.l.b16 %v7815
    %v7996 = vunpack.c.l.b16 %v7816
    %v7997 = vunpack.c.l.b16 %v7817
    %v7998 = vunpack.c.l.b16 %v7818
    %v7999 = vunpack.c.l.b16 %v7819
    %v8000 = vunpack.c.l.b16 %v7820
    %v8001 = vunpack.c.l.b16 %v7821
    %v8002 = vunpack.c.l.b16 %v7822
    %v8003 = vunpack.c.l.b16 %v7823
    %v8004 = vunpack.c.l.b16 %v7824
    %v8005 = vunpack.c.l.b16 %v7825
    %v8006 = vunpack.c.l.b16 %v7826
    %v8007 = vunpack.c.l.b16 %v7827
    %v8008 = vunpack.c.l.b16 %v7828
    %v8009 = vunpack.c.l.b16 %v7829
    %v8010 = vunpack.c.l.b16 %v7830
    %v8011 = vunpack.c.l.b16 %v7831
    %v8012 = vunpack.c.l.b16 %v7832
    %v8013 = vunpack.c.l.b16 %v7833
    %v8014 = vunpack.c.l.b16 %v7834
    %v8015 = vunpack.c.l.b16 %v7835
    %v8016 = vunpack.c.l.b16 %v7836
    %v8017 = vunpack.c.l.b16 %v7837
    %v8018 = vunpack.c.l.b16 %v7838
    %v8019 = vunpack.c.l.b16 %v7839
    %v8020 = vunpack.c.l.b16 %v7840
    %v8021 = vunpack.c.l.b16 %v7841
    %v8022 = vunpack.c.l.b16 %v7842
    %v8023 = vunpack.c.l.b16 %v7843
    %v8024 = vunpack.c.l.b16 %v7844
    %v8025 = vunpack.c.l.b16 %v7845
    %v8026 = vunpack.c.l.b16 %v7846
    %v8027 = vunpack.c.l.b16 %v7847
    %v8028 = vunpack.c.l.b16 %v7848
    %v8029 = vunpack.c.l.b16 %v7849
    %v8030 = vunpack.c.l.b16 %v7850
    %v8031 = vunpack.c.l.b16 %v7851
    %v8032 = vunpack.c.l.b16 %v7852
    %v8033 = vunpack.c.l.b16 %v7853
    %v8034 = vunpack.c.l.b16 %v7854
    %v8035 = vunpack.c.l.b16 %v7855
    %v8036 = vunpack.c.l.b16 %v7856
    %v8037 = vunpack.c.l.b16 %v7857
    %v8038 = vunpack.c.l.b16 %v7858
    %v8039 = vunpack.c.l.b16 %v7859
    %v8040 = vunpack.c.l.b16 %v7860
    %v8041 = vunpack.c.l.b16 %v7861
    %v8042 = vunpack.c.l.b16 %v7862
    %v8043 = vunpack.c.l.b16 %v7863
    %v8044 = vunpack.c.l.b16 %v7864
    %v8045 = vunpack.c.l.b16 %v7865
    %v8046 = vpack.c.b16 %v7958, %v7957
    %v8047 = vpack.c.b16 %v7960, %v7959
    %v8048 = vpack.c.b16 %v7962, %v7961
    %v8049 = vpack.c.b16 %v7964, %v7963
    %v8050 = vpack.c.b16 %v7966, %v7965
    %v8051 = vpack.c.b16 %v7968, %v7967
    %v8052 = vpack.c.b16 %v7970, %v7969
    %v8053 = vpack.c.b16 %v7972, %v7971
    %v8054 = vpack.c.b16 %v7974, %v7973
    %v8055 = vpack.c.b16 %v7976, %v7975
    %v8056 = vpack.c.b16 %v7978, %v7977
    %v8057 = vpack.c.b16 %v7980, %v7979
    %v8058 = vpack.c.b16 %v7982, %v7981
    %v8059 = vpack.c.b16 %v7984, %v7983
    %v8060 = vpack.c.b16 %v7986, %v7985
    %v8061 = vpack.c.b16 %v7988, %v7987
    %v8062 = vpack.c.b16 %v7990, %v7989
    %v8063 = vpack.c.b16 %v7992, %v7991
    %v8064 = vpack.c.b16 %v7994, %v7993
    %v8065 = vpack.c.b16 %v7996, %v7995
    %v8066 = vpack.c.b16 %v7998, %v7997
    %v8067 = vpack.c.b16 %v8000, %v7999
    %v8068 = vpack.c.b16 %v8002, %v8001
    %v8069 = vpack.c.b16 %v8004, %v8003
    %v8070 = vpack.c.b16 %v8006, %v8005
    %v8071 = vpack.c.b16 %v8008, %v8007
    %v8072 = vpack.c.b16 %v8010, %v8009
    %v8073 = vpack.c.b16 %v8012, %v8011
    %v8074 = vpack.c.b16 %v8014, %v8013
    %v8075 = vpack.c.b16 %v8016, %v8015
    %v8076 = vpack.c.b16 %v8018, %v8017
    %v8077 = vpack.c.b16 %v8020, %v8019
    %v8078 = vpack.c.b16 %v8022, %v8021
    %v8079 = vpack.c.b16 %v8024, %v8023
    %v8080 = vpack.c.b16 %v8026, %v8025
    %v8081 = vpack.c.b16 %v8028, %v8027
    %v8082 = vpack.c.b16 %v8030, %v8029
    %v8083 = vpack.c.b16 %v8032, %v8031
    %v8084 = vpack.c.b16 %v8034, %v8033
    %v8085 = vpack.c.b16 %v8036, %v8035
    %v8086 = vpack.c.b16 %v8038, %v8037
    %v8087 = vpack.c.b16 %v8040, %v8039
    %v8088 = vpack.c.b16 %v8042, %v8041
    %v8089 = vpack.c.b16 %v8044, %v8043
    %v8090 = vpack.c.b16 %v8045, %v8045
    %vm8091 = vsmask.f32 5376
    %v8093 = vshrl.u32 %v8046, 16
    %v8095 = vrot.slane %v8093, 2
    %v8096 = vshll.u32 %v8046, 16
    %v8098 = vrot.slane %v8096, 3
    %v8099 = vor.u32 %v8095, %v8098
    %v8101 = vshrl.u32 %v8047, 16
    %v8103 = vrot.slane %v8101, 2
    %v8104 = vshll.u32 %v8047, 16
    %v8106 = vrot.slane %v8104, 3
    %v8107 = vor.u32 %v8103, %v8106
    %v8108 = vsel %vm8091, %v8099, %v8107
    %v8110 = vshrl.u32 %v8048, 16
    %v8112 = vrot.slane %v8110, 2
    %v8113 = vshll.u32 %v8048, 16
    %v8115 = vrot.slane %v8113, 3
    %v8116 = vor.u32 %v8112, %v8115
    %v8117 = vsel %vm8091, %v8107, %v8116
    %v8119 = vshrl.u32 %v8049, 16
    %v8121 = vrot.slane %v8119, 2
    %v8122 = vshll.u32 %v8049, 16
    %v8124 = vrot.slane %v8122, 3
    %v8125 = vor.u32 %v8121, %v8124
    %v8126 = vsel %vm8091, %v8116, %v8125
    %v8128 = vshrl.u32 %v8050, 16
    %v8130 = vrot.slane %v8128, 2
    %v8131 = vshll.u32 %v8050, 16
    %v8133 = vrot.slane %v8131, 3
    %v8134 = vor.u32 %v8130, %v8133
    %v8135 = vsel %vm8091, %v8125, %v8134
    %v8137 = vshrl.u32 %v8051, 16
    %v8139 = vrot.slane %v8137, 2
    %v8140 = vshll.u32 %v8051, 16
    %v8142 = vrot.slane %v8140, 3
    %v8143 = vor.u32 %v8139, %v8142
    %v8144 = vsel %vm8091, %v8134, %v8143
    %v8146 = vshrl.u32 %v8052, 16
    %v8148 = vrot.slane %v8146, 2
    %v8149 = vshll.u32 %v8052, 16
    %v8151 = vrot.slane %v8149, 3
    %v8152 = vor.u32 %v8148, %v8151
    %v8153 = vsel %vm8091, %v8143, %v8152
    %v8155 = vshrl.u32 %v8053, 16
    %v8157 = vrot.slane %v8155, 2
    %v8158 = vshll.u32 %v8053, 16
    %v8160 = vrot.slane %v8158, 3
    %v8161 = vor.u32 %v8157, %v8160
    %v8162 = vsel %vm8091, %v8152, %v8161
    %v8164 = vshrl.u32 %v8054, 16
    %v8166 = vrot.slane %v8164, 2
    %v8167 = vshll.u32 %v8054, 16
    %v8169 = vrot.slane %v8167, 3
    %v8170 = vor.u32 %v8166, %v8169
    %v8171 = vsel %vm8091, %v8161, %v8170
    %v8173 = vshrl.u32 %v8055, 16
    %v8175 = vrot.slane %v8173, 2
    %v8176 = vshll.u32 %v8055, 16
    %v8178 = vrot.slane %v8176, 3
    %v8179 = vor.u32 %v8175, %v8178
    %v8180 = vsel %vm8091, %v8170, %v8179
    %v8182 = vshrl.u32 %v8056, 16
    %v8184 = vrot.slane %v8182, 2
    %v8185 = vshll.u32 %v8056, 16
    %v8187 = vrot.slane %v8185, 3
    %v8188 = vor.u32 %v8184, %v8187
    %v8189 = vsel %vm8091, %v8179, %v8188
    %v8191 = vshrl.u32 %v8057, 16
    %v8193 = vrot.slane %v8191, 2
    %v8194 = vshll.u32 %v8057, 16
    %v8196 = vrot.slane %v8194, 3
    %v8197 = vor.u32 %v8193, %v8196
    %v8198 = vsel %vm8091, %v8188, %v8197
    %v8200 = vshrl.u32 %v8058, 16
    %v8202 = vrot.slane %v8200, 2
    %v8203 = vshll.u32 %v8058, 16
    %v8205 = vrot.slane %v8203, 3
    %v8206 = vor.u32 %v8202, %v8205
    %v8207 = vsel %vm8091, %v8197, %v8206
    %v8209 = vshrl.u32 %v8059, 16
    %v8211 = vrot.slane %v8209, 2
    %v8212 = vshll.u32 %v8059, 16
    %v8214 = vrot.slane %v8212, 3
    %v8215 = vor.u32 %v8211, %v8214
    %v8216 = vsel %vm8091, %v8206, %v8215
    %v8218 = vshrl.u32 %v8060, 16
    %v8220 = vrot.slane %v8218, 2
    %v8221 = vshll.u32 %v8060, 16
    %v8223 = vrot.slane %v8221, 3
    %v8224 = vor.u32 %v8220, %v8223
    %v8225 = vsel %vm8091, %v8215, %v8224
    %v8227 = vshrl.u32 %v8061, 16
    %v8229 = vrot.slane %v8227, 2
    %v8230 = vshll.u32 %v8061, 16
    %v8232 = vrot.slane %v8230, 3
    %v8233 = vor.u32 %v8229, %v8232
    %v8234 = vsel %vm8091, %v8224, %v8233
    %v8236 = vshrl.u32 %v8062, 16
    %v8238 = vrot.slane %v8236, 2
    %v8239 = vshll.u32 %v8062, 16
    %v8241 = vrot.slane %v8239, 3
    %v8242 = vor.u32 %v8238, %v8241
    %v8243 = vsel %vm8091, %v8233, %v8242
    %v8245 = vshrl.u32 %v8063, 16
    %v8247 = vrot.slane %v8245, 2
    %v8248 = vshll.u32 %v8063, 16
    %v8250 = vrot.slane %v8248, 3
    %v8251 = vor.u32 %v8247, %v8250
    %v8252 = vsel %vm8091, %v8242, %v8251
    %v8254 = vshrl.u32 %v8064, 16
    %v8256 = vrot.slane %v8254, 2
    %v8257 = vshll.u32 %v8064, 16
    %v8259 = vrot.slane %v8257, 3
    %v8260 = vor.u32 %v8256, %v8259
    %v8261 = vsel %vm8091, %v8251, %v8260
    %v8263 = vshrl.u32 %v8065, 16
    %v8265 = vrot.slane %v8263, 2
    %v8266 = vshll.u32 %v8065, 16
    %v8268 = vrot.slane %v8266, 3
    %v8269 = vor.u32 %v8265, %v8268
    %v8270 = vsel %vm8091, %v8260, %v8269
    %v8272 = vshrl.u32 %v8066, 16
    %v8274 = vrot.slane %v8272, 2
    %v8275 = vshll.u32 %v8066, 16
    %v8277 = vrot.slane %v8275, 3
    %v8278 = vor.u32 %v8274, %v8277
    %v8279 = vsel %vm8091, %v8269, %v8278
    %v8281 = vshrl.u32 %v8067, 16
    %v8283 = vrot.slane %v8281, 2
    %v8284 = vshll.u32 %v8067, 16
    %v8286 = vrot.slane %v8284, 3
    %v8287 = vor.u32 %v8283, %v8286
    %v8288 = vsel %vm8091, %v8278, %v8287
    %v8290 = vshrl.u32 %v8068, 16
    %v8292 = vrot.slane %v8290, 2
    %v8293 = vshll.u32 %v8068, 16
    %v8295 = vrot.slane %v8293, 3
    %v8296 = vor.u32 %v8292, %v8295
    %v8297 = vsel %vm8091, %v8287, %v8296
    %v8299 = vshrl.u32 %v8069, 16
    %v8301 = vrot.slane %v8299, 2
    %v8302 = vshll.u32 %v8069, 16
    %v8304 = vrot.slane %v8302, 3
    %v8305 = vor.u32 %v8301, %v8304
    %v8306 = vsel %vm8091, %v8296, %v8305
    %v8308 = vshrl.u32 %v8070, 16
    %v8310 = vrot.slane %v8308, 2
    %v8311 = vshll.u32 %v8070, 16
    %v8313 = vrot.slane %v8311, 3
    %v8314 = vor.u32 %v8310, %v8313
    %v8315 = vsel %vm8091, %v8305, %v8314
    %v8317 = vshrl.u32 %v8071, 16
    %v8319 = vrot.slane %v8317, 2
    %v8320 = vshll.u32 %v8071, 16
    %v8322 = vrot.slane %v8320, 3
    %v8323 = vor.u32 %v8319, %v8322
    %v8324 = vsel %vm8091, %v8314, %v8323
    %v8326 = vshrl.u32 %v8072, 16
    %v8328 = vrot.slane %v8326, 2
    %v8329 = vshll.u32 %v8072, 16
    %v8331 = vrot.slane %v8329, 3
    %v8332 = vor.u32 %v8328, %v8331
    %v8333 = vsel %vm8091, %v8323, %v8332
    %v8335 = vshrl.u32 %v8073, 16
    %v8337 = vrot.slane %v8335, 2
    %v8338 = vshll.u32 %v8073, 16
    %v8340 = vrot.slane %v8338, 3
    %v8341 = vor.u32 %v8337, %v8340
    %v8342 = vsel %vm8091, %v8332, %v8341
    %v8344 = vshrl.u32 %v8074, 16
    %v8346 = vrot.slane %v8344, 2
    %v8347 = vshll.u32 %v8074, 16
    %v8349 = vrot.slane %v8347, 3
    %v8350 = vor.u32 %v8346, %v8349
    %v8351 = vsel %vm8091, %v8341, %v8350
    %v8353 = vshrl.u32 %v8075, 16
    %v8355 = vrot.slane %v8353, 2
    %v8356 = vshll.u32 %v8075, 16
    %v8358 = vrot.slane %v8356, 3
    %v8359 = vor.u32 %v8355, %v8358
    %v8360 = vsel %vm8091, %v8350, %v8359
    %v8362 = vshrl.u32 %v8076, 16
    %v8364 = vrot.slane %v8362, 2
    %v8365 = vshll.u32 %v8076, 16
    %v8367 = vrot.slane %v8365, 3
    %v8368 = vor.u32 %v8364, %v8367
    %v8369 = vsel %vm8091, %v8359, %v8368
    %v8371 = vshrl.u32 %v8077, 16
    %v8373 = vrot.slane %v8371, 2
    %v8374 = vshll.u32 %v8077, 16
    %v8376 = vrot.slane %v8374, 3
    %v8377 = vor.u32 %v8373, %v8376
    %v8378 = vsel %vm8091, %v8368, %v8377
    %v8380 = vshrl.u32 %v8078, 16
    %v8382 = vrot.slane %v8380, 2
    %v8383 = vshll.u32 %v8078, 16
    %v8385 = vrot.slane %v8383, 3
    %v8386 = vor.u32 %v8382, %v8385
    %v8387 = vsel %vm8091, %v8377, %v8386
    %v8389 = vshrl.u32 %v8079, 16
    %v8391 = vrot.slane %v8389, 2
    %v8392 = vshll.u32 %v8079, 16
    %v8394 = vrot.slane %v8392, 3
    %v8395 = vor.u32 %v8391, %v8394
    %v8396 = vsel %vm8091, %v8386, %v8395
    %v8398 = vshrl.u32 %v8080, 16
    %v8400 = vrot.slane %v8398, 2
    %v8401 = vshll.u32 %v8080, 16
    %v8403 = vrot.slane %v8401, 3
    %v8404 = vor.u32 %v8400, %v8403
    %v8405 = vsel %vm8091, %v8395, %v8404
    %v8407 = vshrl.u32 %v8081, 16
    %v8409 = vrot.slane %v8407, 2
    %v8410 = vshll.u32 %v8081, 16
    %v8412 = vrot.slane %v8410, 3
    %v8413 = vor.u32 %v8409, %v8412
    %v8414 = vsel %vm8091, %v8404, %v8413
    %v8416 = vshrl.u32 %v8082, 16
    %v8418 = vrot.slane %v8416, 2
    %v8419 = vshll.u32 %v8082, 16
    %v8421 = vrot.slane %v8419, 3
    %v8422 = vor.u32 %v8418, %v8421
    %v8423 = vsel %vm8091, %v8413, %v8422
    %v8425 = vshrl.u32 %v8083, 16
    %v8427 = vrot.slane %v8425, 2
    %v8428 = vshll.u32 %v8083, 16
    %v8430 = vrot.slane %v8428, 3
    %v8431 = vor.u32 %v8427, %v8430
    %v8432 = vsel %vm8091, %v8422, %v8431
    %v8434 = vshrl.u32 %v8084, 16
    %v8436 = vrot.slane %v8434, 2
    %v8437 = vshll.u32 %v8084, 16
    %v8439 = vrot.slane %v8437, 3
    %v8440 = vor.u32 %v8436, %v8439
    %v8441 = vsel %vm8091, %v8431, %v8440
    %v8443 = vshrl.u32 %v8085, 16
    %v8445 = vrot.slane %v8443, 2
    %v8446 = vshll.u32 %v8085, 16
    %v8448 = vrot.slane %v8446, 3
    %v8449 = vor.u32 %v8445, %v8448
    %v8450 = vsel %vm8091, %v8440, %v8449
    %v8452 = vshrl.u32 %v8086, 16
    %v8454 = vrot.slane %v8452, 2
    %v8455 = vshll.u32 %v8086, 16
    %v8457 = vrot.slane %v8455, 3
    %v8458 = vor.u32 %v8454, %v8457
    %v8459 = vsel %vm8091, %v8449, %v8458
    %v8461 = vshrl.u32 %v8087, 16
    %v8463 = vrot.slane %v8461, 2
    %v8464 = vshll.u32 %v8087, 16
    %v8466 = vrot.slane %v8464, 3
    %v8467 = vor.u32 %v8463, %v8466
    %v8468 = vsel %vm8091, %v8458, %v8467
    %v8470 = vshrl.u32 %v8088, 16
    %v8472 = vrot.slane %v8470, 2
    %v8473 = vshll.u32 %v8088, 16
    %v8475 = vrot.slane %v8473, 3
    %v8476 = vor.u32 %v8472, %v8475
    %v8477 = vsel %vm8091, %v8467, %v8476
    %v8479 = vshrl.u32 %v8089, 16
    %v8481 = vrot.slane %v8479, 2
    %v8482 = vshll.u32 %v8089, 16
    %v8484 = vrot.slane %v8482, 3
    %v8485 = vor.u32 %v8481, %v8484
    %v8486 = vsel %vm8091, %v8476, %v8485
    %v8488 = vshrl.u32 %v8090, 16
    %v8490 = vrot.slane %v8488, 2
    %v8491 = vshll.u32 %v8090, 16
    %v8493 = vrot.slane %v8491, 3
    %v8494 = vor.u32 %v8490, %v8493
    %v8495 = vsel %vm8091, %v8485, %v8494
    %v8497 = vsel %vm551, %v8108, 0
    %v8500 = vsel %vm551, %v8117, 0
    %v8503 = vsel %vm551, %v8126, 0
    %v8506 = vsel %vm551, %v8135, 0
    %v8509 = vsel %vm551, %v8144, 0
    %v8512 = vsel %vm551, %v8153, 0
    %v8515 = vsel %vm551, %v8162, 0
    %v8518 = vsel %vm551, %v8171, 0
    %v8521 = vsel %vm551, %v8180, 0
    %v8524 = vsel %vm551, %v8189, 0
    %v8527 = vsel %vm551, %v8198, 0
    %v8530 = vsel %vm551, %v8207, 0
    %v8533 = vsel %vm551, %v8216, 0
    %v8536 = vsel %vm551, %v8225, 0
    %v8539 = vsel %vm551, %v8234, 0
    %v8542 = vsel %vm551, %v8243, 0
    %v8545 = vsel %vm551, %v8252, 0
    %v8548 = vsel %vm551, %v8261, 0
    %v8551 = vsel %vm551, %v8270, 0
    %v8554 = vsel %vm551, %v8279, 0
    %v8557 = vsel %vm551, %v8288, 0
    %v8560 = vsel %vm551, %v8297, 0
    %v8563 = vsel %vm551, %v8306, 0
    %v8566 = vsel %vm551, %v8315, 0
    %v8569 = vsel %vm551, %v8324, 0
    %v8572 = vsel %vm551, %v8333, 0
    %v8575 = vsel %vm551, %v8342, 0
    %v8578 = vsel %vm551, %v8351, 0
    %v8581 = vsel %vm551, %v8360, 0
    %v8584 = vsel %vm551, %v8369, 0
    %v8587 = vsel %vm551, %v8378, 0
    %v8590 = vsel %vm551, %v8387, 0
    %v8593 = vsel %vm551, %v8396, 0
    %v8596 = vsel %vm551, %v8405, 0
    %v8599 = vsel %vm551, %v8414, 0
    %v8602 = vsel %vm551, %v8423, 0
    %v8605 = vsel %vm551, %v8432, 0
    %v8608 = vsel %vm551, %v8441, 0
    %v8611 = vsel %vm551, %v8450, 0
    %v8614 = vsel %vm551, %v8459, 0
    %v8617 = vsel %vm551, %v8468, 0
    %v8620 = vsel %vm551, %v8477, 0
    %v8623 = vsel %vm551, %v8486, 0
    %v8626 = vsel %vm551, %v8495, 0
    %v8629 = vsel %vm684, %v7867, 0
    %8631 = vmatpush.bf16.msra.mxu0 0
    %8632 = vmatpush.bf16.msra.mxu0 0
    %8633 = vmatpush.bf16.msra.mxu0 0
    %8634 = vmatpush.bf16.msra.mxu0 0
    %8635 = vmatpush.bf16.msra.mxu0 0
    %8636 = vmatpush.bf16.msra.mxu0 0
    %8637 = vmatpush.bf16.msra.mxu0 0
    %8638 = vmatpush.bf16.msra.mxu0 %v8629
    %8639 = vmatmul.bf16.gmra.mxu0 %v8497
    %v8640 = vpop.f32.mrf.mxu0
    %v8641 = vadd.f32 0.0, %v8640
    %v8642 = vpop.f32.mrf.mxu0
    %v8643 = vadd.f32 0.0, %v8642
    %8644 = vmatmul.bf16.gmra.mxu0 %v8500
    %v8645 = vpop.f32.mrf.mxu0
    %v8646 = vadd.f32 0.0, %v8645
    %v8647 = vpop.f32.mrf.mxu0
    %v8648 = vadd.f32 0.0, %v8647
    %8649 = vmatmul.bf16.gmra.mxu0 %v8503
    %v8650 = vpop.f32.mrf.mxu0
    %v8651 = vadd.f32 0.0, %v8650
    %v8652 = vpop.f32.mrf.mxu0
    %v8653 = vadd.f32 0.0, %v8652
    %8654 = vmatmul.bf16.gmra.mxu0 %v8506
    %v8655 = vpop.f32.mrf.mxu0
    %v8656 = vadd.f32 0.0, %v8655
    %v8657 = vpop.f32.mrf.mxu0
    %v8658 = vadd.f32 0.0, %v8657
    %8659 = vmatmul.bf16.gmra.mxu0 %v8509
    %v8660 = vpop.f32.mrf.mxu0
    %v8661 = vadd.f32 0.0, %v8660
    %v8662 = vpop.f32.mrf.mxu0
    %v8663 = vadd.f32 0.0, %v8662
    %8664 = vmatmul.bf16.gmra.mxu0 %v8512
    %v8665 = vpop.f32.mrf.mxu0
    %v8666 = vadd.f32 0.0, %v8665
    %v8667 = vpop.f32.mrf.mxu0
    %v8668 = vadd.f32 0.0, %v8667
    %8669 = vmatmul.bf16.gmra.mxu0 %v8515
    %v8670 = vpop.f32.mrf.mxu0
    %v8671 = vadd.f32 0.0, %v8670
    %v8672 = vpop.f32.mrf.mxu0
    %v8673 = vadd.f32 0.0, %v8672
    %8674 = vmatmul.bf16.gmra.mxu0 %v8518
    %v8675 = vpop.f32.mrf.mxu0
    %v8676 = vadd.f32 0.0, %v8675
    %v8677 = vpop.f32.mrf.mxu0
    %v8678 = vadd.f32 0.0, %v8677
    %8679 = vmatmul.bf16.gmra.mxu0 %v8521
    %v8680 = vpop.f32.mrf.mxu0
    %v8681 = vadd.f32 0.0, %v8680
    %v8682 = vpop.f32.mrf.mxu0
    %v8683 = vadd.f32 0.0, %v8682
    %8684 = vmatmul.bf16.gmra.mxu0 %v8524
    %v8685 = vpop.f32.mrf.mxu0
    %v8686 = vadd.f32 0.0, %v8685
    %v8687 = vpop.f32.mrf.mxu0
    %v8688 = vadd.f32 0.0, %v8687
    %8689 = vmatmul.bf16.gmra.mxu0 %v8527
    %v8690 = vpop.f32.mrf.mxu0
    %v8691 = vadd.f32 0.0, %v8690
    %v8692 = vpop.f32.mrf.mxu0
    %v8693 = vadd.f32 0.0, %v8692
    %8694 = vmatmul.bf16.gmra.mxu0 %v8530
    %v8695 = vpop.f32.mrf.mxu0
    %v8696 = vadd.f32 0.0, %v8695
    %v8697 = vpop.f32.mrf.mxu0
    %v8698 = vadd.f32 0.0, %v8697
    %8699 = vmatmul.bf16.gmra.mxu0 %v8533
    %v8700 = vpop.f32.mrf.mxu0
    %v8701 = vadd.f32 0.0, %v8700
    %v8702 = vpop.f32.mrf.mxu0
    %v8703 = vadd.f32 0.0, %v8702
    %8704 = vmatmul.bf16.gmra.mxu0 %v8536
    %v8705 = vpop.f32.mrf.mxu0
    %v8706 = vadd.f32 0.0, %v8705
    %v8707 = vpop.f32.mrf.mxu0
    %v8708 = vadd.f32 0.0, %v8707
    %8709 = vmatmul.bf16.gmra.mxu0 %v8539
    %v8710 = vpop.f32.mrf.mxu0
    %v8711 = vadd.f32 0.0, %v8710
    %v8712 = vpop.f32.mrf.mxu0
    %v8713 = vadd.f32 0.0, %v8712
    %8714 = vmatmul.bf16.gmra.mxu0 %v8542
    %v8715 = vpop.f32.mrf.mxu0
    %v8716 = vadd.f32 0.0, %v8715
    %v8717 = vpop.f32.mrf.mxu0
    %v8718 = vadd.f32 0.0, %v8717
    %8719 = vmatmul.bf16.gmra.mxu0 %v8545
    %v8720 = vpop.f32.mrf.mxu0
    %v8721 = vadd.f32 0.0, %v8720
    %v8722 = vpop.f32.mrf.mxu0
    %v8723 = vadd.f32 0.0, %v8722
    %8724 = vmatmul.bf16.gmra.mxu0 %v8548
    %v8725 = vpop.f32.mrf.mxu0
    %v8726 = vadd.f32 0.0, %v8725
    %v8727 = vpop.f32.mrf.mxu0
    %v8728 = vadd.f32 0.0, %v8727
    %8729 = vmatmul.bf16.gmra.mxu0 %v8551
    %v8730 = vpop.f32.mrf.mxu0
    %v8731 = vadd.f32 0.0, %v8730
    %v8732 = vpop.f32.mrf.mxu0
    %v8733 = vadd.f32 0.0, %v8732
    %8734 = vmatmul.bf16.gmra.mxu0 %v8554
    %v8735 = vpop.f32.mrf.mxu0
    %v8736 = vadd.f32 0.0, %v8735
    %v8737 = vpop.f32.mrf.mxu0
    %v8738 = vadd.f32 0.0, %v8737
    %8739 = vmatmul.bf16.gmra.mxu0 %v8557
    %v8740 = vpop.f32.mrf.mxu0
    %v8741 = vadd.f32 0.0, %v8740
    %v8742 = vpop.f32.mrf.mxu0
    %v8743 = vadd.f32 0.0, %v8742
    %8744 = vmatmul.bf16.gmra.mxu0 %v8560
    %v8745 = vpop.f32.mrf.mxu0
    %v8746 = vadd.f32 0.0, %v8745
    %v8747 = vpop.f32.mrf.mxu0
    %v8748 = vadd.f32 0.0, %v8747
    %8749 = vmatmul.bf16.gmra.mxu0 %v8563
    %v8750 = vpop.f32.mrf.mxu0
    %v8751 = vadd.f32 0.0, %v8750
    %v8752 = vpop.f32.mrf.mxu0
    %v8753 = vadd.f32 0.0, %v8752
    %8754 = vmatmul.bf16.gmra.mxu0 %v8566
    %v8755 = vpop.f32.mrf.mxu0
    %v8756 = vadd.f32 0.0, %v8755
    %v8757 = vpop.f32.mrf.mxu0
    %v8758 = vadd.f32 0.0, %v8757
    %8759 = vmatmul.bf16.gmra.mxu0 %v8569
    %v8760 = vpop.f32.mrf.mxu0
    %v8761 = vadd.f32 0.0, %v8760
    %v8762 = vpop.f32.mrf.mxu0
    %v8763 = vadd.f32 0.0, %v8762
    %8764 = vmatmul.bf16.gmra.mxu0 %v8572
    %v8765 = vpop.f32.mrf.mxu0
    %v8766 = vadd.f32 0.0, %v8765
    %v8767 = vpop.f32.mrf.mxu0
    %v8768 = vadd.f32 0.0, %v8767
    %8769 = vmatmul.bf16.gmra.mxu0 %v8575
    %v8770 = vpop.f32.mrf.mxu0
    %v8771 = vadd.f32 0.0, %v8770
    %v8772 = vpop.f32.mrf.mxu0
    %v8773 = vadd.f32 0.0, %v8772
    %8774 = vmatmul.bf16.gmra.mxu0 %v8578
    %v8775 = vpop.f32.mrf.mxu0
    %v8776 = vadd.f32 0.0, %v8775
    %v8777 = vpop.f32.mrf.mxu0
    %v8778 = vadd.f32 0.0, %v8777
    %8779 = vmatmul.bf16.gmra.mxu0 %v8581
    %v8780 = vpop.f32.mrf.mxu0
    %v8781 = vadd.f32 0.0, %v8780
    %v8782 = vpop.f32.mrf.mxu0
    %v8783 = vadd.f32 0.0, %v8782
    %8784 = vmatmul.bf16.gmra.mxu0 %v8584
    %v8785 = vpop.f32.mrf.mxu0
    %v8786 = vadd.f32 0.0, %v8785
    %v8787 = vpop.f32.mrf.mxu0
    %v8788 = vadd.f32 0.0, %v8787
    %8789 = vmatmul.bf16.gmra.mxu0 %v8587
    %v8790 = vpop.f32.mrf.mxu0
    %v8791 = vadd.f32 0.0, %v8790
    %v8792 = vpop.f32.mrf.mxu0
    %v8793 = vadd.f32 0.0, %v8792
    %8794 = vmatmul.bf16.gmra.mxu0 %v8590
    %v8795 = vpop.f32.mrf.mxu0
    %v8796 = vadd.f32 0.0, %v8795
    %v8797 = vpop.f32.mrf.mxu0
    %v8798 = vadd.f32 0.0, %v8797
    %8799 = vmatmul.bf16.gmra.mxu0 %v8593
    %v8800 = vpop.f32.mrf.mxu0
    %v8801 = vadd.f32 0.0, %v8800
    %v8802 = vpop.f32.mrf.mxu0
    %v8803 = vadd.f32 0.0, %v8802
    %8804 = vmatmul.bf16.gmra.mxu0 %v8596
    %v8805 = vpop.f32.mrf.mxu0
    %v8806 = vadd.f32 0.0, %v8805
    %v8807 = vpop.f32.mrf.mxu0
    %v8808 = vadd.f32 0.0, %v8807
    %8809 = vmatmul.bf16.gmra.mxu0 %v8599
    %v8810 = vpop.f32.mrf.mxu0
    %v8811 = vadd.f32 0.0, %v8810
    %v8812 = vpop.f32.mrf.mxu0
    %v8813 = vadd.f32 0.0, %v8812
    %8814 = vmatmul.bf16.gmra.mxu0 %v8602
    %v8815 = vpop.f32.mrf.mxu0
    %v8816 = vadd.f32 0.0, %v8815
    %v8817 = vpop.f32.mrf.mxu0
    %v8818 = vadd.f32 0.0, %v8817
    %8819 = vmatmul.bf16.gmra.mxu0 %v8605
    %v8820 = vpop.f32.mrf.mxu0
    %v8821 = vadd.f32 0.0, %v8820
    %v8822 = vpop.f32.mrf.mxu0
    %v8823 = vadd.f32 0.0, %v8822
    %8824 = vmatmul.bf16.gmra.mxu0 %v8608
    %v8825 = vpop.f32.mrf.mxu0
    %v8826 = vadd.f32 0.0, %v8825
    %v8827 = vpop.f32.mrf.mxu0
    %v8828 = vadd.f32 0.0, %v8827
    %8829 = vmatmul.bf16.gmra.mxu0 %v8611
    %v8830 = vpop.f32.mrf.mxu0
    %v8831 = vadd.f32 0.0, %v8830
    %v8832 = vpop.f32.mrf.mxu0
    %v8833 = vadd.f32 0.0, %v8832
    %8834 = vmatmul.bf16.gmra.mxu0 %v8614
    %v8835 = vpop.f32.mrf.mxu0
    %v8836 = vadd.f32 0.0, %v8835
    %v8837 = vpop.f32.mrf.mxu0
    %v8838 = vadd.f32 0.0, %v8837
    %8839 = vmatmul.bf16.gmra.mxu0 %v8617
    %v8840 = vpop.f32.mrf.mxu0
    %v8841 = vadd.f32 0.0, %v8840
    %v8842 = vpop.f32.mrf.mxu0
    %v8843 = vadd.f32 0.0, %v8842
    %8844 = vmatmul.bf16.gmra.mxu0 %v8620
    %v8845 = vpop.f32.mrf.mxu0
    %v8846 = vadd.f32 0.0, %v8845
    %v8847 = vpop.f32.mrf.mxu0
    %v8848 = vadd.f32 0.0, %v8847
    %8849 = vmatmul.bf16.gmra.mxu0 %v8623
    %v8850 = vpop.f32.mrf.mxu0
    %v8851 = vadd.f32 0.0, %v8850
    %v8852 = vpop.f32.mrf.mxu0
    %v8853 = vadd.f32 0.0, %v8852
    %8854 = vmatmul.bf16.gmra.mxu0 %v8626
    %v8855 = vpop.f32.mrf.mxu0
    %v8856 = vadd.f32 0.0, %v8855
    %v8857 = vpop.f32.mrf.mxu0
    %v8858 = vadd.f32 0.0, %v8857
    %8859 = vdwg.mxu0
    %v8860 = vld [vmem:[#allocation3] sm:$0xff]
    %v8861 = vld [vmem:[#allocation3 + $0x8] sm:$0xff]
    %v8862 = vld [vmem:[#allocation3 + $0x10] sm:$0xff]
    %v8863 = vld [vmem:[#allocation3 + $0x18] sm:$0xff]
    %v8864 = vld [vmem:[#allocation3 + $0x20] sm:$0xff]
    %v8865 = vld [vmem:[#allocation3 + $0x28] sm:$0xff]
    %v8866 = vld [vmem:[#allocation3 + $0x30] sm:$0xff]
    %v8867 = vld [vmem:[#allocation3 + $0x38] sm:$0xff]
    %v8868 = vld [vmem:[#allocation3 + $0x40] sm:$0xff]
    %v8869 = vld [vmem:[#allocation3 + $0x48] sm:$0xff]
    %v8870 = vld [vmem:[#allocation3 + $0x50] sm:$0xff]
    %v8871 = vld [vmem:[#allocation3 + $0x58] sm:$0xff]
    %v8872 = vld [vmem:[#allocation3 + $0x60] sm:$0xff]
    %v8873 = vld [vmem:[#allocation3 + $0x68] sm:$0xff]
    %v8874 = vld [vmem:[#allocation3 + $0x70] sm:$0xff]
    %v8875 = vld [vmem:[#allocation3 + $0x78] sm:$0xff]
    %v8876 = vld [vmem:[#allocation3 + $0x80] sm:$0xff]
    %v8877 = vld [vmem:[#allocation3 + $0x88] sm:$0xff]
    %v8878 = vld [vmem:[#allocation3 + $0x90] sm:$0xff]
    %v8879 = vld [vmem:[#allocation3 + $0x98] sm:$0xff]
    %v8880 = vld [vmem:[#allocation3 + $0xa0] sm:$0xff]
    %v8881 = vld [vmem:[#allocation3 + $0xa8] sm:$0xff]
    %v8882 = vld [vmem:[#allocation3 + $0xb0] sm:$0xff]
    %v8883 = vld [vmem:[#allocation3 + $0xb8] sm:$0xff]
    %v8884 = vld [vmem:[#allocation3 + $0xc0] sm:$0xff]
    %v8885 = vld [vmem:[#allocation3 + $0xc8] sm:$0xff]
    %v8886 = vld [vmem:[#allocation3 + $0xd0] sm:$0xff]
    %v8887 = vld [vmem:[#allocation3 + $0xd8] sm:$0xff]
    %v8888 = vld [vmem:[#allocation3 + $0xe0] sm:$0xff]
    %v8889 = vld [vmem:[#allocation3 + $0xe8] sm:$0xff]
    %v8890 = vld [vmem:[#allocation3 + $0xf0] sm:$0xff]
    %v8891 = vld [vmem:[#allocation3 + $0xf8] sm:$0xff]
    %v8892 = vld [vmem:[#allocation3 + $0x100] sm:$0xff]
    %v8893 = vld [vmem:[#allocation3 + $0x108] sm:$0xff]
    %v8894 = vld [vmem:[#allocation3 + $0x110] sm:$0xff]
    %v8895 = vld [vmem:[#allocation3 + $0x118] sm:$0xff]
    %v8896 = vld [vmem:[#allocation3 + $0x120] sm:$0xff]
    %v8897 = vld [vmem:[#allocation3 + $0x128] sm:$0xff]
    %v8898 = vld [vmem:[#allocation3 + $0x130] sm:$0xff]
    %v8899 = vld [vmem:[#allocation3 + $0x138] sm:$0xff]
    %v8900 = vld [vmem:[#allocation3 + $0x140] sm:$0xff]
    %v8901 = vld [vmem:[#allocation3 + $0x148] sm:$0xff]
    %v8902 = vld [vmem:[#allocation3 + $0x150] sm:$0xff]
    %v8903 = vld [vmem:[#allocation3 + $0x158] sm:$0xff]
    %v8904 = vld [vmem:[#allocation3 + $0x160] sm:$0xff]
    %v8905 = vld [vmem:[#allocation3 + $0x168] sm:$0xff]
    %v8906 = vld [vmem:[#allocation3 + $0x170] sm:$0xff]
    %v8907 = vld [vmem:[#allocation3 + $0x178] sm:$0xff]
    %v8908 = vld [vmem:[#allocation3 + $0x180] sm:$0xff]
    %v8909 = vld [vmem:[#allocation3 + $0x188] sm:$0xff]
    %v8910 = vld [vmem:[#allocation3 + $0x190] sm:$0xff]
    %v8911 = vld [vmem:[#allocation3 + $0x198] sm:$0xff]
    %v8912 = vld [vmem:[#allocation3 + $0x1a0] sm:$0xff]
    %v8913 = vld [vmem:[#allocation3 + $0x1a8] sm:$0xff]
    %v8914 = vld [vmem:[#allocation3 + $0x1b0] sm:$0xff]
    %v8915 = vld [vmem:[#allocation3 + $0x1b8] sm:$0xff]
    %v8916 = vld [vmem:[#allocation3 + $0x1c0] sm:$0xff]
    %v8917 = vld [vmem:[#allocation3 + $0x1c8] sm:$0xff]
    %v8918 = vld [vmem:[#allocation3 + $0x1d0] sm:$0xff]
    %v8919 = vld [vmem:[#allocation3 + $0x1d8] sm:$0xff]
    %v8920 = vld [vmem:[#allocation3 + $0x1e0] sm:$0xff]
    %v8921 = vld [vmem:[#allocation3 + $0x1e8] sm:$0xff]
    %v8922 = vld [vmem:[#allocation3 + $0x1f0] sm:$0xff]
    %v8923 = vld [vmem:[#allocation3 + $0x1f8] sm:$0xff]
    %v8924 = vld [vmem:[#allocation3 + $0x200] sm:$0xff]
    %v8925 = vld [vmem:[#allocation3 + $0x208] sm:$0xff]
    %v8926 = vld [vmem:[#allocation3 + $0x210] sm:$0xff]
    %v8927 = vld [vmem:[#allocation3 + $0x218] sm:$0xff]
    %v8928 = vld [vmem:[#allocation3 + $0x220] sm:$0xff]
    %v8929 = vld [vmem:[#allocation3 + $0x228] sm:$0xff]
    %v8930 = vld [vmem:[#allocation3 + $0x230] sm:$0xff]
    %v8931 = vld [vmem:[#allocation3 + $0x238] sm:$0xff]
    %v8932 = vld [vmem:[#allocation3 + $0x240] sm:$0xff]
    %v8933 = vld [vmem:[#allocation3 + $0x248] sm:$0xff]
    %v8934 = vld [vmem:[#allocation3 + $0x250] sm:$0xff]
    %v8935 = vld [vmem:[#allocation3 + $0x258] sm:$0xff]
    %v8936 = vld [vmem:[#allocation3 + $0x260] sm:$0xff]
    %v8937 = vld [vmem:[#allocation3 + $0x268] sm:$0xff]
    %v8938 = vld [vmem:[#allocation3 + $0x270] sm:$0xff]
    %v8939 = vld [vmem:[#allocation3 + $0x278] sm:$0xff]
    %v8940 = vld [vmem:[#allocation3 + $0x280] sm:$0xff]
    %v8941 = vld [vmem:[#allocation3 + $0x288] sm:$0xff]
    %v8942 = vld [vmem:[#allocation3 + $0x290] sm:$0xff]
    %v8943 = vld [vmem:[#allocation3 + $0x298] sm:$0xff]
    %v8944 = vld [vmem:[#allocation3 + $0x2a0] sm:$0xff]
    %v8945 = vld [vmem:[#allocation3 + $0x2a8] sm:$0xff]
    %v8946 = vld [vmem:[#allocation3 + $0x2b0] sm:$0xff]
    %v8947 = vld [vmem:[#allocation3 + $0x2b8] sm:$0xff]
    %v8948 = vadd.f32 %v8860, %v8641
    %v8949 = vadd.f32 %v8861, %v8643
    %v8950 = vadd.f32 %v8862, %v8646
    %v8951 = vadd.f32 %v8863, %v8648
    %v8952 = vadd.f32 %v8864, %v8651
    %v8953 = vadd.f32 %v8865, %v8653
    %v8954 = vadd.f32 %v8866, %v8656
    %v8955 = vadd.f32 %v8867, %v8658
    %v8956 = vadd.f32 %v8868, %v8661
    %v8957 = vadd.f32 %v8869, %v8663
    %v8958 = vadd.f32 %v8870, %v8666
    %v8959 = vadd.f32 %v8871, %v8668
    %v8960 = vadd.f32 %v8872, %v8671
    %v8961 = vadd.f32 %v8873, %v8673
    %v8962 = vadd.f32 %v8874, %v8676
    %v8963 = vadd.f32 %v8875, %v8678
    %v8964 = vadd.f32 %v8876, %v8681
    %v8965 = vadd.f32 %v8877, %v8683
    %v8966 = vadd.f32 %v8878, %v8686
    %v8967 = vadd.f32 %v8879, %v8688
    %v8968 = vadd.f32 %v8880, %v8691
    %v8969 = vadd.f32 %v8881, %v8693
    %v8970 = vadd.f32 %v8882, %v8696
    %v8971 = vadd.f32 %v8883, %v8698
    %v8972 = vadd.f32 %v8884, %v8701
    %v8973 = vadd.f32 %v8885, %v8703
    %v8974 = vadd.f32 %v8886, %v8706
    %v8975 = vadd.f32 %v8887, %v8708
    %v8976 = vadd.f32 %v8888, %v8711
    %v8977 = vadd.f32 %v8889, %v8713
    %v8978 = vadd.f32 %v8890, %v8716
    %v8979 = vadd.f32 %v8891, %v8718
    %v8980 = vadd.f32 %v8892, %v8721
    %v8981 = vadd.f32 %v8893, %v8723
    %v8982 = vadd.f32 %v8894, %v8726
    %v8983 = vadd.f32 %v8895, %v8728
    %v8984 = vadd.f32 %v8896, %v8731
    %v8985 = vadd.f32 %v8897, %v8733
    %v8986 = vadd.f32 %v8898, %v8736
    %v8987 = vadd.f32 %v8899, %v8738
    %v8988 = vadd.f32 %v8900, %v8741
    %v8989 = vadd.f32 %v8901, %v8743
    %v8990 = vadd.f32 %v8902, %v8746
    %v8991 = vadd.f32 %v8903, %v8748
    %v8992 = vadd.f32 %v8904, %v8751
    %v8993 = vadd.f32 %v8905, %v8753
    %v8994 = vadd.f32 %v8906, %v8756
    %v8995 = vadd.f32 %v8907, %v8758
    %v8996 = vadd.f32 %v8908, %v8761
    %v8997 = vadd.f32 %v8909, %v8763
    %v8998 = vadd.f32 %v8910, %v8766
    %v8999 = vadd.f32 %v8911, %v8768
    %v9000 = vadd.f32 %v8912, %v8771
    %v9001 = vadd.f32 %v8913, %v8773
    %v9002 = vadd.f32 %v8914, %v8776
    %v9003 = vadd.f32 %v8915, %v8778
    %v9004 = vadd.f32 %v8916, %v8781
    %v9005 = vadd.f32 %v8917, %v8783
    %v9006 = vadd.f32 %v8918, %v8786
    %v9007 = vadd.f32 %v8919, %v8788
    %v9008 = vadd.f32 %v8920, %v8791
    %v9009 = vadd.f32 %v8921, %v8793
    %v9010 = vadd.f32 %v8922, %v8796
    %v9011 = vadd.f32 %v8923, %v8798
    %v9012 = vadd.f32 %v8924, %v8801
    %v9013 = vadd.f32 %v8925, %v8803
    %v9014 = vadd.f32 %v8926, %v8806
    %v9015 = vadd.f32 %v8927, %v8808
    %v9016 = vadd.f32 %v8928, %v8811
    %v9017 = vadd.f32 %v8929, %v8813
    %v9018 = vadd.f32 %v8930, %v8816
    %v9019 = vadd.f32 %v8931, %v8818
    %v9020 = vadd.f32 %v8932, %v8821
    %v9021 = vadd.f32 %v8933, %v8823
    %v9022 = vadd.f32 %v8934, %v8826
    %v9023 = vadd.f32 %v8935, %v8828
    %v9024 = vadd.f32 %v8936, %v8831
    %v9025 = vadd.f32 %v8937, %v8833
    %v9026 = vadd.f32 %v8938, %v8836
    %v9027 = vadd.f32 %v8939, %v8838
    %v9028 = vadd.f32 %v8940, %v8841
    %v9029 = vadd.f32 %v8941, %v8843
    %v9030 = vadd.f32 %v8942, %v8846
    %v9031 = vadd.f32 %v8943, %v8848
    %v9032 = vadd.f32 %v8944, %v8851
    %v9033 = vadd.f32 %v8945, %v8853
    %v9034 = vadd.f32 %v8946, %v8856
    %v9035 = vadd.f32 %v8947, %v8858
    %9036 = vst [vmem:[#allocation3] sm:$0xff] %v8948
    %9037 = vst [vmem:[#allocation3 + $0x8] sm:$0xff] %v8949
    %9038 = vst [vmem:[#allocation3 + $0x10] sm:$0xff] %v8950
    %9039 = vst [vmem:[#allocation3 + $0x18] sm:$0xff] %v8951
    %9040 = vst [vmem:[#allocation3 + $0x20] sm:$0xff] %v8952
    %9041 = vst [vmem:[#allocation3 + $0x28] sm:$0xff] %v8953
    %9042 = vst [vmem:[#allocation3 + $0x30] sm:$0xff] %v8954
    %9043 = vst [vmem:[#allocation3 + $0x38] sm:$0xff] %v8955
    %9044 = vst [vmem:[#allocation3 + $0x40] sm:$0xff] %v8956
    %9045 = vst [vmem:[#allocation3 + $0x48] sm:$0xff] %v8957
    %9046 = vst [vmem:[#allocation3 + $0x50] sm:$0xff] %v8958
    %9047 = vst [vmem:[#allocation3 + $0x58] sm:$0xff] %v8959
    %9048 = vst [vmem:[#allocation3 + $0x60] sm:$0xff] %v8960
    %9049 = vst [vmem:[#allocation3 + $0x68] sm:$0xff] %v8961
    %9050 = vst [vmem:[#allocation3 + $0x70] sm:$0xff] %v8962
    %9051 = vst [vmem:[#allocation3 + $0x78] sm:$0xff] %v8963
    %9052 = vst [vmem:[#allocation3 + $0x80] sm:$0xff] %v8964
    %9053 = vst [vmem:[#allocation3 + $0x88] sm:$0xff] %v8965
    %9054 = vst [vmem:[#allocation3 + $0x90] sm:$0xff] %v8966
    %9055 = vst [vmem:[#allocation3 + $0x98] sm:$0xff] %v8967
    %9056 = vst [vmem:[#allocation3 + $0xa0] sm:$0xff] %v8968
    %9057 = vst [vmem:[#allocation3 + $0xa8] sm:$0xff] %v8969
    %9058 = vst [vmem:[#allocation3 + $0xb0] sm:$0xff] %v8970
    %9059 = vst [vmem:[#allocation3 + $0xb8] sm:$0xff] %v8971
    %9060 = vst [vmem:[#allocation3 + $0xc0] sm:$0xff] %v8972
    %9061 = vst [vmem:[#allocation3 + $0xc8] sm:$0xff] %v8973
    %9062 = vst [vmem:[#allocation3 + $0xd0] sm:$0xff] %v8974
    %9063 = vst [vmem:[#allocation3 + $0xd8] sm:$0xff] %v8975
    %9064 = vst [vmem:[#allocation3 + $0xe0] sm:$0xff] %v8976
    %9065 = vst [vmem:[#allocation3 + $0xe8] sm:$0xff] %v8977
    %9066 = vst [vmem:[#allocation3 + $0xf0] sm:$0xff] %v8978
    %9067 = vst [vmem:[#allocation3 + $0xf8] sm:$0xff] %v8979
    %9068 = vst [vmem:[#allocation3 + $0x100] sm:$0xff] %v8980
    %9069 = vst [vmem:[#allocation3 + $0x108] sm:$0xff] %v8981
    %9070 = vst [vmem:[#allocation3 + $0x110] sm:$0xff] %v8982
    %9071 = vst [vmem:[#allocation3 + $0x118] sm:$0xff] %v8983
    %9072 = vst [vmem:[#allocation3 + $0x120] sm:$0xff] %v8984
    %9073 = vst [vmem:[#allocation3 + $0x128] sm:$0xff] %v8985
    %9074 = vst [vmem:[#allocation3 + $0x130] sm:$0xff] %v8986
    %9075 = vst [vmem:[#allocation3 + $0x138] sm:$0xff] %v8987
    %9076 = vst [vmem:[#allocation3 + $0x140] sm:$0xff] %v8988
    %9077 = vst [vmem:[#allocation3 + $0x148] sm:$0xff] %v8989
    %9078 = vst [vmem:[#allocation3 + $0x150] sm:$0xff] %v8990
    %9079 = vst [vmem:[#allocation3 + $0x158] sm:$0xff] %v8991
    %9080 = vst [vmem:[#allocation3 + $0x160] sm:$0xff] %v8992
    %9081 = vst [vmem:[#allocation3 + $0x168] sm:$0xff] %v8993
    %9082 = vst [vmem:[#allocation3 + $0x170] sm:$0xff] %v8994
    %9083 = vst [vmem:[#allocation3 + $0x178] sm:$0xff] %v8995
    %9084 = vst [vmem:[#allocation3 + $0x180] sm:$0xff] %v8996
    %9085 = vst [vmem:[#allocation3 + $0x188] sm:$0xff] %v8997
    %9086 = vst [vmem:[#allocation3 + $0x190] sm:$0xff] %v8998
    %9087 = vst [vmem:[#allocation3 + $0x198] sm:$0xff] %v8999
    %9088 = vst [vmem:[#allocation3 + $0x1a0] sm:$0xff] %v9000
    %9089 = vst [vmem:[#allocation3 + $0x1a8] sm:$0xff] %v9001
    %9090 = vst [vmem:[#allocation3 + $0x1b0] sm:$0xff] %v9002
    %9091 = vst [vmem:[#allocation3 + $0x1b8] sm:$0xff] %v9003
    %9092 = vst [vmem:[#allocation3 + $0x1c0] sm:$0xff] %v9004
    %9093 = vst [vmem:[#allocation3 + $0x1c8] sm:$0xff] %v9005
    %9094 = vst [vmem:[#allocation3 + $0x1d0] sm:$0xff] %v9006
    %9095 = vst [vmem:[#allocation3 + $0x1d8] sm:$0xff] %v9007
    %9096 = vst [vmem:[#allocation3 + $0x1e0] sm:$0xff] %v9008
    %9097 = vst [vmem:[#allocation3 + $0x1e8] sm:$0xff] %v9009
    %9098 = vst [vmem:[#allocation3 + $0x1f0] sm:$0xff] %v9010
    %9099 = vst [vmem:[#allocation3 + $0x1f8] sm:$0xff] %v9011
    %9100 = vst [vmem:[#allocation3 + $0x200] sm:$0xff] %v9012
    %9101 = vst [vmem:[#allocation3 + $0x208] sm:$0xff] %v9013
    %9102 = vst [vmem:[#allocation3 + $0x210] sm:$0xff] %v9014
    %9103 = vst [vmem:[#allocation3 + $0x218] sm:$0xff] %v9015
    %9104 = vst [vmem:[#allocation3 + $0x220] sm:$0xff] %v9016
    %9105 = vst [vmem:[#allocation3 + $0x228] sm:$0xff] %v9017
    %9106 = vst [vmem:[#allocation3 + $0x230] sm:$0xff] %v9018
    %9107 = vst [vmem:[#allocation3 + $0x238] sm:$0xff] %v9019
    %9108 = vst [vmem:[#allocation3 + $0x240] sm:$0xff] %v9020
    %9109 = vst [vmem:[#allocation3 + $0x248] sm:$0xff] %v9021
    %9110 = vst [vmem:[#allocation3 + $0x250] sm:$0xff] %v9022
    %9111 = vst [vmem:[#allocation3 + $0x258] sm:$0xff] %v9023
    %9112 = vst [vmem:[#allocation3 + $0x260] sm:$0xff] %v9024
    %9113 = vst [vmem:[#allocation3 + $0x268] sm:$0xff] %v9025
    %9114 = vst [vmem:[#allocation3 + $0x270] sm:$0xff] %v9026
    %9115 = vst [vmem:[#allocation3 + $0x278] sm:$0xff] %v9027
    %9116 = vst [vmem:[#allocation3 + $0x280] sm:$0xff] %v9028
    %9117 = vst [vmem:[#allocation3 + $0x288] sm:$0xff] %v9029
    %9118 = vst [vmem:[#allocation3 + $0x290] sm:$0xff] %v9030
    %9119 = vst [vmem:[#allocation3 + $0x298] sm:$0xff] %v9031
    %9120 = vst [vmem:[#allocation3 + $0x2a0] sm:$0xff] %v9032
    %9121 = vst [vmem:[#allocation3 + $0x2a8] sm:$0xff] %v9033
    %9122 = vst [vmem:[#allocation3 + $0x2b0] sm:$0xff] %v9034
    %9123 = vst [vmem:[#allocation3 + $0x2b8] sm:$0xff] %v9035
    %v9124 = vld [vmem:[#allocation2 + $0x10] sm:$0x8]
    %v9125 = vld [vmem:[#allocation2 + $0x14] sm:$0xf]
    %v9126 = vld [vmem:[#allocation2 + $0x18] sm:$0xf]
    %v9127 = vld [vmem:[#allocation2 + $0x1c] sm:$0xf]
    %v9128 = vld [vmem:[#allocation2 + $0x20] sm:$0xf]
    %v9129 = vld [vmem:[#allocation2 + $0x24] sm:$0xf]
    %v9130 = vld [vmem:[#allocation2 + $0x28] sm:$0xf]
    %v9131 = vld [vmem:[#allocation2 + $0x2c] sm:$0xf]
    %v9132 = vld [vmem:[#allocation2 + $0x30] sm:$0xf]
    %v9133 = vld [vmem:[#allocation2 + $0x34] sm:$0xf]
    %v9134 = vld [vmem:[#allocation2 + $0x38] sm:$0xf]
    %v9135 = vld [vmem:[#allocation2 + $0x3c] sm:$0xf]
    %v9136 = vld [vmem:[#allocation2 + $0x40] sm:$0xf]
    %v9137 = vld [vmem:[#allocation2 + $0x44] sm:$0xf]
    %v9138 = vld [vmem:[#allocation2 + $0x48] sm:$0xf]
    %v9139 = vld [vmem:[#allocation2 + $0x4c] sm:$0xf]
    %v9140 = vld [vmem:[#allocation2 + $0x50] sm:$0xf]
    %v9141 = vld [vmem:[#allocation2 + $0x54] sm:$0xf]
    %v9142 = vld [vmem:[#allocation2 + $0x58] sm:$0xf]
    %v9143 = vld [vmem:[#allocation2 + $0x5c] sm:$0xf]
    %v9144 = vld [vmem:[#allocation2 + $0x60] sm:$0xf]
    %v9145 = vld [vmem:[#allocation2 + $0x64] sm:$0xf]
    %v9146 = vld [vmem:[#allocation2 + $0x68] sm:$0xf]
    %v9147 = vld [vmem:[#allocation2 + $0x6c] sm:$0xf]
    %v9148 = vld [vmem:[#allocation2 + $0x70] sm:$0xf]
    %v9149 = vld [vmem:[#allocation2 + $0x74] sm:$0xf]
    %v9150 = vld [vmem:[#allocation2 + $0x78] sm:$0xf]
    %v9151 = vld [vmem:[#allocation2 + $0x7c] sm:$0xf]
    %v9152 = vld [vmem:[#allocation2 + $0x80] sm:$0xf]
    %v9153 = vld [vmem:[#allocation2 + $0x84] sm:$0xf]
    %v9154 = vld [vmem:[#allocation2 + $0x88] sm:$0xf]
    %v9155 = vld [vmem:[#allocation2 + $0x8c] sm:$0xf]
    %v9156 = vld [vmem:[#allocation2 + $0x90] sm:$0xf]
    %v9157 = vld [vmem:[#allocation2 + $0x94] sm:$0xf]
    %v9158 = vld [vmem:[#allocation2 + $0x98] sm:$0xf]
    %v9159 = vld [vmem:[#allocation2 + $0x9c] sm:$0xf]
    %v9160 = vld [vmem:[#allocation2 + $0xa0] sm:$0xf]
    %v9161 = vld [vmem:[#allocation2 + $0xa4] sm:$0xf]
    %v9162 = vld [vmem:[#allocation2 + $0xa8] sm:$0xf]
    %v9163 = vld [vmem:[#allocation2 + $0xac] sm:$0xf]
    %v9164 = vld [vmem:[#allocation2 + $0xb0] sm:$0xf]
    %v9165 = vld [vmem:[#allocation2 + $0xb4] sm:$0xf]
    %v9166 = vld [vmem:[#allocation2 + $0xb8] sm:$0xf]
    %v9167 = vld [vmem:[#allocation2 + $0xbc] sm:$0xf]
    %v9168 = vld [vmem:[#allocation2 + $0xc0] sm:$0xf]
    %v9169 = vld [vmem:[#allocation2 + $0xc4] sm:$0xf]
    %v9170 = vld [vmem:[#allocation2 + $0xc8] sm:$0xf]
    %v9171 = vld [vmem:[#allocation2 + $0xcc] sm:$0xf]
    %v9172 = vld [vmem:[#allocation2 + $0xd0] sm:$0xf]
    %v9173 = vld [vmem:[#allocation2 + $0xd4] sm:$0xf]
    %v9174 = vld [vmem:[#allocation2 + $0xd8] sm:$0xf]
    %v9175 = vld [vmem:[#allocation2 + $0xdc] sm:$0xf]
    %v9176 = vld [vmem:[#allocation2 + $0xe0] sm:$0xf]
    %v9177 = vld [vmem:[#allocation2 + $0xe4] sm:$0xf]
    %v9178 = vld [vmem:[#allocation2 + $0xe8] sm:$0xf]
    %v9179 = vld [vmem:[#allocation2 + $0xec] sm:$0xf]
    %v9180 = vld [vmem:[#allocation2 + $0xf0] sm:$0xf]
    %v9181 = vld [vmem:[#allocation2 + $0xf4] sm:$0xf]
    %v9182 = vld [vmem:[#allocation2 + $0xf8] sm:$0xf]
    %v9183 = vld [vmem:[#allocation2 + $0xfc] sm:$0xf]
    %v9184 = vld [vmem:[#allocation2 + $0x100] sm:$0xf]
    %v9185 = vld [vmem:[#allocation2 + $0x104] sm:$0xf]
    %v9186 = vld [vmem:[#allocation2 + $0x108] sm:$0xf]
    %v9187 = vld [vmem:[#allocation2 + $0x10c] sm:$0xf]
    %v9188 = vld [vmem:[#allocation2 + $0x110] sm:$0xf]
    %v9189 = vld [vmem:[#allocation2 + $0x114] sm:$0xf]
    %v9190 = vld [vmem:[#allocation2 + $0x118] sm:$0xf]
    %v9191 = vld [vmem:[#allocation2 + $0x11c] sm:$0xf]
    %v9192 = vld [vmem:[#allocation2 + $0x120] sm:$0xf]
    %v9193 = vld [vmem:[#allocation2 + $0x124] sm:$0xf]
    %v9194 = vld [vmem:[#allocation2 + $0x128] sm:$0xf]
    %v9195 = vld [vmem:[#allocation2 + $0x12c] sm:$0xf]
    %v9196 = vld [vmem:[#allocation2 + $0x130] sm:$0xf]
    %v9197 = vld [vmem:[#allocation2 + $0x134] sm:$0xf]
    %v9198 = vld [vmem:[#allocation2 + $0x138] sm:$0xf]
    %v9199 = vld [vmem:[#allocation2 + $0x13c] sm:$0xf]
    %v9200 = vld [vmem:[#allocation2 + $0x140] sm:$0xf]
    %v9201 = vld [vmem:[#allocation2 + $0x144] sm:$0xf]
    %v9202 = vld [vmem:[#allocation2 + $0x148] sm:$0xf]
    %v9203 = vld [vmem:[#allocation2 + $0x14c] sm:$0xf]
    %v9204 = vld [vmem:[#allocation2 + $0x150] sm:$0xf]
    %v9205 = vld [vmem:[#allocation2 + $0x154] sm:$0xf]
    %v9206 = vld [vmem:[#allocation2 + $0x158] sm:$0xf]
    %v9207 = vld [vmem:[#allocation2 + $0x15c] sm:$0xf]
    %v9208 = vld [vmem:[#allocation2 + $0x160] sm:$0xf]
    %v9209 = vld [vmem:[#allocation2 + $0x164] sm:$0xf]
    %v9210 = vld [vmem:[#allocation2 + $0x168] sm:$0xf]
    %v9211 = vld [vmem:[#allocation2 + $0x16c] sm:$0xf]
    %v9212 = vld [vmem:[#allocation2 + $0x170] sm:$0x7]
    %s9213 = scalar_lea.vmem %s2, 16
    %v9214 = vld [vmem:[%s9213] sm:$0x3]
    %v9304 = vunpack.c.l.b16 %v9124
    %v9305 = vunpack.c.l.b16 %v9125
    %v9306 = vunpack.c.l.b16 %v9126
    %v9307 = vunpack.c.l.b16 %v9127
    %v9308 = vunpack.c.l.b16 %v9128
    %v9309 = vunpack.c.l.b16 %v9129
    %v9310 = vunpack.c.l.b16 %v9130
    %v9311 = vunpack.c.l.b16 %v9131
    %v9312 = vunpack.c.l.b16 %v9132
    %v9313 = vunpack.c.l.b16 %v9133
    %v9314 = vunpack.c.l.b16 %v9134
    %v9315 = vunpack.c.l.b16 %v9135
    %v9316 = vunpack.c.l.b16 %v9136
    %v9317 = vunpack.c.l.b16 %v9137
    %v9318 = vunpack.c.l.b16 %v9138
    %v9319 = vunpack.c.l.b16 %v9139
    %v9320 = vunpack.c.l.b16 %v9140
    %v9321 = vunpack.c.l.b16 %v9141
    %v9322 = vunpack.c.l.b16 %v9142
    %v9323 = vunpack.c.l.b16 %v9143
    %v9324 = vunpack.c.l.b16 %v9144
    %v9325 = vunpack.c.l.b16 %v9145
    %v9326 = vunpack.c.l.b16 %v9146
    %v9327 = vunpack.c.l.b16 %v9147
    %v9328 = vunpack.c.l.b16 %v9148
    %v9329 = vunpack.c.l.b16 %v9149
    %v9330 = vunpack.c.l.b16 %v9150
    %v9331 = vunpack.c.l.b16 %v9151
    %v9332 = vunpack.c.l.b16 %v9152
    %v9333 = vunpack.c.l.b16 %v9153
    %v9334 = vunpack.c.l.b16 %v9154
    %v9335 = vunpack.c.l.b16 %v9155
    %v9336 = vunpack.c.l.b16 %v9156
    %v9337 = vunpack.c.l.b16 %v9157
    %v9338 = vunpack.c.l.b16 %v9158
    %v9339 = vunpack.c.l.b16 %v9159
    %v9340 = vunpack.c.l.b16 %v9160
    %v9341 = vunpack.c.l.b16 %v9161
    %v9342 = vunpack.c.l.b16 %v9162
    %v9343 = vunpack.c.l.b16 %v9163
    %v9344 = vunpack.c.l.b16 %v9164
    %v9345 = vunpack.c.l.b16 %v9165
    %v9346 = vunpack.c.l.b16 %v9166
    %v9347 = vunpack.c.l.b16 %v9167
    %v9348 = vunpack.c.l.b16 %v9168
    %v9349 = vunpack.c.l.b16 %v9169
    %v9350 = vunpack.c.l.b16 %v9170
    %v9351 = vunpack.c.l.b16 %v9171
    %v9352 = vunpack.c.l.b16 %v9172
    %v9353 = vunpack.c.l.b16 %v9173
    %v9354 = vunpack.c.l.b16 %v9174
    %v9355 = vunpack.c.l.b16 %v9175
    %v9356 = vunpack.c.l.b16 %v9176
    %v9357 = vunpack.c.l.b16 %v9177
    %v9358 = vunpack.c.l.b16 %v9178
    %v9359 = vunpack.c.l.b16 %v9179
    %v9360 = vunpack.c.l.b16 %v9180
    %v9361 = vunpack.c.l.b16 %v9181
    %v9362 = vunpack.c.l.b16 %v9182
    %v9363 = vunpack.c.l.b16 %v9183
    %v9364 = vunpack.c.l.b16 %v9184
    %v9365 = vunpack.c.l.b16 %v9185
    %v9366 = vunpack.c.l.b16 %v9186
    %v9367 = vunpack.c.l.b16 %v9187
    %v9368 = vunpack.c.l.b16 %v9188
    %v9369 = vunpack.c.l.b16 %v9189
    %v9370 = vunpack.c.l.b16 %v9190
    %v9371 = vunpack.c.l.b16 %v9191
    %v9372 = vunpack.c.l.b16 %v9192
    %v9373 = vunpack.c.l.b16 %v9193
    %v9374 = vunpack.c.l.b16 %v9194
    %v9375 = vunpack.c.l.b16 %v9195
    %v9376 = vunpack.c.l.b16 %v9196
    %v9377 = vunpack.c.l.b16 %v9197
    %v9378 = vunpack.c.l.b16 %v9198
    %v9379 = vunpack.c.l.b16 %v9199
    %v9380 = vunpack.c.l.b16 %v9200
    %v9381 = vunpack.c.l.b16 %v9201
    %v9382 = vunpack.c.l.b16 %v9202
    %v9383 = vunpack.c.l.b16 %v9203
    %v9384 = vunpack.c.l.b16 %v9204
    %v9385 = vunpack.c.l.b16 %v9205
    %v9386 = vunpack.c.l.b16 %v9206
    %v9387 = vunpack.c.l.b16 %v9207
    %v9388 = vunpack.c.l.b16 %v9208
    %v9389 = vunpack.c.l.b16 %v9209
    %v9390 = vunpack.c.l.b16 %v9210
    %v9391 = vunpack.c.l.b16 %v9211
    %v9392 = vunpack.c.l.b16 %v9212
    %v9393 = vpack.c.b16 %v9305, %v9304
    %v9394 = vpack.c.b16 %v9307, %v9306
    %v9395 = vpack.c.b16 %v9309, %v9308
    %v9396 = vpack.c.b16 %v9311, %v9310
    %v9397 = vpack.c.b16 %v9313, %v9312
    %v9398 = vpack.c.b16 %v9315, %v9314
    %v9399 = vpack.c.b16 %v9317, %v9316
    %v9400 = vpack.c.b16 %v9319, %v9318
    %v9401 = vpack.c.b16 %v9321, %v9320
    %v9402 = vpack.c.b16 %v9323, %v9322
    %v9403 = vpack.c.b16 %v9325, %v9324
    %v9404 = vpack.c.b16 %v9327, %v9326
    %v9405 = vpack.c.b16 %v9329, %v9328
    %v9406 = vpack.c.b16 %v9331, %v9330
    %v9407 = vpack.c.b16 %v9333, %v9332
    %v9408 = vpack.c.b16 %v9335, %v9334
    %v9409 = vpack.c.b16 %v9337, %v9336
    %v9410 = vpack.c.b16 %v9339, %v9338
    %v9411 = vpack.c.b16 %v9341, %v9340
    %v9412 = vpack.c.b16 %v9343, %v9342
    %v9413 = vpack.c.b16 %v9345, %v9344
    %v9414 = vpack.c.b16 %v9347, %v9346
    %v9415 = vpack.c.b16 %v9349, %v9348
    %v9416 = vpack.c.b16 %v9351, %v9350
    %v9417 = vpack.c.b16 %v9353, %v9352
    %v9418 = vpack.c.b16 %v9355, %v9354
    %v9419 = vpack.c.b16 %v9357, %v9356
    %v9420 = vpack.c.b16 %v9359, %v9358
    %v9421 = vpack.c.b16 %v9361, %v9360
    %v9422 = vpack.c.b16 %v9363, %v9362
    %v9423 = vpack.c.b16 %v9365, %v9364
    %v9424 = vpack.c.b16 %v9367, %v9366
    %v9425 = vpack.c.b16 %v9369, %v9368
    %v9426 = vpack.c.b16 %v9371, %v9370
    %v9427 = vpack.c.b16 %v9373, %v9372
    %v9428 = vpack.c.b16 %v9375, %v9374
    %v9429 = vpack.c.b16 %v9377, %v9376
    %v9430 = vpack.c.b16 %v9379, %v9378
    %v9431 = vpack.c.b16 %v9381, %v9380
    %v9432 = vpack.c.b16 %v9383, %v9382
    %v9433 = vpack.c.b16 %v9385, %v9384
    %v9434 = vpack.c.b16 %v9387, %v9386
    %v9435 = vpack.c.b16 %v9389, %v9388
    %v9436 = vpack.c.b16 %v9391, %v9390
    %v9437 = vpack.c.b16 %v9392, %v9392
    %vm9438 = vcmask 1044480
    %v9439 = vrot.slane %v9393, 3
    %v9440 = vrot.slane %v9394, 3
    %v9441 = vsel %vm9438, %v9439, %v9440
    %v9442 = vrot.slane %v9395, 3
    %v9443 = vsel %vm9438, %v9440, %v9442
    %v9444 = vrot.slane %v9396, 3
    %v9445 = vsel %vm9438, %v9442, %v9444
    %v9446 = vrot.slane %v9397, 3
    %v9447 = vsel %vm9438, %v9444, %v9446
    %v9448 = vrot.slane %v9398, 3
    %v9449 = vsel %vm9438, %v9446, %v9448
    %v9450 = vrot.slane %v9399, 3
    %v9451 = vsel %vm9438, %v9448, %v9450
    %v9452 = vrot.slane %v9400, 3
    %v9453 = vsel %vm9438, %v9450, %v9452
    %v9454 = vrot.slane %v9401, 3
    %v9455 = vsel %vm9438, %v9452, %v9454
    %v9456 = vrot.slane %v9402, 3
    %v9457 = vsel %vm9438, %v9454, %v9456
    %v9458 = vrot.slane %v9403, 3
    %v9459 = vsel %vm9438, %v9456, %v9458
    %v9460 = vrot.slane %v9404, 3
    %v9461 = vsel %vm9438, %v9458, %v9460
    %v9462 = vrot.slane %v9405, 3
    %v9463 = vsel %vm9438, %v9460, %v9462
    %v9464 = vrot.slane %v9406, 3
    %v9465 = vsel %vm9438, %v9462, %v9464
    %v9466 = vrot.slane %v9407, 3
    %v9467 = vsel %vm9438, %v9464, %v9466
    %v9468 = vrot.slane %v9408, 3
    %v9469 = vsel %vm9438, %v9466, %v9468
    %v9470 = vrot.slane %v9409, 3
    %v9471 = vsel %vm9438, %v9468, %v9470
    %v9472 = vrot.slane %v9410, 3
    %v9473 = vsel %vm9438, %v9470, %v9472
    %v9474 = vrot.slane %v9411, 3
    %v9475 = vsel %vm9438, %v9472, %v9474
    %v9476 = vrot.slane %v9412, 3
    %v9477 = vsel %vm9438, %v9474, %v9476
    %v9478 = vrot.slane %v9413, 3
    %v9479 = vsel %vm9438, %v9476, %v9478
    %v9480 = vrot.slane %v9414, 3
    %v9481 = vsel %vm9438, %v9478, %v9480
    %v9482 = vrot.slane %v9415, 3
    %v9483 = vsel %vm9438, %v9480, %v9482
    %v9484 = vrot.slane %v9416, 3
    %v9485 = vsel %vm9438, %v9482, %v9484
    %v9486 = vrot.slane %v9417, 3
    %v9487 = vsel %vm9438, %v9484, %v9486
    %v9488 = vrot.slane %v9418, 3
    %v9489 = vsel %vm9438, %v9486, %v9488
    %v9490 = vrot.slane %v9419, 3
    %v9491 = vsel %vm9438, %v9488, %v9490
    %v9492 = vrot.slane %v9420, 3
    %v9493 = vsel %vm9438, %v9490, %v9492
    %v9494 = vrot.slane %v9421, 3
    %v9495 = vsel %vm9438, %v9492, %v9494
    %v9496 = vrot.slane %v9422, 3
    %v9497 = vsel %vm9438, %v9494, %v9496
    %v9498 = vrot.slane %v9423, 3
    %v9499 = vsel %vm9438, %v9496, %v9498
    %v9500 = vrot.slane %v9424, 3
    %v9501 = vsel %vm9438, %v9498, %v9500
    %v9502 = vrot.slane %v9425, 3
    %v9503 = vsel %vm9438, %v9500, %v9502
    %v9504 = vrot.slane %v9426, 3
    %v9505 = vsel %vm9438, %v9502, %v9504
    %v9506 = vrot.slane %v9427, 3
    %v9507 = vsel %vm9438, %v9504, %v9506
    %v9508 = vrot.slane %v9428, 3
    %v9509 = vsel %vm9438, %v9506, %v9508
    %v9510 = vrot.slane %v9429, 3
    %v9511 = vsel %vm9438, %v9508, %v9510
    %v9512 = vrot.slane %v9430, 3
    %v9513 = vsel %vm9438, %v9510, %v9512
    %v9514 = vrot.slane %v9431, 3
    %v9515 = vsel %vm9438, %v9512, %v9514
    %v9516 = vrot.slane %v9432, 3
    %v9517 = vsel %vm9438, %v9514, %v9516
    %v9518 = vrot.slane %v9433, 3
    %v9519 = vsel %vm9438, %v9516, %v9518
    %v9520 = vrot.slane %v9434, 3
    %v9521 = vsel %vm9438, %v9518, %v9520
    %v9522 = vrot.slane %v9435, 3
    %v9523 = vsel %vm9438, %v9520, %v9522
    %v9524 = vrot.slane %v9436, 3
    %v9525 = vsel %vm9438, %v9522, %v9524
    %v9526 = vrot.slane %v9437, 3
    %v9527 = vsel %vm9438, %v9524, %v9526
    %v9529 = vsel %vm551, %v9441, 0
    %v9532 = vsel %vm551, %v9443, 0
    %v9535 = vsel %vm551, %v9445, 0
    %v9538 = vsel %vm551, %v9447, 0
    %v9541 = vsel %vm551, %v9449, 0
    %v9544 = vsel %vm551, %v9451, 0
    %v9547 = vsel %vm551, %v9453, 0
    %v9550 = vsel %vm551, %v9455, 0
    %v9553 = vsel %vm551, %v9457, 0
    %v9556 = vsel %vm551, %v9459, 0
    %v9559 = vsel %vm551, %v9461, 0
    %v9562 = vsel %vm551, %v9463, 0
    %v9565 = vsel %vm551, %v9465, 0
    %v9568 = vsel %vm551, %v9467, 0
    %v9571 = vsel %vm551, %v9469, 0
    %v9574 = vsel %vm551, %v9471, 0
    %v9577 = vsel %vm551, %v9473, 0
    %v9580 = vsel %vm551, %v9475, 0
    %v9583 = vsel %vm551, %v9477, 0
    %v9586 = vsel %vm551, %v9479, 0
    %v9589 = vsel %vm551, %v9481, 0
    %v9592 = vsel %vm551, %v9483, 0
    %v9595 = vsel %vm551, %v9485, 0
    %v9598 = vsel %vm551, %v9487, 0
    %v9601 = vsel %vm551, %v9489, 0
    %v9604 = vsel %vm551, %v9491, 0
    %v9607 = vsel %vm551, %v9493, 0
    %v9610 = vsel %vm551, %v9495, 0
    %v9613 = vsel %vm551, %v9497, 0
    %v9616 = vsel %vm551, %v9499, 0
    %v9619 = vsel %vm551, %v9501, 0
    %v9622 = vsel %vm551, %v9503, 0
    %v9625 = vsel %vm551, %v9505, 0
    %v9628 = vsel %vm551, %v9507, 0
    %v9631 = vsel %vm551, %v9509, 0
    %v9634 = vsel %vm551, %v9511, 0
    %v9637 = vsel %vm551, %v9513, 0
    %v9640 = vsel %vm551, %v9515, 0
    %v9643 = vsel %vm551, %v9517, 0
    %v9646 = vsel %vm551, %v9519, 0
    %v9649 = vsel %vm551, %v9521, 0
    %v9652 = vsel %vm551, %v9523, 0
    %v9655 = vsel %vm551, %v9525, 0
    %v9658 = vsel %vm551, %v9527, 0
    %v9661 = vsel %vm684, %v9214, 0
    %9663 = vmatpush.bf16.msra.mxu0 0
    %9664 = vmatpush.bf16.msra.mxu0 0
    %9665 = vmatpush.bf16.msra.mxu0 0
    %9666 = vmatpush.bf16.msra.mxu0 0
    %9667 = vmatpush.bf16.msra.mxu0 0
    %9668 = vmatpush.bf16.msra.mxu0 0
    %9669 = vmatpush.bf16.msra.mxu0 0
    %9670 = vmatpush.bf16.msra.mxu0 %v9661
    %9671 = vmatmul.bf16.gmra.mxu0 %v9529
    %v9672 = vpop.f32.mrf.mxu0
    %v9673 = vadd.f32 0.0, %v9672
    %v9674 = vpop.f32.mrf.mxu0
    %v9675 = vadd.f32 0.0, %v9674
    %9676 = vmatmul.bf16.gmra.mxu0 %v9532
    %v9677 = vpop.f32.mrf.mxu0
    %v9678 = vadd.f32 0.0, %v9677
    %v9679 = vpop.f32.mrf.mxu0
    %v9680 = vadd.f32 0.0, %v9679
    %9681 = vmatmul.bf16.gmra.mxu0 %v9535
    %v9682 = vpop.f32.mrf.mxu0
    %v9683 = vadd.f32 0.0, %v9682
    %v9684 = vpop.f32.mrf.mxu0
    %v9685 = vadd.f32 0.0, %v9684
    %9686 = vmatmul.bf16.gmra.mxu0 %v9538
    %v9687 = vpop.f32.mrf.mxu0
    %v9688 = vadd.f32 0.0, %v9687
    %v9689 = vpop.f32.mrf.mxu0
    %v9690 = vadd.f32 0.0, %v9689
    %9691 = vmatmul.bf16.gmra.mxu0 %v9541
    %v9692 = vpop.f32.mrf.mxu0
    %v9693 = vadd.f32 0.0, %v9692
    %v9694 = vpop.f32.mrf.mxu0
    %v9695 = vadd.f32 0.0, %v9694
    %9696 = vmatmul.bf16.gmra.mxu0 %v9544
    %v9697 = vpop.f32.mrf.mxu0
    %v9698 = vadd.f32 0.0, %v9697
    %v9699 = vpop.f32.mrf.mxu0
    %v9700 = vadd.f32 0.0, %v9699
    %9701 = vmatmul.bf16.gmra.mxu0 %v9547
    %v9702 = vpop.f32.mrf.mxu0
    %v9703 = vadd.f32 0.0, %v9702
    %v9704 = vpop.f32.mrf.mxu0
    %v9705 = vadd.f32 0.0, %v9704
    %9706 = vmatmul.bf16.gmra.mxu0 %v9550
    %v9707 = vpop.f32.mrf.mxu0
    %v9708 = vadd.f32 0.0, %v9707
    %v9709 = vpop.f32.mrf.mxu0
    %v9710 = vadd.f32 0.0, %v9709
    %9711 = vmatmul.bf16.gmra.mxu0 %v9553
    %v9712 = vpop.f32.mrf.mxu0
    %v9713 = vadd.f32 0.0, %v9712
    %v9714 = vpop.f32.mrf.mxu0
    %v9715 = vadd.f32 0.0, %v9714
    %9716 = vmatmul.bf16.gmra.mxu0 %v9556
    %v9717 = vpop.f32.mrf.mxu0
    %v9718 = vadd.f32 0.0, %v9717
    %v9719 = vpop.f32.mrf.mxu0
    %v9720 = vadd.f32 0.0, %v9719
    %9721 = vmatmul.bf16.gmra.mxu0 %v9559
    %v9722 = vpop.f32.mrf.mxu0
    %v9723 = vadd.f32 0.0, %v9722
    %v9724 = vpop.f32.mrf.mxu0
    %v9725 = vadd.f32 0.0, %v9724
    %9726 = vmatmul.bf16.gmra.mxu0 %v9562
    %v9727 = vpop.f32.mrf.mxu0
    %v9728 = vadd.f32 0.0, %v9727
    %v9729 = vpop.f32.mrf.mxu0
    %v9730 = vadd.f32 0.0, %v9729
    %9731 = vmatmul.bf16.gmra.mxu0 %v9565
    %v9732 = vpop.f32.mrf.mxu0
    %v9733 = vadd.f32 0.0, %v9732
    %v9734 = vpop.f32.mrf.mxu0
    %v9735 = vadd.f32 0.0, %v9734
    %9736 = vmatmul.bf16.gmra.mxu0 %v9568
    %v9737 = vpop.f32.mrf.mxu0
    %v9738 = vadd.f32 0.0, %v9737
    %v9739 = vpop.f32.mrf.mxu0
    %v9740 = vadd.f32 0.0, %v9739
    %9741 = vmatmul.bf16.gmra.mxu0 %v9571
    %v9742 = vpop.f32.mrf.mxu0
    %v9743 = vadd.f32 0.0, %v9742
    %v9744 = vpop.f32.mrf.mxu0
    %v9745 = vadd.f32 0.0, %v9744
    %9746 = vmatmul.bf16.gmra.mxu0 %v9574
    %v9747 = vpop.f32.mrf.mxu0
    %v9748 = vadd.f32 0.0, %v9747
    %v9749 = vpop.f32.mrf.mxu0
    %v9750 = vadd.f32 0.0, %v9749
    %9751 = vmatmul.bf16.gmra.mxu0 %v9577
    %v9752 = vpop.f32.mrf.mxu0
    %v9753 = vadd.f32 0.0, %v9752
    %v9754 = vpop.f32.mrf.mxu0
    %v9755 = vadd.f32 0.0, %v9754
    %9756 = vmatmul.bf16.gmra.mxu0 %v9580
    %v9757 = vpop.f32.mrf.mxu0
    %v9758 = vadd.f32 0.0, %v9757
    %v9759 = vpop.f32.mrf.mxu0
    %v9760 = vadd.f32 0.0, %v9759
    %9761 = vmatmul.bf16.gmra.mxu0 %v9583
    %v9762 = vpop.f32.mrf.mxu0
    %v9763 = vadd.f32 0.0, %v9762
    %v9764 = vpop.f32.mrf.mxu0
    %v9765 = vadd.f32 0.0, %v9764
    %9766 = vmatmul.bf16.gmra.mxu0 %v9586
    %v9767 = vpop.f32.mrf.mxu0
    %v9768 = vadd.f32 0.0, %v9767
    %v9769 = vpop.f32.mrf.mxu0
    %v9770 = vadd.f32 0.0, %v9769
    %9771 = vmatmul.bf16.gmra.mxu0 %v9589
    %v9772 = vpop.f32.mrf.mxu0
    %v9773 = vadd.f32 0.0, %v9772
    %v9774 = vpop.f32.mrf.mxu0
    %v9775 = vadd.f32 0.0, %v9774
    %9776 = vmatmul.bf16.gmra.mxu0 %v9592
    %v9777 = vpop.f32.mrf.mxu0
    %v9778 = vadd.f32 0.0, %v9777
    %v9779 = vpop.f32.mrf.mxu0
    %v9780 = vadd.f32 0.0, %v9779
    %9781 = vmatmul.bf16.gmra.mxu0 %v9595
    %v9782 = vpop.f32.mrf.mxu0
    %v9783 = vadd.f32 0.0, %v9782
    %v9784 = vpop.f32.mrf.mxu0
    %v9785 = vadd.f32 0.0, %v9784
    %9786 = vmatmul.bf16.gmra.mxu0 %v9598
    %v9787 = vpop.f32.mrf.mxu0
    %v9788 = vadd.f32 0.0, %v9787
    %v9789 = vpop.f32.mrf.mxu0
    %v9790 = vadd.f32 0.0, %v9789
    %9791 = vmatmul.bf16.gmra.mxu0 %v9601
    %v9792 = vpop.f32.mrf.mxu0
    %v9793 = vadd.f32 0.0, %v9792
    %v9794 = vpop.f32.mrf.mxu0
    %v9795 = vadd.f32 0.0, %v9794
    %9796 = vmatmul.bf16.gmra.mxu0 %v9604
    %v9797 = vpop.f32.mrf.mxu0
    %v9798 = vadd.f32 0.0, %v9797
    %v9799 = vpop.f32.mrf.mxu0
    %v9800 = vadd.f32 0.0, %v9799
    %9801 = vmatmul.bf16.gmra.mxu0 %v9607
    %v9802 = vpop.f32.mrf.mxu0
    %v9803 = vadd.f32 0.0, %v9802
    %v9804 = vpop.f32.mrf.mxu0
    %v9805 = vadd.f32 0.0, %v9804
    %9806 = vmatmul.bf16.gmra.mxu0 %v9610
    %v9807 = vpop.f32.mrf.mxu0
    %v9808 = vadd.f32 0.0, %v9807
    %v9809 = vpop.f32.mrf.mxu0
    %v9810 = vadd.f32 0.0, %v9809
    %9811 = vmatmul.bf16.gmra.mxu0 %v9613
    %v9812 = vpop.f32.mrf.mxu0
    %v9813 = vadd.f32 0.0, %v9812
    %v9814 = vpop.f32.mrf.mxu0
    %v9815 = vadd.f32 0.0, %v9814
    %9816 = vmatmul.bf16.gmra.mxu0 %v9616
    %v9817 = vpop.f32.mrf.mxu0
    %v9818 = vadd.f32 0.0, %v9817
    %v9819 = vpop.f32.mrf.mxu0
    %v9820 = vadd.f32 0.0, %v9819
    %9821 = vmatmul.bf16.gmra.mxu0 %v9619
    %v9822 = vpop.f32.mrf.mxu0
    %v9823 = vadd.f32 0.0, %v9822
    %v9824 = vpop.f32.mrf.mxu0
    %v9825 = vadd.f32 0.0, %v9824
    %9826 = vmatmul.bf16.gmra.mxu0 %v9622
    %v9827 = vpop.f32.mrf.mxu0
    %v9828 = vadd.f32 0.0, %v9827
    %v9829 = vpop.f32.mrf.mxu0
    %v9830 = vadd.f32 0.0, %v9829
    %9831 = vmatmul.bf16.gmra.mxu0 %v9625
    %v9832 = vpop.f32.mrf.mxu0
    %v9833 = vadd.f32 0.0, %v9832
    %v9834 = vpop.f32.mrf.mxu0
    %v9835 = vadd.f32 0.0, %v9834
    %9836 = vmatmul.bf16.gmra.mxu0 %v9628
    %v9837 = vpop.f32.mrf.mxu0
    %v9838 = vadd.f32 0.0, %v9837
    %v9839 = vpop.f32.mrf.mxu0
    %v9840 = vadd.f32 0.0, %v9839
    %9841 = vmatmul.bf16.gmra.mxu0 %v9631
    %v9842 = vpop.f32.mrf.mxu0
    %v9843 = vadd.f32 0.0, %v9842
    %v9844 = vpop.f32.mrf.mxu0
    %v9845 = vadd.f32 0.0, %v9844
    %9846 = vmatmul.bf16.gmra.mxu0 %v9634
    %v9847 = vpop.f32.mrf.mxu0
    %v9848 = vadd.f32 0.0, %v9847
    %v9849 = vpop.f32.mrf.mxu0
    %v9850 = vadd.f32 0.0, %v9849
    %9851 = vmatmul.bf16.gmra.mxu0 %v9637
    %v9852 = vpop.f32.mrf.mxu0
    %v9853 = vadd.f32 0.0, %v9852
    %v9854 = vpop.f32.mrf.mxu0
    %v9855 = vadd.f32 0.0, %v9854
    %9856 = vmatmul.bf16.gmra.mxu0 %v9640
    %v9857 = vpop.f32.mrf.mxu0
    %v9858 = vadd.f32 0.0, %v9857
    %v9859 = vpop.f32.mrf.mxu0
    %v9860 = vadd.f32 0.0, %v9859
    %9861 = vmatmul.bf16.gmra.mxu0 %v9643
    %v9862 = vpop.f32.mrf.mxu0
    %v9863 = vadd.f32 0.0, %v9862
    %v9864 = vpop.f32.mrf.mxu0
    %v9865 = vadd.f32 0.0, %v9864
    %9866 = vmatmul.bf16.gmra.mxu0 %v9646
    %v9867 = vpop.f32.mrf.mxu0
    %v9868 = vadd.f32 0.0, %v9867
    %v9869 = vpop.f32.mrf.mxu0
    %v9870 = vadd.f32 0.0, %v9869
    %9871 = vmatmul.bf16.gmra.mxu0 %v9649
    %v9872 = vpop.f32.mrf.mxu0
    %v9873 = vadd.f32 0.0, %v9872
    %v9874 = vpop.f32.mrf.mxu0
    %v9875 = vadd.f32 0.0, %v9874
    %9876 = vmatmul.bf16.gmra.mxu0 %v9652
    %v9877 = vpop.f32.mrf.mxu0
    %v9878 = vadd.f32 0.0, %v9877
    %v9879 = vpop.f32.mrf.mxu0
    %v9880 = vadd.f32 0.0, %v9879
    %9881 = vmatmul.bf16.gmra.mxu0 %v9655
    %v9882 = vpop.f32.mrf.mxu0
    %v9883 = vadd.f32 0.0, %v9882
    %v9884 = vpop.f32.mrf.mxu0
    %v9885 = vadd.f32 0.0, %v9884
    %9886 = vmatmul.bf16.gmra.mxu0 %v9658
    %v9887 = vpop.f32.mrf.mxu0
    %v9888 = vadd.f32 0.0, %v9887
    %v9889 = vpop.f32.mrf.mxu0
    %v9890 = vadd.f32 0.0, %v9889
    %9891 = vdwg.mxu0
    %v9892 = vld [vmem:[#allocation3] sm:$0xff]
    %v9893 = vld [vmem:[#allocation3 + $0x8] sm:$0xff]
    %v9894 = vld [vmem:[#allocation3 + $0x10] sm:$0xff]
    %v9895 = vld [vmem:[#allocation3 + $0x18] sm:$0xff]
    %v9896 = vld [vmem:[#allocation3 + $0x20] sm:$0xff]
    %v9897 = vld [vmem:[#allocation3 + $0x28] sm:$0xff]
    %v9898 = vld [vmem:[#allocation3 + $0x30] sm:$0xff]
    %v9899 = vld [vmem:[#allocation3 + $0x38] sm:$0xff]
    %v9900 = vld [vmem:[#allocation3 + $0x40] sm:$0xff]
    %v9901 = vld [vmem:[#allocation3 + $0x48] sm:$0xff]
    %v9902 = vld [vmem:[#allocation3 + $0x50] sm:$0xff]
    %v9903 = vld [vmem:[#allocation3 + $0x58] sm:$0xff]
    %v9904 = vld [vmem:[#allocation3 + $0x60] sm:$0xff]
    %v9905 = vld [vmem:[#allocation3 + $0x68] sm:$0xff]
    %v9906 = vld [vmem:[#allocation3 + $0x70] sm:$0xff]
    %v9907 = vld [vmem:[#allocation3 + $0x78] sm:$0xff]
    %v9908 = vld [vmem:[#allocation3 + $0x80] sm:$0xff]
    %v9909 = vld [vmem:[#allocation3 + $0x88] sm:$0xff]
    %v9910 = vld [vmem:[#allocation3 + $0x90] sm:$0xff]
    %v9911 = vld [vmem:[#allocation3 + $0x98] sm:$0xff]
    %v9912 = vld [vmem:[#allocation3 + $0xa0] sm:$0xff]
    %v9913 = vld [vmem:[#allocation3 + $0xa8] sm:$0xff]
    %v9914 = vld [vmem:[#allocation3 + $0xb0] sm:$0xff]
    %v9915 = vld [vmem:[#allocation3 + $0xb8] sm:$0xff]
    %v9916 = vld [vmem:[#allocation3 + $0xc0] sm:$0xff]
    %v9917 = vld [vmem:[#allocation3 + $0xc8] sm:$0xff]
    %v9918 = vld [vmem:[#allocation3 + $0xd0] sm:$0xff]
    %v9919 = vld [vmem:[#allocation3 + $0xd8] sm:$0xff]
    %v9920 = vld [vmem:[#allocation3 + $0xe0] sm:$0xff]
    %v9921 = vld [vmem:[#allocation3 + $0xe8] sm:$0xff]
    %v9922 = vld [vmem:[#allocation3 + $0xf0] sm:$0xff]
    %v9923 = vld [vmem:[#allocation3 + $0xf8] sm:$0xff]
    %v9924 = vld [vmem:[#allocation3 + $0x100] sm:$0xff]
    %v9925 = vld [vmem:[#allocation3 + $0x108] sm:$0xff]
    %v9926 = vld [vmem:[#allocation3 + $0x110] sm:$0xff]
    %v9927 = vld [vmem:[#allocation3 + $0x118] sm:$0xff]
    %v9928 = vld [vmem:[#allocation3 + $0x120] sm:$0xff]
    %v9929 = vld [vmem:[#allocation3 + $0x128] sm:$0xff]
    %v9930 = vld [vmem:[#allocation3 + $0x130] sm:$0xff]
    %v9931 = vld [vmem:[#allocation3 + $0x138] sm:$0xff]
    %v9932 = vld [vmem:[#allocation3 + $0x140] sm:$0xff]
    %v9933 = vld [vmem:[#allocation3 + $0x148] sm:$0xff]
    %v9934 = vld [vmem:[#allocation3 + $0x150] sm:$0xff]
    %v9935 = vld [vmem:[#allocation3 + $0x158] sm:$0xff]
    %v9936 = vld [vmem:[#allocation3 + $0x160] sm:$0xff]
    %v9937 = vld [vmem:[#allocation3 + $0x168] sm:$0xff]
    %v9938 = vld [vmem:[#allocation3 + $0x170] sm:$0xff]
    %v9939 = vld [vmem:[#allocation3 + $0x178] sm:$0xff]
    %v9940 = vld [vmem:[#allocation3 + $0x180] sm:$0xff]
    %v9941 = vld [vmem:[#allocation3 + $0x188] sm:$0xff]
    %v9942 = vld [vmem:[#allocation3 + $0x190] sm:$0xff]
    %v9943 = vld [vmem:[#allocation3 + $0x198] sm:$0xff]
    %v9944 = vld [vmem:[#allocation3 + $0x1a0] sm:$0xff]
    %v9945 = vld [vmem:[#allocation3 + $0x1a8] sm:$0xff]
    %v9946 = vld [vmem:[#allocation3 + $0x1b0] sm:$0xff]
    %v9947 = vld [vmem:[#allocation3 + $0x1b8] sm:$0xff]
    %v9948 = vld [vmem:[#allocation3 + $0x1c0] sm:$0xff]
    %v9949 = vld [vmem:[#allocation3 + $0x1c8] sm:$0xff]
    %v9950 = vld [vmem:[#allocation3 + $0x1d0] sm:$0xff]
    %v9951 = vld [vmem:[#allocation3 + $0x1d8] sm:$0xff]
    %v9952 = vld [vmem:[#allocation3 + $0x1e0] sm:$0xff]
    %v9953 = vld [vmem:[#allocation3 + $0x1e8] sm:$0xff]
    %v9954 = vld [vmem:[#allocation3 + $0x1f0] sm:$0xff]
    %v9955 = vld [vmem:[#allocation3 + $0x1f8] sm:$0xff]
    %v9956 = vld [vmem:[#allocation3 + $0x200] sm:$0xff]
    %v9957 = vld [vmem:[#allocation3 + $0x208] sm:$0xff]
    %v9958 = vld [vmem:[#allocation3 + $0x210] sm:$0xff]
    %v9959 = vld [vmem:[#allocation3 + $0x218] sm:$0xff]
    %v9960 = vld [vmem:[#allocation3 + $0x220] sm:$0xff]
    %v9961 = vld [vmem:[#allocation3 + $0x228] sm:$0xff]
    %v9962 = vld [vmem:[#allocation3 + $0x230] sm:$0xff]
    %v9963 = vld [vmem:[#allocation3 + $0x238] sm:$0xff]
    %v9964 = vld [vmem:[#allocation3 + $0x240] sm:$0xff]
    %v9965 = vld [vmem:[#allocation3 + $0x248] sm:$0xff]
    %v9966 = vld [vmem:[#allocation3 + $0x250] sm:$0xff]
    %v9967 = vld [vmem:[#allocation3 + $0x258] sm:$0xff]
    %v9968 = vld [vmem:[#allocation3 + $0x260] sm:$0xff]
    %v9969 = vld [vmem:[#allocation3 + $0x268] sm:$0xff]
    %v9970 = vld [vmem:[#allocation3 + $0x270] sm:$0xff]
    %v9971 = vld [vmem:[#allocation3 + $0x278] sm:$0xff]
    %v9972 = vld [vmem:[#allocation3 + $0x280] sm:$0xff]
    %v9973 = vld [vmem:[#allocation3 + $0x288] sm:$0xff]
    %v9974 = vld [vmem:[#allocation3 + $0x290] sm:$0xff]
    %v9975 = vld [vmem:[#allocation3 + $0x298] sm:$0xff]
    %v9976 = vld [vmem:[#allocation3 + $0x2a0] sm:$0xff]
    %v9977 = vld [vmem:[#allocation3 + $0x2a8] sm:$0xff]
    %v9978 = vld [vmem:[#allocation3 + $0x2b0] sm:$0xff]
    %v9979 = vld [vmem:[#allocation3 + $0x2b8] sm:$0xff]
    %v9980 = vadd.f32 %v9892, %v9673
    %v9981 = vadd.f32 %v9893, %v9675
    %v9982 = vadd.f32 %v9894, %v9678
    %v9983 = vadd.f32 %v9895, %v9680
    %v9984 = vadd.f32 %v9896, %v9683
    %v9985 = vadd.f32 %v9897, %v9685
    %v9986 = vadd.f32 %v9898, %v9688
    %v9987 = vadd.f32 %v9899, %v9690
    %v9988 = vadd.f32 %v9900, %v9693
    %v9989 = vadd.f32 %v9901, %v9695
    %v9990 = vadd.f32 %v9902, %v9698
    %v9991 = vadd.f32 %v9903, %v9700
    %v9992 = vadd.f32 %v9904, %v9703
    %v9993 = vadd.f32 %v9905, %v9705
    %v9994 = vadd.f32 %v9906, %v9708
    %v9995 = vadd.f32 %v9907, %v9710
    %v9996 = vadd.f32 %v9908, %v9713
    %v9997 = vadd.f32 %v9909, %v9715
    %v9998 = vadd.f32 %v9910, %v9718
    %v9999 = vadd.f32 %v9911, %v9720
    %v10000 = vadd.f32 %v9912, %v9723
    %v10001 = vadd.f32 %v9913, %v9725
    %v10002 = vadd.f32 %v9914, %v9728
    %v10003 = vadd.f32 %v9915, %v9730
    %v10004 = vadd.f32 %v9916, %v9733
    %v10005 = vadd.f32 %v9917, %v9735
    %v10006 = vadd.f32 %v9918, %v9738
    %v10007 = vadd.f32 %v9919, %v9740
    %v10008 = vadd.f32 %v9920, %v9743
    %v10009 = vadd.f32 %v9921, %v9745
    %v10010 = vadd.f32 %v9922, %v9748
    %v10011 = vadd.f32 %v9923, %v9750
    %v10012 = vadd.f32 %v9924, %v9753
    %v10013 = vadd.f32 %v9925, %v9755
    %v10014 = vadd.f32 %v9926, %v9758
    %v10015 = vadd.f32 %v9927, %v9760
    %v10016 = vadd.f32 %v9928, %v9763
    %v10017 = vadd.f32 %v9929, %v9765
    %v10018 = vadd.f32 %v9930, %v9768
    %v10019 = vadd.f32 %v9931, %v9770
    %v10020 = vadd.f32 %v9932, %v9773
    %v10021 = vadd.f32 %v9933, %v9775
    %v10022 = vadd.f32 %v9934, %v9778
    %v10023 = vadd.f32 %v9935, %v9780
    %v10024 = vadd.f32 %v9936, %v9783
    %v10025 = vadd.f32 %v9937, %v9785
    %v10026 = vadd.f32 %v9938, %v9788
    %v10027 = vadd.f32 %v9939, %v9790
    %v10028 = vadd.f32 %v9940, %v9793
    %v10029 = vadd.f32 %v9941, %v9795
    %v10030 = vadd.f32 %v9942, %v9798
    %v10031 = vadd.f32 %v9943, %v9800
    %v10032 = vadd.f32 %v9944, %v9803
    %v10033 = vadd.f32 %v9945, %v9805
    %v10034 = vadd.f32 %v9946, %v9808
    %v10035 = vadd.f32 %v9947, %v9810
    %v10036 = vadd.f32 %v9948, %v9813
    %v10037 = vadd.f32 %v9949, %v9815
    %v10038 = vadd.f32 %v9950, %v9818
    %v10039 = vadd.f32 %v9951, %v9820
    %v10040 = vadd.f32 %v9952, %v9823
    %v10041 = vadd.f32 %v9953, %v9825
    %v10042 = vadd.f32 %v9954, %v9828
    %v10043 = vadd.f32 %v9955, %v9830
    %v10044 = vadd.f32 %v9956, %v9833
    %v10045 = vadd.f32 %v9957, %v9835
    %v10046 = vadd.f32 %v9958, %v9838
    %v10047 = vadd.f32 %v9959, %v9840
    %v10048 = vadd.f32 %v9960, %v9843
    %v10049 = vadd.f32 %v9961, %v9845
    %v10050 = vadd.f32 %v9962, %v9848
    %v10051 = vadd.f32 %v9963, %v9850
    %v10052 = vadd.f32 %v9964, %v9853
    %v10053 = vadd.f32 %v9965, %v9855
    %v10054 = vadd.f32 %v9966, %v9858
    %v10055 = vadd.f32 %v9967, %v9860
    %v10056 = vadd.f32 %v9968, %v9863
    %v10057 = vadd.f32 %v9969, %v9865
    %v10058 = vadd.f32 %v9970, %v9868
    %v10059 = vadd.f32 %v9971, %v9870
    %v10060 = vadd.f32 %v9972, %v9873
    %v10061 = vadd.f32 %v9973, %v9875
    %v10062 = vadd.f32 %v9974, %v9878
    %v10063 = vadd.f32 %v9975, %v9880
    %v10064 = vadd.f32 %v9976, %v9883
    %v10065 = vadd.f32 %v9977, %v9885
    %v10066 = vadd.f32 %v9978, %v9888
    %v10067 = vadd.f32 %v9979, %v9890
    %10068 = vst [vmem:[#allocation3] sm:$0xff] %v9980
    %10069 = vst [vmem:[#allocation3 + $0x8] sm:$0xff] %v9981
    %10070 = vst [vmem:[#allocation3 + $0x10] sm:$0xff] %v9982
    %10071 = vst [vmem:[#allocation3 + $0x18] sm:$0xff] %v9983
    %10072 = vst [vmem:[#allocation3 + $0x20] sm:$0xff] %v9984
    %10073 = vst [vmem:[#allocation3 + $0x28] sm:$0xff] %v9985
    %10074 = vst [vmem:[#allocation3 + $0x30] sm:$0xff] %v9986
    %10075 = vst [vmem:[#allocation3 + $0x38] sm:$0xff] %v9987
    %10076 = vst [vmem:[#allocation3 + $0x40] sm:$0xff] %v9988
    %10077 = vst [vmem:[#allocation3 + $0x48] sm:$0xff] %v9989
    %10078 = vst [vmem:[#allocation3 + $0x50] sm:$0xff] %v9990
    %10079 = vst [vmem:[#allocation3 + $0x58] sm:$0xff] %v9991
    %10080 = vst [vmem:[#allocation3 + $0x60] sm:$0xff] %v9992
    %10081 = vst [vmem:[#allocation3 + $0x68] sm:$0xff] %v9993
    %10082 = vst [vmem:[#allocation3 + $0x70] sm:$0xff] %v9994
    %10083 = vst [vmem:[#allocation3 + $0x78] sm:$0xff] %v9995
    %10084 = vst [vmem:[#allocation3 + $0x80] sm:$0xff] %v9996
    %10085 = vst [vmem:[#allocation3 + $0x88] sm:$0xff] %v9997
    %10086 = vst [vmem:[#allocation3 + $0x90] sm:$0xff] %v9998
    %10087 = vst [vmem:[#allocation3 + $0x98] sm:$0xff] %v9999
    %10088 = vst [vmem:[#allocation3 + $0xa0] sm:$0xff] %v10000
    %10089 = vst [vmem:[#allocation3 + $0xa8] sm:$0xff] %v10001
    %10090 = vst [vmem:[#allocation3 + $0xb0] sm:$0xff] %v10002
    %10091 = vst [vmem:[#allocation3 + $0xb8] sm:$0xff] %v10003
    %10092 = vst [vmem:[#allocation3 + $0xc0] sm:$0xff] %v10004
    %10093 = vst [vmem:[#allocation3 + $0xc8] sm:$0xff] %v10005
    %10094 = vst [vmem:[#allocation3 + $0xd0] sm:$0xff] %v10006
    %10095 = vst [vmem:[#allocation3 + $0xd8] sm:$0xff] %v10007
    %10096 = vst [vmem:[#allocation3 + $0xe0] sm:$0xff] %v10008
    %10097 = vst [vmem:[#allocation3 + $0xe8] sm:$0xff] %v10009
    %10098 = vst [vmem:[#allocation3 + $0xf0] sm:$0xff] %v10010
    %10099 = vst [vmem:[#allocation3 + $0xf8] sm:$0xff] %v10011
    %10100 = vst [vmem:[#allocation3 + $0x100] sm:$0xff] %v10012
    %10101 = vst [vmem:[#allocation3 + $0x108] sm:$0xff] %v10013
    %10102 = vst [vmem:[#allocation3 + $0x110] sm:$0xff] %v10014
    %10103 = vst [vmem:[#allocation3 + $0x118] sm:$0xff] %v10015
    %10104 = vst [vmem:[#allocation3 + $0x120] sm:$0xff] %v10016
    %10105 = vst [vmem:[#allocation3 + $0x128] sm:$0xff] %v10017
    %10106 = vst [vmem:[#allocation3 + $0x130] sm:$0xff] %v10018
    %10107 = vst [vmem:[#allocation3 + $0x138] sm:$0xff] %v10019
    %10108 = vst [vmem:[#allocation3 + $0x140] sm:$0xff] %v10020
    %10109 = vst [vmem:[#allocation3 + $0x148] sm:$0xff] %v10021
    %10110 = vst [vmem:[#allocation3 + $0x150] sm:$0xff] %v10022
    %10111 = vst [vmem:[#allocation3 + $0x158] sm:$0xff] %v10023
    %10112 = vst [vmem:[#allocation3 + $0x160] sm:$0xff] %v10024
    %10113 = vst [vmem:[#allocation3 + $0x168] sm:$0xff] %v10025
    %10114 = vst [vmem:[#allocation3 + $0x170] sm:$0xff] %v10026
    %10115 = vst [vmem:[#allocation3 + $0x178] sm:$0xff] %v10027
    %10116 = vst [vmem:[#allocation3 + $0x180] sm:$0xff] %v10028
    %10117 = vst [vmem:[#allocation3 + $0x188] sm:$0xff] %v10029
    %10118 = vst [vmem:[#allocation3 + $0x190] sm:$0xff] %v10030
    %10119 = vst [vmem:[#allocation3 + $0x198] sm:$0xff] %v10031
    %10120 = vst [vmem:[#allocation3 + $0x1a0] sm:$0xff] %v10032
    %10121 = vst [vmem:[#allocation3 + $0x1a8] sm:$0xff] %v10033
    %10122 = vst [vmem:[#allocation3 + $0x1b0] sm:$0xff] %v10034
    %10123 = vst [vmem:[#allocation3 + $0x1b8] sm:$0xff] %v10035
    %10124 = vst [vmem:[#allocation3 + $0x1c0] sm:$0xff] %v10036
    %10125 = vst [vmem:[#allocation3 + $0x1c8] sm:$0xff] %v10037
    %10126 = vst [vmem:[#allocation3 + $0x1d0] sm:$0xff] %v10038
    %10127 = vst [vmem:[#allocation3 + $0x1d8] sm:$0xff] %v10039
    %10128 = vst [vmem:[#allocation3 + $0x1e0] sm:$0xff] %v10040
    %10129 = vst [vmem:[#allocation3 + $0x1e8] sm:$0xff] %v10041
    %10130 = vst [vmem:[#allocation3 + $0x1f0] sm:$0xff] %v10042
    %10131 = vst [vmem:[#allocation3 + $0x1f8] sm:$0xff] %v10043
    %10132 = vst [vmem:[#allocation3 + $0x200] sm:$0xff] %v10044
    %10133 = vst [vmem:[#allocation3 + $0x208] sm:$0xff] %v10045
    %10134 = vst [vmem:[#allocation3 + $0x210] sm:$0xff] %v10046
    %10135 = vst [vmem:[#allocation3 + $0x218] sm:$0xff] %v10047
    %10136 = vst [vmem:[#allocation3 + $0x220] sm:$0xff] %v10048
    %10137 = vst [vmem:[#allocation3 + $0x228] sm:$0xff] %v10049
    %10138 = vst [vmem:[#allocation3 + $0x230] sm:$0xff] %v10050
    %10139 = vst [vmem:[#allocation3 + $0x238] sm:$0xff] %v10051
    %10140 = vst [vmem:[#allocation3 + $0x240] sm:$0xff] %v10052
    %10141 = vst [vmem:[#allocation3 + $0x248] sm:$0xff] %v10053
    %10142 = vst [vmem:[#allocation3 + $0x250] sm:$0xff] %v10054
    %10143 = vst [vmem:[#allocation3 + $0x258] sm:$0xff] %v10055
    %10144 = vst [vmem:[#allocation3 + $0x260] sm:$0xff] %v10056
    %10145 = vst [vmem:[#allocation3 + $0x268] sm:$0xff] %v10057
    %10146 = vst [vmem:[#allocation3 + $0x270] sm:$0xff] %v10058
    %10147 = vst [vmem:[#allocation3 + $0x278] sm:$0xff] %v10059
    %10148 = vst [vmem:[#allocation3 + $0x280] sm:$0xff] %v10060
    %10149 = vst [vmem:[#allocation3 + $0x288] sm:$0xff] %v10061
    %10150 = vst [vmem:[#allocation3 + $0x290] sm:$0xff] %v10062
    %10151 = vst [vmem:[#allocation3 + $0x298] sm:$0xff] %v10063
    %10152 = vst [vmem:[#allocation3 + $0x2a0] sm:$0xff] %v10064
    %10153 = vst [vmem:[#allocation3 + $0x2a8] sm:$0xff] %v10065
    %10154 = vst [vmem:[#allocation3 + $0x2b0] sm:$0xff] %v10066
    %10155 = vst [vmem:[#allocation3 + $0x2b8] sm:$0xff] %v10067
    %v10156 = vld [vmem:[#allocation3] sm:$0xff]
    %v10157 = vld [vmem:[#allocation3 + $0x8] sm:$0xff]
    %v10158 = vld [vmem:[#allocation3 + $0x10] sm:$0xff]
    %v10159 = vld [vmem:[#allocation3 + $0x18] sm:$0xff]
    %v10160 = vld [vmem:[#allocation3 + $0x20] sm:$0xff]
    %v10161 = vld [vmem:[#allocation3 + $0x28] sm:$0xff]
    %v10162 = vld [vmem:[#allocation3 + $0x30] sm:$0xff]
    %v10163 = vld [vmem:[#allocation3 + $0x38] sm:$0xff]
    %v10164 = vld [vmem:[#allocation3 + $0x40] sm:$0xff]
    %v10165 = vld [vmem:[#allocation3 + $0x48] sm:$0xff]
    %v10166 = vld [vmem:[#allocation3 + $0x50] sm:$0xff]
    %v10167 = vld [vmem:[#allocation3 + $0x58] sm:$0xff]
    %v10168 = vld [vmem:[#allocation3 + $0x60] sm:$0xff]
    %v10169 = vld [vmem:[#allocation3 + $0x68] sm:$0xff]
    %v10170 = vld [vmem:[#allocation3 + $0x70] sm:$0xff]
    %v10171 = vld [vmem:[#allocation3 + $0x78] sm:$0xff]
    %v10172 = vld [vmem:[#allocation3 + $0x80] sm:$0xff]
    %v10173 = vld [vmem:[#allocation3 + $0x88] sm:$0xff]
    %v10174 = vld [vmem:[#allocation3 + $0x90] sm:$0xff]
    %v10175 = vld [vmem:[#allocation3 + $0x98] sm:$0xff]
    %v10176 = vld [vmem:[#allocation3 + $0xa0] sm:$0xff]
    %v10177 = vld [vmem:[#allocation3 + $0xa8] sm:$0xff]
    %v10178 = vld [vmem:[#allocation3 + $0xb0] sm:$0xff]
    %v10179 = vld [vmem:[#allocation3 + $0xb8] sm:$0xff]
    %v10180 = vld [vmem:[#allocation3 + $0xc0] sm:$0xff]
    %v10181 = vld [vmem:[#allocation3 + $0xc8] sm:$0xff]
    %v10182 = vld [vmem:[#allocation3 + $0xd0] sm:$0xff]
    %v10183 = vld [vmem:[#allocation3 + $0xd8] sm:$0xff]
    %v10184 = vld [vmem:[#allocation3 + $0xe0] sm:$0xff]
    %v10185 = vld [vmem:[#allocation3 + $0xe8] sm:$0xff]
    %v10186 = vld [vmem:[#allocation3 + $0xf0] sm:$0xff]
    %v10187 = vld [vmem:[#allocation3 + $0xf8] sm:$0xff]
    %v10188 = vld [vmem:[#allocation3 + $0x100] sm:$0xff]
    %v10189 = vld [vmem:[#allocation3 + $0x108] sm:$0xff]
    %v10190 = vld [vmem:[#allocation3 + $0x110] sm:$0xff]
    %v10191 = vld [vmem:[#allocation3 + $0x118] sm:$0xff]
    %v10192 = vld [vmem:[#allocation3 + $0x120] sm:$0xff]
    %v10193 = vld [vmem:[#allocation3 + $0x128] sm:$0xff]
    %v10194 = vld [vmem:[#allocation3 + $0x130] sm:$0xff]
    %v10195 = vld [vmem:[#allocation3 + $0x138] sm:$0xff]
    %v10196 = vld [vmem:[#allocation3 + $0x140] sm:$0xff]
    %v10197 = vld [vmem:[#allocation3 + $0x148] sm:$0xff]
    %v10198 = vld [vmem:[#allocation3 + $0x150] sm:$0xff]
    %v10199 = vld [vmem:[#allocation3 + $0x158] sm:$0xff]
    %v10200 = vld [vmem:[#allocation3 + $0x160] sm:$0xff]
    %v10201 = vld [vmem:[#allocation3 + $0x168] sm:$0xff]
    %v10202 = vld [vmem:[#allocation3 + $0x170] sm:$0xff]
    %v10203 = vld [vmem:[#allocation3 + $0x178] sm:$0xff]
    %v10204 = vld [vmem:[#allocation3 + $0x180] sm:$0xff]
    %v10205 = vld [vmem:[#allocation3 + $0x188] sm:$0xff]
    %v10206 = vld [vmem:[#allocation3 + $0x190] sm:$0xff]
    %v10207 = vld [vmem:[#allocation3 + $0x198] sm:$0xff]
    %v10208 = vld [vmem:[#allocation3 + $0x1a0] sm:$0xff]
    %v10209 = vld [vmem:[#allocation3 + $0x1a8] sm:$0xff]
    %v10210 = vld [vmem:[#allocation3 + $0x1b0] sm:$0xff]
    %v10211 = vld [vmem:[#allocation3 + $0x1b8] sm:$0xff]
    %v10212 = vld [vmem:[#allocation3 + $0x1c0] sm:$0xff]
    %v10213 = vld [vmem:[#allocation3 + $0x1c8] sm:$0xff]
    %v10214 = vld [vmem:[#allocation3 + $0x1d0] sm:$0xff]
    %v10215 = vld [vmem:[#allocation3 + $0x1d8] sm:$0xff]
    %v10216 = vld [vmem:[#allocation3 + $0x1e0] sm:$0xff]
    %v10217 = vld [vmem:[#allocation3 + $0x1e8] sm:$0xff]
    %v10218 = vld [vmem:[#allocation3 + $0x1f0] sm:$0xff]
    %v10219 = vld [vmem:[#allocation3 + $0x1f8] sm:$0xff]
    %v10220 = vld [vmem:[#allocation3 + $0x200] sm:$0xff]
    %v10221 = vld [vmem:[#allocation3 + $0x208] sm:$0xff]
    %v10222 = vld [vmem:[#allocation3 + $0x210] sm:$0xff]
    %v10223 = vld [vmem:[#allocation3 + $0x218] sm:$0xff]
    %v10224 = vld [vmem:[#allocation3 + $0x220] sm:$0xff]
    %v10225 = vld [vmem:[#allocation3 + $0x228] sm:$0xff]
    %v10226 = vld [vmem:[#allocation3 + $0x230] sm:$0xff]
    %v10227 = vld [vmem:[#allocation3 + $0x238] sm:$0xff]
    %v10228 = vld [vmem:[#allocation3 + $0x240] sm:$0xff]
    %v10229 = vld [vmem:[#allocation3 + $0x248] sm:$0xff]
    %v10230 = vld [vmem:[#allocation3 + $0x250] sm:$0xff]
    %v10231 = vld [vmem:[#allocation3 + $0x258] sm:$0xff]
    %v10232 = vld [vmem:[#allocation3 + $0x260] sm:$0xff]
    %v10233 = vld [vmem:[#allocation3 + $0x268] sm:$0xff]
    %v10234 = vld [vmem:[#allocation3 + $0x270] sm:$0xff]
    %v10235 = vld [vmem:[#allocation3 + $0x278] sm:$0xff]
    %v10236 = vld [vmem:[#allocation3 + $0x280] sm:$0xff]
    %v10237 = vld [vmem:[#allocation3 + $0x288] sm:$0xff]
    %v10238 = vld [vmem:[#allocation3 + $0x290] sm:$0xff]
    %v10239 = vld [vmem:[#allocation3 + $0x298] sm:$0xff]
    %v10240 = vld [vmem:[#allocation3 + $0x2a0] sm:$0xff]
    %v10241 = vld [vmem:[#allocation3 + $0x2a8] sm:$0xff]
    %v10242 = vld [vmem:[#allocation3 + $0x2b0] sm:$0xff]
    %v10243 = vld [vmem:[#allocation3 + $0x2b8] sm:$0xff]
    %v10244 = vld [vmem:[%s3] sm:$0xff]
    %v10245 = vld [vmem:[%s3 + $0x8] sm:$0xff]
    %v10246 = vld [vmem:[%s3 + $0x10] sm:$0xff]
    %v10247 = vld [vmem:[%s3 + $0x18] sm:$0xff]
    %v10248 = vld [vmem:[%s3 + $0x20] sm:$0xff]
    %v10249 = vld [vmem:[%s3 + $0x28] sm:$0xff]
    %v10250 = vld [vmem:[%s3 + $0x30] sm:$0xff]
    %v10251 = vld [vmem:[%s3 + $0x38] sm:$0xff]
    %v10252 = vld [vmem:[%s3 + $0x40] sm:$0xff]
    %v10253 = vld [vmem:[%s3 + $0x48] sm:$0xff]
    %v10254 = vld [vmem:[%s3 + $0x50] sm:$0xff]
    %v10255 = vld [vmem:[%s3 + $0x58] sm:$0xff]
    %v10256 = vld [vmem:[%s3 + $0x60] sm:$0xff]
    %v10257 = vld [vmem:[%s3 + $0x68] sm:$0xff]
    %v10258 = vld [vmem:[%s3 + $0x70] sm:$0xff]
    %v10259 = vld [vmem:[%s3 + $0x78] sm:$0xff]
    %v10260 = vld [vmem:[%s3 + $0x80] sm:$0xff]
    %v10261 = vld [vmem:[%s3 + $0x88] sm:$0xff]
    %v10262 = vld [vmem:[%s3 + $0x90] sm:$0xff]
    %v10263 = vld [vmem:[%s3 + $0x98] sm:$0xff]
    %v10264 = vld [vmem:[%s3 + $0xa0] sm:$0xff]
    %v10265 = vld [vmem:[%s3 + $0xa8] sm:$0xff]
    %v10266 = vld [vmem:[%s3 + $0xb0] sm:$0xff]
    %v10267 = vld [vmem:[%s3 + $0xb8] sm:$0xff]
    %v10268 = vld [vmem:[%s3 + $0xc0] sm:$0xff]
    %v10269 = vld [vmem:[%s3 + $0xc8] sm:$0xff]
    %v10270 = vld [vmem:[%s3 + $0xd0] sm:$0xff]
    %v10271 = vld [vmem:[%s3 + $0xd8] sm:$0xff]
    %v10272 = vld [vmem:[%s3 + $0xe0] sm:$0xff]
    %v10273 = vld [vmem:[%s3 + $0xe8] sm:$0xff]
    %v10274 = vld [vmem:[%s3 + $0xf0] sm:$0xff]
    %v10275 = vld [vmem:[%s3 + $0xf8] sm:$0xff]
    %v10276 = vld [vmem:[%s3 + $0x100] sm:$0xff]
    %v10277 = vld [vmem:[%s3 + $0x108] sm:$0xff]
    %v10278 = vld [vmem:[%s3 + $0x110] sm:$0xff]
    %v10279 = vld [vmem:[%s3 + $0x118] sm:$0xff]
    %v10280 = vld [vmem:[%s3 + $0x120] sm:$0xff]
    %v10281 = vld [vmem:[%s3 + $0x128] sm:$0xff]
    %v10282 = vld [vmem:[%s3 + $0x130] sm:$0xff]
    %v10283 = vld [vmem:[%s3 + $0x138] sm:$0xff]
    %v10284 = vld [vmem:[%s3 + $0x140] sm:$0xff]
    %v10285 = vld [vmem:[%s3 + $0x148] sm:$0xff]
    %v10286 = vld [vmem:[%s3 + $0x150] sm:$0xff]
    %v10287 = vld [vmem:[%s3 + $0x158] sm:$0xff]
    %v10288 = vld [vmem:[%s3 + $0x160] sm:$0xff]
    %v10289 = vld [vmem:[%s3 + $0x168] sm:$0xff]
    %v10290 = vld [vmem:[%s3 + $0x170] sm:$0xff]
    %v10291 = vld [vmem:[%s3 + $0x178] sm:$0xff]
    %v10292 = vld [vmem:[%s3 + $0x180] sm:$0xff]
    %v10293 = vld [vmem:[%s3 + $0x188] sm:$0xff]
    %v10294 = vld [vmem:[%s3 + $0x190] sm:$0xff]
    %v10295 = vld [vmem:[%s3 + $0x198] sm:$0xff]
    %v10296 = vld [vmem:[%s3 + $0x1a0] sm:$0xff]
    %v10297 = vld [vmem:[%s3 + $0x1a8] sm:$0xff]
    %v10298 = vld [vmem:[%s3 + $0x1b0] sm:$0xff]
    %v10299 = vld [vmem:[%s3 + $0x1b8] sm:$0xff]
    %v10300 = vld [vmem:[%s3 + $0x1c0] sm:$0xff]
    %v10301 = vld [vmem:[%s3 + $0x1c8] sm:$0xff]
    %v10302 = vld [vmem:[%s3 + $0x1d0] sm:$0xff]
    %v10303 = vld [vmem:[%s3 + $0x1d8] sm:$0xff]
    %v10304 = vld [vmem:[%s3 + $0x1e0] sm:$0xff]
    %v10305 = vld [vmem:[%s3 + $0x1e8] sm:$0xff]
    %v10306 = vld [vmem:[%s3 + $0x1f0] sm:$0xff]
    %v10307 = vld [vmem:[%s3 + $0x1f8] sm:$0xff]
    %v10308 = vld [vmem:[%s3 + $0x200] sm:$0xff]
    %v10309 = vld [vmem:[%s3 + $0x208] sm:$0xff]
    %v10310 = vld [vmem:[%s3 + $0x210] sm:$0xff]
    %v10311 = vld [vmem:[%s3 + $0x218] sm:$0xff]
    %v10312 = vld [vmem:[%s3 + $0x220] sm:$0xff]
    %v10313 = vld [vmem:[%s3 + $0x228] sm:$0xff]
    %v10314 = vld [vmem:[%s3 + $0x230] sm:$0xff]
    %v10315 = vld [vmem:[%s3 + $0x238] sm:$0xff]
    %v10316 = vld [vmem:[%s3 + $0x240] sm:$0xff]
    %v10317 = vld [vmem:[%s3 + $0x248] sm:$0xff]
    %v10318 = vld [vmem:[%s3 + $0x250] sm:$0xff]
    %v10319 = vld [vmem:[%s3 + $0x258] sm:$0xff]
    %v10320 = vld [vmem:[%s3 + $0x260] sm:$0xff]
    %v10321 = vld [vmem:[%s3 + $0x268] sm:$0xff]
    %v10322 = vld [vmem:[%s3 + $0x270] sm:$0xff]
    %v10323 = vld [vmem:[%s3 + $0x278] sm:$0xff]
    %v10324 = vld [vmem:[%s3 + $0x280] sm:$0xff]
    %v10325 = vld [vmem:[%s3 + $0x288] sm:$0xff]
    %v10326 = vld [vmem:[%s3 + $0x290] sm:$0xff]
    %v10327 = vld [vmem:[%s3 + $0x298] sm:$0xff]
    %v10328 = vld [vmem:[%s3 + $0x2a0] sm:$0xff]
    %v10329 = vld [vmem:[%s3 + $0x2a8] sm:$0xff]
    %v10330 = vld [vmem:[%s3 + $0x2b0] sm:$0xff]
    %v10331 = vld [vmem:[%s3 + $0x2b8] sm:$0xff]
    %10333 = vset.pattern.permute.xlu0 0
    %10334 = vperm.xlu0 %10333, %v10244
    %v10335 = vpop.permute.xlu0 %10334
    %10338 = vset.pattern.permute.xlu0 0
    %10339 = vperm.xlu0 %10338, %v10245
    %v10340 = vpop.permute.xlu0 %10339
    %10343 = vset.pattern.permute.xlu0 0
    %10344 = vperm.xlu0 %10343, %v10246
    %v10345 = vpop.permute.xlu0 %10344
    %10348 = vset.pattern.permute.xlu0 0
    %10349 = vperm.xlu0 %10348, %v10247
    %v10350 = vpop.permute.xlu0 %10349
    %10353 = vset.pattern.permute.xlu0 0
    %10354 = vperm.xlu0 %10353, %v10248
    %v10355 = vpop.permute.xlu0 %10354
    %10358 = vset.pattern.permute.xlu0 0
    %10359 = vperm.xlu0 %10358, %v10249
    %v10360 = vpop.permute.xlu0 %10359
    %10363 = vset.pattern.permute.xlu0 0
    %10364 = vperm.xlu0 %10363, %v10250
    %v10365 = vpop.permute.xlu0 %10364
    %10368 = vset.pattern.permute.xlu0 0
    %10369 = vperm.xlu0 %10368, %v10251
    %v10370 = vpop.permute.xlu0 %10369
    %10373 = vset.pattern.permute.xlu0 0
    %10374 = vperm.xlu0 %10373, %v10252
    %v10375 = vpop.permute.xlu0 %10374
    %10378 = vset.pattern.permute.xlu0 0
    %10379 = vperm.xlu0 %10378, %v10253
    %v10380 = vpop.permute.xlu0 %10379
    %10383 = vset.pattern.permute.xlu0 0
    %10384 = vperm.xlu0 %10383, %v10254
    %v10385 = vpop.permute.xlu0 %10384
    %10388 = vset.pattern.permute.xlu0 0
    %10389 = vperm.xlu0 %10388, %v10255
    %v10390 = vpop.permute.xlu0 %10389
    %10393 = vset.pattern.permute.xlu0 0
    %10394 = vperm.xlu0 %10393, %v10256
    %v10395 = vpop.permute.xlu0 %10394
    %10398 = vset.pattern.permute.xlu0 0
    %10399 = vperm.xlu0 %10398, %v10257
    %v10400 = vpop.permute.xlu0 %10399
    %10403 = vset.pattern.permute.xlu0 0
    %10404 = vperm.xlu0 %10403, %v10258
    %v10405 = vpop.permute.xlu0 %10404
    %10408 = vset.pattern.permute.xlu0 0
    %10409 = vperm.xlu0 %10408, %v10259
    %v10410 = vpop.permute.xlu0 %10409
    %10413 = vset.pattern.permute.xlu0 0
    %10414 = vperm.xlu0 %10413, %v10260
    %v10415 = vpop.permute.xlu0 %10414
    %10418 = vset.pattern.permute.xlu0 0
    %10419 = vperm.xlu0 %10418, %v10261
    %v10420 = vpop.permute.xlu0 %10419
    %10423 = vset.pattern.permute.xlu0 0
    %10424 = vperm.xlu0 %10423, %v10262
    %v10425 = vpop.permute.xlu0 %10424
    %10428 = vset.pattern.permute.xlu0 0
    %10429 = vperm.xlu0 %10428, %v10263
    %v10430 = vpop.permute.xlu0 %10429
    %10433 = vset.pattern.permute.xlu0 0
    %10434 = vperm.xlu0 %10433, %v10264
    %v10435 = vpop.permute.xlu0 %10434
    %10438 = vset.pattern.permute.xlu0 0
    %10439 = vperm.xlu0 %10438, %v10265
    %v10440 = vpop.permute.xlu0 %10439
    %10443 = vset.pattern.permute.xlu0 0
    %10444 = vperm.xlu0 %10443, %v10266
    %v10445 = vpop.permute.xlu0 %10444
    %10448 = vset.pattern.permute.xlu0 0
    %10449 = vperm.xlu0 %10448, %v10267
    %v10450 = vpop.permute.xlu0 %10449
    %10453 = vset.pattern.permute.xlu0 0
    %10454 = vperm.xlu0 %10453, %v10268
    %v10455 = vpop.permute.xlu0 %10454
    %10458 = vset.pattern.permute.xlu0 0
    %10459 = vperm.xlu0 %10458, %v10269
    %v10460 = vpop.permute.xlu0 %10459
    %10463 = vset.pattern.permute.xlu0 0
    %10464 = vperm.xlu0 %10463, %v10270
    %v10465 = vpop.permute.xlu0 %10464
    %10468 = vset.pattern.permute.xlu0 0
    %10469 = vperm.xlu0 %10468, %v10271
    %v10470 = vpop.permute.xlu0 %10469
    %10473 = vset.pattern.permute.xlu0 0
    %10474 = vperm.xlu0 %10473, %v10272
    %v10475 = vpop.permute.xlu0 %10474
    %10478 = vset.pattern.permute.xlu0 0
    %10479 = vperm.xlu0 %10478, %v10273
    %v10480 = vpop.permute.xlu0 %10479
    %10483 = vset.pattern.permute.xlu0 0
    %10484 = vperm.xlu0 %10483, %v10274
    %v10485 = vpop.permute.xlu0 %10484
    %10488 = vset.pattern.permute.xlu0 0
    %10489 = vperm.xlu0 %10488, %v10275
    %v10490 = vpop.permute.xlu0 %10489
    %10493 = vset.pattern.permute.xlu0 0
    %10494 = vperm.xlu0 %10493, %v10276
    %v10495 = vpop.permute.xlu0 %10494
    %10498 = vset.pattern.permute.xlu0 0
    %10499 = vperm.xlu0 %10498, %v10277
    %v10500 = vpop.permute.xlu0 %10499
    %10503 = vset.pattern.permute.xlu0 0
    %10504 = vperm.xlu0 %10503, %v10278
    %v10505 = vpop.permute.xlu0 %10504
    %10508 = vset.pattern.permute.xlu0 0
    %10509 = vperm.xlu0 %10508, %v10279
    %v10510 = vpop.permute.xlu0 %10509
    %10513 = vset.pattern.permute.xlu0 0
    %10514 = vperm.xlu0 %10513, %v10280
    %v10515 = vpop.permute.xlu0 %10514
    %10518 = vset.pattern.permute.xlu0 0
    %10519 = vperm.xlu0 %10518, %v10281
    %v10520 = vpop.permute.xlu0 %10519
    %10523 = vset.pattern.permute.xlu0 0
    %10524 = vperm.xlu0 %10523, %v10282
    %v10525 = vpop.permute.xlu0 %10524
    %10528 = vset.pattern.permute.xlu0 0
    %10529 = vperm.xlu0 %10528, %v10283
    %v10530 = vpop.permute.xlu0 %10529
    %10533 = vset.pattern.permute.xlu0 0
    %10534 = vperm.xlu0 %10533, %v10284
    %v10535 = vpop.permute.xlu0 %10534
    %10538 = vset.pattern.permute.xlu0 0
    %10539 = vperm.xlu0 %10538, %v10285
    %v10540 = vpop.permute.xlu0 %10539
    %10543 = vset.pattern.permute.xlu0 0
    %10544 = vperm.xlu0 %10543, %v10286
    %v10545 = vpop.permute.xlu0 %10544
    %10548 = vset.pattern.permute.xlu0 0
    %10549 = vperm.xlu0 %10548, %v10287
    %v10550 = vpop.permute.xlu0 %10549
    %10553 = vset.pattern.permute.xlu0 0
    %10554 = vperm.xlu0 %10553, %v10288
    %v10555 = vpop.permute.xlu0 %10554
    %10558 = vset.pattern.permute.xlu0 0
    %10559 = vperm.xlu0 %10558, %v10289
    %v10560 = vpop.permute.xlu0 %10559
    %10563 = vset.pattern.permute.xlu0 0
    %10564 = vperm.xlu0 %10563, %v10290
    %v10565 = vpop.permute.xlu0 %10564
    %10568 = vset.pattern.permute.xlu0 0
    %10569 = vperm.xlu0 %10568, %v10291
    %v10570 = vpop.permute.xlu0 %10569
    %10573 = vset.pattern.permute.xlu0 0
    %10574 = vperm.xlu0 %10573, %v10292
    %v10575 = vpop.permute.xlu0 %10574
    %10578 = vset.pattern.permute.xlu0 0
    %10579 = vperm.xlu0 %10578, %v10293
    %v10580 = vpop.permute.xlu0 %10579
    %10583 = vset.pattern.permute.xlu0 0
    %10584 = vperm.xlu0 %10583, %v10294
    %v10585 = vpop.permute.xlu0 %10584
    %10588 = vset.pattern.permute.xlu0 0
    %10589 = vperm.xlu0 %10588, %v10295
    %v10590 = vpop.permute.xlu0 %10589
    %10593 = vset.pattern.permute.xlu0 0
    %10594 = vperm.xlu0 %10593, %v10296
    %v10595 = vpop.permute.xlu0 %10594
    %10598 = vset.pattern.permute.xlu0 0
    %10599 = vperm.xlu0 %10598, %v10297
    %v10600 = vpop.permute.xlu0 %10599
    %10603 = vset.pattern.permute.xlu0 0
    %10604 = vperm.xlu0 %10603, %v10298
    %v10605 = vpop.permute.xlu0 %10604
    %10608 = vset.pattern.permute.xlu0 0
    %10609 = vperm.xlu0 %10608, %v10299
    %v10610 = vpop.permute.xlu0 %10609
    %10613 = vset.pattern.permute.xlu0 0
    %10614 = vperm.xlu0 %10613, %v10300
    %v10615 = vpop.permute.xlu0 %10614
    %10618 = vset.pattern.permute.xlu0 0
    %10619 = vperm.xlu0 %10618, %v10301
    %v10620 = vpop.permute.xlu0 %10619
    %10623 = vset.pattern.permute.xlu0 0
    %10624 = vperm.xlu0 %10623, %v10302
    %v10625 = vpop.permute.xlu0 %10624
    %10628 = vset.pattern.permute.xlu0 0
    %10629 = vperm.xlu0 %10628, %v10303
    %v10630 = vpop.permute.xlu0 %10629
    %10633 = vset.pattern.permute.xlu0 0
    %10634 = vperm.xlu0 %10633, %v10304
    %v10635 = vpop.permute.xlu0 %10634
    %10638 = vset.pattern.permute.xlu0 0
    %10639 = vperm.xlu0 %10638, %v10305
    %v10640 = vpop.permute.xlu0 %10639
    %10643 = vset.pattern.permute.xlu0 0
    %10644 = vperm.xlu0 %10643, %v10306
    %v10645 = vpop.permute.xlu0 %10644
    %10648 = vset.pattern.permute.xlu0 0
    %10649 = vperm.xlu0 %10648, %v10307
    %v10650 = vpop.permute.xlu0 %10649
    %10653 = vset.pattern.permute.xlu0 0
    %10654 = vperm.xlu0 %10653, %v10308
    %v10655 = vpop.permute.xlu0 %10654
    %10658 = vset.pattern.permute.xlu0 0
    %10659 = vperm.xlu0 %10658, %v10309
    %v10660 = vpop.permute.xlu0 %10659
    %10663 = vset.pattern.permute.xlu0 0
    %10664 = vperm.xlu0 %10663, %v10310
    %v10665 = vpop.permute.xlu0 %10664
    %10668 = vset.pattern.permute.xlu0 0
    %10669 = vperm.xlu0 %10668, %v10311
    %v10670 = vpop.permute.xlu0 %10669
    %10673 = vset.pattern.permute.xlu0 0
    %10674 = vperm.xlu0 %10673, %v10312
    %v10675 = vpop.permute.xlu0 %10674
    %10678 = vset.pattern.permute.xlu0 0
    %10679 = vperm.xlu0 %10678, %v10313
    %v10680 = vpop.permute.xlu0 %10679
    %10683 = vset.pattern.permute.xlu0 0
    %10684 = vperm.xlu0 %10683, %v10314
    %v10685 = vpop.permute.xlu0 %10684
    %10688 = vset.pattern.permute.xlu0 0
    %10689 = vperm.xlu0 %10688, %v10315
    %v10690 = vpop.permute.xlu0 %10689
    %10693 = vset.pattern.permute.xlu0 0
    %10694 = vperm.xlu0 %10693, %v10316
    %v10695 = vpop.permute.xlu0 %10694
    %10698 = vset.pattern.permute.xlu0 0
    %10699 = vperm.xlu0 %10698, %v10317
    %v10700 = vpop.permute.xlu0 %10699
    %10703 = vset.pattern.permute.xlu0 0
    %10704 = vperm.xlu0 %10703, %v10318
    %v10705 = vpop.permute.xlu0 %10704
    %10708 = vset.pattern.permute.xlu0 0
    %10709 = vperm.xlu0 %10708, %v10319
    %v10710 = vpop.permute.xlu0 %10709
    %10713 = vset.pattern.permute.xlu0 0
    %10714 = vperm.xlu0 %10713, %v10320
    %v10715 = vpop.permute.xlu0 %10714
    %10718 = vset.pattern.permute.xlu0 0
    %10719 = vperm.xlu0 %10718, %v10321
    %v10720 = vpop.permute.xlu0 %10719
    %10723 = vset.pattern.permute.xlu0 0
    %10724 = vperm.xlu0 %10723, %v10322
    %v10725 = vpop.permute.xlu0 %10724
    %10728 = vset.pattern.permute.xlu0 0
    %10729 = vperm.xlu0 %10728, %v10323
    %v10730 = vpop.permute.xlu0 %10729
    %10733 = vset.pattern.permute.xlu0 0
    %10734 = vperm.xlu0 %10733, %v10324
    %v10735 = vpop.permute.xlu0 %10734
    %10738 = vset.pattern.permute.xlu0 0
    %10739 = vperm.xlu0 %10738, %v10325
    %v10740 = vpop.permute.xlu0 %10739
    %10743 = vset.pattern.permute.xlu0 0
    %10744 = vperm.xlu0 %10743, %v10326
    %v10745 = vpop.permute.xlu0 %10744
    %10748 = vset.pattern.permute.xlu0 0
    %10749 = vperm.xlu0 %10748, %v10327
    %v10750 = vpop.permute.xlu0 %10749
    %10753 = vset.pattern.permute.xlu0 0
    %10754 = vperm.xlu0 %10753, %v10328
    %v10755 = vpop.permute.xlu0 %10754
    %10758 = vset.pattern.permute.xlu0 0
    %10759 = vperm.xlu0 %10758, %v10329
    %v10760 = vpop.permute.xlu0 %10759
    %10763 = vset.pattern.permute.xlu0 0
    %10764 = vperm.xlu0 %10763, %v10330
    %v10765 = vpop.permute.xlu0 %10764
    %10768 = vset.pattern.permute.xlu0 0
    %10769 = vperm.xlu0 %10768, %v10331
    %v10770 = vpop.permute.xlu0 %10769
    %v10772 = vmul.f32 %v10156, %v10335
    %v10773 = vmul.f32 %v10157, %v10340
    %v10774 = vmul.f32 %v10158, %v10345
    %v10775 = vmul.f32 %v10159, %v10350
    %v10776 = vmul.f32 %v10160, %v10355
    %v10777 = vmul.f32 %v10161, %v10360
    %v10778 = vmul.f32 %v10162, %v10365
    %v10779 = vmul.f32 %v10163, %v10370
    %v10780 = vmul.f32 %v10164, %v10375
    %v10781 = vmul.f32 %v10165, %v10380
    %v10782 = vmul.f32 %v10166, %v10385
    %v10783 = vmul.f32 %v10167, %v10390
    %v10784 = vmul.f32 %v10168, %v10395
    %v10785 = vmul.f32 %v10169, %v10400
    %v10786 = vmul.f32 %v10170, %v10405
    %v10787 = vmul.f32 %v10171, %v10410
    %v10788 = vmul.f32 %v10172, %v10415
    %v10789 = vmul.f32 %v10173, %v10420
    %v10790 = vmul.f32 %v10174, %v10425
    %v10791 = vmul.f32 %v10175, %v10430
    %v10792 = vmul.f32 %v10176, %v10435
    %v10793 = vmul.f32 %v10177, %v10440
    %v10794 = vmul.f32 %v10178, %v10445
    %v10795 = vmul.f32 %v10179, %v10450
    %v10796 = vmul.f32 %v10180, %v10455
    %v10797 = vmul.f32 %v10181, %v10460
    %v10798 = vmul.f32 %v10182, %v10465
    %v10799 = vmul.f32 %v10183, %v10470
    %v10800 = vmul.f32 %v10184, %v10475
    %v10801 = vmul.f32 %v10185, %v10480
    %v10802 = vmul.f32 %v10186, %v10485
    %v10803 = vmul.f32 %v10187, %v10490
    %v10804 = vmul.f32 %v10188, %v10495
    %v10805 = vmul.f32 %v10189, %v10500
    %v10806 = vmul.f32 %v10190, %v10505
    %v10807 = vmul.f32 %v10191, %v10510
    %v10808 = vmul.f32 %v10192, %v10515
    %v10809 = vmul.f32 %v10193, %v10520
    %v10810 = vmul.f32 %v10194, %v10525
    %v10811 = vmul.f32 %v10195, %v10530
    %v10812 = vmul.f32 %v10196, %v10535
    %v10813 = vmul.f32 %v10197, %v10540
    %v10814 = vmul.f32 %v10198, %v10545
    %v10815 = vmul.f32 %v10199, %v10550
    %v10816 = vmul.f32 %v10200, %v10555
    %v10817 = vmul.f32 %v10201, %v10560
    %v10818 = vmul.f32 %v10202, %v10565
    %v10819 = vmul.f32 %v10203, %v10570
    %v10820 = vmul.f32 %v10204, %v10575
    %v10821 = vmul.f32 %v10205, %v10580
    %v10822 = vmul.f32 %v10206, %v10585
    %v10823 = vmul.f32 %v10207, %v10590
    %v10824 = vmul.f32 %v10208, %v10595
    %v10825 = vmul.f32 %v10209, %v10600
    %v10826 = vmul.f32 %v10210, %v10605
    %v10827 = vmul.f32 %v10211, %v10610
    %v10828 = vmul.f32 %v10212, %v10615
    %v10829 = vmul.f32 %v10213, %v10620
    %v10830 = vmul.f32 %v10214, %v10625
    %v10831 = vmul.f32 %v10215, %v10630
    %v10832 = vmul.f32 %v10216, %v10635
    %v10833 = vmul.f32 %v10217, %v10640
    %v10834 = vmul.f32 %v10218, %v10645
    %v10835 = vmul.f32 %v10219, %v10650
    %v10836 = vmul.f32 %v10220, %v10655
    %v10837 = vmul.f32 %v10221, %v10660
    %v10838 = vmul.f32 %v10222, %v10665
    %v10839 = vmul.f32 %v10223, %v10670
    %v10840 = vmul.f32 %v10224, %v10675
    %v10841 = vmul.f32 %v10225, %v10680
    %v10842 = vmul.f32 %v10226, %v10685
    %v10843 = vmul.f32 %v10227, %v10690
    %v10844 = vmul.f32 %v10228, %v10695
    %v10845 = vmul.f32 %v10229, %v10700
    %v10846 = vmul.f32 %v10230, %v10705
    %v10847 = vmul.f32 %v10231, %v10710
    %v10848 = vmul.f32 %v10232, %v10715
    %v10849 = vmul.f32 %v10233, %v10720
    %v10850 = vmul.f32 %v10234, %v10725
    %v10851 = vmul.f32 %v10235, %v10730
    %v10852 = vmul.f32 %v10236, %v10735
    %v10853 = vmul.f32 %v10237, %v10740
    %v10854 = vmul.f32 %v10238, %v10745
    %v10855 = vmul.f32 %v10239, %v10750
    %v10856 = vmul.f32 %v10240, %v10755
    %v10857 = vmul.f32 %v10241, %v10760
    %v10858 = vmul.f32 %v10242, %v10765
    %v10859 = vmul.f32 %v10243, %v10770
    %v10860 = vpack.c.bf16 %v10772, %v10772
    %v10861 = vpack.c.bf16 %v10773, %v10773
    %v10862 = vpack.c.bf16 %v10774, %v10774
    %v10863 = vpack.c.bf16 %v10775, %v10775
    %v10864 = vpack.c.bf16 %v10776, %v10776
    %v10865 = vpack.c.bf16 %v10777, %v10777
    %v10866 = vpack.c.bf16 %v10778, %v10778
    %v10867 = vpack.c.bf16 %v10779, %v10779
    %v10868 = vpack.c.bf16 %v10780, %v10780
    %v10869 = vpack.c.bf16 %v10781, %v10781
    %v10870 = vpack.c.bf16 %v10782, %v10782
    %v10871 = vpack.c.bf16 %v10783, %v10783
    %v10872 = vpack.c.bf16 %v10784, %v10784
    %v10873 = vpack.c.bf16 %v10785, %v10785
    %v10874 = vpack.c.bf16 %v10786, %v10786
    %v10875 = vpack.c.bf16 %v10787, %v10787
    %v10876 = vpack.c.bf16 %v10788, %v10788
    %v10877 = vpack.c.bf16 %v10789, %v10789
    %v10878 = vpack.c.bf16 %v10790, %v10790
    %v10879 = vpack.c.bf16 %v10791, %v10791
    %v10880 = vpack.c.bf16 %v10792, %v10792
    %v10881 = vpack.c.bf16 %v10793, %v10793
    %v10882 = vpack.c.bf16 %v10794, %v10794
    %v10883 = vpack.c.bf16 %v10795, %v10795
    %v10884 = vpack.c.bf16 %v10796, %v10796
    %v10885 = vpack.c.bf16 %v10797, %v10797
    %v10886 = vpack.c.bf16 %v10798, %v10798
    %v10887 = vpack.c.bf16 %v10799, %v10799
    %v10888 = vpack.c.bf16 %v10800, %v10800
    %v10889 = vpack.c.bf16 %v10801, %v10801
    %v10890 = vpack.c.bf16 %v10802, %v10802
    %v10891 = vpack.c.bf16 %v10803, %v10803
    %v10892 = vpack.c.bf16 %v10804, %v10804
    %v10893 = vpack.c.bf16 %v10805, %v10805
    %v10894 = vpack.c.bf16 %v10806, %v10806
    %v10895 = vpack.c.bf16 %v10807, %v10807
    %v10896 = vpack.c.bf16 %v10808, %v10808
    %v10897 = vpack.c.bf16 %v10809, %v10809
    %v10898 = vpack.c.bf16 %v10810, %v10810
    %v10899 = vpack.c.bf16 %v10811, %v10811
    %v10900 = vpack.c.bf16 %v10812, %v10812
    %v10901 = vpack.c.bf16 %v10813, %v10813
    %v10902 = vpack.c.bf16 %v10814, %v10814
    %v10903 = vpack.c.bf16 %v10815, %v10815
    %v10904 = vpack.c.bf16 %v10816, %v10816
    %v10905 = vpack.c.bf16 %v10817, %v10817
    %v10906 = vpack.c.bf16 %v10818, %v10818
    %v10907 = vpack.c.bf16 %v10819, %v10819
    %v10908 = vpack.c.bf16 %v10820, %v10820
    %v10909 = vpack.c.bf16 %v10821, %v10821
    %v10910 = vpack.c.bf16 %v10822, %v10822
    %v10911 = vpack.c.bf16 %v10823, %v10823
    %v10912 = vpack.c.bf16 %v10824, %v10824
    %v10913 = vpack.c.bf16 %v10825, %v10825
    %v10914 = vpack.c.bf16 %v10826, %v10826
    %v10915 = vpack.c.bf16 %v10827, %v10827
    %v10916 = vpack.c.bf16 %v10828, %v10828
    %v10917 = vpack.c.bf16 %v10829, %v10829
    %v10918 = vpack.c.bf16 %v10830, %v10830
    %v10919 = vpack.c.bf16 %v10831, %v10831
    %v10920 = vpack.c.bf16 %v10832, %v10832
    %v10921 = vpack.c.bf16 %v10833, %v10833
    %v10922 = vpack.c.bf16 %v10834, %v10834
    %v10923 = vpack.c.bf16 %v10835, %v10835
    %v10924 = vpack.c.bf16 %v10836, %v10836
    %v10925 = vpack.c.bf16 %v10837, %v10837
    %v10926 = vpack.c.bf16 %v10838, %v10838
    %v10927 = vpack.c.bf16 %v10839, %v10839
    %v10928 = vpack.c.bf16 %v10840, %v10840
    %v10929 = vpack.c.bf16 %v10841, %v10841
    %v10930 = vpack.c.bf16 %v10842, %v10842
    %v10931 = vpack.c.bf16 %v10843, %v10843
    %v10932 = vpack.c.bf16 %v10844, %v10844
    %v10933 = vpack.c.bf16 %v10845, %v10845
    %v10934 = vpack.c.bf16 %v10846, %v10846
    %v10935 = vpack.c.bf16 %v10847, %v10847
    %v10936 = vpack.c.bf16 %v10848, %v10848
    %v10937 = vpack.c.bf16 %v10849, %v10849
    %v10938 = vpack.c.bf16 %v10850, %v10850
    %v10939 = vpack.c.bf16 %v10851, %v10851
    %v10940 = vpack.c.bf16 %v10852, %v10852
    %v10941 = vpack.c.bf16 %v10853, %v10853
    %v10942 = vpack.c.bf16 %v10854, %v10854
    %v10943 = vpack.c.bf16 %v10855, %v10855
    %v10944 = vpack.c.bf16 %v10856, %v10856
    %v10945 = vpack.c.bf16 %v10857, %v10857
    %v10946 = vpack.c.bf16 %v10858, %v10858
    %v10947 = vpack.c.bf16 %v10859, %v10859
    %10948 = vst [vmem:[#allocation4] sm:$0xf] %v10860
    %10949 = vst [vmem:[#allocation4 + $0x4] sm:$0xf] %v10861
    %10950 = vst [vmem:[#allocation4 + $0x8] sm:$0xf] %v10862
    %10951 = vst [vmem:[#allocation4 + $0xc] sm:$0xf] %v10863
    %10952 = vst [vmem:[#allocation4 + $0x10] sm:$0xf] %v10864
    %10953 = vst [vmem:[#allocation4 + $0x14] sm:$0xf] %v10865
    %10954 = vst [vmem:[#allocation4 + $0x18] sm:$0xf] %v10866
    %10955 = vst [vmem:[#allocation4 + $0x1c] sm:$0xf] %v10867
    %10956 = vst [vmem:[#allocation4 + $0x20] sm:$0xf] %v10868
    %10957 = vst [vmem:[#allocation4 + $0x24] sm:$0xf] %v10869
    %10958 = vst [vmem:[#allocation4 + $0x28] sm:$0xf] %v10870
    %10959 = vst [vmem:[#allocation4 + $0x2c] sm:$0xf] %v10871
    %10960 = vst [vmem:[#allocation4 + $0x30] sm:$0xf] %v10872
    %10961 = vst [vmem:[#allocation4 + $0x34] sm:$0xf] %v10873
    %10962 = vst [vmem:[#allocation4 + $0x38] sm:$0xf] %v10874
    %10963 = vst [vmem:[#allocation4 + $0x3c] sm:$0xf] %v10875
    %10964 = vst [vmem:[#allocation4 + $0x40] sm:$0xf] %v10876
    %10965 = vst [vmem:[#allocation4 + $0x44] sm:$0xf] %v10877
    %10966 = vst [vmem:[#allocation4 + $0x48] sm:$0xf] %v10878
    %10967 = vst [vmem:[#allocation4 + $0x4c] sm:$0xf] %v10879
    %10968 = vst [vmem:[#allocation4 + $0x50] sm:$0xf] %v10880
    %10969 = vst [vmem:[#allocation4 + $0x54] sm:$0xf] %v10881
    %10970 = vst [vmem:[#allocation4 + $0x58] sm:$0xf] %v10882
    %10971 = vst [vmem:[#allocation4 + $0x5c] sm:$0xf] %v10883
    %10972 = vst [vmem:[#allocation4 + $0x60] sm:$0xf] %v10884
    %10973 = vst [vmem:[#allocation4 + $0x64] sm:$0xf] %v10885
    %10974 = vst [vmem:[#allocation4 + $0x68] sm:$0xf] %v10886
    %10975 = vst [vmem:[#allocation4 + $0x6c] sm:$0xf] %v10887
    %10976 = vst [vmem:[#allocation4 + $0x70] sm:$0xf] %v10888
    %10977 = vst [vmem:[#allocation4 + $0x74] sm:$0xf] %v10889
    %10978 = vst [vmem:[#allocation4 + $0x78] sm:$0xf] %v10890
    %10979 = vst [vmem:[#allocation4 + $0x7c] sm:$0xf] %v10891
    %10980 = vst [vmem:[#allocation4 + $0x80] sm:$0xf] %v10892
    %10981 = vst [vmem:[#allocation4 + $0x84] sm:$0xf] %v10893
    %10982 = vst [vmem:[#allocation4 + $0x88] sm:$0xf] %v10894
    %10983 = vst [vmem:[#allocation4 + $0x8c] sm:$0xf] %v10895
    %10984 = vst [vmem:[#allocation4 + $0x90] sm:$0xf] %v10896
    %10985 = vst [vmem:[#allocation4 + $0x94] sm:$0xf] %v10897
    %10986 = vst [vmem:[#allocation4 + $0x98] sm:$0xf] %v10898
    %10987 = vst [vmem:[#allocation4 + $0x9c] sm:$0xf] %v10899
    %10988 = vst [vmem:[#allocation4 + $0xa0] sm:$0xf] %v10900
    %10989 = vst [vmem:[#allocation4 + $0xa4] sm:$0xf] %v10901
    %10990 = vst [vmem:[#allocation4 + $0xa8] sm:$0xf] %v10902
    %10991 = vst [vmem:[#allocation4 + $0xac] sm:$0xf] %v10903
    %10992 = vst [vmem:[#allocation4 + $0xb0] sm:$0xf] %v10904
    %10993 = vst [vmem:[#allocation4 + $0xb4] sm:$0xf] %v10905
    %10994 = vst [vmem:[#allocation4 + $0xb8] sm:$0xf] %v10906
    %10995 = vst [vmem:[#allocation4 + $0xbc] sm:$0xf] %v10907
    %10996 = vst [vmem:[#allocation4 + $0xc0] sm:$0xf] %v10908
    %10997 = vst [vmem:[#allocation4 + $0xc4] sm:$0xf] %v10909
    %10998 = vst [vmem:[#allocation4 + $0xc8] sm:$0xf] %v10910
    %10999 = vst [vmem:[#allocation4 + $0xcc] sm:$0xf] %v10911
    %11000 = vst [vmem:[#allocation4 + $0xd0] sm:$0xf] %v10912
    %11001 = vst [vmem:[#allocation4 + $0xd4] sm:$0xf] %v10913
    %11002 = vst [vmem:[#allocation4 + $0xd8] sm:$0xf] %v10914
    %11003 = vst [vmem:[#allocation4 + $0xdc] sm:$0xf] %v10915
    %11004 = vst [vmem:[#allocation4 + $0xe0] sm:$0xf] %v10916
    %11005 = vst [vmem:[#allocation4 + $0xe4] sm:$0xf] %v10917
    %11006 = vst [vmem:[#allocation4 + $0xe8] sm:$0xf] %v10918
    %11007 = vst [vmem:[#allocation4 + $0xec] sm:$0xf] %v10919
    %11008 = vst [vmem:[#allocation4 + $0xf0] sm:$0xf] %v10920
    %11009 = vst [vmem:[#allocation4 + $0xf4] sm:$0xf] %v10921
    %11010 = vst [vmem:[#allocation4 + $0xf8] sm:$0xf] %v10922
    %11011 = vst [vmem:[#allocation4 + $0xfc] sm:$0xf] %v10923
    %11012 = vst [vmem:[#allocation4 + $0x100] sm:$0xf] %v10924
    %11013 = vst [vmem:[#allocation4 + $0x104] sm:$0xf] %v10925
    %11014 = vst [vmem:[#allocation4 + $0x108] sm:$0xf] %v10926
    %11015 = vst [vmem:[#allocation4 + $0x10c] sm:$0xf] %v10927
    %11016 = vst [vmem:[#allocation4 + $0x110] sm:$0xf] %v10928
    %11017 = vst [vmem:[#allocation4 + $0x114] sm:$0xf] %v10929
    %11018 = vst [vmem:[#allocation4 + $0x118] sm:$0xf] %v10930
    %11019 = vst [vmem:[#allocation4 + $0x11c] sm:$0xf] %v10931
    %11020 = vst [vmem:[#allocation4 + $0x120] sm:$0xf] %v10932
    %11021 = vst [vmem:[#allocation4 + $0x124] sm:$0xf] %v10933
    %11022 = vst [vmem:[#allocation4 + $0x128] sm:$0xf] %v10934
    %11023 = vst [vmem:[#allocation4 + $0x12c] sm:$0xf] %v10935
    %11024 = vst [vmem:[#allocation4 + $0x130] sm:$0xf] %v10936
    %11025 = vst [vmem:[#allocation4 + $0x134] sm:$0xf] %v10937
    %11026 = vst [vmem:[#allocation4 + $0x138] sm:$0xf] %v10938
    %11027 = vst [vmem:[#allocation4 + $0x13c] sm:$0xf] %v10939
    %11028 = vst [vmem:[#allocation4 + $0x140] sm:$0xf] %v10940
    %11029 = vst [vmem:[#allocation4 + $0x144] sm:$0xf] %v10941
    %11030 = vst [vmem:[#allocation4 + $0x148] sm:$0xf] %v10942
    %11031 = vst [vmem:[#allocation4 + $0x14c] sm:$0xf] %v10943
    %11032 = vst [vmem:[#allocation4 + $0x150] sm:$0xf] %v10944
    %11033 = vst [vmem:[#allocation4 + $0x154] sm:$0xf] %v10945
    %11034 = vst [vmem:[#allocation4 + $0x158] sm:$0xf] %v10946
    %11035 = vst [vmem:[#allocation4 + $0x15c] sm:$0xf] %v10947
    %v11036 = vadd.f32 %v10772, %v10773
    %v11037 = vadd.f32 %v11036, %v10774
    %v11038 = vadd.f32 %v11037, %v10775
    %v11039 = vadd.f32 %v11038, %v10776
    %v11040 = vadd.f32 %v11039, %v10777
    %v11041 = vadd.f32 %v11040, %v10778
    %v11042 = vadd.f32 %v11041, %v10779
    %v11043 = vadd.f32 %v11042, %v10780
    %v11044 = vadd.f32 %v11043, %v10781
    %v11045 = vadd.f32 %v11044, %v10782
    %v11046 = vadd.f32 %v11045, %v10783
    %v11047 = vadd.f32 %v11046, %v10784
    %v11048 = vadd.f32 %v11047, %v10785
    %v11049 = vadd.f32 %v11048, %v10786
    %v11050 = vadd.f32 %v11049, %v10787
    %v11051 = vadd.f32 %v11050, %v10788
    %v11052 = vadd.f32 %v11051, %v10789
    %v11053 = vadd.f32 %v11052, %v10790
    %v11054 = vadd.f32 %v11053, %v10791
    %v11055 = vadd.f32 %v11054, %v10792
    %v11056 = vadd.f32 %v11055, %v10793
    %v11057 = vadd.f32 %v11056, %v10794
    %v11058 = vadd.f32 %v11057, %v10795
    %v11059 = vadd.f32 %v11058, %v10796
    %v11060 = vadd.f32 %v11059, %v10797
    %v11061 = vadd.f32 %v11060, %v10798
    %v11062 = vadd.f32 %v11061, %v10799
    %v11063 = vadd.f32 %v11062, %v10800
    %v11064 = vadd.f32 %v11063, %v10801
    %v11065 = vadd.f32 %v11064, %v10802
    %v11066 = vadd.f32 %v11065, %v10803
    %v11067 = vadd.f32 %v11066, %v10804
    %v11068 = vadd.f32 %v11067, %v10805
    %v11069 = vadd.f32 %v11068, %v10806
    %v11070 = vadd.f32 %v11069, %v10807
    %v11071 = vadd.f32 %v11070, %v10808
    %v11072 = vadd.f32 %v11071, %v10809
    %v11073 = vadd.f32 %v11072, %v10810
    %v11074 = vadd.f32 %v11073, %v10811
    %v11075 = vadd.f32 %v11074, %v10812
    %v11076 = vadd.f32 %v11075, %v10813
    %v11077 = vadd.f32 %v11076, %v10814
    %v11078 = vadd.f32 %v11077, %v10815
    %v11079 = vadd.f32 %v11078, %v10816
    %v11080 = vadd.f32 %v11079, %v10817
    %v11081 = vadd.f32 %v11080, %v10818
    %v11082 = vadd.f32 %v11081, %v10819
    %v11083 = vadd.f32 %v11082, %v10820
    %v11084 = vadd.f32 %v11083, %v10821
    %v11085 = vadd.f32 %v11084, %v10822
    %v11086 = vadd.f32 %v11085, %v10823
    %v11087 = vadd.f32 %v11086, %v10824
    %v11088 = vadd.f32 %v11087, %v10825
    %v11089 = vadd.f32 %v11088, %v10826
    %v11090 = vadd.f32 %v11089, %v10827
    %v11091 = vadd.f32 %v11090, %v10828
    %v11092 = vadd.f32 %v11091, %v10829
    %v11093 = vadd.f32 %v11092, %v10830
    %v11094 = vadd.f32 %v11093, %v10831
    %v11095 = vadd.f32 %v11094, %v10832
    %v11096 = vadd.f32 %v11095, %v10833
    %v11097 = vadd.f32 %v11096, %v10834
    %v11098 = vadd.f32 %v11097, %v10835
    %v11099 = vadd.f32 %v11098, %v10836
    %v11100 = vadd.f32 %v11099, %v10837
    %v11101 = vadd.f32 %v11100, %v10838
    %v11102 = vadd.f32 %v11101, %v10839
    %v11103 = vadd.f32 %v11102, %v10840
    %v11104 = vadd.f32 %v11103, %v10841
    %v11105 = vadd.f32 %v11104, %v10842
    %v11106 = vadd.f32 %v11105, %v10843
    %v11107 = vadd.f32 %v11106, %v10844
    %v11108 = vadd.f32 %v11107, %v10845
    %v11109 = vadd.f32 %v11108, %v10846
    %v11110 = vadd.f32 %v11109, %v10847
    %v11111 = vadd.f32 %v11110, %v10848
    %v11112 = vadd.f32 %v11111, %v10849
    %v11113 = vadd.f32 %v11112, %v10850
    %v11114 = vadd.f32 %v11113, %v10851
    %v11115 = vadd.f32 %v11114, %v10852
    %v11116 = vadd.f32 %v11115, %v10853
    %v11117 = vadd.f32 %v11116, %v10854
    %v11118 = vadd.f32 %v11117, %v10855
    %v11119 = vadd.f32 %v11118, %v10856
    %v11120 = vadd.f32 %v11119, %v10857
    %v11121 = vadd.f32 %v11120, %v10858
    %v11122 = vadd.f32 %v11121, %v10859
    %v11123 = vrot.slane %v11122, 4
    %v11124 = vadd.f32 %v11122, %v11123
    %v11125 = vrot.slane %v11124, 2
    %v11126 = vadd.f32 %v11124, %v11125
    %v11127 = vrot.slane %v11126, 1
    %v11128 = vadd.f32 %v11126, %v11127
    %11129 = vst [vmem:[#allocation6] sm:$0x1] %v11128
    %v11130 = vmul.f32 %v10772, %v10772
    %v11131 = vmul.f32 %v10773, %v10773
    %v11132 = vmul.f32 %v10774, %v10774
    %v11133 = vmul.f32 %v10775, %v10775
    %v11134 = vmul.f32 %v10776, %v10776
    %v11135 = vmul.f32 %v10777, %v10777
    %v11136 = vmul.f32 %v10778, %v10778
    %v11137 = vmul.f32 %v10779, %v10779
    %v11138 = vmul.f32 %v10780, %v10780
    %v11139 = vmul.f32 %v10781, %v10781
    %v11140 = vmul.f32 %v10782, %v10782
    %v11141 = vmul.f32 %v10783, %v10783
    %v11142 = vmul.f32 %v10784, %v10784
    %v11143 = vmul.f32 %v10785, %v10785
    %v11144 = vmul.f32 %v10786, %v10786
    %v11145 = vmul.f32 %v10787, %v10787
    %v11146 = vmul.f32 %v10788, %v10788
    %v11147 = vmul.f32 %v10789, %v10789
    %v11148 = vmul.f32 %v10790, %v10790
    %v11149 = vmul.f32 %v10791, %v10791
    %v11150 = vmul.f32 %v10792, %v10792
    %v11151 = vmul.f32 %v10793, %v10793
    %v11152 = vmul.f32 %v10794, %v10794
    %v11153 = vmul.f32 %v10795, %v10795
    %v11154 = vmul.f32 %v10796, %v10796
    %v11155 = vmul.f32 %v10797, %v10797
    %v11156 = vmul.f32 %v10798, %v10798
    %v11157 = vmul.f32 %v10799, %v10799
    %v11158 = vmul.f32 %v10800, %v10800
    %v11159 = vmul.f32 %v10801, %v10801
    %v11160 = vmul.f32 %v10802, %v10802
    %v11161 = vmul.f32 %v10803, %v10803
    %v11162 = vmul.f32 %v10804, %v10804
    %v11163 = vmul.f32 %v10805, %v10805
    %v11164 = vmul.f32 %v10806, %v10806
    %v11165 = vmul.f32 %v10807, %v10807
    %v11166 = vmul.f32 %v10808, %v10808
    %v11167 = vmul.f32 %v10809, %v10809
    %v11168 = vmul.f32 %v10810, %v10810
    %v11169 = vmul.f32 %v10811, %v10811
    %v11170 = vmul.f32 %v10812, %v10812
    %v11171 = vmul.f32 %v10813, %v10813
    %v11172 = vmul.f32 %v10814, %v10814
    %v11173 = vmul.f32 %v10815, %v10815
    %v11174 = vmul.f32 %v10816, %v10816
    %v11175 = vmul.f32 %v10817, %v10817
    %v11176 = vmul.f32 %v10818, %v10818
    %v11177 = vmul.f32 %v10819, %v10819
    %v11178 = vmul.f32 %v10820, %v10820
    %v11179 = vmul.f32 %v10821, %v10821
    %v11180 = vmul.f32 %v10822, %v10822
    %v11181 = vmul.f32 %v10823, %v10823
    %v11182 = vmul.f32 %v10824, %v10824
    %v11183 = vmul.f32 %v10825, %v10825
    %v11184 = vmul.f32 %v10826, %v10826
    %v11185 = vmul.f32 %v10827, %v10827
    %v11186 = vmul.f32 %v10828, %v10828
    %v11187 = vmul.f32 %v10829, %v10829
    %v11188 = vmul.f32 %v10830, %v10830
    %v11189 = vmul.f32 %v10831, %v10831
    %v11190 = vmul.f32 %v10832, %v10832
    %v11191 = vmul.f32 %v10833, %v10833
    %v11192 = vmul.f32 %v10834, %v10834
    %v11193 = vmul.f32 %v10835, %v10835
    %v11194 = vmul.f32 %v10836, %v10836
    %v11195 = vmul.f32 %v10837, %v10837
    %v11196 = vmul.f32 %v10838, %v10838
    %v11197 = vmul.f32 %v10839, %v10839
    %v11198 = vmul.f32 %v10840, %v10840
    %v11199 = vmul.f32 %v10841, %v10841
    %v11200 = vmul.f32 %v10842, %v10842
    %v11201 = vmul.f32 %v10843, %v10843
    %v11202 = vmul.f32 %v10844, %v10844
    %v11203 = vmul.f32 %v10845, %v10845
    %v11204 = vmul.f32 %v10846, %v10846
    %v11205 = vmul.f32 %v10847, %v10847
    %v11206 = vmul.f32 %v10848, %v10848
    %v11207 = vmul.f32 %v10849, %v10849
    %v11208 = vmul.f32 %v10850, %v10850
    %v11209 = vmul.f32 %v10851, %v10851
    %v11210 = vmul.f32 %v10852, %v10852
    %v11211 = vmul.f32 %v10853, %v10853
    %v11212 = vmul.f32 %v10854, %v10854
    %v11213 = vmul.f32 %v10855, %v10855
    %v11214 = vmul.f32 %v10856, %v10856
    %v11215 = vmul.f32 %v10857, %v10857
    %v11216 = vmul.f32 %v10858, %v10858
    %v11217 = vmul.f32 %v10859, %v10859
    %v11218 = vadd.f32 %v11130, %v11131
    %v11219 = vadd.f32 %v11218, %v11132
    %v11220 = vadd.f32 %v11219, %v11133
    %v11221 = vadd.f32 %v11220, %v11134
    %v11222 = vadd.f32 %v11221, %v11135
    %v11223 = vadd.f32 %v11222, %v11136
    %v11224 = vadd.f32 %v11223, %v11137
    %v11225 = vadd.f32 %v11224, %v11138
    %v11226 = vadd.f32 %v11225, %v11139
    %v11227 = vadd.f32 %v11226, %v11140
    %v11228 = vadd.f32 %v11227, %v11141
    %v11229 = vadd.f32 %v11228, %v11142
    %v11230 = vadd.f32 %v11229, %v11143
    %v11231 = vadd.f32 %v11230, %v11144
    %v11232 = vadd.f32 %v11231, %v11145
    %v11233 = vadd.f32 %v11232, %v11146
    %v11234 = vadd.f32 %v11233, %v11147
    %v11235 = vadd.f32 %v11234, %v11148
    %v11236 = vadd.f32 %v11235, %v11149
    %v11237 = vadd.f32 %v11236, %v11150
    %v11238 = vadd.f32 %v11237, %v11151
    %v11239 = vadd.f32 %v11238, %v11152
    %v11240 = vadd.f32 %v11239, %v11153
    %v11241 = vadd.f32 %v11240, %v11154
    %v11242 = vadd.f32 %v11241, %v11155
    %v11243 = vadd.f32 %v11242, %v11156
    %v11244 = vadd.f32 %v11243, %v11157
    %v11245 = vadd.f32 %v11244, %v11158
    %v11246 = vadd.f32 %v11245, %v11159
    %v11247 = vadd.f32 %v11246, %v11160
    %v11248 = vadd.f32 %v11247, %v11161
    %v11249 = vadd.f32 %v11248, %v11162
    %v11250 = vadd.f32 %v11249, %v11163
    %v11251 = vadd.f32 %v11250, %v11164
    %v11252 = vadd.f32 %v11251, %v11165
    %v11253 = vadd.f32 %v11252, %v11166
    %v11254 = vadd.f32 %v11253, %v11167
    %v11255 = vadd.f32 %v11254, %v11168
    %v11256 = vadd.f32 %v11255, %v11169
    %v11257 = vadd.f32 %v11256, %v11170
    %v11258 = vadd.f32 %v11257, %v11171
    %v11259 = vadd.f32 %v11258, %v11172
    %v11260 = vadd.f32 %v11259, %v11173
    %v11261 = vadd.f32 %v11260, %v11174
    %v11262 = vadd.f32 %v11261, %v11175
    %v11263 = vadd.f32 %v11262, %v11176
    %v11264 = vadd.f32 %v11263, %v11177
    %v11265 = vadd.f32 %v11264, %v11178
    %v11266 = vadd.f32 %v11265, %v11179
    %v11267 = vadd.f32 %v11266, %v11180
    %v11268 = vadd.f32 %v11267, %v11181
    %v11269 = vadd.f32 %v11268, %v11182
    %v11270 = vadd.f32 %v11269, %v11183
    %v11271 = vadd.f32 %v11270, %v11184
    %v11272 = vadd.f32 %v11271, %v11185
    %v11273 = vadd.f32 %v11272, %v11186
    %v11274 = vadd.f32 %v11273, %v11187
    %v11275 = vadd.f32 %v11274, %v11188
    %v11276 = vadd.f32 %v11275, %v11189
    %v11277 = vadd.f32 %v11276, %v11190
    %v11278 = vadd.f32 %v11277, %v11191
    %v11279 = vadd.f32 %v11278, %v11192
    %v11280 = vadd.f32 %v11279, %v11193
    %v11281 = vadd.f32 %v11280, %v11194
    %v11282 = vadd.f32 %v11281, %v11195
    %v11283 = vadd.f32 %v11282, %v11196
    %v11284 = vadd.f32 %v11283, %v11197
    %v11285 = vadd.f32 %v11284, %v11198
    %v11286 = vadd.f32 %v11285, %v11199
    %v11287 = vadd.f32 %v11286, %v11200
    %v11288 = vadd.f32 %v11287, %v11201
    %v11289 = vadd.f32 %v11288, %v11202
    %v11290 = vadd.f32 %v11289, %v11203
    %v11291 = vadd.f32 %v11290, %v11204
    %v11292 = vadd.f32 %v11291, %v11205
    %v11293 = vadd.f32 %v11292, %v11206
    %v11294 = vadd.f32 %v11293, %v11207
    %v11295 = vadd.f32 %v11294, %v11208
    %v11296 = vadd.f32 %v11295, %v11209
    %v11297 = vadd.f32 %v11296, %v11210
    %v11298 = vadd.f32 %v11297, %v11211
    %v11299 = vadd.f32 %v11298, %v11212
    %v11300 = vadd.f32 %v11299, %v11213
    %v11301 = vadd.f32 %v11300, %v11214
    %v11302 = vadd.f32 %v11301, %v11215
    %v11303 = vadd.f32 %v11302, %v11216
    %v11304 = vadd.f32 %v11303, %v11217
    %v11305 = vrot.slane %v11304, 4
    %v11306 = vadd.f32 %v11304, %v11305
    %v11307 = vrot.slane %v11306, 2
    %v11308 = vadd.f32 %v11306, %v11307
    %v11309 = vrot.slane %v11308, 1
    %v11310 = vadd.f32 %v11308, %v11309
    %11311 = vst [vmem:[#allocation6 + $0x1] sm:$0x1] %v11310
    // Predicated region
    $region18: #{tpu_custom_call.1} parent=1 // pred_check
      _
    $region19: #{tpu_custom_call.1} parent=1 // pred_check_branch
      %11313 = sbr.rel (0) target = $region21
    $region20: #{tpu_custom_call.1} parent=1 // pred_region
      %11315 = vsyncadd [#allocation5], 0
      %s11316 = sshll.u32 [#allocation4], 4
      %s11317 = int_to_ptr.vmem [resolvable:$true] %s11316
      %s11318 = sshll.u32 %s4, 4
      %s11319 = int_to_ptr.hbm [resolvable:$true] %s11318
      %11324 = dma.vmem_to_hbm [thread:$0]  %s11317, 5632, %s11319, [#allocation5], 64, 64, 4
    $region21: #{tpu_custom_call.1} parent=1 // pred_fallthru
      _
    // Predicated region
    $region22: #{tpu_custom_call.1} parent=1 // pred_check
      _
    $region23: #{tpu_custom_call.1} parent=1 // pred_check_branch
      %11326 = sbr.rel (0) target = $region25
    $region24: #{tpu_custom_call.1} parent=1 // pred_region
      %11328 = vsyncadd [#allocation7], 0
      %s11330 = sshll.u32 [#allocation6], 4
      %s11331 = int_to_ptr.vmem [resolvable:$true] %s11330
      %s11332 = sshll.u32 %s5, 4
      %s11333 = int_to_ptr.hbm [resolvable:$true] %s11332
      %11335 = dma.vmem_to_hbm [thread:$0]  %s11331, 32, %s11333, [#allocation7]
    $region25: #{tpu_custom_call.1} parent=1 // pred_fallthru
      _
    // Predicated region
    $region26: #{tpu_custom_call.1} parent=1 // pred_check
      _
    $region27: #{tpu_custom_call.1} parent=1 // pred_check_branch
      %11337 = sbr.rel (0) target = $region29
    $region28: #{tpu_custom_call.1} parent=1 // pred_region
      %11339 = dma.done [#allocation5], 5632
    $region29: #{tpu_custom_call.1} parent=1 // pred_fallthru
      _
    // Predicated region
    $region30: #{tpu_custom_call.1} parent=1 // pred_check
      _
    $region31: #{tpu_custom_call.1} parent=1 // pred_check_branch
      %11341 = sbr.rel (0) target = $region33
    $region32: #{tpu_custom_call.1} parent=1 // pred_region
      %11343 = dma.done [#allocation7], 32
    $region33: #{tpu_custom_call.1} parent=1 // pred_fallthru
      _
    %11344 = vsyncpa [#allocation5], 1
    %11345 = vsyncpa [#allocation7], 1

</llo_original>
